<compile_context>
chip_gen: v6e
topology: v6e:2x2x1
jax: 0.10.0
libtpu: 0.0.40
codegen_flags: <defaults>
</compile_context>

<pallas_src>
import numpy as np
import jax
import jax.numpy as jnp
from jax.experimental import pallas as pl
from jax.experimental.pallas import tpu as pltpu

# ---------------------------------------------------------------------------
# Fixed geometry of CNN_KWS for a (N, 1, 34, 13) input (so the flatten == 1920).
# ---------------------------------------------------------------------------
H_IN, W_IN = 34, 13
C1, KH1, KW1 = 28, 10, 4            # conv1: 1 -> 28, kernel (10, 4), stride (1, 1)
C2, KH2, KW2, SW2 = 30, 10, 4, 2    # conv2: 28 -> 30, kernel (10, 4), stride (1, 2)
OH1, OW1 = H_IN - KH1 + 1, W_IN - KW1 + 1           # 25, 10
OH2, OW2 = OH1 - KH2 + 1, (OW1 - KW2) // SW2 + 1    # 16, 4
N1 = OW1 * C1                       # 280   conv1 output row width  (ow1, c1)
N2 = OW2 * C2                       # 120   conv2 output row width  (ow2, c2)
NCLS = 128                          # fc2 output classes (lane-dense)


# ---------------------------------------------------------------------------
# The fused kernel (runs once per batch sample; everything stays in VMEM).
# ---------------------------------------------------------------------------
def _cnn_kws_kernel(x_ref, r1_ref, b1_ref, r2_ref, b2_ref,
                    wfc1_ref, bfc1_ref, wfc2_ref, bfc2_ref,
                    o_ref, y1_ref, y2_ref):
    bf16 = jnp.bfloat16
    f32 = jnp.float32

    # ---- conv1 + ReLU ----------------------------------------------------
    # out[oh1, ow1*C1+c] = sum_kh (x rows oh1+kh) @ r1[kh]; the kernel-width taps
    # are folded into the width-Toeplitz slab r1[kh] of shape (W_IN, OW1*C1).
    acc1 = jnp.zeros((OH1, N1), f32)
    for kh in range(KH1):                                     # static unroll
        acc1 = acc1 + jnp.dot(x_ref[0, kh:kh + OH1, :].astype(bf16), r1_ref[kh],
                              preferred_element_type=f32)
    y1_ref[...] = jnp.maximum(acc1 + b1_ref[...], 0.0)        # (25, 280)

    # ---- conv2 + ReLU ----------------------------------------------------
    # Same trick on conv1's VMEM-resident output; width stride 2 is in r2.
    acc2 = jnp.zeros((OH2, N2), f32)
    for kh in range(KH2):
        acc2 = acc2 + jnp.dot(y1_ref[kh:kh + OH2, :].astype(bf16), r2_ref[kh],
                              preferred_element_type=f32)
    y2_ref[...] = jnp.maximum(acc2 + b2_ref[...], 0.0)        # (16, 120)

    # ---- fc1 + ReLU --------------------------------------------------------
    # PyTorch flattens relu(conv2) in NCHW order; wfc1 is pre-permuted so that
    # weight slab `oh2` contracts directly against y2 row `oh2` (cols (ow2, c2)),
    # avoiding any in-kernel relayout of the activations.
    h1 = bfc1_ref[...]                                        # (1, 16)
    for oh2 in range(OH2):
        h1 = h1 + jnp.dot(y2_ref[oh2:oh2 + 1, :], wfc1_ref[oh2],
                          preferred_element_type=f32)
    h1 = jnp.maximum(h1, 0.0)

    # ---- fc2 + log_softmax (f32, lane-dense 128-wide store) ---------------
    logits = jnp.dot(h1, wfc2_ref[...], preferred_element_type=f32) + bfc2_ref[...]
    m = jnp.max(logits, axis=-1, keepdims=True)
    s = logits - m
    lse = jnp.log(jnp.sum(jnp.exp(s), axis=-1, keepdims=True))
    o_ref[0] = (s - lse).astype(o_ref.dtype)


# ---------------------------------------------------------------------------
# One-time host-side repack of the PyTorch-layout parameters.
# ---------------------------------------------------------------------------
def pack_params(p):
    w1 = np.asarray(p["conv1_w"], np.float32)   # (28, 1, 10, 4)
    w2 = np.asarray(p["conv2_w"], np.float32)   # (30, 28, 10, 4)

    # conv1: r1[kh, w, ow1*C1 + c] = w1[c, 0, kh, w - ow1]  (0 <= w-ow1 < KW1)
    r1 = np.zeros((KH1, W_IN, OW1, C1), np.float32)
    for ow in range(OW1):
        for kw in range(KW1):
            r1[:, ow + kw, ow, :] = w1[:, 0, :, kw].T                     # (KH1, C1)
    r1 = r1.reshape(KH1, W_IN, N1)

    # conv2 (width stride 2): r2[kh, ow1*C1 + ci, ow2*C2 + c] = w2[c, ci, kh, kw]
    # with ow1 = 2*ow2 + kw.
    r2 = np.zeros((KH2, OW1, C1, OW2, C2), np.float32)
    for ow in range(OW2):
        for kw in range(KW2):
            r2[:, SW2 * ow + kw, :, ow, :] = np.transpose(w2[:, :, :, kw], (2, 1, 0))
    r2 = r2.reshape(KH2, N1, N2)

    # fc1: PyTorch flatten order is (c2, oh2, ow2); the kernel holds activations as
    # rows oh2, cols (ow2, c2) -> permute the weight once to (oh2, ow2*c2, 16).
    wf1 = np.asarray(p["fc1_w"], np.float32).reshape(16, C2, OH2, OW2)    # (o,c2,oh2,ow2)
    wf1 = np.transpose(wf1, (2, 3, 1, 0)).reshape(OH2, N2, 16)            # (oh2, ow2*c2, o)

    return {
        "r1": jnp.asarray(r1, jnp.bfloat16),
        "b1": jnp.asarray(np.tile(np.asarray(p["conv1_b"], np.float32), OW1).reshape(1, N1)),
        "r2": jnp.asarray(r2, jnp.bfloat16),
        "b2": jnp.asarray(np.tile(np.asarray(p["conv2_b"], np.float32), OW2).reshape(1, N2)),
        "wfc1": jnp.asarray(wf1),
        "bfc1": jnp.asarray(np.asarray(p["fc1_b"], np.float32).reshape(1, 16)),
        "wfc2": jnp.asarray(np.asarray(p["fc2_w"], np.float32).T),        # (16, 128)
        "bfc2": jnp.asarray(np.asarray(p["fc2_b"], np.float32).reshape(1, NCLS)),
    }


# ---------------------------------------------------------------------------
# Forward: one pallas_call over grid=(batch,).
# ---------------------------------------------------------------------------
def cnn_kws_forward(x, pk):
    n = x.shape[0]
    x3 = x.reshape(n, H_IN, W_IN).astype(jnp.float32)    # squeeze Cin=1 (free)
    out = pl.pallas_call(
        _cnn_kws_kernel,
        out_shape=jax.ShapeDtypeStruct((n, 1, NCLS), jnp.float32),
        grid_spec=pltpu.PrefetchScalarGridSpec(
            num_scalar_prefetch=0,
            grid=(n,),
            in_specs=[
                pl.BlockSpec((1, H_IN, W_IN), lambda i: (i, 0, 0)),   # x, per sample
                pl.BlockSpec((KH1, W_IN, N1), lambda i: (0, 0, 0)),   # conv1 Toeplitz (bf16)
                pl.BlockSpec((1, N1), lambda i: (0, 0)),              # conv1 bias (tiled)
                pl.BlockSpec((KH2, N1, N2), lambda i: (0, 0, 0)),     # conv2 Toeplitz (bf16)
                pl.BlockSpec((1, N2), lambda i: (0, 0)),              # conv2 bias (tiled)
                pl.BlockSpec((OH2, N2, 16), lambda i: (0, 0, 0)),     # fc1 weight (permuted)
                pl.BlockSpec((1, 16), lambda i: (0, 0)),              # fc1 bias
                pl.BlockSpec((16, NCLS), lambda i: (0, 0)),           # fc2 weight^T
                pl.BlockSpec((1, NCLS), lambda i: (0, 0)),            # fc2 bias
            ],
            out_specs=pl.BlockSpec((1, 1, NCLS), lambda i: (i, 0, 0)),
            scratch_shapes=[
                pltpu.VMEM((OH1, N1), jnp.float32),   # relu(conv1) activations
                pltpu.VMEM((OH2, N2), jnp.float32),   # relu(conv2) activations
            ],
        ),
        compiler_params=pltpu.CompilerParams(
            dimension_semantics=("parallel",),        # shard batch across v7x's 2 TCs
        ),
    )(x3, pk["r1"], pk["b1"], pk["r2"], pk["b2"],
      pk["wfc1"], pk["bfc1"], pk["wfc2"], pk["bfc2"])
    return out.reshape(n, NCLS)


# ---------------------------------------------------------------------------
# Pure-JAX reference (correctness check only) and parameter init.
# ---------------------------------------------------------------------------
def cnn_kws_ref(x, p):
    dn = ("NCHW", "OIHW", "NCHW")
    y = jax.lax.conv_general_dilated(x, p["conv1_w"], (1, 1), "VALID", dimension_numbers=dn)
    y = jax.nn.relu(y + p["conv1_b"].reshape(1, -1, 1, 1))
    y = jax.lax.conv_general_dilated(y, p["conv2_w"], (1, 2), "VALID", dimension_numbers=dn)
    y = jax.nn.relu(y + p["conv2_b"].reshape(1, -1, 1, 1))
    y = y.reshape(y.shape[0], -1)
    y = jax.nn.relu(y @ p["fc1_w"].T + p["fc1_b"])
    y = y @ p["fc2_w"].T + p["fc2_b"]
    return jax.nn.log_softmax(y, axis=1)


def init_params(key):
    ks = jax.random.split(key, 8)
    def w(k, shape, fan_in):
        return jax.random.normal(k, shape, jnp.float32) * (1.0 / jnp.sqrt(fan_in))
    return {
        "conv1_w": w(ks[0], (28, 1, 10, 4), 1 * 10 * 4),
        "conv1_b": w(ks[1], (28,), 1 * 10 * 4),
        "conv2_w": w(ks[2], (30, 28, 10, 4), 28 * 10 * 4),
        "conv2_b": w(ks[3], (30,), 28 * 10 * 4),
        "fc1_w": w(ks[4], (16, 1920), 1920),
        "fc1_b": w(ks[5], (16,), 1920),
        "fc2_w": w(ks[6], (128, 16), 16),
        "fc2_b": w(ks[7], (128,), 16),
    }


if __name__ == "__main__":
    key = jax.random.PRNGKey(0)
    k_in, k_p = jax.random.split(key)
    params = init_params(k_p)
    packed = pack_params(params)          # one-time weight repack (host, init time)

    # Input spatial size chosen so the flatten is exactly 1920 = 30 * 16 * 4:
    # conv1: 34x13 -> 25x10 ; conv2 (stride (1,2)): 25x10 -> 16x4.
    x = jax.random.normal(k_in, (2, 1, 34, 13), jnp.float32)

    fwd = jax.jit(cnn_kws_forward)
    out = jax.block_until_ready(fwd(x, packed))
    ref = jax.block_until_ready(cnn_kws_ref(x, params))

    assert out.shape == (2, 128), out.shape
    # Conv matmuls use bf16 MXU operands (f32 accumulation) -> compare at ~bf16 accuracy.
    assert jnp.allclose(out, ref, atol=1e-2, rtol=5e-2), float(jnp.max(jnp.abs(out - ref)))
    print("KERNEL_OK")
</pallas_src>

<mosaic_0001>
module attributes {stable_mosaic.version = 11 : i64} {
  func.func @_cnn_kws_kernel(%arg0: i32, %arg1: memref<1x34x13xf32, #tpu.memory_space<vmem>>, %arg2: memref<10x13x280xbf16, #tpu.memory_space<vmem>>, %arg3: memref<1x280xf32, #tpu.memory_space<vmem>>, %arg4: memref<10x280x120xbf16, #tpu.memory_space<vmem>>, %arg5: memref<1x120xf32, #tpu.memory_space<vmem>>, %arg6: memref<16x120x16xf32, #tpu.memory_space<vmem>>, %arg7: memref<1x16xf32, #tpu.memory_space<vmem>>, %arg8: memref<16x128xf32, #tpu.memory_space<vmem>>, %arg9: memref<1x128xf32, #tpu.memory_space<vmem>>, %arg10: memref<1x1x128xf32, #tpu.memory_space<vmem>>, %arg11: memref<25x280xf32, #tpu.memory_space<vmem>>, %arg12: memref<16x120xf32, #tpu.memory_space<vmem>>) attributes {dimension_semantics = [#tpu.dimension_semantics<parallel>], iteration_bounds = array<i64: 2>, scalar_prefetch = 0 : i64, scratch_operands = 2 : i64, tpu.core_type = #tpu.core_type<tc>, window_params = [{transform_indices = @transform_0, window_bounds = array<i64: 1, 34, 13>}, {pipeline_mode = #tpu.pipeline_mode<synchronous>, transform_indices = @transform_1, window_bounds = array<i64: 10, 13, 280>}, {pipeline_mode = #tpu.pipeline_mode<synchronous>, transform_indices = @transform_2, window_bounds = array<i64: 1, 280>}, {pipeline_mode = #tpu.pipeline_mode<synchronous>, transform_indices = @transform_3, window_bounds = array<i64: 10, 280, 120>}, {pipeline_mode = #tpu.pipeline_mode<synchronous>, transform_indices = @transform_4, window_bounds = array<i64: 1, 120>}, {pipeline_mode = #tpu.pipeline_mode<synchronous>, transform_indices = @transform_5, window_bounds = array<i64: 16, 120, 16>}, {pipeline_mode = #tpu.pipeline_mode<synchronous>, transform_indices = @transform_6, window_bounds = array<i64: 1, 16>}, {pipeline_mode = #tpu.pipeline_mode<synchronous>, transform_indices = @transform_7, window_bounds = array<i64: 16, 128>}, {pipeline_mode = #tpu.pipeline_mode<synchronous>, transform_indices = @transform_8, window_bounds = array<i64: 1, 128>}, {transform_indices = @transform_9, window_bounds = array<i64: 1, 1, 128>}]} {
    %cst = arith.constant 0.000000e+00 : f32
    %0 = vector.broadcast %cst : f32 to vector<25x280xf32>
    %c0 = arith.constant 0 : index
    %c0_0 = arith.constant 0 : index
    %c0_1 = arith.constant 0 : index
    %1 = vector.load %arg1[%c0, %c0_0, %c0_1] : memref<1x34x13xf32, #tpu.memory_space<vmem>>, vector<1x25x13xf32>
    %2 = vector.shape_cast %1 : vector<1x25x13xf32> to vector<25x13xf32>
    %3 = arith.truncf %2 : vector<25x13xf32> to vector<25x13xbf16>
    %c0_2 = arith.constant 0 : index
    %c0_3 = arith.constant 0 : index
    %c0_4 = arith.constant 0 : index
    %4 = vector.load %arg2[%c0_2, %c0_3, %c0_4] : memref<10x13x280xbf16, #tpu.memory_space<vmem>>, vector<1x13x280xbf16>
    %5 = vector.shape_cast %4 : vector<1x13x280xbf16> to vector<13x280xbf16>
    %cst_5 = arith.constant dense<0.000000e+00> : vector<25x280xf32>
    %6 = tpu.matmul %3, %5, %cst_5 {dimension_numbers = #tpu.dot_dimension_numbers<[1], [0], [0], [1], [0, 0, 1, 1], [], []>} : vector<25x13xbf16>, vector<13x280xbf16>, vector<25x280xf32> -> vector<25x280xf32>
    %7 = arith.addf %0, %6 : vector<25x280xf32>
    %c0_6 = arith.constant 0 : index
    %c1 = arith.constant 1 : index
    %c0_7 = arith.constant 0 : index
    %8 = vector.load %arg1[%c0_6, %c1, %c0_7] : memref<1x34x13xf32, #tpu.memory_space<vmem>>, vector<1x25x13xf32>
    %9 = vector.shape_cast %8 : vector<1x25x13xf32> to vector<25x13xf32>
    %10 = arith.truncf %9 : vector<25x13xf32> to vector<25x13xbf16>
    %c1_8 = arith.constant 1 : index
    %c0_9 = arith.constant 0 : index
    %c0_10 = arith.constant 0 : index
    %11 = vector.load %arg2[%c1_8, %c0_9, %c0_10] : memref<10x13x280xbf16, #tpu.memory_space<vmem>>, vector<1x13x280xbf16>
    %12 = vector.shape_cast %11 : vector<1x13x280xbf16> to vector<13x280xbf16>
    %cst_11 = arith.constant dense<0.000000e+00> : vector<25x280xf32>
    %13 = tpu.matmul %10, %12, %cst_11 {dimension_numbers = #tpu.dot_dimension_numbers<[1], [0], [0], [1], [0, 0, 1, 1], [], []>} : vector<25x13xbf16>, vector<13x280xbf16>, vector<25x280xf32> -> vector<25x280xf32>
    %14 = arith.addf %7, %13 : vector<25x280xf32>
    %c0_12 = arith.constant 0 : index
    %c2 = arith.constant 2 : index
    %c0_13 = arith.constant 0 : index
    %15 = vector.load %arg1[%c0_12, %c2, %c0_13] : memref<1x34x13xf32, #tpu.memory_space<vmem>>, vector<1x25x13xf32>
    %16 = vector.shape_cast %15 : vector<1x25x13xf32> to vector<25x13xf32>
    %17 = arith.truncf %16 : vector<25x13xf32> to vector<25x13xbf16>
    %c2_14 = arith.constant 2 : index
    %c0_15 = arith.constant 0 : index
    %c0_16 = arith.constant 0 : index
    %18 = vector.load %arg2[%c2_14, %c0_15, %c0_16] : memref<10x13x280xbf16, #tpu.memory_space<vmem>>, vector<1x13x280xbf16>
    %19 = vector.shape_cast %18 : vector<1x13x280xbf16> to vector<13x280xbf16>
    %cst_17 = arith.constant dense<0.000000e+00> : vector<25x280xf32>
    %20 = tpu.matmul %17, %19, %cst_17 {dimension_numbers = #tpu.dot_dimension_numbers<[1], [0], [0], [1], [0, 0, 1, 1], [], []>} : vector<25x13xbf16>, vector<13x280xbf16>, vector<25x280xf32> -> vector<25x280xf32>
    %21 = arith.addf %14, %20 : vector<25x280xf32>
    %c0_18 = arith.constant 0 : index
    %c3 = arith.constant 3 : index
    %c0_19 = arith.constant 0 : index
    %22 = vector.load %arg1[%c0_18, %c3, %c0_19] : memref<1x34x13xf32, #tpu.memory_space<vmem>>, vector<1x25x13xf32>
    %23 = vector.shape_cast %22 : vector<1x25x13xf32> to vector<25x13xf32>
    %24 = arith.truncf %23 : vector<25x13xf32> to vector<25x13xbf16>
    %c3_20 = arith.constant 3 : index
    %c0_21 = arith.constant 0 : index
    %c0_22 = arith.constant 0 : index
    %25 = vector.load %arg2[%c3_20, %c0_21, %c0_22] : memref<10x13x280xbf16, #tpu.memory_space<vmem>>, vector<1x13x280xbf16>
    %26 = vector.shape_cast %25 : vector<1x13x280xbf16> to vector<13x280xbf16>
    %cst_23 = arith.constant dense<0.000000e+00> : vector<25x280xf32>
    %27 = tpu.matmul %24, %26, %cst_23 {dimension_numbers = #tpu.dot_dimension_numbers<[1], [0], [0], [1], [0, 0, 1, 1], [], []>} : vector<25x13xbf16>, vector<13x280xbf16>, vector<25x280xf32> -> vector<25x280xf32>
    %28 = arith.addf %21, %27 : vector<25x280xf32>
    %c0_24 = arith.constant 0 : index
    %c4 = arith.constant 4 : index
    %c0_25 = arith.constant 0 : index
    %29 = vector.load %arg1[%c0_24, %c4, %c0_25] : memref<1x34x13xf32, #tpu.memory_space<vmem>>, vector<1x25x13xf32>
    %30 = vector.shape_cast %29 : vector<1x25x13xf32> to vector<25x13xf32>
    %31 = arith.truncf %30 : vector<25x13xf32> to vector<25x13xbf16>
    %c4_26 = arith.constant 4 : index
    %c0_27 = arith.constant 0 : index
    %c0_28 = arith.constant 0 : index
    %32 = vector.load %arg2[%c4_26, %c0_27, %c0_28] : memref<10x13x280xbf16, #tpu.memory_space<vmem>>, vector<1x13x280xbf16>
    %33 = vector.shape_cast %32 : vector<1x13x280xbf16> to vector<13x280xbf16>
    %cst_29 = arith.constant dense<0.000000e+00> : vector<25x280xf32>
    %34 = tpu.matmul %31, %33, %cst_29 {dimension_numbers = #tpu.dot_dimension_numbers<[1], [0], [0], [1], [0, 0, 1, 1], [], []>} : vector<25x13xbf16>, vector<13x280xbf16>, vector<25x280xf32> -> vector<25x280xf32>
    %35 = arith.addf %28, %34 : vector<25x280xf32>
    %c0_30 = arith.constant 0 : index
    %c5 = arith.constant 5 : index
    %c0_31 = arith.constant 0 : index
    %36 = vector.load %arg1[%c0_30, %c5, %c0_31] : memref<1x34x13xf32, #tpu.memory_space<vmem>>, vector<1x25x13xf32>
    %37 = vector.shape_cast %36 : vector<1x25x13xf32> to vector<25x13xf32>
    %38 = arith.truncf %37 : vector<25x13xf32> to vector<25x13xbf16>
    %c5_32 = arith.constant 5 : index
    %c0_33 = arith.constant 0 : index
    %c0_34 = arith.constant 0 : index
    %39 = vector.load %arg2[%c5_32, %c0_33, %c0_34] : memref<10x13x280xbf16, #tpu.memory_space<vmem>>, vector<1x13x280xbf16>
    %40 = vector.shape_cast %39 : vector<1x13x280xbf16> to vector<13x280xbf16>
    %cst_35 = arith.constant dense<0.000000e+00> : vector<25x280xf32>
    %41 = tpu.matmul %38, %40, %cst_35 {dimension_numbers = #tpu.dot_dimension_numbers<[1], [0], [0], [1], [0, 0, 1, 1], [], []>} : vector<25x13xbf16>, vector<13x280xbf16>, vector<25x280xf32> -> vector<25x280xf32>
    %42 = arith.addf %35, %41 : vector<25x280xf32>
    %c0_36 = arith.constant 0 : index
    %c6 = arith.constant 6 : index
    %c0_37 = arith.constant 0 : index
    %43 = vector.load %arg1[%c0_36, %c6, %c0_37] : memref<1x34x13xf32, #tpu.memory_space<vmem>>, vector<1x25x13xf32>
    %44 = vector.shape_cast %43 : vector<1x25x13xf32> to vector<25x13xf32>
    %45 = arith.truncf %44 : vector<25x13xf32> to vector<25x13xbf16>
    %c6_38 = arith.constant 6 : index
    %c0_39 = arith.constant 0 : index
    %c0_40 = arith.constant 0 : index
    %46 = vector.load %arg2[%c6_38, %c0_39, %c0_40] : memref<10x13x280xbf16, #tpu.memory_space<vmem>>, vector<1x13x280xbf16>
    %47 = vector.shape_cast %46 : vector<1x13x280xbf16> to vector<13x280xbf16>
    %cst_41 = arith.constant dense<0.000000e+00> : vector<25x280xf32>
    %48 = tpu.matmul %45, %47, %cst_41 {dimension_numbers = #tpu.dot_dimension_numbers<[1], [0], [0], [1], [0, 0, 1, 1], [], []>} : vector<25x13xbf16>, vector<13x280xbf16>, vector<25x280xf32> -> vector<25x280xf32>
    %49 = arith.addf %42, %48 : vector<25x280xf32>
    %c0_42 = arith.constant 0 : index
    %c7 = arith.constant 7 : index
    %c0_43 = arith.constant 0 : index
    %50 = vector.load %arg1[%c0_42, %c7, %c0_43] : memref<1x34x13xf32, #tpu.memory_space<vmem>>, vector<1x25x13xf32>
    %51 = vector.shape_cast %50 : vector<1x25x13xf32> to vector<25x13xf32>
    %52 = arith.truncf %51 : vector<25x13xf32> to vector<25x13xbf16>
    %c7_44 = arith.constant 7 : index
    %c0_45 = arith.constant 0 : index
    %c0_46 = arith.constant 0 : index
    %53 = vector.load %arg2[%c7_44, %c0_45, %c0_46] : memref<10x13x280xbf16, #tpu.memory_space<vmem>>, vector<1x13x280xbf16>
    %54 = vector.shape_cast %53 : vector<1x13x280xbf16> to vector<13x280xbf16>
    %cst_47 = arith.constant dense<0.000000e+00> : vector<25x280xf32>
    %55 = tpu.matmul %52, %54, %cst_47 {dimension_numbers = #tpu.dot_dimension_numbers<[1], [0], [0], [1], [0, 0, 1, 1], [], []>} : vector<25x13xbf16>, vector<13x280xbf16>, vector<25x280xf32> -> vector<25x280xf32>
    %56 = arith.addf %49, %55 : vector<25x280xf32>
    %c0_48 = arith.constant 0 : index
    %c8 = arith.constant 8 : index
    %c0_49 = arith.constant 0 : index
    %57 = vector.load %arg1[%c0_48, %c8, %c0_49] : memref<1x34x13xf32, #tpu.memory_space<vmem>>, vector<1x25x13xf32>
    %58 = vector.shape_cast %57 : vector<1x25x13xf32> to vector<25x13xf32>
    %59 = arith.truncf %58 : vector<25x13xf32> to vector<25x13xbf16>
    %c8_50 = arith.constant 8 : index
    %c0_51 = arith.constant 0 : index
    %c0_52 = arith.constant 0 : index
    %60 = vector.load %arg2[%c8_50, %c0_51, %c0_52] : memref<10x13x280xbf16, #tpu.memory_space<vmem>>, vector<1x13x280xbf16>
    %61 = vector.shape_cast %60 : vector<1x13x280xbf16> to vector<13x280xbf16>
    %cst_53 = arith.constant dense<0.000000e+00> : vector<25x280xf32>
    %62 = tpu.matmul %59, %61, %cst_53 {dimension_numbers = #tpu.dot_dimension_numbers<[1], [0], [0], [1], [0, 0, 1, 1], [], []>} : vector<25x13xbf16>, vector<13x280xbf16>, vector<25x280xf32> -> vector<25x280xf32>
    %63 = arith.addf %56, %62 : vector<25x280xf32>
    %c0_54 = arith.constant 0 : index
    %c9 = arith.constant 9 : index
    %c0_55 = arith.constant 0 : index
    %64 = vector.load %arg1[%c0_54, %c9, %c0_55] : memref<1x34x13xf32, #tpu.memory_space<vmem>>, vector<1x25x13xf32>
    %65 = vector.shape_cast %64 : vector<1x25x13xf32> to vector<25x13xf32>
    %66 = arith.truncf %65 : vector<25x13xf32> to vector<25x13xbf16>
    %c9_56 = arith.constant 9 : index
    %c0_57 = arith.constant 0 : index
    %c0_58 = arith.constant 0 : index
    %67 = vector.load %arg2[%c9_56, %c0_57, %c0_58] : memref<10x13x280xbf16, #tpu.memory_space<vmem>>, vector<1x13x280xbf16>
    %68 = vector.shape_cast %67 : vector<1x13x280xbf16> to vector<13x280xbf16>
    %cst_59 = arith.constant dense<0.000000e+00> : vector<25x280xf32>
    %69 = tpu.matmul %66, %68, %cst_59 {dimension_numbers = #tpu.dot_dimension_numbers<[1], [0], [0], [1], [0, 0, 1, 1], [], []>} : vector<25x13xbf16>, vector<13x280xbf16>, vector<25x280xf32> -> vector<25x280xf32>
    %70 = arith.addf %63, %69 : vector<25x280xf32>
    %c0_60 = arith.constant 0 : index
    %c0_61 = arith.constant 0 : index
    %71 = vector.load %arg3[%c0_60, %c0_61] : memref<1x280xf32, #tpu.memory_space<vmem>>, vector<1x280xf32>
    %72 = vector.broadcast %71 : vector<1x280xf32> to vector<25x280xf32>
    %73 = arith.addf %70, %72 : vector<25x280xf32>
    %cst_62 = arith.constant 0.000000e+00 : f32
    %74 = vector.broadcast %cst_62 : f32 to vector<25x280xf32>
    %75 = arith.maximumf %73, %74 : vector<25x280xf32>
    %c0_63 = arith.constant 0 : index
    %c0_64 = arith.constant 0 : index
    %76 = vector.load %arg11[%c0_63, %c0_64] : memref<25x280xf32, #tpu.memory_space<vmem>>, vector<25x280xf32>
    tpu.vector_store %arg11[%c0_63, %c0_64], %75 {strides = array<i32>} : memref<25x280xf32, #tpu.memory_space<vmem>>, vector<25x280xf32>,
    %cst_65 = arith.constant 0.000000e+00 : f32
    %77 = vector.broadcast %cst_65 : f32 to vector<16x120xf32>
    %c0_66 = arith.constant 0 : index
    %c0_67 = arith.constant 0 : index
    %78 = vector.load %arg11[%c0_66, %c0_67] : memref<25x280xf32, #tpu.memory_space<vmem>>, vector<16x280xf32>
    %79 = arith.truncf %78 : vector<16x280xf32> to vector<16x280xbf16>
    %c0_68 = arith.constant 0 : index
    %c0_69 = arith.constant 0 : index
    %c0_70 = arith.constant 0 : index
    %80 = vector.load %arg4[%c0_68, %c0_69, %c0_70] : memref<10x280x120xbf16, #tpu.memory_space<vmem>>, vector<1x280x120xbf16>
    %81 = vector.shape_cast %80 : vector<1x280x120xbf16> to vector<280x120xbf16>
    %cst_71 = arith.constant dense<0.000000e+00> : vector<16x120xf32>
    %82 = tpu.matmul %79, %81, %cst_71 {dimension_numbers = #tpu.dot_dimension_numbers<[1], [0], [0], [1], [0, 0, 1, 1], [], []>} : vector<16x280xbf16>, vector<280x120xbf16>, vector<16x120xf32> -> vector<16x120xf32>
    %83 = arith.addf %77, %82 : vector<16x120xf32>
    %c1_72 = arith.constant 1 : index
    %c0_73 = arith.constant 0 : index
    %84 = vector.load %arg11[%c1_72, %c0_73] : memref<25x280xf32, #tpu.memory_space<vmem>>, vector<16x280xf32>
    %85 = arith.truncf %84 : vector<16x280xf32> to vector<16x280xbf16>
    %c1_74 = arith.constant 1 : index
    %c0_75 = arith.constant 0 : index
    %c0_76 = arith.constant 0 : index
    %86 = vector.load %arg4[%c1_74, %c0_75, %c0_76] : memref<10x280x120xbf16, #tpu.memory_space<vmem>>, vector<1x280x120xbf16>
    %87 = vector.shape_cast %86 : vector<1x280x120xbf16> to vector<280x120xbf16>
    %cst_77 = arith.constant dense<0.000000e+00> : vector<16x120xf32>
    %88 = tpu.matmul %85, %87, %cst_77 {dimension_numbers = #tpu.dot_dimension_numbers<[1], [0], [0], [1], [0, 0, 1, 1], [], []>} : vector<16x280xbf16>, vector<280x120xbf16>, vector<16x120xf32> -> vector<16x120xf32>
    %89 = arith.addf %83, %88 : vector<16x120xf32>
    %c2_78 = arith.constant 2 : index
    %c0_79 = arith.constant 0 : index
    %90 = vector.load %arg11[%c2_78, %c0_79] : memref<25x280xf32, #tpu.memory_space<vmem>>, vector<16x280xf32>
    %91 = arith.truncf %90 : vector<16x280xf32> to vector<16x280xbf16>
    %c2_80 = arith.constant 2 : index
    %c0_81 = arith.constant 0 : index
    %c0_82 = arith.constant 0 : index
    %92 = vector.load %arg4[%c2_80, %c0_81, %c0_82] : memref<10x280x120xbf16, #tpu.memory_space<vmem>>, vector<1x280x120xbf16>
    %93 = vector.shape_cast %92 : vector<1x280x120xbf16> to vector<280x120xbf16>
    %cst_83 = arith.constant dense<0.000000e+00> : vector<16x120xf32>
    %94 = tpu.matmul %91, %93, %cst_83 {dimension_numbers = #tpu.dot_dimension_numbers<[1], [0], [0], [1], [0, 0, 1, 1], [], []>} : vector<16x280xbf16>, vector<280x120xbf16>, vector<16x120xf32> -> vector<16x120xf32>
    %95 = arith.addf %89, %94 : vector<16x120xf32>
    %c3_84 = arith.constant 3 : index
    %c0_85 = arith.constant 0 : index
    %96 = vector.load %arg11[%c3_84, %c0_85] : memref<25x280xf32, #tpu.memory_space<vmem>>, vector<16x280xf32>
    %97 = arith.truncf %96 : vector<16x280xf32> to vector<16x280xbf16>
    %c3_86 = arith.constant 3 : index
    %c0_87 = arith.constant 0 : index
    %c0_88 = arith.constant 0 : index
    %98 = vector.load %arg4[%c3_86, %c0_87, %c0_88] : memref<10x280x120xbf16, #tpu.memory_space<vmem>>, vector<1x280x120xbf16>
    %99 = vector.shape_cast %98 : vector<1x280x120xbf16> to vector<280x120xbf16>
    %cst_89 = arith.constant dense<0.000000e+00> : vector<16x120xf32>
    %100 = tpu.matmul %97, %99, %cst_89 {dimension_numbers = #tpu.dot_dimension_numbers<[1], [0], [0], [1], [0, 0, 1, 1], [], []>} : vector<16x280xbf16>, vector<280x120xbf16>, vector<16x120xf32> -> vector<16x120xf32>
    %101 = arith.addf %95, %100 : vector<16x120xf32>
    %c4_90 = arith.constant 4 : index
    %c0_91 = arith.constant 0 : index
    %102 = vector.load %arg11[%c4_90, %c0_91] : memref<25x280xf32, #tpu.memory_space<vmem>>, vector<16x280xf32>
    %103 = arith.truncf %102 : vector<16x280xf32> to vector<16x280xbf16>
    %c4_92 = arith.constant 4 : index
    %c0_93 = arith.constant 0 : index
    %c0_94 = arith.constant 0 : index
    %104 = vector.load %arg4[%c4_92, %c0_93, %c0_94] : memref<10x280x120xbf16, #tpu.memory_space<vmem>>, vector<1x280x120xbf16>
    %105 = vector.shape_cast %104 : vector<1x280x120xbf16> to vector<280x120xbf16>
    %cst_95 = arith.constant dense<0.000000e+00> : vector<16x120xf32>
    %106 = tpu.matmul %103, %105, %cst_95 {dimension_numbers = #tpu.dot_dimension_numbers<[1], [0], [0], [1], [0, 0, 1, 1], [], []>} : vector<16x280xbf16>, vector<280x120xbf16>, vector<16x120xf32> -> vector<16x120xf32>
    %107 = arith.addf %101, %106 : vector<16x120xf32>
    %c5_96 = arith.constant 5 : index
    %c0_97 = arith.constant 0 : index
    %108 = vector.load %arg11[%c5_96, %c0_97] : memref<25x280xf32, #tpu.memory_space<vmem>>, vector<16x280xf32>
    %109 = arith.truncf %108 : vector<16x280xf32> to vector<16x280xbf16>
    %c5_98 = arith.constant 5 : index
    %c0_99 = arith.constant 0 : index
    %c0_100 = arith.constant 0 : index
    %110 = vector.load %arg4[%c5_98, %c0_99, %c0_100] : memref<10x280x120xbf16, #tpu.memory_space<vmem>>, vector<1x280x120xbf16>
    %111 = vector.shape_cast %110 : vector<1x280x120xbf16> to vector<280x120xbf16>
    %cst_101 = arith.constant dense<0.000000e+00> : vector<16x120xf32>
    %112 = tpu.matmul %109, %111, %cst_101 {dimension_numbers = #tpu.dot_dimension_numbers<[1], [0], [0], [1], [0, 0, 1, 1], [], []>} : vector<16x280xbf16>, vector<280x120xbf16>, vector<16x120xf32> -> vector<16x120xf32>
    %113 = arith.addf %107, %112 : vector<16x120xf32>
    %c6_102 = arith.constant 6 : index
    %c0_103 = arith.constant 0 : index
    %114 = vector.load %arg11[%c6_102, %c0_103] : memref<25x280xf32, #tpu.memory_space<vmem>>, vector<16x280xf32>
    %115 = arith.truncf %114 : vector<16x280xf32> to vector<16x280xbf16>
    %c6_104 = arith.constant 6 : index
    %c0_105 = arith.constant 0 : index
    %c0_106 = arith.constant 0 : index
    %116 = vector.load %arg4[%c6_104, %c0_105, %c0_106] : memref<10x280x120xbf16, #tpu.memory_space<vmem>>, vector<1x280x120xbf16>
    %117 = vector.shape_cast %116 : vector<1x280x120xbf16> to vector<280x120xbf16>
    %cst_107 = arith.constant dense<0.000000e+00> : vector<16x120xf32>
    %118 = tpu.matmul %115, %117, %cst_107 {dimension_numbers = #tpu.dot_dimension_numbers<[1], [0], [0], [1], [0, 0, 1, 1], [], []>} : vector<16x280xbf16>, vector<280x120xbf16>, vector<16x120xf32> -> vector<16x120xf32>
    %119 = arith.addf %113, %118 : vector<16x120xf32>
    %c7_108 = arith.constant 7 : index
    %c0_109 = arith.constant 0 : index
    %120 = vector.load %arg11[%c7_108, %c0_109] : memref<25x280xf32, #tpu.memory_space<vmem>>, vector<16x280xf32>
    %121 = arith.truncf %120 : vector<16x280xf32> to vector<16x280xbf16>
    %c7_110 = arith.constant 7 : index
    %c0_111 = arith.constant 0 : index
    %c0_112 = arith.constant 0 : index
    %122 = vector.load %arg4[%c7_110, %c0_111, %c0_112] : memref<10x280x120xbf16, #tpu.memory_space<vmem>>, vector<1x280x120xbf16>
    %123 = vector.shape_cast %122 : vector<1x280x120xbf16> to vector<280x120xbf16>
    %cst_113 = arith.constant dense<0.000000e+00> : vector<16x120xf32>
    %124 = tpu.matmul %121, %123, %cst_113 {dimension_numbers = #tpu.dot_dimension_numbers<[1], [0], [0], [1], [0, 0, 1, 1], [], []>} : vector<16x280xbf16>, vector<280x120xbf16>, vector<16x120xf32> -> vector<16x120xf32>
    %125 = arith.addf %119, %124 : vector<16x120xf32>
    %c8_114 = arith.constant 8 : index
    %c0_115 = arith.constant 0 : index
    %126 = vector.load %arg11[%c8_114, %c0_115] : memref<25x280xf32, #tpu.memory_space<vmem>>, vector<16x280xf32>
    %127 = arith.truncf %126 : vector<16x280xf32> to vector<16x280xbf16>
    %c8_116 = arith.constant 8 : index
    %c0_117 = arith.constant 0 : index
    %c0_118 = arith.constant 0 : index
    %128 = vector.load %arg4[%c8_116, %c0_117, %c0_118] : memref<10x280x120xbf16, #tpu.memory_space<vmem>>, vector<1x280x120xbf16>
    %129 = vector.shape_cast %128 : vector<1x280x120xbf16> to vector<280x120xbf16>
    %cst_119 = arith.constant dense<0.000000e+00> : vector<16x120xf32>
    %130 = tpu.matmul %127, %129, %cst_119 {dimension_numbers = #tpu.dot_dimension_numbers<[1], [0], [0], [1], [0, 0, 1, 1], [], []>} : vector<16x280xbf16>, vector<280x120xbf16>, vector<16x120xf32> -> vector<16x120xf32>
    %131 = arith.addf %125, %130 : vector<16x120xf32>
    %c9_120 = arith.constant 9 : index
    %c0_121 = arith.constant 0 : index
    %132 = vector.load %arg11[%c9_120, %c0_121] : memref<25x280xf32, #tpu.memory_space<vmem>>, vector<16x280xf32>
    %133 = arith.truncf %132 : vector<16x280xf32> to vector<16x280xbf16>
    %c9_122 = arith.constant 9 : index
    %c0_123 = arith.constant 0 : index
    %c0_124 = arith.constant 0 : index
    %134 = vector.load %arg4[%c9_122, %c0_123, %c0_124] : memref<10x280x120xbf16, #tpu.memory_space<vmem>>, vector<1x280x120xbf16>
    %135 = vector.shape_cast %134 : vector<1x280x120xbf16> to vector<280x120xbf16>
    %cst_125 = arith.constant dense<0.000000e+00> : vector<16x120xf32>
    %136 = tpu.matmul %133, %135, %cst_125 {dimension_numbers = #tpu.dot_dimension_numbers<[1], [0], [0], [1], [0, 0, 1, 1], [], []>} : vector<16x280xbf16>, vector<280x120xbf16>, vector<16x120xf32> -> vector<16x120xf32>
    %137 = arith.addf %131, %136 : vector<16x120xf32>
    %c0_126 = arith.constant 0 : index
    %c0_127 = arith.constant 0 : index
    %138 = vector.load %arg5[%c0_126, %c0_127] : memref<1x120xf32, #tpu.memory_space<vmem>>, vector<1x120xf32>
    %139 = vector.broadcast %138 : vector<1x120xf32> to vector<16x120xf32>
    %140 = arith.addf %137, %139 : vector<16x120xf32>
    %cst_128 = arith.constant 0.000000e+00 : f32
    %141 = vector.broadcast %cst_128 : f32 to vector<16x120xf32>
    %142 = arith.maximumf %140, %141 : vector<16x120xf32>
    %c0_129 = arith.constant 0 : index
    %c0_130 = arith.constant 0 : index
    %143 = vector.load %arg12[%c0_129, %c0_130] : memref<16x120xf32, #tpu.memory_space<vmem>>, vector<16x120xf32>
    tpu.vector_store %arg12[%c0_129, %c0_130], %142 {strides = array<i32>} : memref<16x120xf32, #tpu.memory_space<vmem>>, vector<16x120xf32>,
    %c0_131 = arith.constant 0 : index
    %c0_132 = arith.constant 0 : index
    %144 = vector.load %arg7[%c0_131, %c0_132] : memref<1x16xf32, #tpu.memory_space<vmem>>, vector<1x16xf32>
    %c0_133 = arith.constant 0 : index
    %c0_134 = arith.constant 0 : index
    %145 = vector.load %arg12[%c0_133, %c0_134] : memref<16x120xf32, #tpu.memory_space<vmem>>, vector<1x120xf32>
    %c0_135 = arith.constant 0 : index
    %c0_136 = arith.constant 0 : index
    %c0_137 = arith.constant 0 : index
    %146 = vector.load %arg6[%c0_135, %c0_136, %c0_137] : memref<16x120x16xf32, #tpu.memory_space<vmem>>, vector<1x120x16xf32>
    %147 = vector.shape_cast %146 : vector<1x120x16xf32> to vector<120x16xf32>
    %cst_138 = arith.constant dense<0.000000e+00> : vector<1x16xf32>
    %148 = tpu.matmul %145, %147, %cst_138 {dimension_numbers = #tpu.dot_dimension_numbers<[1], [0], [0], [1], [0, 0, 1, 1], [], []>} : vector<1x120xf32>, vector<120x16xf32>, vector<1x16xf32> -> vector<1x16xf32>
    %149 = arith.addf %144, %148 : vector<1x16xf32>
    %c1_139 = arith.constant 1 : index
    %c0_140 = arith.constant 0 : index
    %150 = vector.load %arg12[%c1_139, %c0_140] : memref<16x120xf32, #tpu.memory_space<vmem>>, vector<1x120xf32>
    %c1_141 = arith.constant 1 : index
    %c0_142 = arith.constant 0 : index
    %c0_143 = arith.constant 0 : index
    %151 = vector.load %arg6[%c1_141, %c0_142, %c0_143] : memref<16x120x16xf32, #tpu.memory_space<vmem>>, vector<1x120x16xf32>
    %152 = vector.shape_cast %151 : vector<1x120x16xf32> to vector<120x16xf32>
    %cst_144 = arith.constant dense<0.000000e+00> : vector<1x16xf32>
    %153 = tpu.matmul %150, %152, %cst_144 {dimension_numbers = #tpu.dot_dimension_numbers<[1], [0], [0], [1], [0, 0, 1, 1], [], []>} : vector<1x120xf32>, vector<120x16xf32>, vector<1x16xf32> -> vector<1x16xf32>
    %154 = arith.addf %149, %153 : vector<1x16xf32>
    %c2_145 = arith.constant 2 : index
    %c0_146 = arith.constant 0 : index
    %155 = vector.load %arg12[%c2_145, %c0_146] : memref<16x120xf32, #tpu.memory_space<vmem>>, vector<1x120xf32>
    %c2_147 = arith.constant 2 : index
    %c0_148 = arith.constant 0 : index
    %c0_149 = arith.constant 0 : index
    %156 = vector.load %arg6[%c2_147, %c0_148, %c0_149] : memref<16x120x16xf32, #tpu.memory_space<vmem>>, vector<1x120x16xf32>
    %157 = vector.shape_cast %156 : vector<1x120x16xf32> to vector<120x16xf32>
    %cst_150 = arith.constant dense<0.000000e+00> : vector<1x16xf32>
    %158 = tpu.matmul %155, %157, %cst_150 {dimension_numbers = #tpu.dot_dimension_numbers<[1], [0], [0], [1], [0, 0, 1, 1], [], []>} : vector<1x120xf32>, vector<120x16xf32>, vector<1x16xf32> -> vector<1x16xf32>
    %159 = arith.addf %154, %158 : vector<1x16xf32>
    %c3_151 = arith.constant 3 : index
    %c0_152 = arith.constant 0 : index
    %160 = vector.load %arg12[%c3_151, %c0_152] : memref<16x120xf32, #tpu.memory_space<vmem>>, vector<1x120xf32>
    %c3_153 = arith.constant 3 : index
    %c0_154 = arith.constant 0 : index
    %c0_155 = arith.constant 0 : index
    %161 = vector.load %arg6[%c3_153, %c0_154, %c0_155] : memref<16x120x16xf32, #tpu.memory_space<vmem>>, vector<1x120x16xf32>
    %162 = vector.shape_cast %161 : vector<1x120x16xf32> to vector<120x16xf32>
    %cst_156 = arith.constant dense<0.000000e+00> : vector<1x16xf32>
    %163 = tpu.matmul %160, %162, %cst_156 {dimension_numbers = #tpu.dot_dimension_numbers<[1], [0], [0], [1], [0, 0, 1, 1], [], []>} : vector<1x120xf32>, vector<120x16xf32>, vector<1x16xf32> -> vector<1x16xf32>
    %164 = arith.addf %159, %163 : vector<1x16xf32>
    %c4_157 = arith.constant 4 : index
    %c0_158 = arith.constant 0 : index
    %165 = vector.load %arg12[%c4_157, %c0_158] : memref<16x120xf32, #tpu.memory_space<vmem>>, vector<1x120xf32>
    %c4_159 = arith.constant 4 : index
    %c0_160 = arith.constant 0 : index
    %c0_161 = arith.constant 0 : index
    %166 = vector.load %arg6[%c4_159, %c0_160, %c0_161] : memref<16x120x16xf32, #tpu.memory_space<vmem>>, vector<1x120x16xf32>
    %167 = vector.shape_cast %166 : vector<1x120x16xf32> to vector<120x16xf32>
    %cst_162 = arith.constant dense<0.000000e+00> : vector<1x16xf32>
    %168 = tpu.matmul %165, %167, %cst_162 {dimension_numbers = #tpu.dot_dimension_numbers<[1], [0], [0], [1], [0, 0, 1, 1], [], []>} : vector<1x120xf32>, vector<120x16xf32>, vector<1x16xf32> -> vector<1x16xf32>
    %169 = arith.addf %164, %168 : vector<1x16xf32>
    %c5_163 = arith.constant 5 : index
    %c0_164 = arith.constant 0 : index
    %170 = vector.load %arg12[%c5_163, %c0_164] : memref<16x120xf32, #tpu.memory_space<vmem>>, vector<1x120xf32>
    %c5_165 = arith.constant 5 : index
    %c0_166 = arith.constant 0 : index
    %c0_167 = arith.constant 0 : index
    %171 = vector.load %arg6[%c5_165, %c0_166, %c0_167] : memref<16x120x16xf32, #tpu.memory_space<vmem>>, vector<1x120x16xf32>
    %172 = vector.shape_cast %171 : vector<1x120x16xf32> to vector<120x16xf32>
    %cst_168 = arith.constant dense<0.000000e+00> : vector<1x16xf32>
    %173 = tpu.matmul %170, %172, %cst_168 {dimension_numbers = #tpu.dot_dimension_numbers<[1], [0], [0], [1], [0, 0, 1, 1], [], []>} : vector<1x120xf32>, vector<120x16xf32>, vector<1x16xf32> -> vector<1x16xf32>
    %174 = arith.addf %169, %173 : vector<1x16xf32>
    %c6_169 = arith.constant 6 : index
    %c0_170 = arith.constant 0 : index
    %175 = vector.load %arg12[%c6_169, %c0_170] : memref<16x120xf32, #tpu.memory_space<vmem>>, vector<1x120xf32>
    %c6_171 = arith.constant 6 : index
    %c0_172 = arith.constant 0 : index
    %c0_173 = arith.constant 0 : index
    %176 = vector.load %arg6[%c6_171, %c0_172, %c0_173] : memref<16x120x16xf32, #tpu.memory_space<vmem>>, vector<1x120x16xf32>
    %177 = vector.shape_cast %176 : vector<1x120x16xf32> to vector<120x16xf32>
    %cst_174 = arith.constant dense<0.000000e+00> : vector<1x16xf32>
    %178 = tpu.matmul %175, %177, %cst_174 {dimension_numbers = #tpu.dot_dimension_numbers<[1], [0], [0], [1], [0, 0, 1, 1], [], []>} : vector<1x120xf32>, vector<120x16xf32>, vector<1x16xf32> -> vector<1x16xf32>
    %179 = arith.addf %174, %178 : vector<1x16xf32>
    %c7_175 = arith.constant 7 : index
    %c0_176 = arith.constant 0 : index
    %180 = vector.load %arg12[%c7_175, %c0_176] : memref<16x120xf32, #tpu.memory_space<vmem>>, vector<1x120xf32>
    %c7_177 = arith.constant 7 : index
    %c0_178 = arith.constant 0 : index
    %c0_179 = arith.constant 0 : index
    %181 = vector.load %arg6[%c7_177, %c0_178, %c0_179] : memref<16x120x16xf32, #tpu.memory_space<vmem>>, vector<1x120x16xf32>
    %182 = vector.shape_cast %181 : vector<1x120x16xf32> to vector<120x16xf32>
    %cst_180 = arith.constant dense<0.000000e+00> : vector<1x16xf32>
    %183 = tpu.matmul %180, %182, %cst_180 {dimension_numbers = #tpu.dot_dimension_numbers<[1], [0], [0], [1], [0, 0, 1, 1], [], []>} : vector<1x120xf32>, vector<120x16xf32>, vector<1x16xf32> -> vector<1x16xf32>
    %184 = arith.addf %179, %183 : vector<1x16xf32>
    %c8_181 = arith.constant 8 : index
    %c0_182 = arith.constant 0 : index
    %185 = vector.load %arg12[%c8_181, %c0_182] : memref<16x120xf32, #tpu.memory_space<vmem>>, vector<1x120xf32>
    %c8_183 = arith.constant 8 : index
    %c0_184 = arith.constant 0 : index
    %c0_185 = arith.constant 0 : index
    %186 = vector.load %arg6[%c8_183, %c0_184, %c0_185] : memref<16x120x16xf32, #tpu.memory_space<vmem>>, vector<1x120x16xf32>
    %187 = vector.shape_cast %186 : vector<1x120x16xf32> to vector<120x16xf32>
    %cst_186 = arith.constant dense<0.000000e+00> : vector<1x16xf32>
    %188 = tpu.matmul %185, %187, %cst_186 {dimension_numbers = #tpu.dot_dimension_numbers<[1], [0], [0], [1], [0, 0, 1, 1], [], []>} : vector<1x120xf32>, vector<120x16xf32>, vector<1x16xf32> -> vector<1x16xf32>
    %189 = arith.addf %184, %188 : vector<1x16xf32>
    %c9_187 = arith.constant 9 : index
    %c0_188 = arith.constant 0 : index
    %190 = vector.load %arg12[%c9_187, %c0_188] : memref<16x120xf32, #tpu.memory_space<vmem>>, vector<1x120xf32>
    %c9_189 = arith.constant 9 : index
    %c0_190 = arith.constant 0 : index
    %c0_191 = arith.constant 0 : index
    %191 = vector.load %arg6[%c9_189, %c0_190, %c0_191] : memref<16x120x16xf32, #tpu.memory_space<vmem>>, vector<1x120x16xf32>
    %192 = vector.shape_cast %191 : vector<1x120x16xf32> to vector<120x16xf32>
    %cst_192 = arith.constant dense<0.000000e+00> : vector<1x16xf32>
    %193 = tpu.matmul %190, %192, %cst_192 {dimension_numbers = #tpu.dot_dimension_numbers<[1], [0], [0], [1], [0, 0, 1, 1], [], []>} : vector<1x120xf32>, vector<120x16xf32>, vector<1x16xf32> -> vector<1x16xf32>
    %194 = arith.addf %189, %193 : vector<1x16xf32>
    %c10 = arith.constant 10 : index
    %c0_193 = arith.constant 0 : index
    %195 = vector.load %arg12[%c10, %c0_193] : memref<16x120xf32, #tpu.memory_space<vmem>>, vector<1x120xf32>
    %c10_194 = arith.constant 10 : index
    %c0_195 = arith.constant 0 : index
    %c0_196 = arith.constant 0 : index
    %196 = vector.load %arg6[%c10_194, %c0_195, %c0_196] : memref<16x120x16xf32, #tpu.memory_space<vmem>>, vector<1x120x16xf32>
    %197 = vector.shape_cast %196 : vector<1x120x16xf32> to vector<120x16xf32>
    %cst_197 = arith.constant dense<0.000000e+00> : vector<1x16xf32>
    %198 = tpu.matmul %195, %197, %cst_197 {dimension_numbers = #tpu.dot_dimension_numbers<[1], [0], [0], [1], [0, 0, 1, 1], [], []>} : vector<1x120xf32>, vector<120x16xf32>, vector<1x16xf32> -> vector<1x16xf32>
    %199 = arith.addf %194, %198 : vector<1x16xf32>
    %c11 = arith.constant 11 : index
    %c0_198 = arith.constant 0 : index
    %200 = vector.load %arg12[%c11, %c0_198] : memref<16x120xf32, #tpu.memory_space<vmem>>, vector<1x120xf32>
    %c11_199 = arith.constant 11 : index
    %c0_200 = arith.constant 0 : index
    %c0_201 = arith.constant 0 : index
    %201 = vector.load %arg6[%c11_199, %c0_200, %c0_201] : memref<16x120x16xf32, #tpu.memory_space<vmem>>, vector<1x120x16xf32>
    %202 = vector.shape_cast %201 : vector<1x120x16xf32> to vector<120x16xf32>
    %cst_202 = arith.constant dense<0.000000e+00> : vector<1x16xf32>
    %203 = tpu.matmul %200, %202, %cst_202 {dimension_numbers = #tpu.dot_dimension_numbers<[1], [0], [0], [1], [0, 0, 1, 1], [], []>} : vector<1x120xf32>, vector<120x16xf32>, vector<1x16xf32> -> vector<1x16xf32>
    %204 = arith.addf %199, %203 : vector<1x16xf32>
    %c12 = arith.constant 12 : index
    %c0_203 = arith.constant 0 : index
    %205 = vector.load %arg12[%c12, %c0_203] : memref<16x120xf32, #tpu.memory_space<vmem>>, vector<1x120xf32>
    %c12_204 = arith.constant 12 : index
    %c0_205 = arith.constant 0 : index
    %c0_206 = arith.constant 0 : index
    %206 = vector.load %arg6[%c12_204, %c0_205, %c0_206] : memref<16x120x16xf32, #tpu.memory_space<vmem>>, vector<1x120x16xf32>
    %207 = vector.shape_cast %206 : vector<1x120x16xf32> to vector<120x16xf32>
    %cst_207 = arith.constant dense<0.000000e+00> : vector<1x16xf32>
    %208 = tpu.matmul %205, %207, %cst_207 {dimension_numbers = #tpu.dot_dimension_numbers<[1], [0], [0], [1], [0, 0, 1, 1], [], []>} : vector<1x120xf32>, vector<120x16xf32>, vector<1x16xf32> -> vector<1x16xf32>
    %209 = arith.addf %204, %208 : vector<1x16xf32>
    %c13 = arith.constant 13 : index
    %c0_208 = arith.constant 0 : index
    %210 = vector.load %arg12[%c13, %c0_208] : memref<16x120xf32, #tpu.memory_space<vmem>>, vector<1x120xf32>
    %c13_209 = arith.constant 13 : index
    %c0_210 = arith.constant 0 : index
    %c0_211 = arith.constant 0 : index
    %211 = vector.load %arg6[%c13_209, %c0_210, %c0_211] : memref<16x120x16xf32, #tpu.memory_space<vmem>>, vector<1x120x16xf32>
    %212 = vector.shape_cast %211 : vector<1x120x16xf32> to vector<120x16xf32>
    %cst_212 = arith.constant dense<0.000000e+00> : vector<1x16xf32>
    %213 = tpu.matmul %210, %212, %cst_212 {dimension_numbers = #tpu.dot_dimension_numbers<[1], [0], [0], [1], [0, 0, 1, 1], [], []>} : vector<1x120xf32>, vector<120x16xf32>, vector<1x16xf32> -> vector<1x16xf32>
    %214 = arith.addf %209, %213 : vector<1x16xf32>
    %c14 = arith.constant 14 : index
    %c0_213 = arith.constant 0 : index
    %215 = vector.load %arg12[%c14, %c0_213] : memref<16x120xf32, #tpu.memory_space<vmem>>, vector<1x120xf32>
    %c14_214 = arith.constant 14 : index
    %c0_215 = arith.constant 0 : index
    %c0_216 = arith.constant 0 : index
    %216 = vector.load %arg6[%c14_214, %c0_215, %c0_216] : memref<16x120x16xf32, #tpu.memory_space<vmem>>, vector<1x120x16xf32>
    %217 = vector.shape_cast %216 : vector<1x120x16xf32> to vector<120x16xf32>
    %cst_217 = arith.constant dense<0.000000e+00> : vector<1x16xf32>
    %218 = tpu.matmul %215, %217, %cst_217 {dimension_numbers = #tpu.dot_dimension_numbers<[1], [0], [0], [1], [0, 0, 1, 1], [], []>} : vector<1x120xf32>, vector<120x16xf32>, vector<1x16xf32> -> vector<1x16xf32>
    %219 = arith.addf %214, %218 : vector<1x16xf32>
    %c15 = arith.constant 15 : index
    %c0_218 = arith.constant 0 : index
    %220 = vector.load %arg12[%c15, %c0_218] : memref<16x120xf32, #tpu.memory_space<vmem>>, vector<1x120xf32>
    %c15_219 = arith.constant 15 : index
    %c0_220 = arith.constant 0 : index
    %c0_221 = arith.constant 0 : index
    %221 = vector.load %arg6[%c15_219, %c0_220, %c0_221] : memref<16x120x16xf32, #tpu.memory_space<vmem>>, vector<1x120x16xf32>
    %222 = vector.shape_cast %221 : vector<1x120x16xf32> to vector<120x16xf32>
    %cst_222 = arith.constant dense<0.000000e+00> : vector<1x16xf32>
    %223 = tpu.matmul %220, %222, %cst_222 {dimension_numbers = #tpu.dot_dimension_numbers<[1], [0], [0], [1], [0, 0, 1, 1], [], []>} : vector<1x120xf32>, vector<120x16xf32>, vector<1x16xf32> -> vector<1x16xf32>
    %224 = arith.addf %219, %223 : vector<1x16xf32>
    %cst_223 = arith.constant 0.000000e+00 : f32
    %225 = vector.broadcast %cst_223 : f32 to vector<1x16xf32>
    %226 = arith.maximumf %224, %225 : vector<1x16xf32>
    %c0_224 = arith.constant 0 : index
    %c0_225 = arith.constant 0 : index
    %227 = vector.load %arg8[%c0_224, %c0_225] : memref<16x128xf32, #tpu.memory_space<vmem>>, vector<16x128xf32>
    %cst_226 = arith.constant dense<0.000000e+00> : vector<1x128xf32>
    %228 = tpu.matmul %226, %227, %cst_226 {dimension_numbers = #tpu.dot_dimension_numbers<[1], [0], [0], [1], [0, 0, 1, 1], [], []>} : vector<1x16xf32>, vector<16x128xf32>, vector<1x128xf32> -> vector<1x128xf32>
    %c0_227 = arith.constant 0 : index
    %c0_228 = arith.constant 0 : index
    %229 = vector.load %arg9[%c0_227, %c0_228] : memref<1x128xf32, #tpu.memory_space<vmem>>, vector<1x128xf32>
    %230 = arith.addf %228, %229 : vector<1x128xf32>
    %cst_229 = arith.constant dense<0xFF800000> : vector<1xf32>
    %231 = vector.multi_reduction <maximumf>, %230, %cst_229 [1] : vector<1x128xf32> to vector<1xf32>
    %232 = vector.shape_cast %231 : vector<1xf32> to vector<1x1xf32>
    %233 = vector.broadcast %232 : vector<1x1xf32> to vector<1x128xf32>
    %234 = arith.subf %230, %233 : vector<1x128xf32>
    %235 = math.exp %234 : vector<1x128xf32>
    %cst_230 = arith.constant dense<0.000000e+00> : vector<1xf32>
    %236 = vector.multi_reduction <add>, %235, %cst_230 [1] : vector<1x128xf32> to vector<1xf32>
    %237 = vector.shape_cast %236 : vector<1xf32> to vector<1x1xf32>
    %238 = math.log %237 : vector<1x1xf32>
    %239 = vector.broadcast %238 : vector<1x1xf32> to vector<1x128xf32>
    %240 = arith.subf %234, %239 : vector<1x128xf32>
    %c0_231 = arith.constant 0 : index
    %c0_232 = arith.constant 0 : index
    %c0_233 = arith.constant 0 : index
    %241 = vector.load %arg10[%c0_231, %c0_232, %c0_233] : memref<1x1x128xf32, #tpu.memory_space<vmem>>, vector<1x1x128xf32>
    %242 = vector.shape_cast %241 : vector<1x1x128xf32> to vector<1x128xf32>
    %243 = vector.shape_cast %240 : vector<1x128xf32> to vector<1x1x128xf32>
    tpu.vector_store %arg10[%c0_231, %c0_232, %c0_233], %243 {strides = array<i32>} : memref<1x1x128xf32, #tpu.memory_space<vmem>>, vector<1x1x128xf32>,
    return
  }
  func.func @transform_0(%arg0: i32) -> (i32, i32, i32) {
    %c0_i32 = arith.constant 0 : i32
    %c0_i32_0 = arith.constant 0 : i32
    %c0_i32_1 = arith.constant 0 : i32
    return %arg0, %c0_i32, %c0_i32_0 : i32, i32, i32
  }
  func.func @transform_1(%arg0: i32) -> (i32, i32, i32) {
    %c0_i32 = arith.constant 0 : i32
    %c0_i32_0 = arith.constant 0 : i32
    %c0_i32_1 = arith.constant 0 : i32
    %c0_i32_2 = arith.constant 0 : i32
    return %c0_i32, %c0_i32_0, %c0_i32_1 : i32, i32, i32
  }
  func.func @transform_2(%arg0: i32) -> (i32, i32) {
    %c0_i32 = arith.constant 0 : i32
    %c0_i32_0 = arith.constant 0 : i32
    %c0_i32_1 = arith.constant 0 : i32
    return %c0_i32, %c0_i32_0 : i32, i32
  }
  func.func @transform_3(%arg0: i32) -> (i32, i32, i32) {
    %c0_i32 = arith.constant 0 : i32
    %c0_i32_0 = arith.constant 0 : i32
    %c0_i32_1 = arith.constant 0 : i32
    %c0_i32_2 = arith.constant 0 : i32
    return %c0_i32, %c0_i32_0, %c0_i32_1 : i32, i32, i32
  }
  func.func @transform_4(%arg0: i32) -> (i32, i32) {
    %c0_i32 = arith.constant 0 : i32
    %c0_i32_0 = arith.constant 0 : i32
    %c0_i32_1 = arith.constant 0 : i32
    return %c0_i32, %c0_i32_0 : i32, i32
  }
  func.func @transform_5(%arg0: i32) -> (i32, i32, i32) {
    %c0_i32 = arith.constant 0 : i32
    %c0_i32_0 = arith.constant 0 : i32
    %c0_i32_1 = arith.constant 0 : i32
    %c0_i32_2 = arith.constant 0 : i32
    return %c0_i32, %c0_i32_0, %c0_i32_1 : i32, i32, i32
  }
  func.func @transform_6(%arg0: i32) -> (i32, i32) {
    %c0_i32 = arith.constant 0 : i32
    %c0_i32_0 = arith.constant 0 : i32
    %c0_i32_1 = arith.constant 0 : i32
    return %c0_i32, %c0_i32_0 : i32, i32
  }
  func.func @transform_7(%arg0: i32) -> (i32, i32) {
    %c0_i32 = arith.constant 0 : i32
    %c0_i32_0 = arith.constant 0 : i32
    %c0_i32_1 = arith.constant 0 : i32
    return %c0_i32, %c0_i32_0 : i32, i32
  }
  func.func @transform_8(%arg0: i32) -> (i32, i32) {
    %c0_i32 = arith.constant 0 : i32
    %c0_i32_0 = arith.constant 0 : i32
    %c0_i32_1 = arith.constant 0 : i32
    return %c0_i32, %c0_i32_0 : i32, i32
  }
  func.func @transform_9(%arg0: i32) -> (i32, i32, i32) {
    %c0_i32 = arith.constant 0 : i32
    %c0_i32_0 = arith.constant 0 : i32
    %c0_i32_1 = arith.constant 0 : i32
    return %arg0, %c0_i32, %c0_i32_0 : i32, i32, i32
  }
}

</mosaic_0001>

<llo_original>
// kernel: cnn_kws_forward.1
$region0: #{cnn_kws_forward.1}
  #allocation0 [shape = 'u32[]', space=smem, size = 0x4, offset = 0x4, fixed_abs, tag = 'smem constant byte address 0x4 - core index']
  #allocation1 [shape = 'u32[144,128]{1,0:T(1,128)}', space=vmem, size = 0x12000, scoped, tag = 'internal scratch']
  #allocation2 [shape = 'f32[25,280]{1,0:T(8,128)}', space=vmem, size = 0xc000, scoped, tag = 'scratch operand']
  #allocation3 [shape = 'f32[16,120]{1,0:T(8,128)}', space=vmem, size = 0x2000, scoped, tag = 'scratch operand']
  %s0 = inlined_call_operand.vmem [shape: f32[2,34,13], index: 0, kind: input, shape index: {}]
  %s1 = inlined_call_operand.vmem [shape: bf16[10,13,280], index: 1, kind: input, shape index: {}]
  %s2 = inlined_call_operand.vmem [shape: f32[1,280], index: 2, kind: input, shape index: {}]
  %s3 = inlined_call_operand.vmem [shape: bf16[10,280,120], index: 3, kind: input, shape index: {}]
  %s4 = inlined_call_operand.vmem [shape: f32[1,120], index: 4, kind: input, shape index: {}]
  %s5 = inlined_call_operand.vmem [shape: f32[16,120,16], index: 5, kind: input, shape index: {}]
  %s6 = inlined_call_operand.vmem [shape: f32[1,16], index: 6, kind: input, shape index: {}]
  %s7 = inlined_call_operand.vmem [shape: f32[16,128], index: 7, kind: input, shape index: {}]
  %s8 = inlined_call_operand.vmem [shape: f32[1,128], index: 8, kind: input, shape index: {}]
  %s9 = inlined_call_operand.hbm [shape: f32[2,1,128], index: 9, kind: output, shape index: {}]
  %s10 = sld [smem:[#allocation0]]
  $region69: #{cnn_kws_forward.1} parent=0
    _
  %s12 = ssub.s32 1, %s10
  %s13 = scalar_select 0, %s12, %s10
  $region1: #{cnn_kws_forward.1} parent=0
    #allocation4 [shape = 'u8[1024]{0}', space=vmem, size = 0x400, scoped, tag = 'output window, operand 0']
    #allocation5 [shape = 's32[2]{0}', space=sflag, size = 0x8, scoped, tag = 'scoped memory for cnn_kws_forward.1']
    %14 = vsyncpa [#allocation5], 0
    %s15 = scalar_lea.sflag [#allocation5], 1
    %16 = vsyncpa %s15, 0
    loop: start=0, step=1, limit=4
    $region2: #{cnn_kws_forward.1} parent=1 // loop_pre_header
      _
    $region3: #{cnn_kws_forward.1} parent=1 // loop_header
      %s18 = sphi 0, %s22
      %p19 = scmp.ge.s32.totalorder %s18, 4
      %s28 = sphi 0, %s30
      %s31 = sphi 0, %s28
      %s32 = sphi 0, %s31
      %s48 = sphi 0, %s32
      %s52 = sphi 0, %s52
      %s54 = sphi 0, %s52
      %s55 = sphi 0, %s54
      %s69 = sphi 0, %s55
      %s73 = sphi 0, %s73
      %s75 = sphi 0, %s73
      %s76 = sphi 0, %s75
      %s90 = sphi 0, %s76
      %s94 = sphi 0, %s94
      %s96 = sphi 0, %s94
      %s97 = sphi 0, %s96
      %s111 = sphi 0, %s97
      %s115 = sphi 0, %s115
      %s117 = sphi 0, %s115
      %s118 = sphi 0, %s117
      %s132 = sphi 0, %s118
      %s136 = sphi 0, %s136
      %s138 = sphi 0, %s136
      %s139 = sphi 0, %s138
      %s153 = sphi 0, %s139
      %s157 = sphi 0, %s157
      %s159 = sphi 0, %s157
      %s160 = sphi 0, %s159
      %s174 = sphi 0, %s160
      %s178 = sphi 0, %s178
      %s180 = sphi 0, %s178
      %s181 = sphi 0, %s180
      %s195 = sphi 0, %s181
      %s199 = sphi 0, %s199
      %s201 = sphi 0, %s199
      %s202 = sphi 0, %s201
      %s216 = sphi 0, %s202
      %s222 = sphi 0, %s224
      %s225 = sphi 0, %s222
      %s226 = sphi 0, %s225
      %s242 = sphi 0, %s226
    $region4: #{cnn_kws_forward.1} parent=1 // loop_header_branch
      %21 = sbr.rel (%p19) target = $region8
    $region5: #{cnn_kws_forward.1} parent=1 // loop_body
      %s23 = ssub.s32 %s18, 1
      %s24 = ssub.s32 %s18, 2
      %s25 = sadd.s32 %s18, 1
      %s26 = ssub.s32 %s18, %s25
      %p27 = scmp.eq.s32.totalorder %s26, 0
      %s29 = sadd.s32 %s28, 1
      %s30 = scalar_select %p27, %s28, %s29
      %p33 = pneg %p27
      %p34 = scmp.eq.s32.totalorder %s18, 1
      %p35 = por %p33, %p34
      %p36 = scmp.ne.s32.totalorder %s28, %s31
      %p37 = scmp.eq.s32.totalorder %s18, 0
      %p38 = por %p36, %p37
      %p39 = scmp.ne.s32.totalorder %s28, %s31
      %p40 = scmp.eq.s32.totalorder %s23, 1
      %p41 = por %p39, %p40
      %p42 = scmp.ne.s32.totalorder %s31, %s32
      %p43 = scmp.eq.s32.totalorder %s23, 0
      %p44 = por %p42, %p43
      %p45 = scmp.ne.s32.totalorder %s31, %s32
      %p46 = scmp.eq.s32.totalorder %s24, 1
      %p47 = por %p45, %p46
      %p49 = scmp.ne.s32.totalorder %s32, %s48
      %p50 = scmp.eq.s32.totalorder %s24, 0
      %p51 = por %p49, %p50
      %s53 = sadd.s32 %s52, 1
      %p56 = scmp.eq.s32.totalorder %s18, 1
      %p57 = scmp.ne.s32.totalorder %s52, %s54
      %p58 = scmp.eq.s32.totalorder %s18, 0
      %p59 = por %p57, %p58
      %p60 = scmp.ne.s32.totalorder %s52, %s54
      %p61 = scmp.eq.s32.totalorder %s23, 1
      %p62 = por %p60, %p61
      %p63 = scmp.ne.s32.totalorder %s54, %s55
      %p64 = scmp.eq.s32.totalorder %s23, 0
      %p65 = por %p63, %p64
      %p66 = scmp.ne.s32.totalorder %s54, %s55
      %p67 = scmp.eq.s32.totalorder %s24, 1
      %p68 = por %p66, %p67
      %p70 = scmp.ne.s32.totalorder %s55, %s69
      %p71 = scmp.eq.s32.totalorder %s24, 0
      %p72 = por %p70, %p71
      %s74 = sadd.s32 %s73, 1
      %p77 = scmp.eq.s32.totalorder %s18, 1
      %p78 = scmp.ne.s32.totalorder %s73, %s75
      %p79 = scmp.eq.s32.totalorder %s18, 0
      %p80 = por %p78, %p79
      %p81 = scmp.ne.s32.totalorder %s73, %s75
      %p82 = scmp.eq.s32.totalorder %s23, 1
      %p83 = por %p81, %p82
      %p84 = scmp.ne.s32.totalorder %s75, %s76
      %p85 = scmp.eq.s32.totalorder %s23, 0
      %p86 = por %p84, %p85
      %p87 = scmp.ne.s32.totalorder %s75, %s76
      %p88 = scmp.eq.s32.totalorder %s24, 1
      %p89 = por %p87, %p88
      %p91 = scmp.ne.s32.totalorder %s76, %s90
      %p92 = scmp.eq.s32.totalorder %s24, 0
      %p93 = por %p91, %p92
      %s95 = sadd.s32 %s94, 1
      %p98 = scmp.eq.s32.totalorder %s18, 1
      %p99 = scmp.ne.s32.totalorder %s94, %s96
      %p100 = scmp.eq.s32.totalorder %s18, 0
      %p101 = por %p99, %p100
      %p102 = scmp.ne.s32.totalorder %s94, %s96
      %p103 = scmp.eq.s32.totalorder %s23, 1
      %p104 = por %p102, %p103
      %p105 = scmp.ne.s32.totalorder %s96, %s97
      %p106 = scmp.eq.s32.totalorder %s23, 0
      %p107 = por %p105, %p106
      %p108 = scmp.ne.s32.totalorder %s96, %s97
      %p109 = scmp.eq.s32.totalorder %s24, 1
      %p110 = por %p108, %p109
      %p112 = scmp.ne.s32.totalorder %s97, %s111
      %p113 = scmp.eq.s32.totalorder %s24, 0
      %p114 = por %p112, %p113
      %s116 = sadd.s32 %s115, 1
      %p119 = scmp.eq.s32.totalorder %s18, 1
      %p120 = scmp.ne.s32.totalorder %s115, %s117
      %p121 = scmp.eq.s32.totalorder %s18, 0
      %p122 = por %p120, %p121
      %p123 = scmp.ne.s32.totalorder %s115, %s117
      %p124 = scmp.eq.s32.totalorder %s23, 1
      %p125 = por %p123, %p124
      %p126 = scmp.ne.s32.totalorder %s117, %s118
      %p127 = scmp.eq.s32.totalorder %s23, 0
      %p128 = por %p126, %p127
      %p129 = scmp.ne.s32.totalorder %s117, %s118
      %p130 = scmp.eq.s32.totalorder %s24, 1
      %p131 = por %p129, %p130
      %p133 = scmp.ne.s32.totalorder %s118, %s132
      %p134 = scmp.eq.s32.totalorder %s24, 0
      %p135 = por %p133, %p134
      %s137 = sadd.s32 %s136, 1
      %p140 = scmp.eq.s32.totalorder %s18, 1
      %p141 = scmp.ne.s32.totalorder %s136, %s138
      %p142 = scmp.eq.s32.totalorder %s18, 0
      %p143 = por %p141, %p142
      %p144 = scmp.ne.s32.totalorder %s136, %s138
      %p145 = scmp.eq.s32.totalorder %s23, 1
      %p146 = por %p144, %p145
      %p147 = scmp.ne.s32.totalorder %s138, %s139
      %p148 = scmp.eq.s32.totalorder %s23, 0
      %p149 = por %p147, %p148
      %p150 = scmp.ne.s32.totalorder %s138, %s139
      %p151 = scmp.eq.s32.totalorder %s24, 1
      %p152 = por %p150, %p151
      %p154 = scmp.ne.s32.totalorder %s139, %s153
      %p155 = scmp.eq.s32.totalorder %s24, 0
      %p156 = por %p154, %p155
      %s158 = sadd.s32 %s157, 1
      %p161 = scmp.eq.s32.totalorder %s18, 1
      %p162 = scmp.ne.s32.totalorder %s157, %s159
      %p163 = scmp.eq.s32.totalorder %s18, 0
      %p164 = por %p162, %p163
      %p165 = scmp.ne.s32.totalorder %s157, %s159
      %p166 = scmp.eq.s32.totalorder %s23, 1
      %p167 = por %p165, %p166
      %p168 = scmp.ne.s32.totalorder %s159, %s160
      %p169 = scmp.eq.s32.totalorder %s23, 0
      %p170 = por %p168, %p169
      %p171 = scmp.ne.s32.totalorder %s159, %s160
      %p172 = scmp.eq.s32.totalorder %s24, 1
      %p173 = por %p171, %p172
      %p175 = scmp.ne.s32.totalorder %s160, %s174
      %p176 = scmp.eq.s32.totalorder %s24, 0
      %p177 = por %p175, %p176
      %s179 = sadd.s32 %s178, 1
      %p182 = scmp.eq.s32.totalorder %s18, 1
      %p183 = scmp.ne.s32.totalorder %s178, %s180
      %p184 = scmp.eq.s32.totalorder %s18, 0
      %p185 = por %p183, %p184
      %p186 = scmp.ne.s32.totalorder %s178, %s180
      %p187 = scmp.eq.s32.totalorder %s23, 1
      %p188 = por %p186, %p187
      %p189 = scmp.ne.s32.totalorder %s180, %s181
      %p190 = scmp.eq.s32.totalorder %s23, 0
      %p191 = por %p189, %p190
      %p192 = scmp.ne.s32.totalorder %s180, %s181
      %p193 = scmp.eq.s32.totalorder %s24, 1
      %p194 = por %p192, %p193
      %p196 = scmp.ne.s32.totalorder %s181, %s195
      %p197 = scmp.eq.s32.totalorder %s24, 0
      %p198 = por %p196, %p197
      %s200 = sadd.s32 %s199, 1
      %p203 = scmp.eq.s32.totalorder %s18, 1
      %p204 = scmp.ne.s32.totalorder %s199, %s201
      %p205 = scmp.eq.s32.totalorder %s18, 0
      %p206 = por %p204, %p205
      %p207 = scmp.ne.s32.totalorder %s199, %s201
      %p208 = scmp.eq.s32.totalorder %s23, 1
      %p209 = por %p207, %p208
      %p210 = scmp.ne.s32.totalorder %s201, %s202
      %p211 = scmp.eq.s32.totalorder %s23, 0
      %p212 = por %p210, %p211
      %p213 = scmp.ne.s32.totalorder %s201, %s202
      %p214 = scmp.eq.s32.totalorder %s24, 1
      %p215 = por %p213, %p214
      %p217 = scmp.ne.s32.totalorder %s202, %s216
      %p218 = scmp.eq.s32.totalorder %s24, 0
      %p219 = por %p217, %p218
      %s220 = ssub.s32 %s18, %s25
      %p221 = scmp.eq.s32.totalorder %s220, 0
      %s223 = sadd.s32 %s222, 1
      %s224 = scalar_select %p221, %s222, %s223
      %p227 = pneg %p221
      %p228 = scmp.eq.s32.totalorder %s18, 1
      %p229 = por %p227, %p228
      %p230 = scmp.ne.s32.totalorder %s222, %s225
      %p231 = scmp.eq.s32.totalorder %s18, 0
      %p232 = por %p230, %p231
      %p233 = scmp.ne.s32.totalorder %s222, %s225
      %p234 = scmp.eq.s32.totalorder %s23, 1
      %p235 = por %p233, %p234
      %p236 = scmp.ne.s32.totalorder %s225, %s226
      %p237 = scmp.eq.s32.totalorder %s23, 0
      %p238 = por %p236, %p237
      %p239 = scmp.ne.s32.totalorder %s225, %s226
      %p240 = scmp.eq.s32.totalorder %s24, 1
      %p241 = por %p239, %p240
      %p243 = scmp.ne.s32.totalorder %s226, %s242
      %p244 = scmp.eq.s32.totalorder %s24, 0
      %p245 = por %p243, %p244
      %p246 = scmp.le.s32.totalorder 1, %s18
      %p247 = scmp.lt.s32.totalorder %s18, 3
      %p248 = pnand %p246, %p247
      %p249 = pneg %p248
      // Predicated region
      $region9: #{cnn_kws_forward.1} parent=5 // pred_check
        _
      $region10: #{cnn_kws_forward.1} parent=5 // pred_check_branch
        %251 = sbr.rel (%p248) target = $region12
      $region11: #{cnn_kws_forward.1} parent=5 // pred_region
        %s252 = ssub.s32 %s18, 1
        // Predicated region
        $region13: #{cnn_kws_forward.1} parent=11 // pred_check
          %p253 = pneg %p65
        $region14: #{cnn_kws_forward.1} parent=11 // pred_check_branch
          %255 = sbr.rel (%p253) target = $region16
        $region15: #{cnn_kws_forward.1} parent=11 // pred_region
          _
        $region16: #{cnn_kws_forward.1} parent=11 // pred_fallthru
          _
        // Predicated region
        $region17: #{cnn_kws_forward.1} parent=11 // pred_check
          %p256 = pneg %p86
        $region18: #{cnn_kws_forward.1} parent=11 // pred_check_branch
          %258 = sbr.rel (%p256) target = $region20
        $region19: #{cnn_kws_forward.1} parent=11 // pred_region
          _
        $region20: #{cnn_kws_forward.1} parent=11 // pred_fallthru
          _
        // Predicated region
        $region21: #{cnn_kws_forward.1} parent=11 // pred_check
          %p259 = pneg %p107
        $region22: #{cnn_kws_forward.1} parent=11 // pred_check_branch
          %261 = sbr.rel (%p259) target = $region24
        $region23: #{cnn_kws_forward.1} parent=11 // pred_region
          _
        $region24: #{cnn_kws_forward.1} parent=11 // pred_fallthru
          _
        // Predicated region
        $region25: #{cnn_kws_forward.1} parent=11 // pred_check
          %p262 = pneg %p128
        $region26: #{cnn_kws_forward.1} parent=11 // pred_check_branch
          %264 = sbr.rel (%p262) target = $region28
        $region27: #{cnn_kws_forward.1} parent=11 // pred_region
          _
        $region28: #{cnn_kws_forward.1} parent=11 // pred_fallthru
          _
        // Predicated region
        $region29: #{cnn_kws_forward.1} parent=11 // pred_check
          %p265 = pneg %p149
        $region30: #{cnn_kws_forward.1} parent=11 // pred_check_branch
          %267 = sbr.rel (%p265) target = $region32
        $region31: #{cnn_kws_forward.1} parent=11 // pred_region
          _
        $region32: #{cnn_kws_forward.1} parent=11 // pred_fallthru
          _
        // Predicated region
        $region33: #{cnn_kws_forward.1} parent=11 // pred_check
          %p268 = pneg %p170
        $region34: #{cnn_kws_forward.1} parent=11 // pred_check_branch
          %270 = sbr.rel (%p268) target = $region36
        $region35: #{cnn_kws_forward.1} parent=11 // pred_region
          _
        $region36: #{cnn_kws_forward.1} parent=11 // pred_fallthru
          _
        // Predicated region
        $region37: #{cnn_kws_forward.1} parent=11 // pred_check
          %p271 = pneg %p191
        $region38: #{cnn_kws_forward.1} parent=11 // pred_check_branch
          %273 = sbr.rel (%p271) target = $region40
        $region39: #{cnn_kws_forward.1} parent=11 // pred_region
          _
        $region40: #{cnn_kws_forward.1} parent=11 // pred_fallthru
          _
        // Predicated region
        $region41: #{cnn_kws_forward.1} parent=11 // pred_check
          %p274 = pneg %p212
        $region42: #{cnn_kws_forward.1} parent=11 // pred_check_branch
          %276 = sbr.rel (%p274) target = $region44
        $region43: #{cnn_kws_forward.1} parent=11 // pred_region
          _
        $region44: #{cnn_kws_forward.1} parent=11 // pred_fallthru
          _
      $region12: #{cnn_kws_forward.1} parent=5 // pred_fallthru
        _
      %p277 = scmp.lt.s32.totalorder %s18, 2
      // Predicated region
      $region45: #{cnn_kws_forward.1} parent=5 // pred_check
        %p278 = pneg %p277
      $region46: #{cnn_kws_forward.1} parent=5 // pred_check_branch
        %280 = sbr.rel (%p278) target = $region48
      $region47: #{cnn_kws_forward.1} parent=5 // pred_region
        // Predicated region
        $region49: #{cnn_kws_forward.1} parent=47 // pred_check
          %p281 = pneg %p38
        $region50: #{cnn_kws_forward.1} parent=47 // pred_check_branch
          %283 = sbr.rel (%p281) target = $region52
        $region51: #{cnn_kws_forward.1} parent=47 // pred_region
          %p284 = scmp.lt.s32.totalorder %s18, 1
          %s285 = scalar_select %p284, %s18, 1
          %s286 = smul.addr %s285, 5
          %s287 = smul.addr %s286, 8
          %s288 = scalar_lea.vmem %s0, %s287
        $region52: #{cnn_kws_forward.1} parent=47 // pred_fallthru
          _
      $region48: #{cnn_kws_forward.1} parent=5 // pred_fallthru
        _
      %p289 = scmp.le.s32.totalorder 1, %s18
      %p290 = scmp.lt.s32.totalorder %s18, 3
      %p291 = pnand %p289, %p290
      %p292 = pneg %p291
      // Predicated region
      $region53: #{cnn_kws_forward.1} parent=5 // pred_check
        _
      $region54: #{cnn_kws_forward.1} parent=5 // pred_check_branch
        %294 = sbr.rel (%p291) target = $region56
      $region55: #{cnn_kws_forward.1} parent=5 // pred_region
        %s295 = ssub.s32 %s18, 1
        %p296 = scmp.lt.s32.totalorder %s23, 1
        %s297 = scalar_select %p296, %s23, 1
        %s298 = smul.addr %s297, 5
        %s299 = smul.addr %s298, 8
        %s300 = scalar_lea.vmem %s0, %s299
        %p301 = pneg %p44
        %p302 = pneg %p41
        %p303 = pneg %p65
        %p304 = pneg %p62
        %p305 = pneg %p86
        %p306 = pneg %p83
        %p307 = pneg %p107
        %p308 = pneg %p104
        %p309 = pneg %p128
        %p310 = pneg %p125
        %p311 = pneg %p149
        %p312 = pneg %p146
        %p313 = pneg %p170
        %p314 = pneg %p167
        %p315 = pneg %p191
        %p316 = pneg %p188
        %p317 = pneg %p212
        %p318 = pneg %p209
        %p319 = pneg %p238
        %p320 = pneg %p235
        %s321 = sand.u32 %s225, 1
        %s322 = scalar_lea.sflag [#allocation5], %s321
        %s323 = sand.u32 %s225, 1
        %s324 = scalar_lea.vmem [#allocation4], %s323
        %p325 = scmp.lt.s32.totalorder %s23, 1
        %s326 = scalar_select %p325, %s23, 1
        %s327 = smul.addr %s326, 5
        %s328 = smul.addr %s327, 8
        %s329 = scalar_lea.vmem %s0, %s328
        %v331 = vld [vmem:[%s329] sm:$0xff]
        %v332 = vld [vmem:[%s329 + $0x8] sm:$0xff]
        %v333 = vld [vmem:[%s329 + $0x10] sm:$0xff]
        %v334 = vld [vmem:[%s329 + $0x18] sm:$0x1]
        %v335 = vpack.c.bf16 %v332, %v331
        %v336 = vpack.c.bf16 %v334, %v333
        %v337 = vld [vmem:[%s1] sm:$0xff]
        %v338 = vld [vmem:[%s1 + $0x8] sm:$0xf]
        %v339 = vld [vmem:[%s1 + $0xc] sm:$0x77]
        %v340 = vld [vmem:[%s1 + $0x14] sm:$0x7]
        %v341 = vld [vmem:[%s329 + $0x1] sm:$0xff]
        %v342 = vld [vmem:[%s329 + $0x9] sm:$0xff]
        %v343 = vld [vmem:[%s329 + $0x11] sm:$0xff]
        %v344 = vld [vmem:[%s329 + $0x19] sm:$0x1]
        %v345 = vpack.c.bf16 %v342, %v341
        %v346 = vpack.c.bf16 %v344, %v343
        %s347 = scalar_lea.vmem %s1, 24
        %v348 = vld [vmem:[%s347] sm:$0xff]
        %v349 = vld [vmem:[%s347 + $0x8] sm:$0xf]
        %v350 = vld [vmem:[%s347 + $0xc] sm:$0x77]
        %v351 = vld [vmem:[%s347 + $0x14] sm:$0x7]
        %v356 = vunpack.c.l.b16 %v348
        %v357 = vunpack.c.h.b16 %v348
        %v358 = vunpack.c.l.b16 %v349
        %v359 = vunpack.c.l.b16 %v350
        %v360 = vunpack.c.h.b16 %v350
        %v361 = vunpack.c.l.b16 %v351
        %v362 = vpack.c.b16 %v359, %v356
        %v363 = vpack.c.b16 %v360, %v357
        %v364 = vpack.c.b16 %v361, %v358
        %vm365 = vcmask 105472
        %v367 = vsel %vm365, %v345, 0
        %v370 = vsel %vm365, %v346, 0
        %vm372 = vcmask 1045504
        %vm373 = vcmask 1046528
        %v374 = vsel %vm372, 4294967295, 65535
        %v375 = vsel %vm373, %v374, 0
        %v377 = vand.u32 %v362, %v375
        %v380 = vand.u32 %v363, %v375
        %v383 = vand.u32 %v364, %v375
        %385 = vmatprep.subr.bf16.mxu0 0
        %386 = vmatpush1.bf16.msra.mxu0 0
        %387 = vmatprep.subr.bf16.mxu0 0
        %388 = vmatpush1.bf16.msra.mxu0 0
        %389 = vmatprep.subr.bf16.mxu0 0
        %390 = vmatpush1.bf16.msra.mxu0 0
        %391 = vmatprep.subr.bf16.mxu0 0
        %392 = vmatpush1.bf16.msra.mxu0 0
        %393 = vmatprep.subr.bf16.mxu0 0
        %394 = vmatpush1.bf16.msra.mxu0 0
        %395 = vmatprep.subr.bf16.mxu0 0
        %396 = vmatpush1.bf16.msra.mxu0 0
        %397 = vmatprep.subr.bf16.mxu0 0
        %398 = vmatpush1.bf16.msra.mxu0 0
        %399 = vmatprep.subr.bf16.mxu0 %v380
        %400 = vmatpush1.bf16.msra.mxu0 %v377
        %401 = vmatprep.subr.bf16.mxu0 0
        %402 = vmatpush2.bf16.msra.mxu0 0
        %403 = vmatprep.subr.bf16.mxu0 0
        %404 = vmatpush2.bf16.msra.mxu0 0
        %405 = vmatprep.subr.bf16.mxu0 0
        %406 = vmatpush2.bf16.msra.mxu0 0
        %407 = vmatprep.subr.bf16.mxu0 0
        %408 = vmatpush2.bf16.msra.mxu0 0
        %409 = vmatprep.subr.bf16.mxu0 0
        %410 = vmatpush2.bf16.msra.mxu0 0
        %411 = vmatprep.subr.bf16.mxu0 0
        %412 = vmatpush2.bf16.msra.mxu0 0
        %413 = vmatprep.subr.bf16.mxu0 0
        %414 = vmatpush2.bf16.msra.mxu0 0
        %415 = vmatprep.subr.bf16.mxu0 0
        %416 = vmatpush2.bf16.msra.mxu0 0
        %417 = vmatprep.mubr.bf16.mxu0 0
        %418 = vmatmul.mubr.bf16.gmra.mxu0 %v367
        %v419 = vpop.f32.mrf.mxu0
        %v420 = vadd.f32 0.0, %v419
        %v421 = vpop.f32.mrf.mxu0
        %v422 = vadd.f32 0.0, %v421
        %v423 = vpop.f32.mrf.mxu0
        %v424 = vadd.f32 0.0, %v423
        %v425 = vpop.f32.mrf.mxu0
        %v426 = vadd.f32 0.0, %v425
        %427 = vmatprep.mubr.bf16.mxu0 0
        %428 = vmatmul.mubr.bf16.gmra.mxu0 %v370
        %v429 = vpop.f32.mrf.mxu0
        %v430 = vadd.f32 0.0, %v429
        %v431 = vpop.f32.mrf.mxu0
        %v432 = vadd.f32 0.0, %v431
        %v433 = vpop.f32.mrf.mxu0
        %v434 = vadd.f32 0.0, %v433
        %v435 = vpop.f32.mrf.mxu0
        %v436 = vadd.f32 0.0, %v435
        %437 = vdwg.mxu0
        %438 = vmatprep.subr.bf16.mxu0 0
        %439 = vmatpush1.bf16.msra.mxu0 0
        %440 = vmatprep.subr.bf16.mxu0 0
        %441 = vmatpush1.bf16.msra.mxu0 0
        %442 = vmatprep.subr.bf16.mxu0 0
        %443 = vmatpush1.bf16.msra.mxu0 0
        %444 = vmatprep.subr.bf16.mxu0 0
        %445 = vmatpush1.bf16.msra.mxu0 0
        %446 = vmatprep.subr.bf16.mxu0 0
        %447 = vmatpush1.bf16.msra.mxu0 0
        %448 = vmatprep.subr.bf16.mxu0 0
        %449 = vmatpush1.bf16.msra.mxu0 0
        %450 = vmatprep.subr.bf16.mxu0 0
        %451 = vmatpush1.bf16.msra.mxu0 0
        %452 = vmatprep.subr.bf16.mxu0 0
        %453 = vmatpush1.bf16.msra.mxu0 %v383
        %454 = vmatprep.subr.bf16.mxu0 0
        %455 = vmatpush2.bf16.msra.mxu0 0
        %456 = vmatprep.subr.bf16.mxu0 0
        %457 = vmatpush2.bf16.msra.mxu0 0
        %458 = vmatprep.subr.bf16.mxu0 0
        %459 = vmatpush2.bf16.msra.mxu0 0
        %460 = vmatprep.subr.bf16.mxu0 0
        %461 = vmatpush2.bf16.msra.mxu0 0
        %462 = vmatprep.subr.bf16.mxu0 0
        %463 = vmatpush2.bf16.msra.mxu0 0
        %464 = vmatprep.subr.bf16.mxu0 0
        %465 = vmatpush2.bf16.msra.mxu0 0
        %466 = vmatprep.subr.bf16.mxu0 0
        %467 = vmatpush2.bf16.msra.mxu0 0
        %468 = vmatprep.subr.bf16.mxu0 0
        %469 = vmatpush2.bf16.msra.mxu0 0
        %470 = vmatprep.mubr.bf16.mxu0 0
        %471 = vmatmul.mubr.bf16.gmra.mxu0 %v367
        %v472 = vpop.f32.mrf.mxu0
        %v473 = vadd.f32 0.0, %v472
        %v474 = vpop.f32.mrf.mxu0
        %v475 = vpop.f32.mrf.mxu0
        %v476 = vadd.f32 0.0, %v475
        %v477 = vpop.f32.mrf.mxu0
        %478 = vmatprep.mubr.bf16.mxu0 0
        %479 = vmatmul.mubr.bf16.gmra.mxu0 %v370
        %v480 = vpop.f32.mrf.mxu0
        %v481 = vadd.f32 0.0, %v480
        %v482 = vpop.f32.mrf.mxu0
        %v483 = vpop.f32.mrf.mxu0
        %v484 = vadd.f32 0.0, %v483
        %v485 = vpop.f32.mrf.mxu0
        %486 = vdwg.mxu0
        %v491 = vunpack.c.l.b16 %v337
        %v492 = vunpack.c.h.b16 %v337
        %v493 = vunpack.c.l.b16 %v338
        %v494 = vunpack.c.l.b16 %v339
        %v495 = vunpack.c.h.b16 %v339
        %v496 = vunpack.c.l.b16 %v340
        %v497 = vpack.c.b16 %v494, %v491
        %v498 = vpack.c.b16 %v495, %v492
        %v499 = vpack.c.b16 %v496, %v493
        %v501 = vsel %vm365, %v335, 0
        %v504 = vsel %vm365, %v336, 0
        %v507 = vand.u32 %v497, %v375
        %v510 = vand.u32 %v498, %v375
        %v513 = vand.u32 %v499, %v375
        %515 = vmatprep.subr.bf16.mxu0 0
        %516 = vmatpush1.bf16.msra.mxu0 0
        %517 = vmatprep.subr.bf16.mxu0 0
        %518 = vmatpush1.bf16.msra.mxu0 0
        %519 = vmatprep.subr.bf16.mxu0 0
        %520 = vmatpush1.bf16.msra.mxu0 0
        %521 = vmatprep.subr.bf16.mxu0 0
        %522 = vmatpush1.bf16.msra.mxu0 0
        %523 = vmatprep.subr.bf16.mxu0 0
        %524 = vmatpush1.bf16.msra.mxu0 0
        %525 = vmatprep.subr.bf16.mxu0 0
        %526 = vmatpush1.bf16.msra.mxu0 0
        %527 = vmatprep.subr.bf16.mxu0 0
        %528 = vmatpush1.bf16.msra.mxu0 0
        %529 = vmatprep.subr.bf16.mxu0 %v510
        %530 = vmatpush1.bf16.msra.mxu0 %v507
        %531 = vmatprep.subr.bf16.mxu0 0
        %532 = vmatpush2.bf16.msra.mxu0 0
        %533 = vmatprep.subr.bf16.mxu0 0
        %534 = vmatpush2.bf16.msra.mxu0 0
        %535 = vmatprep.subr.bf16.mxu0 0
        %536 = vmatpush2.bf16.msra.mxu0 0
        %537 = vmatprep.subr.bf16.mxu0 0
        %538 = vmatpush2.bf16.msra.mxu0 0
        %539 = vmatprep.subr.bf16.mxu0 0
        %540 = vmatpush2.bf16.msra.mxu0 0
        %541 = vmatprep.subr.bf16.mxu0 0
        %542 = vmatpush2.bf16.msra.mxu0 0
        %543 = vmatprep.subr.bf16.mxu0 0
        %544 = vmatpush2.bf16.msra.mxu0 0
        %545 = vmatprep.subr.bf16.mxu0 0
        %546 = vmatpush2.bf16.msra.mxu0 0
        %547 = vmatprep.mubr.bf16.mxu0 0
        %548 = vmatmul.mubr.bf16.gmra.mxu0 %v501
        %v549 = vpop.f32.mrf.mxu0
        %v550 = vadd.f32 %v420, %v549
        %v551 = vpop.f32.mrf.mxu0
        %v552 = vadd.f32 %v422, %v551
        %v553 = vpop.f32.mrf.mxu0
        %v554 = vadd.f32 %v424, %v553
        %v555 = vpop.f32.mrf.mxu0
        %v556 = vadd.f32 %v426, %v555
        %557 = vmatprep.mubr.bf16.mxu0 0
        %558 = vmatmul.mubr.bf16.gmra.mxu0 %v504
        %v559 = vpop.f32.mrf.mxu0
        %v560 = vadd.f32 %v430, %v559
        %v561 = vpop.f32.mrf.mxu0
        %v562 = vadd.f32 %v432, %v561
        %v563 = vpop.f32.mrf.mxu0
        %v564 = vadd.f32 %v434, %v563
        %v565 = vpop.f32.mrf.mxu0
        %v566 = vadd.f32 %v436, %v565
        %567 = vdwg.mxu0
        %568 = vmatprep.subr.bf16.mxu0 0
        %569 = vmatpush1.bf16.msra.mxu0 0
        %570 = vmatprep.subr.bf16.mxu0 0
        %571 = vmatpush1.bf16.msra.mxu0 0
        %572 = vmatprep.subr.bf16.mxu0 0
        %573 = vmatpush1.bf16.msra.mxu0 0
        %574 = vmatprep.subr.bf16.mxu0 0
        %575 = vmatpush1.bf16.msra.mxu0 0
        %576 = vmatprep.subr.bf16.mxu0 0
        %577 = vmatpush1.bf16.msra.mxu0 0
        %578 = vmatprep.subr.bf16.mxu0 0
        %579 = vmatpush1.bf16.msra.mxu0 0
        %580 = vmatprep.subr.bf16.mxu0 0
        %581 = vmatpush1.bf16.msra.mxu0 0
        %582 = vmatprep.subr.bf16.mxu0 0
        %583 = vmatpush1.bf16.msra.mxu0 %v513
        %584 = vmatprep.subr.bf16.mxu0 0
        %585 = vmatpush2.bf16.msra.mxu0 0
        %586 = vmatprep.subr.bf16.mxu0 0
        %587 = vmatpush2.bf16.msra.mxu0 0
        %588 = vmatprep.subr.bf16.mxu0 0
        %589 = vmatpush2.bf16.msra.mxu0 0
        %590 = vmatprep.subr.bf16.mxu0 0
        %591 = vmatpush2.bf16.msra.mxu0 0
        %592 = vmatprep.subr.bf16.mxu0 0
        %593 = vmatpush2.bf16.msra.mxu0 0
        %594 = vmatprep.subr.bf16.mxu0 0
        %595 = vmatpush2.bf16.msra.mxu0 0
        %596 = vmatprep.subr.bf16.mxu0 0
        %597 = vmatpush2.bf16.msra.mxu0 0
        %598 = vmatprep.subr.bf16.mxu0 0
        %599 = vmatpush2.bf16.msra.mxu0 0
        %600 = vmatprep.mubr.bf16.mxu0 0
        %601 = vmatmul.mubr.bf16.gmra.mxu0 %v501
        %v602 = vpop.f32.mrf.mxu0
        %v603 = vadd.f32 %v473, %v602
        %v604 = vpop.f32.mrf.mxu0
        %v605 = vpop.f32.mrf.mxu0
        %v606 = vadd.f32 %v476, %v605
        %v607 = vpop.f32.mrf.mxu0
        %608 = vmatprep.mubr.bf16.mxu0 0
        %609 = vmatmul.mubr.bf16.gmra.mxu0 %v504
        %v610 = vpop.f32.mrf.mxu0
        %v611 = vadd.f32 %v481, %v610
        %v612 = vpop.f32.mrf.mxu0
        %v613 = vpop.f32.mrf.mxu0
        %v614 = vadd.f32 %v484, %v613
        %v615 = vpop.f32.mrf.mxu0
        %616 = vdwg.mxu0
        %v617 = vld [vmem:[%s329 + $0x2] sm:$0xff]
        %v618 = vld [vmem:[%s329 + $0xa] sm:$0xff]
        %v619 = vld [vmem:[%s329 + $0x12] sm:$0xff]
        %v620 = vld [vmem:[%s329 + $0x1a] sm:$0x1]
        %v621 = vpack.c.bf16 %v618, %v617
        %v622 = vpack.c.bf16 %v620, %v619
        %s623 = scalar_lea.vmem %s1, 48
        %v624 = vld [vmem:[%s623] sm:$0xff]
        %v625 = vld [vmem:[%s623 + $0x8] sm:$0xf]
        %v626 = vld [vmem:[%s623 + $0xc] sm:$0x77]
        %v627 = vld [vmem:[%s623 + $0x14] sm:$0x7]
        %v632 = vunpack.c.l.b16 %v624
        %v633 = vunpack.c.h.b16 %v624
        %v634 = vunpack.c.l.b16 %v625
        %v635 = vunpack.c.l.b16 %v626
        %v636 = vunpack.c.h.b16 %v626
        %v637 = vunpack.c.l.b16 %v627
        %v638 = vpack.c.b16 %v635, %v632
        %v639 = vpack.c.b16 %v636, %v633
        %v640 = vpack.c.b16 %v637, %v634
        %v642 = vsel %vm365, %v621, 0
        %v645 = vsel %vm365, %v622, 0
        %v648 = vand.u32 %v638, %v375
        %v651 = vand.u32 %v639, %v375
        %v654 = vand.u32 %v640, %v375
        %656 = vmatprep.subr.bf16.mxu0 0
        %657 = vmatpush1.bf16.msra.mxu0 0
        %658 = vmatprep.subr.bf16.mxu0 0
        %659 = vmatpush1.bf16.msra.mxu0 0
        %660 = vmatprep.subr.bf16.mxu0 0
        %661 = vmatpush1.bf16.msra.mxu0 0
        %662 = vmatprep.subr.bf16.mxu0 0
        %663 = vmatpush1.bf16.msra.mxu0 0
        %664 = vmatprep.subr.bf16.mxu0 0
        %665 = vmatpush1.bf16.msra.mxu0 0
        %666 = vmatprep.subr.bf16.mxu0 0
        %667 = vmatpush1.bf16.msra.mxu0 0
        %668 = vmatprep.subr.bf16.mxu0 0
        %669 = vmatpush1.bf16.msra.mxu0 0
        %670 = vmatprep.subr.bf16.mxu0 %v651
        %671 = vmatpush1.bf16.msra.mxu0 %v648
        %672 = vmatprep.subr.bf16.mxu0 0
        %673 = vmatpush2.bf16.msra.mxu0 0
        %674 = vmatprep.subr.bf16.mxu0 0
        %675 = vmatpush2.bf16.msra.mxu0 0
        %676 = vmatprep.subr.bf16.mxu0 0
        %677 = vmatpush2.bf16.msra.mxu0 0
        %678 = vmatprep.subr.bf16.mxu0 0
        %679 = vmatpush2.bf16.msra.mxu0 0
        %680 = vmatprep.subr.bf16.mxu0 0
        %681 = vmatpush2.bf16.msra.mxu0 0
        %682 = vmatprep.subr.bf16.mxu0 0
        %683 = vmatpush2.bf16.msra.mxu0 0
        %684 = vmatprep.subr.bf16.mxu0 0
        %685 = vmatpush2.bf16.msra.mxu0 0
        %686 = vmatprep.subr.bf16.mxu0 0
        %687 = vmatpush2.bf16.msra.mxu0 0
        %688 = vmatprep.mubr.bf16.mxu0 0
        %689 = vmatmul.mubr.bf16.gmra.mxu0 %v642
        %v690 = vpop.f32.mrf.mxu0
        %v691 = vadd.f32 0.0, %v690
        %v692 = vpop.f32.mrf.mxu0
        %v693 = vadd.f32 0.0, %v692
        %v694 = vpop.f32.mrf.mxu0
        %v695 = vadd.f32 0.0, %v694
        %v696 = vpop.f32.mrf.mxu0
        %v697 = vadd.f32 0.0, %v696
        %698 = vmatprep.mubr.bf16.mxu0 0
        %699 = vmatmul.mubr.bf16.gmra.mxu0 %v645
        %v700 = vpop.f32.mrf.mxu0
        %v701 = vadd.f32 0.0, %v700
        %v702 = vpop.f32.mrf.mxu0
        %v703 = vadd.f32 0.0, %v702
        %v704 = vpop.f32.mrf.mxu0
        %v705 = vadd.f32 0.0, %v704
        %v706 = vpop.f32.mrf.mxu0
        %v707 = vadd.f32 0.0, %v706
        %708 = vdwg.mxu0
        %709 = vmatprep.subr.bf16.mxu0 0
        %710 = vmatpush1.bf16.msra.mxu0 0
        %711 = vmatprep.subr.bf16.mxu0 0
        %712 = vmatpush1.bf16.msra.mxu0 0
        %713 = vmatprep.subr.bf16.mxu0 0
        %714 = vmatpush1.bf16.msra.mxu0 0
        %715 = vmatprep.subr.bf16.mxu0 0
        %716 = vmatpush1.bf16.msra.mxu0 0
        %717 = vmatprep.subr.bf16.mxu0 0
        %718 = vmatpush1.bf16.msra.mxu0 0
        %719 = vmatprep.subr.bf16.mxu0 0
        %720 = vmatpush1.bf16.msra.mxu0 0
        %721 = vmatprep.subr.bf16.mxu0 0
        %722 = vmatpush1.bf16.msra.mxu0 0
        %723 = vmatprep.subr.bf16.mxu0 0
        %724 = vmatpush1.bf16.msra.mxu0 %v654
        %725 = vmatprep.subr.bf16.mxu0 0
        %726 = vmatpush2.bf16.msra.mxu0 0
        %727 = vmatprep.subr.bf16.mxu0 0
        %728 = vmatpush2.bf16.msra.mxu0 0
        %729 = vmatprep.subr.bf16.mxu0 0
        %730 = vmatpush2.bf16.msra.mxu0 0
        %731 = vmatprep.subr.bf16.mxu0 0
        %732 = vmatpush2.bf16.msra.mxu0 0
        %733 = vmatprep.subr.bf16.mxu0 0
        %734 = vmatpush2.bf16.msra.mxu0 0
        %735 = vmatprep.subr.bf16.mxu0 0
        %736 = vmatpush2.bf16.msra.mxu0 0
        %737 = vmatprep.subr.bf16.mxu0 0
        %738 = vmatpush2.bf16.msra.mxu0 0
        %739 = vmatprep.subr.bf16.mxu0 0
        %740 = vmatpush2.bf16.msra.mxu0 0
        %741 = vmatprep.mubr.bf16.mxu0 0
        %742 = vmatmul.mubr.bf16.gmra.mxu0 %v642
        %v743 = vpop.f32.mrf.mxu0
        %v744 = vadd.f32 0.0, %v743
        %v745 = vpop.f32.mrf.mxu0
        %v746 = vpop.f32.mrf.mxu0
        %v747 = vadd.f32 0.0, %v746
        %v748 = vpop.f32.mrf.mxu0
        %749 = vmatprep.mubr.bf16.mxu0 0
        %750 = vmatmul.mubr.bf16.gmra.mxu0 %v645
        %v751 = vpop.f32.mrf.mxu0
        %v752 = vadd.f32 0.0, %v751
        %v753 = vpop.f32.mrf.mxu0
        %v754 = vpop.f32.mrf.mxu0
        %v755 = vadd.f32 0.0, %v754
        %v756 = vpop.f32.mrf.mxu0
        %757 = vdwg.mxu0
        %v758 = vadd.f32 %v550, %v691
        %v759 = vadd.f32 %v552, %v693
        %v760 = vadd.f32 %v603, %v744
        %v761 = vadd.f32 %v554, %v695
        %v762 = vadd.f32 %v556, %v697
        %v763 = vadd.f32 %v606, %v747
        %v764 = vadd.f32 %v560, %v701
        %v765 = vadd.f32 %v562, %v703
        %v766 = vadd.f32 %v611, %v752
        %v767 = vadd.f32 %v564, %v705
        %v768 = vadd.f32 %v566, %v707
        %v769 = vadd.f32 %v614, %v755
        %v770 = vld [vmem:[%s329 + $0x3] sm:$0xff]
        %v771 = vld [vmem:[%s329 + $0xb] sm:$0xff]
        %v772 = vld [vmem:[%s329 + $0x13] sm:$0xff]
        %v773 = vld [vmem:[%s329 + $0x1b] sm:$0x1]
        %v774 = vpack.c.bf16 %v771, %v770
        %v775 = vpack.c.bf16 %v773, %v772
        %s776 = scalar_lea.vmem %s1, 72
        %v777 = vld [vmem:[%s776] sm:$0xff]
        %v778 = vld [vmem:[%s776 + $0x8] sm:$0xf]
        %v779 = vld [vmem:[%s776 + $0xc] sm:$0x77]
        %v780 = vld [vmem:[%s776 + $0x14] sm:$0x7]
        %v785 = vunpack.c.l.b16 %v777
        %v786 = vunpack.c.h.b16 %v777
        %v787 = vunpack.c.l.b16 %v778
        %v788 = vunpack.c.l.b16 %v779
        %v789 = vunpack.c.h.b16 %v779
        %v790 = vunpack.c.l.b16 %v780
        %v791 = vpack.c.b16 %v788, %v785
        %v792 = vpack.c.b16 %v789, %v786
        %v793 = vpack.c.b16 %v790, %v787
        %v795 = vsel %vm365, %v774, 0
        %v798 = vsel %vm365, %v775, 0
        %v801 = vand.u32 %v791, %v375
        %v804 = vand.u32 %v792, %v375
        %v807 = vand.u32 %v793, %v375
        %809 = vmatprep.subr.bf16.mxu0 0
        %810 = vmatpush1.bf16.msra.mxu0 0
        %811 = vmatprep.subr.bf16.mxu0 0
        %812 = vmatpush1.bf16.msra.mxu0 0
        %813 = vmatprep.subr.bf16.mxu0 0
        %814 = vmatpush1.bf16.msra.mxu0 0
        %815 = vmatprep.subr.bf16.mxu0 0
        %816 = vmatpush1.bf16.msra.mxu0 0
        %817 = vmatprep.subr.bf16.mxu0 0
        %818 = vmatpush1.bf16.msra.mxu0 0
        %819 = vmatprep.subr.bf16.mxu0 0
        %820 = vmatpush1.bf16.msra.mxu0 0
        %821 = vmatprep.subr.bf16.mxu0 0
        %822 = vmatpush1.bf16.msra.mxu0 0
        %823 = vmatprep.subr.bf16.mxu0 %v804
        %824 = vmatpush1.bf16.msra.mxu0 %v801
        %825 = vmatprep.subr.bf16.mxu0 0
        %826 = vmatpush2.bf16.msra.mxu0 0
        %827 = vmatprep.subr.bf16.mxu0 0
        %828 = vmatpush2.bf16.msra.mxu0 0
        %829 = vmatprep.subr.bf16.mxu0 0
        %830 = vmatpush2.bf16.msra.mxu0 0
        %831 = vmatprep.subr.bf16.mxu0 0
        %832 = vmatpush2.bf16.msra.mxu0 0
        %833 = vmatprep.subr.bf16.mxu0 0
        %834 = vmatpush2.bf16.msra.mxu0 0
        %835 = vmatprep.subr.bf16.mxu0 0
        %836 = vmatpush2.bf16.msra.mxu0 0
        %837 = vmatprep.subr.bf16.mxu0 0
        %838 = vmatpush2.bf16.msra.mxu0 0
        %839 = vmatprep.subr.bf16.mxu0 0
        %840 = vmatpush2.bf16.msra.mxu0 0
        %841 = vmatprep.mubr.bf16.mxu0 0
        %842 = vmatmul.mubr.bf16.gmra.mxu0 %v795
        %v843 = vpop.f32.mrf.mxu0
        %v844 = vadd.f32 0.0, %v843
        %v845 = vpop.f32.mrf.mxu0
        %v846 = vadd.f32 0.0, %v845
        %v847 = vpop.f32.mrf.mxu0
        %v848 = vadd.f32 0.0, %v847
        %v849 = vpop.f32.mrf.mxu0
        %v850 = vadd.f32 0.0, %v849
        %851 = vmatprep.mubr.bf16.mxu0 0
        %852 = vmatmul.mubr.bf16.gmra.mxu0 %v798
        %v853 = vpop.f32.mrf.mxu0
        %v854 = vadd.f32 0.0, %v853
        %v855 = vpop.f32.mrf.mxu0
        %v856 = vadd.f32 0.0, %v855
        %v857 = vpop.f32.mrf.mxu0
        %v858 = vadd.f32 0.0, %v857
        %v859 = vpop.f32.mrf.mxu0
        %v860 = vadd.f32 0.0, %v859
        %861 = vdwg.mxu0
        %862 = vmatprep.subr.bf16.mxu0 0
        %863 = vmatpush1.bf16.msra.mxu0 0
        %864 = vmatprep.subr.bf16.mxu0 0
        %865 = vmatpush1.bf16.msra.mxu0 0
        %866 = vmatprep.subr.bf16.mxu0 0
        %867 = vmatpush1.bf16.msra.mxu0 0
        %868 = vmatprep.subr.bf16.mxu0 0
        %869 = vmatpush1.bf16.msra.mxu0 0
        %870 = vmatprep.subr.bf16.mxu0 0
        %871 = vmatpush1.bf16.msra.mxu0 0
        %872 = vmatprep.subr.bf16.mxu0 0
        %873 = vmatpush1.bf16.msra.mxu0 0
        %874 = vmatprep.subr.bf16.mxu0 0
        %875 = vmatpush1.bf16.msra.mxu0 0
        %876 = vmatprep.subr.bf16.mxu0 0
        %877 = vmatpush1.bf16.msra.mxu0 %v807
        %878 = vmatprep.subr.bf16.mxu0 0
        %879 = vmatpush2.bf16.msra.mxu0 0
        %880 = vmatprep.subr.bf16.mxu0 0
        %881 = vmatpush2.bf16.msra.mxu0 0
        %882 = vmatprep.subr.bf16.mxu0 0
        %883 = vmatpush2.bf16.msra.mxu0 0
        %884 = vmatprep.subr.bf16.mxu0 0
        %885 = vmatpush2.bf16.msra.mxu0 0
        %886 = vmatprep.subr.bf16.mxu0 0
        %887 = vmatpush2.bf16.msra.mxu0 0
        %888 = vmatprep.subr.bf16.mxu0 0
        %889 = vmatpush2.bf16.msra.mxu0 0
        %890 = vmatprep.subr.bf16.mxu0 0
        %891 = vmatpush2.bf16.msra.mxu0 0
        %892 = vmatprep.subr.bf16.mxu0 0
        %893 = vmatpush2.bf16.msra.mxu0 0
        %894 = vmatprep.mubr.bf16.mxu0 0
        %895 = vmatmul.mubr.bf16.gmra.mxu0 %v795
        %v896 = vpop.f32.mrf.mxu0
        %v897 = vadd.f32 0.0, %v896
        %v898 = vpop.f32.mrf.mxu0
        %v899 = vpop.f32.mrf.mxu0
        %v900 = vadd.f32 0.0, %v899
        %v901 = vpop.f32.mrf.mxu0
        %902 = vmatprep.mubr.bf16.mxu0 0
        %903 = vmatmul.mubr.bf16.gmra.mxu0 %v798
        %v904 = vpop.f32.mrf.mxu0
        %v905 = vadd.f32 0.0, %v904
        %v906 = vpop.f32.mrf.mxu0
        %v907 = vpop.f32.mrf.mxu0
        %v908 = vadd.f32 0.0, %v907
        %v909 = vpop.f32.mrf.mxu0
        %910 = vdwg.mxu0
        %v911 = vadd.f32 %v758, %v844
        %v912 = vadd.f32 %v759, %v846
        %v913 = vadd.f32 %v760, %v897
        %v914 = vadd.f32 %v761, %v848
        %v915 = vadd.f32 %v762, %v850
        %v916 = vadd.f32 %v763, %v900
        %v917 = vadd.f32 %v764, %v854
        %v918 = vadd.f32 %v765, %v856
        %v919 = vadd.f32 %v766, %v905
        %v920 = vadd.f32 %v767, %v858
        %v921 = vadd.f32 %v768, %v860
        %v922 = vadd.f32 %v769, %v908
        %v923 = vld [vmem:[%s329 + $0x4] sm:$0xff]
        %v924 = vld [vmem:[%s329 + $0xc] sm:$0xff]
        %v925 = vld [vmem:[%s329 + $0x14] sm:$0xff]
        %v926 = vld [vmem:[%s329 + $0x1c] sm:$0x1]
        %v927 = vpack.c.bf16 %v924, %v923
        %v928 = vpack.c.bf16 %v926, %v925
        %s929 = scalar_lea.vmem %s1, 96
        %v930 = vld [vmem:[%s929] sm:$0xff]
        %v931 = vld [vmem:[%s929 + $0x8] sm:$0xf]
        %v932 = vld [vmem:[%s929 + $0xc] sm:$0x77]
        %v933 = vld [vmem:[%s929 + $0x14] sm:$0x7]
        %v938 = vunpack.c.l.b16 %v930
        %v939 = vunpack.c.h.b16 %v930
        %v940 = vunpack.c.l.b16 %v931
        %v941 = vunpack.c.l.b16 %v932
        %v942 = vunpack.c.h.b16 %v932
        %v943 = vunpack.c.l.b16 %v933
        %v944 = vpack.c.b16 %v941, %v938
        %v945 = vpack.c.b16 %v942, %v939
        %v946 = vpack.c.b16 %v943, %v940
        %v948 = vsel %vm365, %v927, 0
        %v951 = vsel %vm365, %v928, 0
        %v954 = vand.u32 %v944, %v375
        %v957 = vand.u32 %v945, %v375
        %v960 = vand.u32 %v946, %v375
        %962 = vmatprep.subr.bf16.mxu0 0
        %963 = vmatpush1.bf16.msra.mxu0 0
        %964 = vmatprep.subr.bf16.mxu0 0
        %965 = vmatpush1.bf16.msra.mxu0 0
        %966 = vmatprep.subr.bf16.mxu0 0
        %967 = vmatpush1.bf16.msra.mxu0 0
        %968 = vmatprep.subr.bf16.mxu0 0
        %969 = vmatpush1.bf16.msra.mxu0 0
        %970 = vmatprep.subr.bf16.mxu0 0
        %971 = vmatpush1.bf16.msra.mxu0 0
        %972 = vmatprep.subr.bf16.mxu0 0
        %973 = vmatpush1.bf16.msra.mxu0 0
        %974 = vmatprep.subr.bf16.mxu0 0
        %975 = vmatpush1.bf16.msra.mxu0 0
        %976 = vmatprep.subr.bf16.mxu0 %v957
        %977 = vmatpush1.bf16.msra.mxu0 %v954
        %978 = vmatprep.subr.bf16.mxu0 0
        %979 = vmatpush2.bf16.msra.mxu0 0
        %980 = vmatprep.subr.bf16.mxu0 0
        %981 = vmatpush2.bf16.msra.mxu0 0
        %982 = vmatprep.subr.bf16.mxu0 0
        %983 = vmatpush2.bf16.msra.mxu0 0
        %984 = vmatprep.subr.bf16.mxu0 0
        %985 = vmatpush2.bf16.msra.mxu0 0
        %986 = vmatprep.subr.bf16.mxu0 0
        %987 = vmatpush2.bf16.msra.mxu0 0
        %988 = vmatprep.subr.bf16.mxu0 0
        %989 = vmatpush2.bf16.msra.mxu0 0
        %990 = vmatprep.subr.bf16.mxu0 0
        %991 = vmatpush2.bf16.msra.mxu0 0
        %992 = vmatprep.subr.bf16.mxu0 0
        %993 = vmatpush2.bf16.msra.mxu0 0
        %994 = vmatprep.mubr.bf16.mxu0 0
        %995 = vmatmul.mubr.bf16.gmra.mxu0 %v948
        %v996 = vpop.f32.mrf.mxu0
        %v997 = vadd.f32 0.0, %v996
        %v998 = vpop.f32.mrf.mxu0
        %v999 = vadd.f32 0.0, %v998
        %v1000 = vpop.f32.mrf.mxu0
        %v1001 = vadd.f32 0.0, %v1000
        %v1002 = vpop.f32.mrf.mxu0
        %v1003 = vadd.f32 0.0, %v1002
        %1004 = vmatprep.mubr.bf16.mxu0 0
        %1005 = vmatmul.mubr.bf16.gmra.mxu0 %v951
        %v1006 = vpop.f32.mrf.mxu0
        %v1007 = vadd.f32 0.0, %v1006
        %v1008 = vpop.f32.mrf.mxu0
        %v1009 = vadd.f32 0.0, %v1008
        %v1010 = vpop.f32.mrf.mxu0
        %v1011 = vadd.f32 0.0, %v1010
        %v1012 = vpop.f32.mrf.mxu0
        %v1013 = vadd.f32 0.0, %v1012
        %1014 = vdwg.mxu0
        %1015 = vmatprep.subr.bf16.mxu0 0
        %1016 = vmatpush1.bf16.msra.mxu0 0
        %1017 = vmatprep.subr.bf16.mxu0 0
        %1018 = vmatpush1.bf16.msra.mxu0 0
        %1019 = vmatprep.subr.bf16.mxu0 0
        %1020 = vmatpush1.bf16.msra.mxu0 0
        %1021 = vmatprep.subr.bf16.mxu0 0
        %1022 = vmatpush1.bf16.msra.mxu0 0
        %1023 = vmatprep.subr.bf16.mxu0 0
        %1024 = vmatpush1.bf16.msra.mxu0 0
        %1025 = vmatprep.subr.bf16.mxu0 0
        %1026 = vmatpush1.bf16.msra.mxu0 0
        %1027 = vmatprep.subr.bf16.mxu0 0
        %1028 = vmatpush1.bf16.msra.mxu0 0
        %1029 = vmatprep.subr.bf16.mxu0 0
        %1030 = vmatpush1.bf16.msra.mxu0 %v960
        %1031 = vmatprep.subr.bf16.mxu0 0
        %1032 = vmatpush2.bf16.msra.mxu0 0
        %1033 = vmatprep.subr.bf16.mxu0 0
        %1034 = vmatpush2.bf16.msra.mxu0 0
        %1035 = vmatprep.subr.bf16.mxu0 0
        %1036 = vmatpush2.bf16.msra.mxu0 0
        %1037 = vmatprep.subr.bf16.mxu0 0
        %1038 = vmatpush2.bf16.msra.mxu0 0
        %1039 = vmatprep.subr.bf16.mxu0 0
        %1040 = vmatpush2.bf16.msra.mxu0 0
        %1041 = vmatprep.subr.bf16.mxu0 0
        %1042 = vmatpush2.bf16.msra.mxu0 0
        %1043 = vmatprep.subr.bf16.mxu0 0
        %1044 = vmatpush2.bf16.msra.mxu0 0
        %1045 = vmatprep.subr.bf16.mxu0 0
        %1046 = vmatpush2.bf16.msra.mxu0 0
        %1047 = vmatprep.mubr.bf16.mxu0 0
        %1048 = vmatmul.mubr.bf16.gmra.mxu0 %v948
        %v1049 = vpop.f32.mrf.mxu0
        %v1050 = vadd.f32 0.0, %v1049
        %v1051 = vpop.f32.mrf.mxu0
        %v1052 = vpop.f32.mrf.mxu0
        %v1053 = vadd.f32 0.0, %v1052
        %v1054 = vpop.f32.mrf.mxu0
        %1055 = vmatprep.mubr.bf16.mxu0 0
        %1056 = vmatmul.mubr.bf16.gmra.mxu0 %v951
        %v1057 = vpop.f32.mrf.mxu0
        %v1058 = vadd.f32 0.0, %v1057
        %v1059 = vpop.f32.mrf.mxu0
        %v1060 = vpop.f32.mrf.mxu0
        %v1061 = vadd.f32 0.0, %v1060
        %v1062 = vpop.f32.mrf.mxu0
        %1063 = vdwg.mxu0
        %v1064 = vadd.f32 %v911, %v997
        %v1065 = vadd.f32 %v912, %v999
        %v1066 = vadd.f32 %v913, %v1050
        %v1067 = vadd.f32 %v914, %v1001
        %v1068 = vadd.f32 %v915, %v1003
        %v1069 = vadd.f32 %v916, %v1053
        %v1070 = vadd.f32 %v917, %v1007
        %v1071 = vadd.f32 %v918, %v1009
        %v1072 = vadd.f32 %v919, %v1058
        %v1073 = vadd.f32 %v920, %v1011
        %v1074 = vadd.f32 %v921, %v1013
        %v1075 = vadd.f32 %v922, %v1061
        %v1076 = vld [vmem:[%s329 + $0x5] sm:$0xff]
        %v1077 = vld [vmem:[%s329 + $0xd] sm:$0xff]
        %v1078 = vld [vmem:[%s329 + $0x15] sm:$0xff]
        %v1079 = vld [vmem:[%s329 + $0x1d] sm:$0x1]
        %v1080 = vpack.c.bf16 %v1077, %v1076
        %v1081 = vpack.c.bf16 %v1079, %v1078
        %s1082 = scalar_lea.vmem %s1, 120
        %v1083 = vld [vmem:[%s1082] sm:$0xff]
        %v1084 = vld [vmem:[%s1082 + $0x8] sm:$0xf]
        %v1085 = vld [vmem:[%s1082 + $0xc] sm:$0x77]
        %v1086 = vld [vmem:[%s1082 + $0x14] sm:$0x7]
        %v1091 = vunpack.c.l.b16 %v1083
        %v1092 = vunpack.c.h.b16 %v1083
        %v1093 = vunpack.c.l.b16 %v1084
        %v1094 = vunpack.c.l.b16 %v1085
        %v1095 = vunpack.c.h.b16 %v1085
        %v1096 = vunpack.c.l.b16 %v1086
        %v1097 = vpack.c.b16 %v1094, %v1091
        %v1098 = vpack.c.b16 %v1095, %v1092
        %v1099 = vpack.c.b16 %v1096, %v1093
        %v1101 = vsel %vm365, %v1080, 0
        %v1104 = vsel %vm365, %v1081, 0
        %v1107 = vand.u32 %v1097, %v375
        %v1110 = vand.u32 %v1098, %v375
        %v1113 = vand.u32 %v1099, %v375
        %1115 = vmatprep.subr.bf16.mxu0 0
        %1116 = vmatpush1.bf16.msra.mxu0 0
        %1117 = vmatprep.subr.bf16.mxu0 0
        %1118 = vmatpush1.bf16.msra.mxu0 0
        %1119 = vmatprep.subr.bf16.mxu0 0
        %1120 = vmatpush1.bf16.msra.mxu0 0
        %1121 = vmatprep.subr.bf16.mxu0 0
        %1122 = vmatpush1.bf16.msra.mxu0 0
        %1123 = vmatprep.subr.bf16.mxu0 0
        %1124 = vmatpush1.bf16.msra.mxu0 0
        %1125 = vmatprep.subr.bf16.mxu0 0
        %1126 = vmatpush1.bf16.msra.mxu0 0
        %1127 = vmatprep.subr.bf16.mxu0 0
        %1128 = vmatpush1.bf16.msra.mxu0 0
        %1129 = vmatprep.subr.bf16.mxu0 %v1110
        %1130 = vmatpush1.bf16.msra.mxu0 %v1107
        %1131 = vmatprep.subr.bf16.mxu0 0
        %1132 = vmatpush2.bf16.msra.mxu0 0
        %1133 = vmatprep.subr.bf16.mxu0 0
        %1134 = vmatpush2.bf16.msra.mxu0 0
        %1135 = vmatprep.subr.bf16.mxu0 0
        %1136 = vmatpush2.bf16.msra.mxu0 0
        %1137 = vmatprep.subr.bf16.mxu0 0
        %1138 = vmatpush2.bf16.msra.mxu0 0
        %1139 = vmatprep.subr.bf16.mxu0 0
        %1140 = vmatpush2.bf16.msra.mxu0 0
        %1141 = vmatprep.subr.bf16.mxu0 0
        %1142 = vmatpush2.bf16.msra.mxu0 0
        %1143 = vmatprep.subr.bf16.mxu0 0
        %1144 = vmatpush2.bf16.msra.mxu0 0
        %1145 = vmatprep.subr.bf16.mxu0 0
        %1146 = vmatpush2.bf16.msra.mxu0 0
        %1147 = vmatprep.mubr.bf16.mxu0 0
        %1148 = vmatmul.mubr.bf16.gmra.mxu0 %v1101
        %v1149 = vpop.f32.mrf.mxu0
        %v1150 = vadd.f32 0.0, %v1149
        %v1151 = vpop.f32.mrf.mxu0
        %v1152 = vadd.f32 0.0, %v1151
        %v1153 = vpop.f32.mrf.mxu0
        %v1154 = vadd.f32 0.0, %v1153
        %v1155 = vpop.f32.mrf.mxu0
        %v1156 = vadd.f32 0.0, %v1155
        %1157 = vmatprep.mubr.bf16.mxu0 0
        %1158 = vmatmul.mubr.bf16.gmra.mxu0 %v1104
        %v1159 = vpop.f32.mrf.mxu0
        %v1160 = vadd.f32 0.0, %v1159
        %v1161 = vpop.f32.mrf.mxu0
        %v1162 = vadd.f32 0.0, %v1161
        %v1163 = vpop.f32.mrf.mxu0
        %v1164 = vadd.f32 0.0, %v1163
        %v1165 = vpop.f32.mrf.mxu0
        %v1166 = vadd.f32 0.0, %v1165
        %1167 = vdwg.mxu0
        %1168 = vmatprep.subr.bf16.mxu0 0
        %1169 = vmatpush1.bf16.msra.mxu0 0
        %1170 = vmatprep.subr.bf16.mxu0 0
        %1171 = vmatpush1.bf16.msra.mxu0 0
        %1172 = vmatprep.subr.bf16.mxu0 0
        %1173 = vmatpush1.bf16.msra.mxu0 0
        %1174 = vmatprep.subr.bf16.mxu0 0
        %1175 = vmatpush1.bf16.msra.mxu0 0
        %1176 = vmatprep.subr.bf16.mxu0 0
        %1177 = vmatpush1.bf16.msra.mxu0 0
        %1178 = vmatprep.subr.bf16.mxu0 0
        %1179 = vmatpush1.bf16.msra.mxu0 0
        %1180 = vmatprep.subr.bf16.mxu0 0
        %1181 = vmatpush1.bf16.msra.mxu0 0
        %1182 = vmatprep.subr.bf16.mxu0 0
        %1183 = vmatpush1.bf16.msra.mxu0 %v1113
        %1184 = vmatprep.subr.bf16.mxu0 0
        %1185 = vmatpush2.bf16.msra.mxu0 0
        %1186 = vmatprep.subr.bf16.mxu0 0
        %1187 = vmatpush2.bf16.msra.mxu0 0
        %1188 = vmatprep.subr.bf16.mxu0 0
        %1189 = vmatpush2.bf16.msra.mxu0 0
        %1190 = vmatprep.subr.bf16.mxu0 0
        %1191 = vmatpush2.bf16.msra.mxu0 0
        %1192 = vmatprep.subr.bf16.mxu0 0
        %1193 = vmatpush2.bf16.msra.mxu0 0
        %1194 = vmatprep.subr.bf16.mxu0 0
        %1195 = vmatpush2.bf16.msra.mxu0 0
        %1196 = vmatprep.subr.bf16.mxu0 0
        %1197 = vmatpush2.bf16.msra.mxu0 0
        %1198 = vmatprep.subr.bf16.mxu0 0
        %1199 = vmatpush2.bf16.msra.mxu0 0
        %1200 = vmatprep.mubr.bf16.mxu0 0
        %1201 = vmatmul.mubr.bf16.gmra.mxu0 %v1101
        %v1202 = vpop.f32.mrf.mxu0
        %v1203 = vadd.f32 0.0, %v1202
        %v1204 = vpop.f32.mrf.mxu0
        %v1205 = vpop.f32.mrf.mxu0
        %v1206 = vadd.f32 0.0, %v1205
        %v1207 = vpop.f32.mrf.mxu0
        %1208 = vmatprep.mubr.bf16.mxu0 0
        %1209 = vmatmul.mubr.bf16.gmra.mxu0 %v1104
        %v1210 = vpop.f32.mrf.mxu0
        %v1211 = vadd.f32 0.0, %v1210
        %v1212 = vpop.f32.mrf.mxu0
        %v1213 = vpop.f32.mrf.mxu0
        %v1214 = vadd.f32 0.0, %v1213
        %v1215 = vpop.f32.mrf.mxu0
        %1216 = vdwg.mxu0
        %v1217 = vadd.f32 %v1064, %v1150
        %v1218 = vadd.f32 %v1065, %v1152
        %v1219 = vadd.f32 %v1066, %v1203
        %v1220 = vadd.f32 %v1067, %v1154
        %v1221 = vadd.f32 %v1068, %v1156
        %v1222 = vadd.f32 %v1069, %v1206
        %v1223 = vadd.f32 %v1070, %v1160
        %v1224 = vadd.f32 %v1071, %v1162
        %v1225 = vadd.f32 %v1072, %v1211
        %v1226 = vadd.f32 %v1073, %v1164
        %v1227 = vadd.f32 %v1074, %v1166
        %v1228 = vadd.f32 %v1075, %v1214
        %v1229 = vld [vmem:[%s329 + $0x6] sm:$0xff]
        %v1230 = vld [vmem:[%s329 + $0xe] sm:$0xff]
        %v1231 = vld [vmem:[%s329 + $0x16] sm:$0xff]
        %v1232 = vld [vmem:[%s329 + $0x1e] sm:$0x1]
        %v1233 = vpack.c.bf16 %v1230, %v1229
        %v1234 = vpack.c.bf16 %v1232, %v1231
        %s1235 = scalar_lea.vmem %s1, 144
        %v1236 = vld [vmem:[%s1235] sm:$0xff]
        %v1237 = vld [vmem:[%s1235 + $0x8] sm:$0xf]
        %v1238 = vld [vmem:[%s1235 + $0xc] sm:$0x77]
        %v1239 = vld [vmem:[%s1235 + $0x14] sm:$0x7]
        %v1244 = vunpack.c.l.b16 %v1236
        %v1245 = vunpack.c.h.b16 %v1236
        %v1246 = vunpack.c.l.b16 %v1237
        %v1247 = vunpack.c.l.b16 %v1238
        %v1248 = vunpack.c.h.b16 %v1238
        %v1249 = vunpack.c.l.b16 %v1239
        %v1250 = vpack.c.b16 %v1247, %v1244
        %v1251 = vpack.c.b16 %v1248, %v1245
        %v1252 = vpack.c.b16 %v1249, %v1246
        %v1254 = vsel %vm365, %v1233, 0
        %v1257 = vsel %vm365, %v1234, 0
        %v1260 = vand.u32 %v1250, %v375
        %v1263 = vand.u32 %v1251, %v375
        %v1266 = vand.u32 %v1252, %v375
        %1268 = vmatprep.subr.bf16.mxu0 0
        %1269 = vmatpush1.bf16.msra.mxu0 0
        %1270 = vmatprep.subr.bf16.mxu0 0
        %1271 = vmatpush1.bf16.msra.mxu0 0
        %1272 = vmatprep.subr.bf16.mxu0 0
        %1273 = vmatpush1.bf16.msra.mxu0 0
        %1274 = vmatprep.subr.bf16.mxu0 0
        %1275 = vmatpush1.bf16.msra.mxu0 0
        %1276 = vmatprep.subr.bf16.mxu0 0
        %1277 = vmatpush1.bf16.msra.mxu0 0
        %1278 = vmatprep.subr.bf16.mxu0 0
        %1279 = vmatpush1.bf16.msra.mxu0 0
        %1280 = vmatprep.subr.bf16.mxu0 0
        %1281 = vmatpush1.bf16.msra.mxu0 0
        %1282 = vmatprep.subr.bf16.mxu0 %v1263
        %1283 = vmatpush1.bf16.msra.mxu0 %v1260
        %1284 = vmatprep.subr.bf16.mxu0 0
        %1285 = vmatpush2.bf16.msra.mxu0 0
        %1286 = vmatprep.subr.bf16.mxu0 0
        %1287 = vmatpush2.bf16.msra.mxu0 0
        %1288 = vmatprep.subr.bf16.mxu0 0
        %1289 = vmatpush2.bf16.msra.mxu0 0
        %1290 = vmatprep.subr.bf16.mxu0 0
        %1291 = vmatpush2.bf16.msra.mxu0 0
        %1292 = vmatprep.subr.bf16.mxu0 0
        %1293 = vmatpush2.bf16.msra.mxu0 0
        %1294 = vmatprep.subr.bf16.mxu0 0
        %1295 = vmatpush2.bf16.msra.mxu0 0
        %1296 = vmatprep.subr.bf16.mxu0 0
        %1297 = vmatpush2.bf16.msra.mxu0 0
        %1298 = vmatprep.subr.bf16.mxu0 0
        %1299 = vmatpush2.bf16.msra.mxu0 0
        %1300 = vmatprep.mubr.bf16.mxu0 0
        %1301 = vmatmul.mubr.bf16.gmra.mxu0 %v1254
        %v1302 = vpop.f32.mrf.mxu0
        %v1303 = vadd.f32 0.0, %v1302
        %v1304 = vpop.f32.mrf.mxu0
        %v1305 = vadd.f32 0.0, %v1304
        %v1306 = vpop.f32.mrf.mxu0
        %v1307 = vadd.f32 0.0, %v1306
        %v1308 = vpop.f32.mrf.mxu0
        %v1309 = vadd.f32 0.0, %v1308
        %1310 = vmatprep.mubr.bf16.mxu0 0
        %1311 = vmatmul.mubr.bf16.gmra.mxu0 %v1257
        %v1312 = vpop.f32.mrf.mxu0
        %v1313 = vadd.f32 0.0, %v1312
        %v1314 = vpop.f32.mrf.mxu0
        %v1315 = vadd.f32 0.0, %v1314
        %v1316 = vpop.f32.mrf.mxu0
        %v1317 = vadd.f32 0.0, %v1316
        %v1318 = vpop.f32.mrf.mxu0
        %v1319 = vadd.f32 0.0, %v1318
        %1320 = vdwg.mxu0
        %1321 = vmatprep.subr.bf16.mxu0 0
        %1322 = vmatpush1.bf16.msra.mxu0 0
        %1323 = vmatprep.subr.bf16.mxu0 0
        %1324 = vmatpush1.bf16.msra.mxu0 0
        %1325 = vmatprep.subr.bf16.mxu0 0
        %1326 = vmatpush1.bf16.msra.mxu0 0
        %1327 = vmatprep.subr.bf16.mxu0 0
        %1328 = vmatpush1.bf16.msra.mxu0 0
        %1329 = vmatprep.subr.bf16.mxu0 0
        %1330 = vmatpush1.bf16.msra.mxu0 0
        %1331 = vmatprep.subr.bf16.mxu0 0
        %1332 = vmatpush1.bf16.msra.mxu0 0
        %1333 = vmatprep.subr.bf16.mxu0 0
        %1334 = vmatpush1.bf16.msra.mxu0 0
        %1335 = vmatprep.subr.bf16.mxu0 0
        %1336 = vmatpush1.bf16.msra.mxu0 %v1266
        %1337 = vmatprep.subr.bf16.mxu0 0
        %1338 = vmatpush2.bf16.msra.mxu0 0
        %1339 = vmatprep.subr.bf16.mxu0 0
        %1340 = vmatpush2.bf16.msra.mxu0 0
        %1341 = vmatprep.subr.bf16.mxu0 0
        %1342 = vmatpush2.bf16.msra.mxu0 0
        %1343 = vmatprep.subr.bf16.mxu0 0
        %1344 = vmatpush2.bf16.msra.mxu0 0
        %1345 = vmatprep.subr.bf16.mxu0 0
        %1346 = vmatpush2.bf16.msra.mxu0 0
        %1347 = vmatprep.subr.bf16.mxu0 0
        %1348 = vmatpush2.bf16.msra.mxu0 0
        %1349 = vmatprep.subr.bf16.mxu0 0
        %1350 = vmatpush2.bf16.msra.mxu0 0
        %1351 = vmatprep.subr.bf16.mxu0 0
        %1352 = vmatpush2.bf16.msra.mxu0 0
        %1353 = vmatprep.mubr.bf16.mxu0 0
        %1354 = vmatmul.mubr.bf16.gmra.mxu0 %v1254
        %v1355 = vpop.f32.mrf.mxu0
        %v1356 = vadd.f32 0.0, %v1355
        %v1357 = vpop.f32.mrf.mxu0
        %v1358 = vpop.f32.mrf.mxu0
        %v1359 = vadd.f32 0.0, %v1358
        %v1360 = vpop.f32.mrf.mxu0
        %1361 = vmatprep.mubr.bf16.mxu0 0
        %1362 = vmatmul.mubr.bf16.gmra.mxu0 %v1257
        %v1363 = vpop.f32.mrf.mxu0
        %v1364 = vadd.f32 0.0, %v1363
        %v1365 = vpop.f32.mrf.mxu0
        %v1366 = vpop.f32.mrf.mxu0
        %v1367 = vadd.f32 0.0, %v1366
        %v1368 = vpop.f32.mrf.mxu0
        %1369 = vdwg.mxu0
        %v1370 = vadd.f32 %v1217, %v1303
        %v1371 = vadd.f32 %v1218, %v1305
        %v1372 = vadd.f32 %v1219, %v1356
        %v1373 = vadd.f32 %v1220, %v1307
        %v1374 = vadd.f32 %v1221, %v1309
        %v1375 = vadd.f32 %v1222, %v1359
        %v1376 = vadd.f32 %v1223, %v1313
        %v1377 = vadd.f32 %v1224, %v1315
        %v1378 = vadd.f32 %v1225, %v1364
        %v1379 = vadd.f32 %v1226, %v1317
        %v1380 = vadd.f32 %v1227, %v1319
        %v1381 = vadd.f32 %v1228, %v1367
        %v1382 = vld [vmem:[%s329 + $0x7] sm:$0xff]
        %v1383 = vld [vmem:[%s329 + $0xf] sm:$0xff]
        %v1384 = vld [vmem:[%s329 + $0x17] sm:$0xff]
        %v1385 = vld [vmem:[%s329 + $0x1f] sm:$0x1]
        %v1386 = vpack.c.bf16 %v1383, %v1382
        %v1387 = vpack.c.bf16 %v1385, %v1384
        %s1388 = scalar_lea.vmem %s1, 168
        %v1389 = vld [vmem:[%s1388] sm:$0xff]
        %v1390 = vld [vmem:[%s1388 + $0x8] sm:$0xf]
        %v1391 = vld [vmem:[%s1388 + $0xc] sm:$0x77]
        %v1392 = vld [vmem:[%s1388 + $0x14] sm:$0x7]
        %v1397 = vunpack.c.l.b16 %v1389
        %v1398 = vunpack.c.h.b16 %v1389
        %v1399 = vunpack.c.l.b16 %v1390
        %v1400 = vunpack.c.l.b16 %v1391
        %v1401 = vunpack.c.h.b16 %v1391
        %v1402 = vunpack.c.l.b16 %v1392
        %v1403 = vpack.c.b16 %v1400, %v1397
        %v1404 = vpack.c.b16 %v1401, %v1398
        %v1405 = vpack.c.b16 %v1402, %v1399
        %v1407 = vsel %vm365, %v1386, 0
        %v1410 = vsel %vm365, %v1387, 0
        %v1413 = vand.u32 %v1403, %v375
        %v1416 = vand.u32 %v1404, %v375
        %v1419 = vand.u32 %v1405, %v375
        %1421 = vmatprep.subr.bf16.mxu0 0
        %1422 = vmatpush1.bf16.msra.mxu0 0
        %1423 = vmatprep.subr.bf16.mxu0 0
        %1424 = vmatpush1.bf16.msra.mxu0 0
        %1425 = vmatprep.subr.bf16.mxu0 0
        %1426 = vmatpush1.bf16.msra.mxu0 0
        %1427 = vmatprep.subr.bf16.mxu0 0
        %1428 = vmatpush1.bf16.msra.mxu0 0
        %1429 = vmatprep.subr.bf16.mxu0 0
        %1430 = vmatpush1.bf16.msra.mxu0 0
        %1431 = vmatprep.subr.bf16.mxu0 0
        %1432 = vmatpush1.bf16.msra.mxu0 0
        %1433 = vmatprep.subr.bf16.mxu0 0
        %1434 = vmatpush1.bf16.msra.mxu0 0
        %1435 = vmatprep.subr.bf16.mxu0 %v1416
        %1436 = vmatpush1.bf16.msra.mxu0 %v1413
        %1437 = vmatprep.subr.bf16.mxu0 0
        %1438 = vmatpush2.bf16.msra.mxu0 0
        %1439 = vmatprep.subr.bf16.mxu0 0
        %1440 = vmatpush2.bf16.msra.mxu0 0
        %1441 = vmatprep.subr.bf16.mxu0 0
        %1442 = vmatpush2.bf16.msra.mxu0 0
        %1443 = vmatprep.subr.bf16.mxu0 0
        %1444 = vmatpush2.bf16.msra.mxu0 0
        %1445 = vmatprep.subr.bf16.mxu0 0
        %1446 = vmatpush2.bf16.msra.mxu0 0
        %1447 = vmatprep.subr.bf16.mxu0 0
        %1448 = vmatpush2.bf16.msra.mxu0 0
        %1449 = vmatprep.subr.bf16.mxu0 0
        %1450 = vmatpush2.bf16.msra.mxu0 0
        %1451 = vmatprep.subr.bf16.mxu0 0
        %1452 = vmatpush2.bf16.msra.mxu0 0
        %1453 = vmatprep.mubr.bf16.mxu0 0
        %1454 = vmatmul.mubr.bf16.gmra.mxu0 %v1407
        %v1455 = vpop.f32.mrf.mxu0
        %v1456 = vadd.f32 0.0, %v1455
        %v1457 = vpop.f32.mrf.mxu0
        %v1458 = vadd.f32 0.0, %v1457
        %v1459 = vpop.f32.mrf.mxu0
        %v1460 = vadd.f32 0.0, %v1459
        %v1461 = vpop.f32.mrf.mxu0
        %v1462 = vadd.f32 0.0, %v1461
        %1463 = vmatprep.mubr.bf16.mxu0 0
        %1464 = vmatmul.mubr.bf16.gmra.mxu0 %v1410
        %v1465 = vpop.f32.mrf.mxu0
        %v1466 = vadd.f32 0.0, %v1465
        %v1467 = vpop.f32.mrf.mxu0
        %v1468 = vadd.f32 0.0, %v1467
        %v1469 = vpop.f32.mrf.mxu0
        %v1470 = vadd.f32 0.0, %v1469
        %v1471 = vpop.f32.mrf.mxu0
        %v1472 = vadd.f32 0.0, %v1471
        %1473 = vdwg.mxu0
        %1474 = vmatprep.subr.bf16.mxu0 0
        %1475 = vmatpush1.bf16.msra.mxu0 0
        %1476 = vmatprep.subr.bf16.mxu0 0
        %1477 = vmatpush1.bf16.msra.mxu0 0
        %1478 = vmatprep.subr.bf16.mxu0 0
        %1479 = vmatpush1.bf16.msra.mxu0 0
        %1480 = vmatprep.subr.bf16.mxu0 0
        %1481 = vmatpush1.bf16.msra.mxu0 0
        %1482 = vmatprep.subr.bf16.mxu0 0
        %1483 = vmatpush1.bf16.msra.mxu0 0
        %1484 = vmatprep.subr.bf16.mxu0 0
        %1485 = vmatpush1.bf16.msra.mxu0 0
        %1486 = vmatprep.subr.bf16.mxu0 0
        %1487 = vmatpush1.bf16.msra.mxu0 0
        %1488 = vmatprep.subr.bf16.mxu0 0
        %1489 = vmatpush1.bf16.msra.mxu0 %v1419
        %1490 = vmatprep.subr.bf16.mxu0 0
        %1491 = vmatpush2.bf16.msra.mxu0 0
        %1492 = vmatprep.subr.bf16.mxu0 0
        %1493 = vmatpush2.bf16.msra.mxu0 0
        %1494 = vmatprep.subr.bf16.mxu0 0
        %1495 = vmatpush2.bf16.msra.mxu0 0
        %1496 = vmatprep.subr.bf16.mxu0 0
        %1497 = vmatpush2.bf16.msra.mxu0 0
        %1498 = vmatprep.subr.bf16.mxu0 0
        %1499 = vmatpush2.bf16.msra.mxu0 0
        %1500 = vmatprep.subr.bf16.mxu0 0
        %1501 = vmatpush2.bf16.msra.mxu0 0
        %1502 = vmatprep.subr.bf16.mxu0 0
        %1503 = vmatpush2.bf16.msra.mxu0 0
        %1504 = vmatprep.subr.bf16.mxu0 0
        %1505 = vmatpush2.bf16.msra.mxu0 0
        %1506 = vmatprep.mubr.bf16.mxu0 0
        %1507 = vmatmul.mubr.bf16.gmra.mxu0 %v1407
        %v1508 = vpop.f32.mrf.mxu0
        %v1509 = vadd.f32 0.0, %v1508
        %v1510 = vpop.f32.mrf.mxu0
        %v1511 = vpop.f32.mrf.mxu0
        %v1512 = vadd.f32 0.0, %v1511
        %v1513 = vpop.f32.mrf.mxu0
        %1514 = vmatprep.mubr.bf16.mxu0 0
        %1515 = vmatmul.mubr.bf16.gmra.mxu0 %v1410
        %v1516 = vpop.f32.mrf.mxu0
        %v1517 = vadd.f32 0.0, %v1516
        %v1518 = vpop.f32.mrf.mxu0
        %v1519 = vpop.f32.mrf.mxu0
        %v1520 = vadd.f32 0.0, %v1519
        %v1521 = vpop.f32.mrf.mxu0
        %1522 = vdwg.mxu0
        %v1523 = vadd.f32 %v1370, %v1456
        %v1524 = vadd.f32 %v1371, %v1458
        %v1525 = vadd.f32 %v1372, %v1509
        %v1526 = vadd.f32 %v1373, %v1460
        %v1527 = vadd.f32 %v1374, %v1462
        %v1528 = vadd.f32 %v1375, %v1512
        %v1529 = vadd.f32 %v1376, %v1466
        %v1530 = vadd.f32 %v1377, %v1468
        %v1531 = vadd.f32 %v1378, %v1517
        %v1532 = vadd.f32 %v1379, %v1470
        %v1533 = vadd.f32 %v1380, %v1472
        %v1534 = vadd.f32 %v1381, %v1520
        %v1535 = vld [vmem:[%s329 + $0x8] sm:$0xff]
        %v1536 = vld [vmem:[%s329 + $0x10] sm:$0xff]
        %v1537 = vld [vmem:[%s329 + $0x18] sm:$0xff]
        %v1538 = vld [vmem:[%s329 + $0x20] sm:$0x1]
        %v1539 = vpack.c.bf16 %v1536, %v1535
        %v1540 = vpack.c.bf16 %v1538, %v1537
        %s1541 = scalar_lea.vmem %s1, 192
        %v1542 = vld [vmem:[%s1541] sm:$0xff]
        %v1543 = vld [vmem:[%s1541 + $0x8] sm:$0xf]
        %v1544 = vld [vmem:[%s1541 + $0xc] sm:$0x77]
        %v1545 = vld [vmem:[%s1541 + $0x14] sm:$0x7]
        %v1550 = vunpack.c.l.b16 %v1542
        %v1551 = vunpack.c.h.b16 %v1542
        %v1552 = vunpack.c.l.b16 %v1543
        %v1553 = vunpack.c.l.b16 %v1544
        %v1554 = vunpack.c.h.b16 %v1544
        %v1555 = vunpack.c.l.b16 %v1545
        %v1556 = vpack.c.b16 %v1553, %v1550
        %v1557 = vpack.c.b16 %v1554, %v1551
        %v1558 = vpack.c.b16 %v1555, %v1552
        %v1560 = vsel %vm365, %v1539, 0
        %v1563 = vsel %vm365, %v1540, 0
        %v1566 = vand.u32 %v1556, %v375
        %v1569 = vand.u32 %v1557, %v375
        %v1572 = vand.u32 %v1558, %v375
        %1574 = vmatprep.subr.bf16.mxu0 0
        %1575 = vmatpush1.bf16.msra.mxu0 0
        %1576 = vmatprep.subr.bf16.mxu0 0
        %1577 = vmatpush1.bf16.msra.mxu0 0
        %1578 = vmatprep.subr.bf16.mxu0 0
        %1579 = vmatpush1.bf16.msra.mxu0 0
        %1580 = vmatprep.subr.bf16.mxu0 0
        %1581 = vmatpush1.bf16.msra.mxu0 0
        %1582 = vmatprep.subr.bf16.mxu0 0
        %1583 = vmatpush1.bf16.msra.mxu0 0
        %1584 = vmatprep.subr.bf16.mxu0 0
        %1585 = vmatpush1.bf16.msra.mxu0 0
        %1586 = vmatprep.subr.bf16.mxu0 0
        %1587 = vmatpush1.bf16.msra.mxu0 0
        %1588 = vmatprep.subr.bf16.mxu0 %v1569
        %1589 = vmatpush1.bf16.msra.mxu0 %v1566
        %1590 = vmatprep.subr.bf16.mxu0 0
        %1591 = vmatpush2.bf16.msra.mxu0 0
        %1592 = vmatprep.subr.bf16.mxu0 0
        %1593 = vmatpush2.bf16.msra.mxu0 0
        %1594 = vmatprep.subr.bf16.mxu0 0
        %1595 = vmatpush2.bf16.msra.mxu0 0
        %1596 = vmatprep.subr.bf16.mxu0 0
        %1597 = vmatpush2.bf16.msra.mxu0 0
        %1598 = vmatprep.subr.bf16.mxu0 0
        %1599 = vmatpush2.bf16.msra.mxu0 0
        %1600 = vmatprep.subr.bf16.mxu0 0
        %1601 = vmatpush2.bf16.msra.mxu0 0
        %1602 = vmatprep.subr.bf16.mxu0 0
        %1603 = vmatpush2.bf16.msra.mxu0 0
        %1604 = vmatprep.subr.bf16.mxu0 0
        %1605 = vmatpush2.bf16.msra.mxu0 0
        %1606 = vmatprep.mubr.bf16.mxu0 0
        %1607 = vmatmul.mubr.bf16.gmra.mxu0 %v1560
        %v1608 = vpop.f32.mrf.mxu0
        %v1609 = vadd.f32 0.0, %v1608
        %v1610 = vpop.f32.mrf.mxu0
        %v1611 = vadd.f32 0.0, %v1610
        %v1612 = vpop.f32.mrf.mxu0
        %v1613 = vadd.f32 0.0, %v1612
        %v1614 = vpop.f32.mrf.mxu0
        %v1615 = vadd.f32 0.0, %v1614
        %1616 = vmatprep.mubr.bf16.mxu0 0
        %1617 = vmatmul.mubr.bf16.gmra.mxu0 %v1563
        %v1618 = vpop.f32.mrf.mxu0
        %v1619 = vadd.f32 0.0, %v1618
        %v1620 = vpop.f32.mrf.mxu0
        %v1621 = vadd.f32 0.0, %v1620
        %v1622 = vpop.f32.mrf.mxu0
        %v1623 = vadd.f32 0.0, %v1622
        %v1624 = vpop.f32.mrf.mxu0
        %v1625 = vadd.f32 0.0, %v1624
        %1626 = vdwg.mxu0
        %1627 = vmatprep.subr.bf16.mxu0 0
        %1628 = vmatpush1.bf16.msra.mxu0 0
        %1629 = vmatprep.subr.bf16.mxu0 0
        %1630 = vmatpush1.bf16.msra.mxu0 0
        %1631 = vmatprep.subr.bf16.mxu0 0
        %1632 = vmatpush1.bf16.msra.mxu0 0
        %1633 = vmatprep.subr.bf16.mxu0 0
        %1634 = vmatpush1.bf16.msra.mxu0 0
        %1635 = vmatprep.subr.bf16.mxu0 0
        %1636 = vmatpush1.bf16.msra.mxu0 0
        %1637 = vmatprep.subr.bf16.mxu0 0
        %1638 = vmatpush1.bf16.msra.mxu0 0
        %1639 = vmatprep.subr.bf16.mxu0 0
        %1640 = vmatpush1.bf16.msra.mxu0 0
        %1641 = vmatprep.subr.bf16.mxu0 0
        %1642 = vmatpush1.bf16.msra.mxu0 %v1572
        %1643 = vmatprep.subr.bf16.mxu0 0
        %1644 = vmatpush2.bf16.msra.mxu0 0
        %1645 = vmatprep.subr.bf16.mxu0 0
        %1646 = vmatpush2.bf16.msra.mxu0 0
        %1647 = vmatprep.subr.bf16.mxu0 0
        %1648 = vmatpush2.bf16.msra.mxu0 0
        %1649 = vmatprep.subr.bf16.mxu0 0
        %1650 = vmatpush2.bf16.msra.mxu0 0
        %1651 = vmatprep.subr.bf16.mxu0 0
        %1652 = vmatpush2.bf16.msra.mxu0 0
        %1653 = vmatprep.subr.bf16.mxu0 0
        %1654 = vmatpush2.bf16.msra.mxu0 0
        %1655 = vmatprep.subr.bf16.mxu0 0
        %1656 = vmatpush2.bf16.msra.mxu0 0
        %1657 = vmatprep.subr.bf16.mxu0 0
        %1658 = vmatpush2.bf16.msra.mxu0 0
        %1659 = vmatprep.mubr.bf16.mxu0 0
        %1660 = vmatmul.mubr.bf16.gmra.mxu0 %v1560
        %v1661 = vpop.f32.mrf.mxu0
        %v1662 = vadd.f32 0.0, %v1661
        %v1663 = vpop.f32.mrf.mxu0
        %v1664 = vpop.f32.mrf.mxu0
        %v1665 = vadd.f32 0.0, %v1664
        %v1666 = vpop.f32.mrf.mxu0
        %1667 = vmatprep.mubr.bf16.mxu0 0
        %1668 = vmatmul.mubr.bf16.gmra.mxu0 %v1563
        %v1669 = vpop.f32.mrf.mxu0
        %v1670 = vadd.f32 0.0, %v1669
        %v1671 = vpop.f32.mrf.mxu0
        %v1672 = vpop.f32.mrf.mxu0
        %v1673 = vadd.f32 0.0, %v1672
        %v1674 = vpop.f32.mrf.mxu0
        %1675 = vdwg.mxu0
        %v1676 = vadd.f32 %v1523, %v1609
        %v1677 = vadd.f32 %v1524, %v1611
        %v1678 = vadd.f32 %v1525, %v1662
        %v1679 = vadd.f32 %v1526, %v1613
        %v1680 = vadd.f32 %v1527, %v1615
        %v1681 = vadd.f32 %v1528, %v1665
        %v1682 = vadd.f32 %v1529, %v1619
        %v1683 = vadd.f32 %v1530, %v1621
        %v1684 = vadd.f32 %v1531, %v1670
        %v1685 = vadd.f32 %v1532, %v1623
        %v1686 = vadd.f32 %v1533, %v1625
        %v1687 = vadd.f32 %v1534, %v1673
        %v1688 = vld [vmem:[%s329 + $0x9] sm:$0xff]
        %v1689 = vld [vmem:[%s329 + $0x11] sm:$0xff]
        %v1690 = vld [vmem:[%s329 + $0x19] sm:$0xff]
        %v1691 = vld [vmem:[%s329 + $0x21] sm:$0x1]
        %v1692 = vpack.c.bf16 %v1689, %v1688
        %v1693 = vpack.c.bf16 %v1691, %v1690
        %s1694 = scalar_lea.vmem %s1, 216
        %v1695 = vld [vmem:[%s1694] sm:$0xff]
        %v1696 = vld [vmem:[%s1694 + $0x8] sm:$0xf]
        %v1697 = vld [vmem:[%s1694 + $0xc] sm:$0x77]
        %v1698 = vld [vmem:[%s1694 + $0x14] sm:$0x7]
        %v1703 = vunpack.c.l.b16 %v1695
        %v1704 = vunpack.c.h.b16 %v1695
        %v1705 = vunpack.c.l.b16 %v1696
        %v1706 = vunpack.c.l.b16 %v1697
        %v1707 = vunpack.c.h.b16 %v1697
        %v1708 = vunpack.c.l.b16 %v1698
        %v1709 = vpack.c.b16 %v1706, %v1703
        %v1710 = vpack.c.b16 %v1707, %v1704
        %v1711 = vpack.c.b16 %v1708, %v1705
        %v1713 = vsel %vm365, %v1692, 0
        %v1716 = vsel %vm365, %v1693, 0
        %v1719 = vand.u32 %v1709, %v375
        %v1722 = vand.u32 %v1710, %v375
        %v1725 = vand.u32 %v1711, %v375
        %1727 = vmatprep.subr.bf16.mxu0 0
        %1728 = vmatpush1.bf16.msra.mxu0 0
        %1729 = vmatprep.subr.bf16.mxu0 0
        %1730 = vmatpush1.bf16.msra.mxu0 0
        %1731 = vmatprep.subr.bf16.mxu0 0
        %1732 = vmatpush1.bf16.msra.mxu0 0
        %1733 = vmatprep.subr.bf16.mxu0 0
        %1734 = vmatpush1.bf16.msra.mxu0 0
        %1735 = vmatprep.subr.bf16.mxu0 0
        %1736 = vmatpush1.bf16.msra.mxu0 0
        %1737 = vmatprep.subr.bf16.mxu0 0
        %1738 = vmatpush1.bf16.msra.mxu0 0
        %1739 = vmatprep.subr.bf16.mxu0 0
        %1740 = vmatpush1.bf16.msra.mxu0 0
        %1741 = vmatprep.subr.bf16.mxu0 %v1722
        %1742 = vmatpush1.bf16.msra.mxu0 %v1719
        %1743 = vmatprep.subr.bf16.mxu0 0
        %1744 = vmatpush2.bf16.msra.mxu0 0
        %1745 = vmatprep.subr.bf16.mxu0 0
        %1746 = vmatpush2.bf16.msra.mxu0 0
        %1747 = vmatprep.subr.bf16.mxu0 0
        %1748 = vmatpush2.bf16.msra.mxu0 0
        %1749 = vmatprep.subr.bf16.mxu0 0
        %1750 = vmatpush2.bf16.msra.mxu0 0
        %1751 = vmatprep.subr.bf16.mxu0 0
        %1752 = vmatpush2.bf16.msra.mxu0 0
        %1753 = vmatprep.subr.bf16.mxu0 0
        %1754 = vmatpush2.bf16.msra.mxu0 0
        %1755 = vmatprep.subr.bf16.mxu0 0
        %1756 = vmatpush2.bf16.msra.mxu0 0
        %1757 = vmatprep.subr.bf16.mxu0 0
        %1758 = vmatpush2.bf16.msra.mxu0 0
        %1759 = vmatprep.mubr.bf16.mxu0 0
        %1760 = vmatmul.mubr.bf16.gmra.mxu0 %v1713
        %v1761 = vpop.f32.mrf.mxu0
        %v1762 = vadd.f32 0.0, %v1761
        %v1763 = vpop.f32.mrf.mxu0
        %v1764 = vadd.f32 0.0, %v1763
        %v1765 = vpop.f32.mrf.mxu0
        %v1766 = vadd.f32 0.0, %v1765
        %v1767 = vpop.f32.mrf.mxu0
        %v1768 = vadd.f32 0.0, %v1767
        %1769 = vmatprep.mubr.bf16.mxu0 0
        %1770 = vmatmul.mubr.bf16.gmra.mxu0 %v1716
        %v1771 = vpop.f32.mrf.mxu0
        %v1772 = vadd.f32 0.0, %v1771
        %v1773 = vpop.f32.mrf.mxu0
        %v1774 = vadd.f32 0.0, %v1773
        %v1775 = vpop.f32.mrf.mxu0
        %v1776 = vadd.f32 0.0, %v1775
        %v1777 = vpop.f32.mrf.mxu0
        %v1778 = vadd.f32 0.0, %v1777
        %1779 = vdwg.mxu0
        %1780 = vmatprep.subr.bf16.mxu0 0
        %1781 = vmatpush1.bf16.msra.mxu0 0
        %1782 = vmatprep.subr.bf16.mxu0 0
        %1783 = vmatpush1.bf16.msra.mxu0 0
        %1784 = vmatprep.subr.bf16.mxu0 0
        %1785 = vmatpush1.bf16.msra.mxu0 0
        %1786 = vmatprep.subr.bf16.mxu0 0
        %1787 = vmatpush1.bf16.msra.mxu0 0
        %1788 = vmatprep.subr.bf16.mxu0 0
        %1789 = vmatpush1.bf16.msra.mxu0 0
        %1790 = vmatprep.subr.bf16.mxu0 0
        %1791 = vmatpush1.bf16.msra.mxu0 0
        %1792 = vmatprep.subr.bf16.mxu0 0
        %1793 = vmatpush1.bf16.msra.mxu0 0
        %1794 = vmatprep.subr.bf16.mxu0 0
        %1795 = vmatpush1.bf16.msra.mxu0 %v1725
        %1796 = vmatprep.subr.bf16.mxu0 0
        %1797 = vmatpush2.bf16.msra.mxu0 0
        %1798 = vmatprep.subr.bf16.mxu0 0
        %1799 = vmatpush2.bf16.msra.mxu0 0
        %1800 = vmatprep.subr.bf16.mxu0 0
        %1801 = vmatpush2.bf16.msra.mxu0 0
        %1802 = vmatprep.subr.bf16.mxu0 0
        %1803 = vmatpush2.bf16.msra.mxu0 0
        %1804 = vmatprep.subr.bf16.mxu0 0
        %1805 = vmatpush2.bf16.msra.mxu0 0
        %1806 = vmatprep.subr.bf16.mxu0 0
        %1807 = vmatpush2.bf16.msra.mxu0 0
        %1808 = vmatprep.subr.bf16.mxu0 0
        %1809 = vmatpush2.bf16.msra.mxu0 0
        %1810 = vmatprep.subr.bf16.mxu0 0
        %1811 = vmatpush2.bf16.msra.mxu0 0
        %1812 = vmatprep.mubr.bf16.mxu0 0
        %1813 = vmatmul.mubr.bf16.gmra.mxu0 %v1713
        %v1814 = vpop.f32.mrf.mxu0
        %v1815 = vadd.f32 0.0, %v1814
        %v1816 = vpop.f32.mrf.mxu0
        %v1817 = vpop.f32.mrf.mxu0
        %v1818 = vadd.f32 0.0, %v1817
        %v1819 = vpop.f32.mrf.mxu0
        %1820 = vmatprep.mubr.bf16.mxu0 0
        %1821 = vmatmul.mubr.bf16.gmra.mxu0 %v1716
        %v1822 = vpop.f32.mrf.mxu0
        %v1823 = vadd.f32 0.0, %v1822
        %v1824 = vpop.f32.mrf.mxu0
        %v1825 = vpop.f32.mrf.mxu0
        %v1826 = vadd.f32 0.0, %v1825
        %v1827 = vpop.f32.mrf.mxu0
        %1828 = vdwg.mxu0
        %v1829 = vadd.f32 %v1676, %v1762
        %v1830 = vadd.f32 %v1677, %v1764
        %v1831 = vadd.f32 %v1678, %v1815
        %v1832 = vadd.f32 %v1679, %v1766
        %v1833 = vadd.f32 %v1680, %v1768
        %v1834 = vadd.f32 %v1681, %v1818
        %v1835 = vadd.f32 %v1682, %v1772
        %v1836 = vadd.f32 %v1683, %v1774
        %v1837 = vadd.f32 %v1684, %v1823
        %v1838 = vadd.f32 %v1685, %v1776
        %v1839 = vadd.f32 %v1686, %v1778
        %v1840 = vadd.f32 %v1687, %v1826
        %v1841 = vld [vmem:[%s2] sm:$0x7]
        %v1843 = vlaneseq
        %v1844 = vshrl.u32 %v1843, 7
        %v1845 = vsub.s32 0, %v1844
        %v1846 = vrot.slane %v1841, %v1845
        %v1847 = vlaneseq
        %v1848 = vshrl.u32 %v1847, 7
        %v1849 = vsub.s32 1, %v1848
        %v1850 = vrot.slane %v1841, %v1849
        %v1851 = vlaneseq
        %v1852 = vshrl.u32 %v1851, 7
        %v1853 = vsub.s32 2, %v1852
        %v1854 = vrot.slane %v1841, %v1853
        %v1858 = vadd.f32 %v1829, %v1846
        %v1859 = vadd.f32 %v1830, %v1850
        %v1860 = vadd.f32 %v1831, %v1854
        %v1861 = vadd.f32 %v1832, %v1846
        %v1862 = vadd.f32 %v1833, %v1850
        %v1863 = vadd.f32 %v1834, %v1854
        %v1864 = vadd.f32 %v1835, %v1846
        %v1865 = vadd.f32 %v1836, %v1850
        %v1866 = vadd.f32 %v1837, %v1854
        %v1867 = vadd.f32 %v1838, %v1846
        %v1868 = vadd.f32 %v1839, %v1850
        %v1869 = vadd.f32 %v1840, %v1854
        %v1870 = vmax.f32 %v1858, 0.0
        %v1871 = vmax.f32 %v1859, 0.0
        %v1872 = vmax.f32 %v1860, 0.0
        %v1873 = vmax.f32 %v1861, 0.0
        %v1874 = vmax.f32 %v1862, 0.0
        %v1875 = vmax.f32 %v1863, 0.0
        %v1876 = vmax.f32 %v1864, 0.0
        %v1877 = vmax.f32 %v1865, 0.0
        %v1878 = vmax.f32 %v1866, 0.0
        %v1879 = vmax.f32 %v1867, 0.0
        %v1880 = vmax.f32 %v1868, 0.0
        %v1881 = vmax.f32 %v1869, 0.0
        %1882 = vst [vmem:[#allocation2] sm:$0xff] %v1870
        %1883 = vst [vmem:[#allocation2 + $0x8] sm:$0xff] %v1871
        %vm1884 = vcmask 195584
        %1885 = vst.msk [vmem:[#allocation2 + $0x10] sm:$0xff] %vm1884, %v1872
        %1886 = vst [vmem:[#allocation2 + $0x18] sm:$0xff] %v1873
        %1887 = vst [vmem:[#allocation2 + $0x20] sm:$0xff] %v1874
        %1888 = vst.msk [vmem:[#allocation2 + $0x28] sm:$0xff] %vm1884, %v1875
        %1889 = vst [vmem:[#allocation2 + $0x30] sm:$0xff] %v1876
        %1890 = vst [vmem:[#allocation2 + $0x38] sm:$0xff] %v1877
        %1891 = vst.msk [vmem:[#allocation2 + $0x40] sm:$0xff] %vm1884, %v1878
        %1892 = vst [vmem:[#allocation2 + $0x48] sm:$0x1] %v1879
        %1893 = vst [vmem:[#allocation2 + $0x50] sm:$0x1] %v1880
        %vm1894 = vcmask 188416
        %1895 = vst.msk [vmem:[#allocation2 + $0x58] sm:$0x1] %vm1894, %v1881
        %v1896 = vld [vmem:[#allocation2] sm:$0xff]
        %v1897 = vld [vmem:[#allocation2 + $0x8] sm:$0xff]
        %v1898 = vld [vmem:[#allocation2 + $0x10] sm:$0xff]
        %v1899 = vld [vmem:[#allocation2 + $0x18] sm:$0xff]
        %v1900 = vld [vmem:[#allocation2 + $0x20] sm:$0xff]
        %v1901 = vld [vmem:[#allocation2 + $0x28] sm:$0xff]
        %v1902 = vpack.c.bf16 %v1899, %v1896
        %v1903 = vpack.c.bf16 %v1900, %v1897
        %v1904 = vpack.c.bf16 %v1901, %v1898
        %v1905 = vld [vmem:[%s3] sm:$0xf]
        %v1906 = vld [vmem:[%s3 + $0x4] sm:$0xf]
        %v1907 = vld [vmem:[%s3 + $0x8] sm:$0xf]
        %v1908 = vld [vmem:[%s3 + $0xc] sm:$0xf]
        %v1909 = vld [vmem:[%s3 + $0x10] sm:$0xf]
        %v1910 = vld [vmem:[%s3 + $0x14] sm:$0xf]
        %v1911 = vld [vmem:[%s3 + $0x18] sm:$0xf]
        %v1912 = vld [vmem:[%s3 + $0x1c] sm:$0xf]
        %v1913 = vld [vmem:[%s3 + $0x20] sm:$0xf]
        %v1914 = vld [vmem:[%s3 + $0x24] sm:$0xf]
        %v1915 = vld [vmem:[%s3 + $0x28] sm:$0xf]
        %v1916 = vld [vmem:[%s3 + $0x2c] sm:$0xf]
        %v1917 = vld [vmem:[%s3 + $0x30] sm:$0xf]
        %v1918 = vld [vmem:[%s3 + $0x34] sm:$0xf]
        %v1919 = vld [vmem:[%s3 + $0x38] sm:$0xf]
        %v1920 = vld [vmem:[%s3 + $0x3c] sm:$0xf]
        %v1921 = vld [vmem:[%s3 + $0x40] sm:$0xf]
        %v1922 = vld [vmem:[%s3 + $0x44] sm:$0xf]
        %v1923 = vld [vmem:[%s3 + $0x48] sm:$0xf]
        %v1924 = vld [vmem:[%s3 + $0x4c] sm:$0xf]
        %v1925 = vld [vmem:[%s3 + $0x50] sm:$0xf]
        %v1926 = vld [vmem:[%s3 + $0x54] sm:$0xf]
        %v1927 = vld [vmem:[%s3 + $0x58] sm:$0xf]
        %v1928 = vld [vmem:[%s3 + $0x5c] sm:$0xf]
        %v1929 = vld [vmem:[%s3 + $0x60] sm:$0xf]
        %v1930 = vld [vmem:[%s3 + $0x64] sm:$0xf]
        %v1931 = vld [vmem:[%s3 + $0x68] sm:$0xf]
        %v1932 = vld [vmem:[%s3 + $0x6c] sm:$0xf]
        %v1933 = vld [vmem:[%s3 + $0x70] sm:$0xf]
        %v1934 = vld [vmem:[%s3 + $0x74] sm:$0xf]
        %v1935 = vld [vmem:[%s3 + $0x78] sm:$0xf]
        %v1936 = vld [vmem:[%s3 + $0x7c] sm:$0xf]
        %v1937 = vld [vmem:[%s3 + $0x80] sm:$0xf]
        %v1938 = vld [vmem:[%s3 + $0x84] sm:$0xf]
        %v1939 = vld [vmem:[%s3 + $0x88] sm:$0xf]
        %v1940 = vld [vmem:[#allocation2] sm:$0xfe]
        %v1941 = vld [vmem:[#allocation2 + $0x8] sm:$0xfe]
        %v1942 = vld [vmem:[#allocation2 + $0x10] sm:$0xfe]
        %v1943 = vld [vmem:[#allocation2 + $0x30] sm:$0x1]
        %v1944 = vld [vmem:[#allocation2 + $0x38] sm:$0x1]
        %v1945 = vld [vmem:[#allocation2 + $0x40] sm:$0x1]
        %v1946 = vpack.c.bf16 %v1899, %v1940
        %v1947 = vpack.c.bf16 %v1900, %v1941
        %v1948 = vpack.c.bf16 %v1901, %v1942
        %v1949 = vpack.c.bf16 %v1943, %v1943
        %v1950 = vpack.c.bf16 %v1944, %v1944
        %v1951 = vpack.c.bf16 %v1945, %v1945
        %s1952 = scalar_lea.vmem %s3, 140
        %v1953 = vld [vmem:[%s1952] sm:$0xf]
        %v1954 = vld [vmem:[%s1952 + $0x4] sm:$0xf]
        %v1955 = vld [vmem:[%s1952 + $0x8] sm:$0xf]
        %v1956 = vld [vmem:[%s1952 + $0xc] sm:$0xf]
        %v1957 = vld [vmem:[%s1952 + $0x10] sm:$0xf]
        %v1958 = vld [vmem:[%s1952 + $0x14] sm:$0xf]
        %v1959 = vld [vmem:[%s1952 + $0x18] sm:$0xf]
        %v1960 = vld [vmem:[%s1952 + $0x1c] sm:$0xf]
        %v1961 = vld [vmem:[%s1952 + $0x20] sm:$0xf]
        %v1962 = vld [vmem:[%s1952 + $0x24] sm:$0xf]
        %v1963 = vld [vmem:[%s1952 + $0x28] sm:$0xf]
        %v1964 = vld [vmem:[%s1952 + $0x2c] sm:$0xf]
        %v1965 = vld [vmem:[%s1952 + $0x30] sm:$0xf]
        %v1966 = vld [vmem:[%s1952 + $0x34] sm:$0xf]
        %v1967 = vld [vmem:[%s1952 + $0x38] sm:$0xf]
        %v1968 = vld [vmem:[%s1952 + $0x3c] sm:$0xf]
        %v1969 = vld [vmem:[%s1952 + $0x40] sm:$0xf]
        %v1970 = vld [vmem:[%s1952 + $0x44] sm:$0xf]
        %v1971 = vld [vmem:[%s1952 + $0x48] sm:$0xf]
        %v1972 = vld [vmem:[%s1952 + $0x4c] sm:$0xf]
        %v1973 = vld [vmem:[%s1952 + $0x50] sm:$0xf]
        %v1974 = vld [vmem:[%s1952 + $0x54] sm:$0xf]
        %v1975 = vld [vmem:[%s1952 + $0x58] sm:$0xf]
        %v1976 = vld [vmem:[%s1952 + $0x5c] sm:$0xf]
        %v1977 = vld [vmem:[%s1952 + $0x60] sm:$0xf]
        %v1978 = vld [vmem:[%s1952 + $0x64] sm:$0xf]
        %v1979 = vld [vmem:[%s1952 + $0x68] sm:$0xf]
        %v1980 = vld [vmem:[%s1952 + $0x6c] sm:$0xf]
        %v1981 = vld [vmem:[%s1952 + $0x70] sm:$0xf]
        %v1982 = vld [vmem:[%s1952 + $0x74] sm:$0xf]
        %v1983 = vld [vmem:[%s1952 + $0x78] sm:$0xf]
        %v1984 = vld [vmem:[%s1952 + $0x7c] sm:$0xf]
        %v1985 = vld [vmem:[%s1952 + $0x80] sm:$0xf]
        %v1986 = vld [vmem:[%s1952 + $0x84] sm:$0xf]
        %v1987 = vld [vmem:[%s1952 + $0x88] sm:$0xf]
        %vm1988 = vsmask.f32 7424
        %v1990 = vshrl.u32 %v1946, 16
        %v1992 = vshll.u32 %v1946, 16
        %v1994 = vrot.slane %v1992, 1
        %v1995 = vor.u32 %v1990, %v1994
        %v1997 = vshll.u32 %v1949, 16
        %v1999 = vrot.slane %v1997, 1
        %v2000 = vsel %vm1988, %v1995, %v1999
        %v2002 = vshrl.u32 %v1947, 16
        %v2004 = vshll.u32 %v1947, 16
        %v2006 = vrot.slane %v2004, 1
        %v2007 = vor.u32 %v2002, %v2006
        %v2009 = vshll.u32 %v1950, 16
        %v2011 = vrot.slane %v2009, 1
        %v2012 = vsel %vm1988, %v2007, %v2011
        %v2014 = vshrl.u32 %v1948, 16
        %v2016 = vshll.u32 %v1948, 16
        %v2018 = vrot.slane %v2016, 1
        %v2019 = vor.u32 %v2014, %v2018
        %v2021 = vshll.u32 %v1951, 16
        %v2023 = vrot.slane %v2021, 1
        %v2024 = vsel %vm1988, %v2019, %v2023
        %v2062 = vunpack.c.l.b16 %v1953
        %v2063 = vunpack.c.l.b16 %v1954
        %v2064 = vunpack.c.l.b16 %v1955
        %v2065 = vunpack.c.l.b16 %v1956
        %v2066 = vunpack.c.l.b16 %v1957
        %v2067 = vunpack.c.l.b16 %v1958
        %v2068 = vunpack.c.l.b16 %v1959
        %v2069 = vunpack.c.l.b16 %v1960
        %v2070 = vunpack.c.l.b16 %v1961
        %v2071 = vunpack.c.l.b16 %v1962
        %v2072 = vunpack.c.l.b16 %v1963
        %v2073 = vunpack.c.l.b16 %v1964
        %v2074 = vunpack.c.l.b16 %v1965
        %v2075 = vunpack.c.l.b16 %v1966
        %v2076 = vunpack.c.l.b16 %v1967
        %v2077 = vunpack.c.l.b16 %v1968
        %v2078 = vunpack.c.l.b16 %v1969
        %v2079 = vunpack.c.l.b16 %v1970
        %v2080 = vunpack.c.l.b16 %v1971
        %v2081 = vunpack.c.l.b16 %v1972
        %v2082 = vunpack.c.l.b16 %v1973
        %v2083 = vunpack.c.l.b16 %v1974
        %v2084 = vunpack.c.l.b16 %v1975
        %v2085 = vunpack.c.l.b16 %v1976
        %v2086 = vunpack.c.l.b16 %v1977
        %v2087 = vunpack.c.l.b16 %v1978
        %v2088 = vunpack.c.l.b16 %v1979
        %v2089 = vunpack.c.l.b16 %v1980
        %v2090 = vunpack.c.l.b16 %v1981
        %v2091 = vunpack.c.l.b16 %v1982
        %v2092 = vunpack.c.l.b16 %v1983
        %v2093 = vunpack.c.l.b16 %v1984
        %v2094 = vunpack.c.l.b16 %v1985
        %v2095 = vunpack.c.l.b16 %v1986
        %v2096 = vunpack.c.l.b16 %v1987
        %v2097 = vpack.c.b16 %v2063, %v2062
        %v2098 = vpack.c.b16 %v2065, %v2064
        %v2099 = vpack.c.b16 %v2067, %v2066
        %v2100 = vpack.c.b16 %v2069, %v2068
        %v2101 = vpack.c.b16 %v2071, %v2070
        %v2102 = vpack.c.b16 %v2073, %v2072
        %v2103 = vpack.c.b16 %v2075, %v2074
        %v2104 = vpack.c.b16 %v2077, %v2076
        %v2105 = vpack.c.b16 %v2079, %v2078
        %v2106 = vpack.c.b16 %v2081, %v2080
        %v2107 = vpack.c.b16 %v2083, %v2082
        %v2108 = vpack.c.b16 %v2085, %v2084
        %v2109 = vpack.c.b16 %v2087, %v2086
        %v2110 = vpack.c.b16 %v2089, %v2088
        %v2111 = vpack.c.b16 %v2091, %v2090
        %v2112 = vpack.c.b16 %v2093, %v2092
        %v2113 = vpack.c.b16 %v2095, %v2094
        %v2114 = vpack.c.b16 %v2096, %v2096
        %v2133 = vsel %vm1884, %v2024, 0
        %vm2135 = vcmask 1043456
        %v2137 = vsel %vm2135, %v2114, 0
        %2139 = vmatprep.subr.bf16.mxu0 0
        %2140 = vmatpush1.bf16.msra.mxu0 %v2104
        %2141 = vmatprep.subr.bf16.mxu0 0
        %2142 = vmatpush1.bf16.msra.mxu0 %v2103
        %2143 = vmatprep.subr.bf16.mxu0 0
        %2144 = vmatpush1.bf16.msra.mxu0 %v2102
        %2145 = vmatprep.subr.bf16.mxu0 0
        %2146 = vmatpush1.bf16.msra.mxu0 %v2101
        %2147 = vmatprep.subr.bf16.mxu0 0
        %2148 = vmatpush1.bf16.msra.mxu0 %v2100
        %2149 = vmatprep.subr.bf16.mxu0 0
        %2150 = vmatpush1.bf16.msra.mxu0 %v2099
        %2151 = vmatprep.subr.bf16.mxu0 0
        %2152 = vmatpush1.bf16.msra.mxu0 %v2098
        %2153 = vmatprep.subr.bf16.mxu0 0
        %2154 = vmatpush1.bf16.msra.mxu0 %v2097
        %2155 = vmatprep.subr.bf16.mxu0 0
        %2156 = vmatpush2.bf16.msra.mxu0 %v2112
        %2157 = vmatprep.subr.bf16.mxu0 0
        %2158 = vmatpush2.bf16.msra.mxu0 %v2111
        %2159 = vmatprep.subr.bf16.mxu0 0
        %2160 = vmatpush2.bf16.msra.mxu0 %v2110
        %2161 = vmatprep.subr.bf16.mxu0 0
        %2162 = vmatpush2.bf16.msra.mxu0 %v2109
        %2163 = vmatprep.subr.bf16.mxu0 0
        %2164 = vmatpush2.bf16.msra.mxu0 %v2108
        %2165 = vmatprep.subr.bf16.mxu0 0
        %2166 = vmatpush2.bf16.msra.mxu0 %v2107
        %2167 = vmatprep.subr.bf16.mxu0 0
        %2168 = vmatpush2.bf16.msra.mxu0 %v2106
        %2169 = vmatprep.subr.bf16.mxu0 0
        %2170 = vmatpush2.bf16.msra.mxu0 %v2105
        %2171 = vmatprep.mubr.bf16.mxu0 %v2012
        %2172 = vmatmul.mubr.bf16.gmra.mxu0 %v2000
        %v2173 = vpop.f32.mrf.mxu0
        %v2174 = vadd.f32 0.0, %v2173
        %v2175 = vpop.f32.mrf.mxu0
        %v2176 = vpop.f32.mrf.mxu0
        %v2177 = vadd.f32 0.0, %v2176
        %v2178 = vpop.f32.mrf.mxu0
        %2179 = vdwg.mxu0
        %2180 = vmatprep.subr.bf16.mxu0 0
        %2181 = vmatpush1.bf16.msra.mxu0 0
        %2182 = vmatprep.subr.bf16.mxu0 0
        %2183 = vmatpush1.bf16.msra.mxu0 0
        %2184 = vmatprep.subr.bf16.mxu0 0
        %2185 = vmatpush1.bf16.msra.mxu0 0
        %2186 = vmatprep.subr.bf16.mxu0 0
        %2187 = vmatpush1.bf16.msra.mxu0 0
        %2188 = vmatprep.subr.bf16.mxu0 0
        %2189 = vmatpush1.bf16.msra.mxu0 0
        %2190 = vmatprep.subr.bf16.mxu0 0
        %2191 = vmatpush1.bf16.msra.mxu0 0
        %2192 = vmatprep.subr.bf16.mxu0 0
        %2193 = vmatpush1.bf16.msra.mxu0 %v2137
        %2194 = vmatprep.subr.bf16.mxu0 0
        %2195 = vmatpush1.bf16.msra.mxu0 %v2113
        %2196 = vmatprep.subr.bf16.mxu0 0
        %2197 = vmatpush2.bf16.msra.mxu0 0
        %2198 = vmatprep.subr.bf16.mxu0 0
        %2199 = vmatpush2.bf16.msra.mxu0 0
        %2200 = vmatprep.subr.bf16.mxu0 0
        %2201 = vmatpush2.bf16.msra.mxu0 0
        %2202 = vmatprep.subr.bf16.mxu0 0
        %2203 = vmatpush2.bf16.msra.mxu0 0
        %2204 = vmatprep.subr.bf16.mxu0 0
        %2205 = vmatpush2.bf16.msra.mxu0 0
        %2206 = vmatprep.subr.bf16.mxu0 0
        %2207 = vmatpush2.bf16.msra.mxu0 0
        %2208 = vmatprep.subr.bf16.mxu0 0
        %2209 = vmatpush2.bf16.msra.mxu0 0
        %2210 = vmatprep.subr.bf16.mxu0 0
        %2211 = vmatpush2.bf16.msra.mxu0 0
        %2212 = vmatprep.mubr.bf16.mxu0 0
        %2213 = vmatmul.mubr.bf16.gmra.mxu0 %v2133
        %v2214 = vpop.f32.mrf.mxu0
        %v2215 = vadd.f32 %v2174, %v2214
        %v2216 = vpop.f32.mrf.mxu0
        %v2217 = vpop.f32.mrf.mxu0
        %v2218 = vadd.f32 %v2177, %v2217
        %v2219 = vpop.f32.mrf.mxu0
        %2220 = vdwg.mxu0
        %v2256 = vunpack.c.l.b16 %v1905
        %v2257 = vunpack.c.l.b16 %v1906
        %v2258 = vunpack.c.l.b16 %v1907
        %v2259 = vunpack.c.l.b16 %v1908
        %v2260 = vunpack.c.l.b16 %v1909
        %v2261 = vunpack.c.l.b16 %v1910
        %v2262 = vunpack.c.l.b16 %v1911
        %v2263 = vunpack.c.l.b16 %v1912
        %v2264 = vunpack.c.l.b16 %v1913
        %v2265 = vunpack.c.l.b16 %v1914
        %v2266 = vunpack.c.l.b16 %v1915
        %v2267 = vunpack.c.l.b16 %v1916
        %v2268 = vunpack.c.l.b16 %v1917
        %v2269 = vunpack.c.l.b16 %v1918
        %v2270 = vunpack.c.l.b16 %v1919
        %v2271 = vunpack.c.l.b16 %v1920
        %v2272 = vunpack.c.l.b16 %v1921
        %v2273 = vunpack.c.l.b16 %v1922
        %v2274 = vunpack.c.l.b16 %v1923
        %v2275 = vunpack.c.l.b16 %v1924
        %v2276 = vunpack.c.l.b16 %v1925
        %v2277 = vunpack.c.l.b16 %v1926
        %v2278 = vunpack.c.l.b16 %v1927
        %v2279 = vunpack.c.l.b16 %v1928
        %v2280 = vunpack.c.l.b16 %v1929
        %v2281 = vunpack.c.l.b16 %v1930
        %v2282 = vunpack.c.l.b16 %v1931
        %v2283 = vunpack.c.l.b16 %v1932
        %v2284 = vunpack.c.l.b16 %v1933
        %v2285 = vunpack.c.l.b16 %v1934
        %v2286 = vunpack.c.l.b16 %v1935
        %v2287 = vunpack.c.l.b16 %v1936
        %v2288 = vunpack.c.l.b16 %v1937
        %v2289 = vunpack.c.l.b16 %v1938
        %v2290 = vunpack.c.l.b16 %v1939
        %v2291 = vpack.c.b16 %v2257, %v2256
        %v2292 = vpack.c.b16 %v2259, %v2258
        %v2293 = vpack.c.b16 %v2261, %v2260
        %v2294 = vpack.c.b16 %v2263, %v2262
        %v2295 = vpack.c.b16 %v2265, %v2264
        %v2296 = vpack.c.b16 %v2267, %v2266
        %v2297 = vpack.c.b16 %v2269, %v2268
        %v2298 = vpack.c.b16 %v2271, %v2270
        %v2299 = vpack.c.b16 %v2273, %v2272
        %v2300 = vpack.c.b16 %v2275, %v2274
        %v2301 = vpack.c.b16 %v2277, %v2276
        %v2302 = vpack.c.b16 %v2279, %v2278
        %v2303 = vpack.c.b16 %v2281, %v2280
        %v2304 = vpack.c.b16 %v2283, %v2282
        %v2305 = vpack.c.b16 %v2285, %v2284
        %v2306 = vpack.c.b16 %v2287, %v2286
        %v2307 = vpack.c.b16 %v2289, %v2288
        %v2308 = vpack.c.b16 %v2290, %v2290
        %v2327 = vsel %vm1884, %v1904, 0
        %v2330 = vsel %vm2135, %v2308, 0
        %2332 = vmatprep.subr.bf16.mxu0 0
        %2333 = vmatpush1.bf16.msra.mxu0 %v2298
        %2334 = vmatprep.subr.bf16.mxu0 0
        %2335 = vmatpush1.bf16.msra.mxu0 %v2297
        %2336 = vmatprep.subr.bf16.mxu0 0
        %2337 = vmatpush1.bf16.msra.mxu0 %v2296
        %2338 = vmatprep.subr.bf16.mxu0 0
        %2339 = vmatpush1.bf16.msra.mxu0 %v2295
        %2340 = vmatprep.subr.bf16.mxu0 0
        %2341 = vmatpush1.bf16.msra.mxu0 %v2294
        %2342 = vmatprep.subr.bf16.mxu0 0
        %2343 = vmatpush1.bf16.msra.mxu0 %v2293
        %2344 = vmatprep.subr.bf16.mxu0 0
        %2345 = vmatpush1.bf16.msra.mxu0 %v2292
        %2346 = vmatprep.subr.bf16.mxu0 0
        %2347 = vmatpush1.bf16.msra.mxu0 %v2291
        %2348 = vmatprep.subr.bf16.mxu0 0
        %2349 = vmatpush2.bf16.msra.mxu0 %v2306
        %2350 = vmatprep.subr.bf16.mxu0 0
        %2351 = vmatpush2.bf16.msra.mxu0 %v2305
        %2352 = vmatprep.subr.bf16.mxu0 0
        %2353 = vmatpush2.bf16.msra.mxu0 %v2304
        %2354 = vmatprep.subr.bf16.mxu0 0
        %2355 = vmatpush2.bf16.msra.mxu0 %v2303
        %2356 = vmatprep.subr.bf16.mxu0 0
        %2357 = vmatpush2.bf16.msra.mxu0 %v2302
        %2358 = vmatprep.subr.bf16.mxu0 0
        %2359 = vmatpush2.bf16.msra.mxu0 %v2301
        %2360 = vmatprep.subr.bf16.mxu0 0
        %2361 = vmatpush2.bf16.msra.mxu0 %v2300
        %2362 = vmatprep.subr.bf16.mxu0 0
        %2363 = vmatpush2.bf16.msra.mxu0 %v2299
        %2364 = vmatprep.mubr.bf16.mxu0 %v1903
        %2365 = vmatmul.mubr.bf16.gmra.mxu0 %v1902
        %v2366 = vpop.f32.mrf.mxu0
        %v2367 = vadd.f32 %v2215, %v2366
        %v2368 = vpop.f32.mrf.mxu0
        %v2369 = vpop.f32.mrf.mxu0
        %v2370 = vadd.f32 %v2218, %v2369
        %v2371 = vpop.f32.mrf.mxu0
        %2372 = vdwg.mxu0
        %2373 = vmatprep.subr.bf16.mxu0 0
        %2374 = vmatpush1.bf16.msra.mxu0 0
        %2375 = vmatprep.subr.bf16.mxu0 0
        %2376 = vmatpush1.bf16.msra.mxu0 0
        %2377 = vmatprep.subr.bf16.mxu0 0
        %2378 = vmatpush1.bf16.msra.mxu0 0
        %2379 = vmatprep.subr.bf16.mxu0 0
        %2380 = vmatpush1.bf16.msra.mxu0 0
        %2381 = vmatprep.subr.bf16.mxu0 0
        %2382 = vmatpush1.bf16.msra.mxu0 0
        %2383 = vmatprep.subr.bf16.mxu0 0
        %2384 = vmatpush1.bf16.msra.mxu0 0
        %2385 = vmatprep.subr.bf16.mxu0 0
        %2386 = vmatpush1.bf16.msra.mxu0 %v2330
        %2387 = vmatprep.subr.bf16.mxu0 0
        %2388 = vmatpush1.bf16.msra.mxu0 %v2307
        %2389 = vmatprep.subr.bf16.mxu0 0
        %2390 = vmatpush2.bf16.msra.mxu0 0
        %2391 = vmatprep.subr.bf16.mxu0 0
        %2392 = vmatpush2.bf16.msra.mxu0 0
        %2393 = vmatprep.subr.bf16.mxu0 0
        %2394 = vmatpush2.bf16.msra.mxu0 0
        %2395 = vmatprep.subr.bf16.mxu0 0
        %2396 = vmatpush2.bf16.msra.mxu0 0
        %2397 = vmatprep.subr.bf16.mxu0 0
        %2398 = vmatpush2.bf16.msra.mxu0 0
        %2399 = vmatprep.subr.bf16.mxu0 0
        %2400 = vmatpush2.bf16.msra.mxu0 0
        %2401 = vmatprep.subr.bf16.mxu0 0
        %2402 = vmatpush2.bf16.msra.mxu0 0
        %2403 = vmatprep.subr.bf16.mxu0 0
        %2404 = vmatpush2.bf16.msra.mxu0 0
        %2405 = vmatprep.mubr.bf16.mxu0 0
        %2406 = vmatmul.mubr.bf16.gmra.mxu0 %v2327
        %v2407 = vpop.f32.mrf.mxu0
        %v2408 = vadd.f32 %v2367, %v2407
        %v2409 = vpop.f32.mrf.mxu0
        %v2410 = vpop.f32.mrf.mxu0
        %v2411 = vadd.f32 %v2370, %v2410
        %v2412 = vpop.f32.mrf.mxu0
        %2413 = vdwg.mxu0
        %v2414 = vld [vmem:[#allocation2] sm:$0xfc]
        %v2415 = vld [vmem:[#allocation2 + $0x8] sm:$0xfc]
        %v2416 = vld [vmem:[#allocation2 + $0x10] sm:$0xfc]
        %v2417 = vld [vmem:[#allocation2 + $0x30] sm:$0x3]
        %v2418 = vld [vmem:[#allocation2 + $0x38] sm:$0x3]
        %v2419 = vld [vmem:[#allocation2 + $0x40] sm:$0x3]
        %v2420 = vpack.c.bf16 %v1899, %v2414
        %v2421 = vpack.c.bf16 %v1900, %v2415
        %v2422 = vpack.c.bf16 %v1901, %v2416
        %v2423 = vpack.c.bf16 %v2417, %v2417
        %v2424 = vpack.c.bf16 %v2418, %v2418
        %v2425 = vpack.c.bf16 %v2419, %v2419
        %s2426 = scalar_lea.vmem %s3, 280
        %v2427 = vld [vmem:[%s2426] sm:$0xf]
        %v2428 = vld [vmem:[%s2426 + $0x4] sm:$0xf]
        %v2429 = vld [vmem:[%s2426 + $0x8] sm:$0xf]
        %v2430 = vld [vmem:[%s2426 + $0xc] sm:$0xf]
        %v2431 = vld [vmem:[%s2426 + $0x10] sm:$0xf]
        %v2432 = vld [vmem:[%s2426 + $0x14] sm:$0xf]
        %v2433 = vld [vmem:[%s2426 + $0x18] sm:$0xf]
        %v2434 = vld [vmem:[%s2426 + $0x1c] sm:$0xf]
        %v2435 = vld [vmem:[%s2426 + $0x20] sm:$0xf]
        %v2436 = vld [vmem:[%s2426 + $0x24] sm:$0xf]
        %v2437 = vld [vmem:[%s2426 + $0x28] sm:$0xf]
        %v2438 = vld [vmem:[%s2426 + $0x2c] sm:$0xf]
        %v2439 = vld [vmem:[%s2426 + $0x30] sm:$0xf]
        %v2440 = vld [vmem:[%s2426 + $0x34] sm:$0xf]
        %v2441 = vld [vmem:[%s2426 + $0x38] sm:$0xf]
        %v2442 = vld [vmem:[%s2426 + $0x3c] sm:$0xf]
        %v2443 = vld [vmem:[%s2426 + $0x40] sm:$0xf]
        %v2444 = vld [vmem:[%s2426 + $0x44] sm:$0xf]
        %v2445 = vld [vmem:[%s2426 + $0x48] sm:$0xf]
        %v2446 = vld [vmem:[%s2426 + $0x4c] sm:$0xf]
        %v2447 = vld [vmem:[%s2426 + $0x50] sm:$0xf]
        %v2448 = vld [vmem:[%s2426 + $0x54] sm:$0xf]
        %v2449 = vld [vmem:[%s2426 + $0x58] sm:$0xf]
        %v2450 = vld [vmem:[%s2426 + $0x5c] sm:$0xf]
        %v2451 = vld [vmem:[%s2426 + $0x60] sm:$0xf]
        %v2452 = vld [vmem:[%s2426 + $0x64] sm:$0xf]
        %v2453 = vld [vmem:[%s2426 + $0x68] sm:$0xf]
        %v2454 = vld [vmem:[%s2426 + $0x6c] sm:$0xf]
        %v2455 = vld [vmem:[%s2426 + $0x70] sm:$0xf]
        %v2456 = vld [vmem:[%s2426 + $0x74] sm:$0xf]
        %v2457 = vld [vmem:[%s2426 + $0x78] sm:$0xf]
        %v2458 = vld [vmem:[%s2426 + $0x7c] sm:$0xf]
        %v2459 = vld [vmem:[%s2426 + $0x80] sm:$0xf]
        %v2460 = vld [vmem:[%s2426 + $0x84] sm:$0xf]
        %v2461 = vld [vmem:[%s2426 + $0x88] sm:$0xf]
        %vm2468 = vcmask 1046528
        %v2469 = vrot.slane %v2420, 1
        %v2470 = vrot.slane %v2423, 1
        %v2471 = vsel %vm2468, %v2469, %v2470
        %v2472 = vrot.slane %v2421, 1
        %v2473 = vrot.slane %v2424, 1
        %v2474 = vsel %vm2468, %v2472, %v2473
        %v2475 = vrot.slane %v2422, 1
        %v2476 = vrot.slane %v2425, 1
        %v2477 = vsel %vm2468, %v2475, %v2476
        %v2515 = vunpack.c.l.b16 %v2427
        %v2516 = vunpack.c.l.b16 %v2428
        %v2517 = vunpack.c.l.b16 %v2429
        %v2518 = vunpack.c.l.b16 %v2430
        %v2519 = vunpack.c.l.b16 %v2431
        %v2520 = vunpack.c.l.b16 %v2432
        %v2521 = vunpack.c.l.b16 %v2433
        %v2522 = vunpack.c.l.b16 %v2434
        %v2523 = vunpack.c.l.b16 %v2435
        %v2524 = vunpack.c.l.b16 %v2436
        %v2525 = vunpack.c.l.b16 %v2437
        %v2526 = vunpack.c.l.b16 %v2438
        %v2527 = vunpack.c.l.b16 %v2439
        %v2528 = vunpack.c.l.b16 %v2440
        %v2529 = vunpack.c.l.b16 %v2441
        %v2530 = vunpack.c.l.b16 %v2442
        %v2531 = vunpack.c.l.b16 %v2443
        %v2532 = vunpack.c.l.b16 %v2444
        %v2533 = vunpack.c.l.b16 %v2445
        %v2534 = vunpack.c.l.b16 %v2446
        %v2535 = vunpack.c.l.b16 %v2447
        %v2536 = vunpack.c.l.b16 %v2448
        %v2537 = vunpack.c.l.b16 %v2449
        %v2538 = vunpack.c.l.b16 %v2450
        %v2539 = vunpack.c.l.b16 %v2451
        %v2540 = vunpack.c.l.b16 %v2452
        %v2541 = vunpack.c.l.b16 %v2453
        %v2542 = vunpack.c.l.b16 %v2454
        %v2543 = vunpack.c.l.b16 %v2455
        %v2544 = vunpack.c.l.b16 %v2456
        %v2545 = vunpack.c.l.b16 %v2457
        %v2546 = vunpack.c.l.b16 %v2458
        %v2547 = vunpack.c.l.b16 %v2459
        %v2548 = vunpack.c.l.b16 %v2460
        %v2549 = vunpack.c.l.b16 %v2461
        %v2550 = vpack.c.b16 %v2516, %v2515
        %v2551 = vpack.c.b16 %v2518, %v2517
        %v2552 = vpack.c.b16 %v2520, %v2519
        %v2553 = vpack.c.b16 %v2522, %v2521
        %v2554 = vpack.c.b16 %v2524, %v2523
        %v2555 = vpack.c.b16 %v2526, %v2525
        %v2556 = vpack.c.b16 %v2528, %v2527
        %v2557 = vpack.c.b16 %v2530, %v2529
        %v2558 = vpack.c.b16 %v2532, %v2531
        %v2559 = vpack.c.b16 %v2534, %v2533
        %v2560 = vpack.c.b16 %v2536, %v2535
        %v2561 = vpack.c.b16 %v2538, %v2537
        %v2562 = vpack.c.b16 %v2540, %v2539
        %v2563 = vpack.c.b16 %v2542, %v2541
        %v2564 = vpack.c.b16 %v2544, %v2543
        %v2565 = vpack.c.b16 %v2546, %v2545
        %v2566 = vpack.c.b16 %v2548, %v2547
        %v2567 = vpack.c.b16 %v2549, %v2549
        %v2586 = vsel %vm1884, %v2477, 0
        %v2589 = vsel %vm2135, %v2567, 0
        %2591 = vmatprep.subr.bf16.mxu0 0
        %2592 = vmatpush1.bf16.msra.mxu0 %v2557
        %2593 = vmatprep.subr.bf16.mxu0 0
        %2594 = vmatpush1.bf16.msra.mxu0 %v2556
        %2595 = vmatprep.subr.bf16.mxu0 0
        %2596 = vmatpush1.bf16.msra.mxu0 %v2555
        %2597 = vmatprep.subr.bf16.mxu0 0
        %2598 = vmatpush1.bf16.msra.mxu0 %v2554
        %2599 = vmatprep.subr.bf16.mxu0 0
        %2600 = vmatpush1.bf16.msra.mxu0 %v2553
        %2601 = vmatprep.subr.bf16.mxu0 0
        %2602 = vmatpush1.bf16.msra.mxu0 %v2552
        %2603 = vmatprep.subr.bf16.mxu0 0
        %2604 = vmatpush1.bf16.msra.mxu0 %v2551
        %2605 = vmatprep.subr.bf16.mxu0 0
        %2606 = vmatpush1.bf16.msra.mxu0 %v2550
        %2607 = vmatprep.subr.bf16.mxu0 0
        %2608 = vmatpush2.bf16.msra.mxu0 %v2565
        %2609 = vmatprep.subr.bf16.mxu0 0
        %2610 = vmatpush2.bf16.msra.mxu0 %v2564
        %2611 = vmatprep.subr.bf16.mxu0 0
        %2612 = vmatpush2.bf16.msra.mxu0 %v2563
        %2613 = vmatprep.subr.bf16.mxu0 0
        %2614 = vmatpush2.bf16.msra.mxu0 %v2562
        %2615 = vmatprep.subr.bf16.mxu0 0
        %2616 = vmatpush2.bf16.msra.mxu0 %v2561
        %2617 = vmatprep.subr.bf16.mxu0 0
        %2618 = vmatpush2.bf16.msra.mxu0 %v2560
        %2619 = vmatprep.subr.bf16.mxu0 0
        %2620 = vmatpush2.bf16.msra.mxu0 %v2559
        %2621 = vmatprep.subr.bf16.mxu0 0
        %2622 = vmatpush2.bf16.msra.mxu0 %v2558
        %2623 = vmatprep.mubr.bf16.mxu0 %v2474
        %2624 = vmatmul.mubr.bf16.gmra.mxu0 %v2471
        %v2625 = vpop.f32.mrf.mxu0
        %v2626 = vadd.f32 0.0, %v2625
        %v2627 = vpop.f32.mrf.mxu0
        %v2628 = vpop.f32.mrf.mxu0
        %v2629 = vadd.f32 0.0, %v2628
        %v2630 = vpop.f32.mrf.mxu0
        %2631 = vdwg.mxu0
        %2632 = vmatprep.subr.bf16.mxu0 0
        %2633 = vmatpush1.bf16.msra.mxu0 0
        %2634 = vmatprep.subr.bf16.mxu0 0
        %2635 = vmatpush1.bf16.msra.mxu0 0
        %2636 = vmatprep.subr.bf16.mxu0 0
        %2637 = vmatpush1.bf16.msra.mxu0 0
        %2638 = vmatprep.subr.bf16.mxu0 0
        %2639 = vmatpush1.bf16.msra.mxu0 0
        %2640 = vmatprep.subr.bf16.mxu0 0
        %2641 = vmatpush1.bf16.msra.mxu0 0
        %2642 = vmatprep.subr.bf16.mxu0 0
        %2643 = vmatpush1.bf16.msra.mxu0 0
        %2644 = vmatprep.subr.bf16.mxu0 0
        %2645 = vmatpush1.bf16.msra.mxu0 %v2589
        %2646 = vmatprep.subr.bf16.mxu0 0
        %2647 = vmatpush1.bf16.msra.mxu0 %v2566
        %2648 = vmatprep.subr.bf16.mxu0 0
        %2649 = vmatpush2.bf16.msra.mxu0 0
        %2650 = vmatprep.subr.bf16.mxu0 0
        %2651 = vmatpush2.bf16.msra.mxu0 0
        %2652 = vmatprep.subr.bf16.mxu0 0
        %2653 = vmatpush2.bf16.msra.mxu0 0
        %2654 = vmatprep.subr.bf16.mxu0 0
        %2655 = vmatpush2.bf16.msra.mxu0 0
        %2656 = vmatprep.subr.bf16.mxu0 0
        %2657 = vmatpush2.bf16.msra.mxu0 0
        %2658 = vmatprep.subr.bf16.mxu0 0
        %2659 = vmatpush2.bf16.msra.mxu0 0
        %2660 = vmatprep.subr.bf16.mxu0 0
        %2661 = vmatpush2.bf16.msra.mxu0 0
        %2662 = vmatprep.subr.bf16.mxu0 0
        %2663 = vmatpush2.bf16.msra.mxu0 0
        %2664 = vmatprep.mubr.bf16.mxu0 0
        %2665 = vmatmul.mubr.bf16.gmra.mxu0 %v2586
        %v2666 = vpop.f32.mrf.mxu0
        %v2667 = vadd.f32 %v2626, %v2666
        %v2668 = vpop.f32.mrf.mxu0
        %v2669 = vpop.f32.mrf.mxu0
        %v2670 = vadd.f32 %v2629, %v2669
        %v2671 = vpop.f32.mrf.mxu0
        %2672 = vdwg.mxu0
        %v2673 = vadd.f32 %v2408, %v2667
        %v2674 = vadd.f32 %v2411, %v2670
        %v2675 = vld [vmem:[#allocation2] sm:$0xf8]
        %v2676 = vld [vmem:[#allocation2 + $0x8] sm:$0xf8]
        %v2677 = vld [vmem:[#allocation2 + $0x10] sm:$0xf8]
        %v2678 = vld [vmem:[#allocation2 + $0x30] sm:$0x7]
        %v2679 = vld [vmem:[#allocation2 + $0x38] sm:$0x7]
        %v2680 = vld [vmem:[#allocation2 + $0x40] sm:$0x7]
        %v2681 = vpack.c.bf16 %v1899, %v2675
        %v2682 = vpack.c.bf16 %v1900, %v2676
        %v2683 = vpack.c.bf16 %v1901, %v2677
        %v2684 = vpack.c.bf16 %v2678, %v2678
        %v2685 = vpack.c.bf16 %v2679, %v2679
        %v2686 = vpack.c.bf16 %v2680, %v2680
        %s2687 = scalar_lea.vmem %s3, 420
        %v2688 = vld [vmem:[%s2687] sm:$0xf]
        %v2689 = vld [vmem:[%s2687 + $0x4] sm:$0xf]
        %v2690 = vld [vmem:[%s2687 + $0x8] sm:$0xf]
        %v2691 = vld [vmem:[%s2687 + $0xc] sm:$0xf]
        %v2692 = vld [vmem:[%s2687 + $0x10] sm:$0xf]
        %v2693 = vld [vmem:[%s2687 + $0x14] sm:$0xf]
        %v2694 = vld [vmem:[%s2687 + $0x18] sm:$0xf]
        %v2695 = vld [vmem:[%s2687 + $0x1c] sm:$0xf]
        %v2696 = vld [vmem:[%s2687 + $0x20] sm:$0xf]
        %v2697 = vld [vmem:[%s2687 + $0x24] sm:$0xf]
        %v2698 = vld [vmem:[%s2687 + $0x28] sm:$0xf]
        %v2699 = vld [vmem:[%s2687 + $0x2c] sm:$0xf]
        %v2700 = vld [vmem:[%s2687 + $0x30] sm:$0xf]
        %v2701 = vld [vmem:[%s2687 + $0x34] sm:$0xf]
        %v2702 = vld [vmem:[%s2687 + $0x38] sm:$0xf]
        %v2703 = vld [vmem:[%s2687 + $0x3c] sm:$0xf]
        %v2704 = vld [vmem:[%s2687 + $0x40] sm:$0xf]
        %v2705 = vld [vmem:[%s2687 + $0x44] sm:$0xf]
        %v2706 = vld [vmem:[%s2687 + $0x48] sm:$0xf]
        %v2707 = vld [vmem:[%s2687 + $0x4c] sm:$0xf]
        %v2708 = vld [vmem:[%s2687 + $0x50] sm:$0xf]
        %v2709 = vld [vmem:[%s2687 + $0x54] sm:$0xf]
        %v2710 = vld [vmem:[%s2687 + $0x58] sm:$0xf]
        %v2711 = vld [vmem:[%s2687 + $0x5c] sm:$0xf]
        %v2712 = vld [vmem:[%s2687 + $0x60] sm:$0xf]
        %v2713 = vld [vmem:[%s2687 + $0x64] sm:$0xf]
        %v2714 = vld [vmem:[%s2687 + $0x68] sm:$0xf]
        %v2715 = vld [vmem:[%s2687 + $0x6c] sm:$0xf]
        %v2716 = vld [vmem:[%s2687 + $0x70] sm:$0xf]
        %v2717 = vld [vmem:[%s2687 + $0x74] sm:$0xf]
        %v2718 = vld [vmem:[%s2687 + $0x78] sm:$0xf]
        %v2719 = vld [vmem:[%s2687 + $0x7c] sm:$0xf]
        %v2720 = vld [vmem:[%s2687 + $0x80] sm:$0xf]
        %v2721 = vld [vmem:[%s2687 + $0x84] sm:$0xf]
        %v2722 = vld [vmem:[%s2687 + $0x88] sm:$0xf]
        %vm2723 = vsmask.f32 6400
        %v2725 = vshrl.u32 %v2681, 16
        %v2727 = vrot.slane %v2725, 1
        %v2728 = vshll.u32 %v2681, 16
        %v2730 = vrot.slane %v2728, 2
        %v2731 = vor.u32 %v2727, %v2730
        %v2733 = vshrl.u32 %v2684, 16
        %v2735 = vrot.slane %v2733, 1
        %v2736 = vshll.u32 %v2684, 16
        %v2738 = vrot.slane %v2736, 2
        %v2739 = vor.u32 %v2735, %v2738
        %v2740 = vsel %vm2723, %v2731, %v2739
        %v2742 = vshrl.u32 %v2682, 16
        %v2744 = vrot.slane %v2742, 1
        %v2745 = vshll.u32 %v2682, 16
        %v2747 = vrot.slane %v2745, 2
        %v2748 = vor.u32 %v2744, %v2747
        %v2750 = vshrl.u32 %v2685, 16
        %v2752 = vrot.slane %v2750, 1
        %v2753 = vshll.u32 %v2685, 16
        %v2755 = vrot.slane %v2753, 2
        %v2756 = vor.u32 %v2752, %v2755
        %v2757 = vsel %vm2723, %v2748, %v2756
        %v2759 = vshrl.u32 %v2683, 16
        %v2761 = vrot.slane %v2759, 1
        %v2762 = vshll.u32 %v2683, 16
        %v2764 = vrot.slane %v2762, 2
        %v2765 = vor.u32 %v2761, %v2764
        %v2767 = vshrl.u32 %v2686, 16
        %v2769 = vrot.slane %v2767, 1
        %v2770 = vshll.u32 %v2686, 16
        %v2772 = vrot.slane %v2770, 2
        %v2773 = vor.u32 %v2769, %v2772
        %v2774 = vsel %vm2723, %v2765, %v2773
        %v2812 = vunpack.c.l.b16 %v2688
        %v2813 = vunpack.c.l.b16 %v2689
        %v2814 = vunpack.c.l.b16 %v2690
        %v2815 = vunpack.c.l.b16 %v2691
        %v2816 = vunpack.c.l.b16 %v2692
        %v2817 = vunpack.c.l.b16 %v2693
        %v2818 = vunpack.c.l.b16 %v2694
        %v2819 = vunpack.c.l.b16 %v2695
        %v2820 = vunpack.c.l.b16 %v2696
        %v2821 = vunpack.c.l.b16 %v2697
        %v2822 = vunpack.c.l.b16 %v2698
        %v2823 = vunpack.c.l.b16 %v2699
        %v2824 = vunpack.c.l.b16 %v2700
        %v2825 = vunpack.c.l.b16 %v2701
        %v2826 = vunpack.c.l.b16 %v2702
        %v2827 = vunpack.c.l.b16 %v2703
        %v2828 = vunpack.c.l.b16 %v2704
        %v2829 = vunpack.c.l.b16 %v2705
        %v2830 = vunpack.c.l.b16 %v2706
        %v2831 = vunpack.c.l.b16 %v2707
        %v2832 = vunpack.c.l.b16 %v2708
        %v2833 = vunpack.c.l.b16 %v2709
        %v2834 = vunpack.c.l.b16 %v2710
        %v2835 = vunpack.c.l.b16 %v2711
        %v2836 = vunpack.c.l.b16 %v2712
        %v2837 = vunpack.c.l.b16 %v2713
        %v2838 = vunpack.c.l.b16 %v2714
        %v2839 = vunpack.c.l.b16 %v2715
        %v2840 = vunpack.c.l.b16 %v2716
        %v2841 = vunpack.c.l.b16 %v2717
        %v2842 = vunpack.c.l.b16 %v2718
        %v2843 = vunpack.c.l.b16 %v2719
        %v2844 = vunpack.c.l.b16 %v2720
        %v2845 = vunpack.c.l.b16 %v2721
        %v2846 = vunpack.c.l.b16 %v2722
        %v2847 = vpack.c.b16 %v2813, %v2812
        %v2848 = vpack.c.b16 %v2815, %v2814
        %v2849 = vpack.c.b16 %v2817, %v2816
        %v2850 = vpack.c.b16 %v2819, %v2818
        %v2851 = vpack.c.b16 %v2821, %v2820
        %v2852 = vpack.c.b16 %v2823, %v2822
        %v2853 = vpack.c.b16 %v2825, %v2824
        %v2854 = vpack.c.b16 %v2827, %v2826
        %v2855 = vpack.c.b16 %v2829, %v2828
        %v2856 = vpack.c.b16 %v2831, %v2830
        %v2857 = vpack.c.b16 %v2833, %v2832
        %v2858 = vpack.c.b16 %v2835, %v2834
        %v2859 = vpack.c.b16 %v2837, %v2836
        %v2860 = vpack.c.b16 %v2839, %v2838
        %v2861 = vpack.c.b16 %v2841, %v2840
        %v2862 = vpack.c.b16 %v2843, %v2842
        %v2863 = vpack.c.b16 %v2845, %v2844
        %v2864 = vpack.c.b16 %v2846, %v2846
        %v2883 = vsel %vm1884, %v2774, 0
        %v2886 = vsel %vm2135, %v2864, 0
        %2888 = vmatprep.subr.bf16.mxu0 0
        %2889 = vmatpush1.bf16.msra.mxu0 %v2854
        %2890 = vmatprep.subr.bf16.mxu0 0
        %2891 = vmatpush1.bf16.msra.mxu0 %v2853
        %2892 = vmatprep.subr.bf16.mxu0 0
        %2893 = vmatpush1.bf16.msra.mxu0 %v2852
        %2894 = vmatprep.subr.bf16.mxu0 0
        %2895 = vmatpush1.bf16.msra.mxu0 %v2851
        %2896 = vmatprep.subr.bf16.mxu0 0
        %2897 = vmatpush1.bf16.msra.mxu0 %v2850
        %2898 = vmatprep.subr.bf16.mxu0 0
        %2899 = vmatpush1.bf16.msra.mxu0 %v2849
        %2900 = vmatprep.subr.bf16.mxu0 0
        %2901 = vmatpush1.bf16.msra.mxu0 %v2848
        %2902 = vmatprep.subr.bf16.mxu0 0
        %2903 = vmatpush1.bf16.msra.mxu0 %v2847
        %2904 = vmatprep.subr.bf16.mxu0 0
        %2905 = vmatpush2.bf16.msra.mxu0 %v2862
        %2906 = vmatprep.subr.bf16.mxu0 0
        %2907 = vmatpush2.bf16.msra.mxu0 %v2861
        %2908 = vmatprep.subr.bf16.mxu0 0
        %2909 = vmatpush2.bf16.msra.mxu0 %v2860
        %2910 = vmatprep.subr.bf16.mxu0 0
        %2911 = vmatpush2.bf16.msra.mxu0 %v2859
        %2912 = vmatprep.subr.bf16.mxu0 0
        %2913 = vmatpush2.bf16.msra.mxu0 %v2858
        %2914 = vmatprep.subr.bf16.mxu0 0
        %2915 = vmatpush2.bf16.msra.mxu0 %v2857
        %2916 = vmatprep.subr.bf16.mxu0 0
        %2917 = vmatpush2.bf16.msra.mxu0 %v2856
        %2918 = vmatprep.subr.bf16.mxu0 0
        %2919 = vmatpush2.bf16.msra.mxu0 %v2855
        %2920 = vmatprep.mubr.bf16.mxu0 %v2757
        %2921 = vmatmul.mubr.bf16.gmra.mxu0 %v2740
        %v2922 = vpop.f32.mrf.mxu0
        %v2923 = vadd.f32 0.0, %v2922
        %v2924 = vpop.f32.mrf.mxu0
        %v2925 = vpop.f32.mrf.mxu0
        %v2926 = vadd.f32 0.0, %v2925
        %v2927 = vpop.f32.mrf.mxu0
        %2928 = vdwg.mxu0
        %2929 = vmatprep.subr.bf16.mxu0 0
        %2930 = vmatpush1.bf16.msra.mxu0 0
        %2931 = vmatprep.subr.bf16.mxu0 0
        %2932 = vmatpush1.bf16.msra.mxu0 0
        %2933 = vmatprep.subr.bf16.mxu0 0
        %2934 = vmatpush1.bf16.msra.mxu0 0
        %2935 = vmatprep.subr.bf16.mxu0 0
        %2936 = vmatpush1.bf16.msra.mxu0 0
        %2937 = vmatprep.subr.bf16.mxu0 0
        %2938 = vmatpush1.bf16.msra.mxu0 0
        %2939 = vmatprep.subr.bf16.mxu0 0
        %2940 = vmatpush1.bf16.msra.mxu0 0
        %2941 = vmatprep.subr.bf16.mxu0 0
        %2942 = vmatpush1.bf16.msra.mxu0 %v2886
        %2943 = vmatprep.subr.bf16.mxu0 0
        %2944 = vmatpush1.bf16.msra.mxu0 %v2863
        %2945 = vmatprep.subr.bf16.mxu0 0
        %2946 = vmatpush2.bf16.msra.mxu0 0
        %2947 = vmatprep.subr.bf16.mxu0 0
        %2948 = vmatpush2.bf16.msra.mxu0 0
        %2949 = vmatprep.subr.bf16.mxu0 0
        %2950 = vmatpush2.bf16.msra.mxu0 0
        %2951 = vmatprep.subr.bf16.mxu0 0
        %2952 = vmatpush2.bf16.msra.mxu0 0
        %2953 = vmatprep.subr.bf16.mxu0 0
        %2954 = vmatpush2.bf16.msra.mxu0 0
        %2955 = vmatprep.subr.bf16.mxu0 0
        %2956 = vmatpush2.bf16.msra.mxu0 0
        %2957 = vmatprep.subr.bf16.mxu0 0
        %2958 = vmatpush2.bf16.msra.mxu0 0
        %2959 = vmatprep.subr.bf16.mxu0 0
        %2960 = vmatpush2.bf16.msra.mxu0 0
        %2961 = vmatprep.mubr.bf16.mxu0 0
        %2962 = vmatmul.mubr.bf16.gmra.mxu0 %v2883
        %v2963 = vpop.f32.mrf.mxu0
        %v2964 = vadd.f32 %v2923, %v2963
        %v2965 = vpop.f32.mrf.mxu0
        %v2966 = vpop.f32.mrf.mxu0
        %v2967 = vadd.f32 %v2926, %v2966
        %v2968 = vpop.f32.mrf.mxu0
        %2969 = vdwg.mxu0
        %v2970 = vadd.f32 %v2673, %v2964
        %v2971 = vadd.f32 %v2674, %v2967
        %v2972 = vld [vmem:[#allocation2] sm:$0xf0]
        %v2973 = vld [vmem:[#allocation2 + $0x8] sm:$0xf0]
        %v2974 = vld [vmem:[#allocation2 + $0x10] sm:$0xf0]
        %v2975 = vld [vmem:[#allocation2 + $0x30] sm:$0xf]
        %v2976 = vld [vmem:[#allocation2 + $0x38] sm:$0xf]
        %v2977 = vld [vmem:[#allocation2 + $0x40] sm:$0xf]
        %v2978 = vpack.c.bf16 %v1899, %v2972
        %v2979 = vpack.c.bf16 %v1900, %v2973
        %v2980 = vpack.c.bf16 %v1901, %v2974
        %v2981 = vpack.c.bf16 %v2975, %v2975
        %v2982 = vpack.c.bf16 %v2976, %v2976
        %v2983 = vpack.c.bf16 %v2977, %v2977
        %s2984 = scalar_lea.vmem %s3, 560
        %v2985 = vld [vmem:[%s2984] sm:$0xf]
        %v2986 = vld [vmem:[%s2984 + $0x4] sm:$0xf]
        %v2987 = vld [vmem:[%s2984 + $0x8] sm:$0xf]
        %v2988 = vld [vmem:[%s2984 + $0xc] sm:$0xf]
        %v2989 = vld [vmem:[%s2984 + $0x10] sm:$0xf]
        %v2990 = vld [vmem:[%s2984 + $0x14] sm:$0xf]
        %v2991 = vld [vmem:[%s2984 + $0x18] sm:$0xf]
        %v2992 = vld [vmem:[%s2984 + $0x1c] sm:$0xf]
        %v2993 = vld [vmem:[%s2984 + $0x20] sm:$0xf]
        %v2994 = vld [vmem:[%s2984 + $0x24] sm:$0xf]
        %v2995 = vld [vmem:[%s2984 + $0x28] sm:$0xf]
        %v2996 = vld [vmem:[%s2984 + $0x2c] sm:$0xf]
        %v2997 = vld [vmem:[%s2984 + $0x30] sm:$0xf]
        %v2998 = vld [vmem:[%s2984 + $0x34] sm:$0xf]
        %v2999 = vld [vmem:[%s2984 + $0x38] sm:$0xf]
        %v3000 = vld [vmem:[%s2984 + $0x3c] sm:$0xf]
        %v3001 = vld [vmem:[%s2984 + $0x40] sm:$0xf]
        %v3002 = vld [vmem:[%s2984 + $0x44] sm:$0xf]
        %v3003 = vld [vmem:[%s2984 + $0x48] sm:$0xf]
        %v3004 = vld [vmem:[%s2984 + $0x4c] sm:$0xf]
        %v3005 = vld [vmem:[%s2984 + $0x50] sm:$0xf]
        %v3006 = vld [vmem:[%s2984 + $0x54] sm:$0xf]
        %v3007 = vld [vmem:[%s2984 + $0x58] sm:$0xf]
        %v3008 = vld [vmem:[%s2984 + $0x5c] sm:$0xf]
        %v3009 = vld [vmem:[%s2984 + $0x60] sm:$0xf]
        %v3010 = vld [vmem:[%s2984 + $0x64] sm:$0xf]
        %v3011 = vld [vmem:[%s2984 + $0x68] sm:$0xf]
        %v3012 = vld [vmem:[%s2984 + $0x6c] sm:$0xf]
        %v3013 = vld [vmem:[%s2984 + $0x70] sm:$0xf]
        %v3014 = vld [vmem:[%s2984 + $0x74] sm:$0xf]
        %v3015 = vld [vmem:[%s2984 + $0x78] sm:$0xf]
        %v3016 = vld [vmem:[%s2984 + $0x7c] sm:$0xf]
        %v3017 = vld [vmem:[%s2984 + $0x80] sm:$0xf]
        %v3018 = vld [vmem:[%s2984 + $0x84] sm:$0xf]
        %v3019 = vld [vmem:[%s2984 + $0x88] sm:$0xf]
        %vm3026 = vcmask 1045504
        %v3027 = vrot.slane %v2978, 2
        %v3028 = vrot.slane %v2981, 2
        %v3029 = vsel %vm3026, %v3027, %v3028
        %v3030 = vrot.slane %v2979, 2
        %v3031 = vrot.slane %v2982, 2
        %v3032 = vsel %vm3026, %v3030, %v3031
        %v3033 = vrot.slane %v2980, 2
        %v3034 = vrot.slane %v2983, 2
        %v3035 = vsel %vm3026, %v3033, %v3034
        %v3073 = vunpack.c.l.b16 %v2985
        %v3074 = vunpack.c.l.b16 %v2986
        %v3075 = vunpack.c.l.b16 %v2987
        %v3076 = vunpack.c.l.b16 %v2988
        %v3077 = vunpack.c.l.b16 %v2989
        %v3078 = vunpack.c.l.b16 %v2990
        %v3079 = vunpack.c.l.b16 %v2991
        %v3080 = vunpack.c.l.b16 %v2992
        %v3081 = vunpack.c.l.b16 %v2993
        %v3082 = vunpack.c.l.b16 %v2994
        %v3083 = vunpack.c.l.b16 %v2995
        %v3084 = vunpack.c.l.b16 %v2996
        %v3085 = vunpack.c.l.b16 %v2997
        %v3086 = vunpack.c.l.b16 %v2998
        %v3087 = vunpack.c.l.b16 %v2999
        %v3088 = vunpack.c.l.b16 %v3000
        %v3089 = vunpack.c.l.b16 %v3001
        %v3090 = vunpack.c.l.b16 %v3002
        %v3091 = vunpack.c.l.b16 %v3003
        %v3092 = vunpack.c.l.b16 %v3004
        %v3093 = vunpack.c.l.b16 %v3005
        %v3094 = vunpack.c.l.b16 %v3006
        %v3095 = vunpack.c.l.b16 %v3007
        %v3096 = vunpack.c.l.b16 %v3008
        %v3097 = vunpack.c.l.b16 %v3009
        %v3098 = vunpack.c.l.b16 %v3010
        %v3099 = vunpack.c.l.b16 %v3011
        %v3100 = vunpack.c.l.b16 %v3012
        %v3101 = vunpack.c.l.b16 %v3013
        %v3102 = vunpack.c.l.b16 %v3014
        %v3103 = vunpack.c.l.b16 %v3015
        %v3104 = vunpack.c.l.b16 %v3016
        %v3105 = vunpack.c.l.b16 %v3017
        %v3106 = vunpack.c.l.b16 %v3018
        %v3107 = vunpack.c.l.b16 %v3019
        %v3108 = vpack.c.b16 %v3074, %v3073
        %v3109 = vpack.c.b16 %v3076, %v3075
        %v3110 = vpack.c.b16 %v3078, %v3077
        %v3111 = vpack.c.b16 %v3080, %v3079
        %v3112 = vpack.c.b16 %v3082, %v3081
        %v3113 = vpack.c.b16 %v3084, %v3083
        %v3114 = vpack.c.b16 %v3086, %v3085
        %v3115 = vpack.c.b16 %v3088, %v3087
        %v3116 = vpack.c.b16 %v3090, %v3089
        %v3117 = vpack.c.b16 %v3092, %v3091
        %v3118 = vpack.c.b16 %v3094, %v3093
        %v3119 = vpack.c.b16 %v3096, %v3095
        %v3120 = vpack.c.b16 %v3098, %v3097
        %v3121 = vpack.c.b16 %v3100, %v3099
        %v3122 = vpack.c.b16 %v3102, %v3101
        %v3123 = vpack.c.b16 %v3104, %v3103
        %v3124 = vpack.c.b16 %v3106, %v3105
        %v3125 = vpack.c.b16 %v3107, %v3107
        %v3144 = vsel %vm1884, %v3035, 0
        %v3147 = vsel %vm2135, %v3125, 0
        %3149 = vmatprep.subr.bf16.mxu0 0
        %3150 = vmatpush1.bf16.msra.mxu0 %v3115
        %3151 = vmatprep.subr.bf16.mxu0 0
        %3152 = vmatpush1.bf16.msra.mxu0 %v3114
        %3153 = vmatprep.subr.bf16.mxu0 0
        %3154 = vmatpush1.bf16.msra.mxu0 %v3113
        %3155 = vmatprep.subr.bf16.mxu0 0
        %3156 = vmatpush1.bf16.msra.mxu0 %v3112
        %3157 = vmatprep.subr.bf16.mxu0 0
        %3158 = vmatpush1.bf16.msra.mxu0 %v3111
        %3159 = vmatprep.subr.bf16.mxu0 0
        %3160 = vmatpush1.bf16.msra.mxu0 %v3110
        %3161 = vmatprep.subr.bf16.mxu0 0
        %3162 = vmatpush1.bf16.msra.mxu0 %v3109
        %3163 = vmatprep.subr.bf16.mxu0 0
        %3164 = vmatpush1.bf16.msra.mxu0 %v3108
        %3165 = vmatprep.subr.bf16.mxu0 0
        %3166 = vmatpush2.bf16.msra.mxu0 %v3123
        %3167 = vmatprep.subr.bf16.mxu0 0
        %3168 = vmatpush2.bf16.msra.mxu0 %v3122
        %3169 = vmatprep.subr.bf16.mxu0 0
        %3170 = vmatpush2.bf16.msra.mxu0 %v3121
        %3171 = vmatprep.subr.bf16.mxu0 0
        %3172 = vmatpush2.bf16.msra.mxu0 %v3120
        %3173 = vmatprep.subr.bf16.mxu0 0
        %3174 = vmatpush2.bf16.msra.mxu0 %v3119
        %3175 = vmatprep.subr.bf16.mxu0 0
        %3176 = vmatpush2.bf16.msra.mxu0 %v3118
        %3177 = vmatprep.subr.bf16.mxu0 0
        %3178 = vmatpush2.bf16.msra.mxu0 %v3117
        %3179 = vmatprep.subr.bf16.mxu0 0
        %3180 = vmatpush2.bf16.msra.mxu0 %v3116
        %3181 = vmatprep.mubr.bf16.mxu0 %v3032
        %3182 = vmatmul.mubr.bf16.gmra.mxu0 %v3029
        %v3183 = vpop.f32.mrf.mxu0
        %v3184 = vadd.f32 0.0, %v3183
        %v3185 = vpop.f32.mrf.mxu0
        %v3186 = vpop.f32.mrf.mxu0
        %v3187 = vadd.f32 0.0, %v3186
        %v3188 = vpop.f32.mrf.mxu0
        %3189 = vdwg.mxu0
        %3190 = vmatprep.subr.bf16.mxu0 0
        %3191 = vmatpush1.bf16.msra.mxu0 0
        %3192 = vmatprep.subr.bf16.mxu0 0
        %3193 = vmatpush1.bf16.msra.mxu0 0
        %3194 = vmatprep.subr.bf16.mxu0 0
        %3195 = vmatpush1.bf16.msra.mxu0 0
        %3196 = vmatprep.subr.bf16.mxu0 0
        %3197 = vmatpush1.bf16.msra.mxu0 0
        %3198 = vmatprep.subr.bf16.mxu0 0
        %3199 = vmatpush1.bf16.msra.mxu0 0
        %3200 = vmatprep.subr.bf16.mxu0 0
        %3201 = vmatpush1.bf16.msra.mxu0 0
        %3202 = vmatprep.subr.bf16.mxu0 0
        %3203 = vmatpush1.bf16.msra.mxu0 %v3147
        %3204 = vmatprep.subr.bf16.mxu0 0
        %3205 = vmatpush1.bf16.msra.mxu0 %v3124
        %3206 = vmatprep.subr.bf16.mxu0 0
        %3207 = vmatpush2.bf16.msra.mxu0 0
        %3208 = vmatprep.subr.bf16.mxu0 0
        %3209 = vmatpush2.bf16.msra.mxu0 0
        %3210 = vmatprep.subr.bf16.mxu0 0
        %3211 = vmatpush2.bf16.msra.mxu0 0
        %3212 = vmatprep.subr.bf16.mxu0 0
        %3213 = vmatpush2.bf16.msra.mxu0 0
        %3214 = vmatprep.subr.bf16.mxu0 0
        %3215 = vmatpush2.bf16.msra.mxu0 0
        %3216 = vmatprep.subr.bf16.mxu0 0
        %3217 = vmatpush2.bf16.msra.mxu0 0
        %3218 = vmatprep.subr.bf16.mxu0 0
        %3219 = vmatpush2.bf16.msra.mxu0 0
        %3220 = vmatprep.subr.bf16.mxu0 0
        %3221 = vmatpush2.bf16.msra.mxu0 0
        %3222 = vmatprep.mubr.bf16.mxu0 0
        %3223 = vmatmul.mubr.bf16.gmra.mxu0 %v3144
        %v3224 = vpop.f32.mrf.mxu0
        %v3225 = vadd.f32 %v3184, %v3224
        %v3226 = vpop.f32.mrf.mxu0
        %v3227 = vpop.f32.mrf.mxu0
        %v3228 = vadd.f32 %v3187, %v3227
        %v3229 = vpop.f32.mrf.mxu0
        %3230 = vdwg.mxu0
        %v3231 = vadd.f32 %v2970, %v3225
        %v3232 = vadd.f32 %v2971, %v3228
        %v3233 = vld [vmem:[#allocation2] sm:$0xe0]
        %v3234 = vld [vmem:[#allocation2 + $0x8] sm:$0xe0]
        %v3235 = vld [vmem:[#allocation2 + $0x10] sm:$0xe0]
        %v3236 = vld [vmem:[#allocation2 + $0x30] sm:$0x1f]
        %v3237 = vld [vmem:[#allocation2 + $0x38] sm:$0x1f]
        %v3238 = vld [vmem:[#allocation2 + $0x40] sm:$0x1f]
        %v3239 = vpack.c.bf16 %v1899, %v3233
        %v3240 = vpack.c.bf16 %v1900, %v3234
        %v3241 = vpack.c.bf16 %v1901, %v3235
        %v3242 = vpack.c.bf16 %v3236, %v3236
        %v3243 = vpack.c.bf16 %v3237, %v3237
        %v3244 = vpack.c.bf16 %v3238, %v3238
        %s3245 = scalar_lea.vmem %s3, 700
        %v3246 = vld [vmem:[%s3245] sm:$0xf]
        %v3247 = vld [vmem:[%s3245 + $0x4] sm:$0xf]
        %v3248 = vld [vmem:[%s3245 + $0x8] sm:$0xf]
        %v3249 = vld [vmem:[%s3245 + $0xc] sm:$0xf]
        %v3250 = vld [vmem:[%s3245 + $0x10] sm:$0xf]
        %v3251 = vld [vmem:[%s3245 + $0x14] sm:$0xf]
        %v3252 = vld [vmem:[%s3245 + $0x18] sm:$0xf]
        %v3253 = vld [vmem:[%s3245 + $0x1c] sm:$0xf]
        %v3254 = vld [vmem:[%s3245 + $0x20] sm:$0xf]
        %v3255 = vld [vmem:[%s3245 + $0x24] sm:$0xf]
        %v3256 = vld [vmem:[%s3245 + $0x28] sm:$0xf]
        %v3257 = vld [vmem:[%s3245 + $0x2c] sm:$0xf]
        %v3258 = vld [vmem:[%s3245 + $0x30] sm:$0xf]
        %v3259 = vld [vmem:[%s3245 + $0x34] sm:$0xf]
        %v3260 = vld [vmem:[%s3245 + $0x38] sm:$0xf]
        %v3261 = vld [vmem:[%s3245 + $0x3c] sm:$0xf]
        %v3262 = vld [vmem:[%s3245 + $0x40] sm:$0xf]
        %v3263 = vld [vmem:[%s3245 + $0x44] sm:$0xf]
        %v3264 = vld [vmem:[%s3245 + $0x48] sm:$0xf]
        %v3265 = vld [vmem:[%s3245 + $0x4c] sm:$0xf]
        %v3266 = vld [vmem:[%s3245 + $0x50] sm:$0xf]
        %v3267 = vld [vmem:[%s3245 + $0x54] sm:$0xf]
        %v3268 = vld [vmem:[%s3245 + $0x58] sm:$0xf]
        %v3269 = vld [vmem:[%s3245 + $0x5c] sm:$0xf]
        %v3270 = vld [vmem:[%s3245 + $0x60] sm:$0xf]
        %v3271 = vld [vmem:[%s3245 + $0x64] sm:$0xf]
        %v3272 = vld [vmem:[%s3245 + $0x68] sm:$0xf]
        %v3273 = vld [vmem:[%s3245 + $0x6c] sm:$0xf]
        %v3274 = vld [vmem:[%s3245 + $0x70] sm:$0xf]
        %v3275 = vld [vmem:[%s3245 + $0x74] sm:$0xf]
        %v3276 = vld [vmem:[%s3245 + $0x78] sm:$0xf]
        %v3277 = vld [vmem:[%s3245 + $0x7c] sm:$0xf]
        %v3278 = vld [vmem:[%s3245 + $0x80] sm:$0xf]
        %v3279 = vld [vmem:[%s3245 + $0x84] sm:$0xf]
        %v3280 = vld [vmem:[%s3245 + $0x88] sm:$0xf]
        %vm3281 = vsmask.f32 5376
        %v3283 = vshrl.u32 %v3239, 16
        %v3285 = vrot.slane %v3283, 2
        %v3286 = vshll.u32 %v3239, 16
        %v3288 = vrot.slane %v3286, 3
        %v3289 = vor.u32 %v3285, %v3288
        %v3291 = vshrl.u32 %v3242, 16
        %v3293 = vrot.slane %v3291, 2
        %v3294 = vshll.u32 %v3242, 16
        %v3296 = vrot.slane %v3294, 3
        %v3297 = vor.u32 %v3293, %v3296
        %v3298 = vsel %vm3281, %v3289, %v3297
        %v3300 = vshrl.u32 %v3240, 16
        %v3302 = vrot.slane %v3300, 2
        %v3303 = vshll.u32 %v3240, 16
        %v3305 = vrot.slane %v3303, 3
        %v3306 = vor.u32 %v3302, %v3305
        %v3308 = vshrl.u32 %v3243, 16
        %v3310 = vrot.slane %v3308, 2
        %v3311 = vshll.u32 %v3243, 16
        %v3313 = vrot.slane %v3311, 3
        %v3314 = vor.u32 %v3310, %v3313
        %v3315 = vsel %vm3281, %v3306, %v3314
        %v3317 = vshrl.u32 %v3241, 16
        %v3319 = vrot.slane %v3317, 2
        %v3320 = vshll.u32 %v3241, 16
        %v3322 = vrot.slane %v3320, 3
        %v3323 = vor.u32 %v3319, %v3322
        %v3325 = vshrl.u32 %v3244, 16
        %v3327 = vrot.slane %v3325, 2
        %v3328 = vshll.u32 %v3244, 16
        %v3330 = vrot.slane %v3328, 3
        %v3331 = vor.u32 %v3327, %v3330
        %v3332 = vsel %vm3281, %v3323, %v3331
        %v3370 = vunpack.c.l.b16 %v3246
        %v3371 = vunpack.c.l.b16 %v3247
        %v3372 = vunpack.c.l.b16 %v3248
        %v3373 = vunpack.c.l.b16 %v3249
        %v3374 = vunpack.c.l.b16 %v3250
        %v3375 = vunpack.c.l.b16 %v3251
        %v3376 = vunpack.c.l.b16 %v3252
        %v3377 = vunpack.c.l.b16 %v3253
        %v3378 = vunpack.c.l.b16 %v3254
        %v3379 = vunpack.c.l.b16 %v3255
        %v3380 = vunpack.c.l.b16 %v3256
        %v3381 = vunpack.c.l.b16 %v3257
        %v3382 = vunpack.c.l.b16 %v3258
        %v3383 = vunpack.c.l.b16 %v3259
        %v3384 = vunpack.c.l.b16 %v3260
        %v3385 = vunpack.c.l.b16 %v3261
        %v3386 = vunpack.c.l.b16 %v3262
        %v3387 = vunpack.c.l.b16 %v3263
        %v3388 = vunpack.c.l.b16 %v3264
        %v3389 = vunpack.c.l.b16 %v3265
        %v3390 = vunpack.c.l.b16 %v3266
        %v3391 = vunpack.c.l.b16 %v3267
        %v3392 = vunpack.c.l.b16 %v3268
        %v3393 = vunpack.c.l.b16 %v3269
        %v3394 = vunpack.c.l.b16 %v3270
        %v3395 = vunpack.c.l.b16 %v3271
        %v3396 = vunpack.c.l.b16 %v3272
        %v3397 = vunpack.c.l.b16 %v3273
        %v3398 = vunpack.c.l.b16 %v3274
        %v3399 = vunpack.c.l.b16 %v3275
        %v3400 = vunpack.c.l.b16 %v3276
        %v3401 = vunpack.c.l.b16 %v3277
        %v3402 = vunpack.c.l.b16 %v3278
        %v3403 = vunpack.c.l.b16 %v3279
        %v3404 = vunpack.c.l.b16 %v3280
        %v3405 = vpack.c.b16 %v3371, %v3370
        %v3406 = vpack.c.b16 %v3373, %v3372
        %v3407 = vpack.c.b16 %v3375, %v3374
        %v3408 = vpack.c.b16 %v3377, %v3376
        %v3409 = vpack.c.b16 %v3379, %v3378
        %v3410 = vpack.c.b16 %v3381, %v3380
        %v3411 = vpack.c.b16 %v3383, %v3382
        %v3412 = vpack.c.b16 %v3385, %v3384
        %v3413 = vpack.c.b16 %v3387, %v3386
        %v3414 = vpack.c.b16 %v3389, %v3388
        %v3415 = vpack.c.b16 %v3391, %v3390
        %v3416 = vpack.c.b16 %v3393, %v3392
        %v3417 = vpack.c.b16 %v3395, %v3394
        %v3418 = vpack.c.b16 %v3397, %v3396
        %v3419 = vpack.c.b16 %v3399, %v3398
        %v3420 = vpack.c.b16 %v3401, %v3400
        %v3421 = vpack.c.b16 %v3403, %v3402
        %v3422 = vpack.c.b16 %v3404, %v3404
        %v3441 = vsel %vm1884, %v3332, 0
        %v3444 = vsel %vm2135, %v3422, 0
        %3446 = vmatprep.subr.bf16.mxu0 0
        %3447 = vmatpush1.bf16.msra.mxu0 %v3412
        %3448 = vmatprep.subr.bf16.mxu0 0
        %3449 = vmatpush1.bf16.msra.mxu0 %v3411
        %3450 = vmatprep.subr.bf16.mxu0 0
        %3451 = vmatpush1.bf16.msra.mxu0 %v3410
        %3452 = vmatprep.subr.bf16.mxu0 0
        %3453 = vmatpush1.bf16.msra.mxu0 %v3409
        %3454 = vmatprep.subr.bf16.mxu0 0
        %3455 = vmatpush1.bf16.msra.mxu0 %v3408
        %3456 = vmatprep.subr.bf16.mxu0 0
        %3457 = vmatpush1.bf16.msra.mxu0 %v3407
        %3458 = vmatprep.subr.bf16.mxu0 0
        %3459 = vmatpush1.bf16.msra.mxu0 %v3406
        %3460 = vmatprep.subr.bf16.mxu0 0
        %3461 = vmatpush1.bf16.msra.mxu0 %v3405
        %3462 = vmatprep.subr.bf16.mxu0 0
        %3463 = vmatpush2.bf16.msra.mxu0 %v3420
        %3464 = vmatprep.subr.bf16.mxu0 0
        %3465 = vmatpush2.bf16.msra.mxu0 %v3419
        %3466 = vmatprep.subr.bf16.mxu0 0
        %3467 = vmatpush2.bf16.msra.mxu0 %v3418
        %3468 = vmatprep.subr.bf16.mxu0 0
        %3469 = vmatpush2.bf16.msra.mxu0 %v3417
        %3470 = vmatprep.subr.bf16.mxu0 0
        %3471 = vmatpush2.bf16.msra.mxu0 %v3416
        %3472 = vmatprep.subr.bf16.mxu0 0
        %3473 = vmatpush2.bf16.msra.mxu0 %v3415
        %3474 = vmatprep.subr.bf16.mxu0 0
        %3475 = vmatpush2.bf16.msra.mxu0 %v3414
        %3476 = vmatprep.subr.bf16.mxu0 0
        %3477 = vmatpush2.bf16.msra.mxu0 %v3413
        %3478 = vmatprep.mubr.bf16.mxu0 %v3315
        %3479 = vmatmul.mubr.bf16.gmra.mxu0 %v3298
        %v3480 = vpop.f32.mrf.mxu0
        %v3481 = vadd.f32 0.0, %v3480
        %v3482 = vpop.f32.mrf.mxu0
        %v3483 = vpop.f32.mrf.mxu0
        %v3484 = vadd.f32 0.0, %v3483
        %v3485 = vpop.f32.mrf.mxu0
        %3486 = vdwg.mxu0
        %3487 = vmatprep.subr.bf16.mxu0 0
        %3488 = vmatpush1.bf16.msra.mxu0 0
        %3489 = vmatprep.subr.bf16.mxu0 0
        %3490 = vmatpush1.bf16.msra.mxu0 0
        %3491 = vmatprep.subr.bf16.mxu0 0
        %3492 = vmatpush1.bf16.msra.mxu0 0
        %3493 = vmatprep.subr.bf16.mxu0 0
        %3494 = vmatpush1.bf16.msra.mxu0 0
        %3495 = vmatprep.subr.bf16.mxu0 0
        %3496 = vmatpush1.bf16.msra.mxu0 0
        %3497 = vmatprep.subr.bf16.mxu0 0
        %3498 = vmatpush1.bf16.msra.mxu0 0
        %3499 = vmatprep.subr.bf16.mxu0 0
        %3500 = vmatpush1.bf16.msra.mxu0 %v3444
        %3501 = vmatprep.subr.bf16.mxu0 0
        %3502 = vmatpush1.bf16.msra.mxu0 %v3421
        %3503 = vmatprep.subr.bf16.mxu0 0
        %3504 = vmatpush2.bf16.msra.mxu0 0
        %3505 = vmatprep.subr.bf16.mxu0 0
        %3506 = vmatpush2.bf16.msra.mxu0 0
        %3507 = vmatprep.subr.bf16.mxu0 0
        %3508 = vmatpush2.bf16.msra.mxu0 0
        %3509 = vmatprep.subr.bf16.mxu0 0
        %3510 = vmatpush2.bf16.msra.mxu0 0
        %3511 = vmatprep.subr.bf16.mxu0 0
        %3512 = vmatpush2.bf16.msra.mxu0 0
        %3513 = vmatprep.subr.bf16.mxu0 0
        %3514 = vmatpush2.bf16.msra.mxu0 0
        %3515 = vmatprep.subr.bf16.mxu0 0
        %3516 = vmatpush2.bf16.msra.mxu0 0
        %3517 = vmatprep.subr.bf16.mxu0 0
        %3518 = vmatpush2.bf16.msra.mxu0 0
        %3519 = vmatprep.mubr.bf16.mxu0 0
        %3520 = vmatmul.mubr.bf16.gmra.mxu0 %v3441
        %v3521 = vpop.f32.mrf.mxu0
        %v3522 = vadd.f32 %v3481, %v3521
        %v3523 = vpop.f32.mrf.mxu0
        %v3524 = vpop.f32.mrf.mxu0
        %v3525 = vadd.f32 %v3484, %v3524
        %v3526 = vpop.f32.mrf.mxu0
        %3527 = vdwg.mxu0
        %v3528 = vadd.f32 %v3231, %v3522
        %v3529 = vadd.f32 %v3232, %v3525
        %v3530 = vld [vmem:[#allocation2] sm:$0xc0]
        %v3531 = vld [vmem:[#allocation2 + $0x8] sm:$0xc0]
        %v3532 = vld [vmem:[#allocation2 + $0x10] sm:$0xc0]
        %v3533 = vld [vmem:[#allocation2 + $0x30] sm:$0x3f]
        %v3534 = vld [vmem:[#allocation2 + $0x38] sm:$0x3f]
        %v3535 = vld [vmem:[#allocation2 + $0x40] sm:$0x3f]
        %v3536 = vpack.c.bf16 %v1899, %v3530
        %v3537 = vpack.c.bf16 %v1900, %v3531
        %v3538 = vpack.c.bf16 %v1901, %v3532
        %v3539 = vpack.c.bf16 %v3533, %v3533
        %v3540 = vpack.c.bf16 %v3534, %v3534
        %v3541 = vpack.c.bf16 %v3535, %v3535
        %s3542 = scalar_lea.vmem %s3, 840
        %v3543 = vld [vmem:[%s3542] sm:$0xf]
        %v3544 = vld [vmem:[%s3542 + $0x4] sm:$0xf]
        %v3545 = vld [vmem:[%s3542 + $0x8] sm:$0xf]
        %v3546 = vld [vmem:[%s3542 + $0xc] sm:$0xf]
        %v3547 = vld [vmem:[%s3542 + $0x10] sm:$0xf]
        %v3548 = vld [vmem:[%s3542 + $0x14] sm:$0xf]
        %v3549 = vld [vmem:[%s3542 + $0x18] sm:$0xf]
        %v3550 = vld [vmem:[%s3542 + $0x1c] sm:$0xf]
        %v3551 = vld [vmem:[%s3542 + $0x20] sm:$0xf]
        %v3552 = vld [vmem:[%s3542 + $0x24] sm:$0xf]
        %v3553 = vld [vmem:[%s3542 + $0x28] sm:$0xf]
        %v3554 = vld [vmem:[%s3542 + $0x2c] sm:$0xf]
        %v3555 = vld [vmem:[%s3542 + $0x30] sm:$0xf]
        %v3556 = vld [vmem:[%s3542 + $0x34] sm:$0xf]
        %v3557 = vld [vmem:[%s3542 + $0x38] sm:$0xf]
        %v3558 = vld [vmem:[%s3542 + $0x3c] sm:$0xf]
        %v3559 = vld [vmem:[%s3542 + $0x40] sm:$0xf]
        %v3560 = vld [vmem:[%s3542 + $0x44] sm:$0xf]
        %v3561 = vld [vmem:[%s3542 + $0x48] sm:$0xf]
        %v3562 = vld [vmem:[%s3542 + $0x4c] sm:$0xf]
        %v3563 = vld [vmem:[%s3542 + $0x50] sm:$0xf]
        %v3564 = vld [vmem:[%s3542 + $0x54] sm:$0xf]
        %v3565 = vld [vmem:[%s3542 + $0x58] sm:$0xf]
        %v3566 = vld [vmem:[%s3542 + $0x5c] sm:$0xf]
        %v3567 = vld [vmem:[%s3542 + $0x60] sm:$0xf]
        %v3568 = vld [vmem:[%s3542 + $0x64] sm:$0xf]
        %v3569 = vld [vmem:[%s3542 + $0x68] sm:$0xf]
        %v3570 = vld [vmem:[%s3542 + $0x6c] sm:$0xf]
        %v3571 = vld [vmem:[%s3542 + $0x70] sm:$0xf]
        %v3572 = vld [vmem:[%s3542 + $0x74] sm:$0xf]
        %v3573 = vld [vmem:[%s3542 + $0x78] sm:$0xf]
        %v3574 = vld [vmem:[%s3542 + $0x7c] sm:$0xf]
        %v3575 = vld [vmem:[%s3542 + $0x80] sm:$0xf]
        %v3576 = vld [vmem:[%s3542 + $0x84] sm:$0xf]
        %v3577 = vld [vmem:[%s3542 + $0x88] sm:$0xf]
        %vm3584 = vcmask 1044480
        %v3585 = vrot.slane %v3536, 3
        %v3586 = vrot.slane %v3539, 3
        %v3587 = vsel %vm3584, %v3585, %v3586
        %v3588 = vrot.slane %v3537, 3
        %v3589 = vrot.slane %v3540, 3
        %v3590 = vsel %vm3584, %v3588, %v3589
        %v3591 = vrot.slane %v3538, 3
        %v3592 = vrot.slane %v3541, 3
        %v3593 = vsel %vm3584, %v3591, %v3592
        %v3631 = vunpack.c.l.b16 %v3543
        %v3632 = vunpack.c.l.b16 %v3544
        %v3633 = vunpack.c.l.b16 %v3545
        %v3634 = vunpack.c.l.b16 %v3546
        %v3635 = vunpack.c.l.b16 %v3547
        %v3636 = vunpack.c.l.b16 %v3548
        %v3637 = vunpack.c.l.b16 %v3549
        %v3638 = vunpack.c.l.b16 %v3550
        %v3639 = vunpack.c.l.b16 %v3551
        %v3640 = vunpack.c.l.b16 %v3552
        %v3641 = vunpack.c.l.b16 %v3553
        %v3642 = vunpack.c.l.b16 %v3554
        %v3643 = vunpack.c.l.b16 %v3555
        %v3644 = vunpack.c.l.b16 %v3556
        %v3645 = vunpack.c.l.b16 %v3557
        %v3646 = vunpack.c.l.b16 %v3558
        %v3647 = vunpack.c.l.b16 %v3559
        %v3648 = vunpack.c.l.b16 %v3560
        %v3649 = vunpack.c.l.b16 %v3561
        %v3650 = vunpack.c.l.b16 %v3562
        %v3651 = vunpack.c.l.b16 %v3563
        %v3652 = vunpack.c.l.b16 %v3564
        %v3653 = vunpack.c.l.b16 %v3565
        %v3654 = vunpack.c.l.b16 %v3566
        %v3655 = vunpack.c.l.b16 %v3567
        %v3656 = vunpack.c.l.b16 %v3568
        %v3657 = vunpack.c.l.b16 %v3569
        %v3658 = vunpack.c.l.b16 %v3570
        %v3659 = vunpack.c.l.b16 %v3571
        %v3660 = vunpack.c.l.b16 %v3572
        %v3661 = vunpack.c.l.b16 %v3573
        %v3662 = vunpack.c.l.b16 %v3574
        %v3663 = vunpack.c.l.b16 %v3575
        %v3664 = vunpack.c.l.b16 %v3576
        %v3665 = vunpack.c.l.b16 %v3577
        %v3666 = vpack.c.b16 %v3632, %v3631
        %v3667 = vpack.c.b16 %v3634, %v3633
        %v3668 = vpack.c.b16 %v3636, %v3635
        %v3669 = vpack.c.b16 %v3638, %v3637
        %v3670 = vpack.c.b16 %v3640, %v3639
        %v3671 = vpack.c.b16 %v3642, %v3641
        %v3672 = vpack.c.b16 %v3644, %v3643
        %v3673 = vpack.c.b16 %v3646, %v3645
        %v3674 = vpack.c.b16 %v3648, %v3647
        %v3675 = vpack.c.b16 %v3650, %v3649
        %v3676 = vpack.c.b16 %v3652, %v3651
        %v3677 = vpack.c.b16 %v3654, %v3653
        %v3678 = vpack.c.b16 %v3656, %v3655
        %v3679 = vpack.c.b16 %v3658, %v3657
        %v3680 = vpack.c.b16 %v3660, %v3659
        %v3681 = vpack.c.b16 %v3662, %v3661
        %v3682 = vpack.c.b16 %v3664, %v3663
        %v3683 = vpack.c.b16 %v3665, %v3665
        %v3702 = vsel %vm1884, %v3593, 0
        %v3705 = vsel %vm2135, %v3683, 0
        %3707 = vmatprep.subr.bf16.mxu0 0
        %3708 = vmatpush1.bf16.msra.mxu0 %v3673
        %3709 = vmatprep.subr.bf16.mxu0 0
        %3710 = vmatpush1.bf16.msra.mxu0 %v3672
        %3711 = vmatprep.subr.bf16.mxu0 0
        %3712 = vmatpush1.bf16.msra.mxu0 %v3671
        %3713 = vmatprep.subr.bf16.mxu0 0
        %3714 = vmatpush1.bf16.msra.mxu0 %v3670
        %3715 = vmatprep.subr.bf16.mxu0 0
        %3716 = vmatpush1.bf16.msra.mxu0 %v3669
        %3717 = vmatprep.subr.bf16.mxu0 0
        %3718 = vmatpush1.bf16.msra.mxu0 %v3668
        %3719 = vmatprep.subr.bf16.mxu0 0
        %3720 = vmatpush1.bf16.msra.mxu0 %v3667
        %3721 = vmatprep.subr.bf16.mxu0 0
        %3722 = vmatpush1.bf16.msra.mxu0 %v3666
        %3723 = vmatprep.subr.bf16.mxu0 0
        %3724 = vmatpush2.bf16.msra.mxu0 %v3681
        %3725 = vmatprep.subr.bf16.mxu0 0
        %3726 = vmatpush2.bf16.msra.mxu0 %v3680
        %3727 = vmatprep.subr.bf16.mxu0 0
        %3728 = vmatpush2.bf16.msra.mxu0 %v3679
        %3729 = vmatprep.subr.bf16.mxu0 0
        %3730 = vmatpush2.bf16.msra.mxu0 %v3678
        %3731 = vmatprep.subr.bf16.mxu0 0
        %3732 = vmatpush2.bf16.msra.mxu0 %v3677
        %3733 = vmatprep.subr.bf16.mxu0 0
        %3734 = vmatpush2.bf16.msra.mxu0 %v3676
        %3735 = vmatprep.subr.bf16.mxu0 0
        %3736 = vmatpush2.bf16.msra.mxu0 %v3675
        %3737 = vmatprep.subr.bf16.mxu0 0
        %3738 = vmatpush2.bf16.msra.mxu0 %v3674
        %3739 = vmatprep.mubr.bf16.mxu0 %v3590
        %3740 = vmatmul.mubr.bf16.gmra.mxu0 %v3587
        %v3741 = vpop.f32.mrf.mxu0
        %v3742 = vadd.f32 0.0, %v3741
        %v3743 = vpop.f32.mrf.mxu0
        %v3744 = vpop.f32.mrf.mxu0
        %v3745 = vadd.f32 0.0, %v3744
        %v3746 = vpop.f32.mrf.mxu0
        %3747 = vdwg.mxu0
        %3748 = vmatprep.subr.bf16.mxu0 0
        %3749 = vmatpush1.bf16.msra.mxu0 0
        %3750 = vmatprep.subr.bf16.mxu0 0
        %3751 = vmatpush1.bf16.msra.mxu0 0
        %3752 = vmatprep.subr.bf16.mxu0 0
        %3753 = vmatpush1.bf16.msra.mxu0 0
        %3754 = vmatprep.subr.bf16.mxu0 0
        %3755 = vmatpush1.bf16.msra.mxu0 0
        %3756 = vmatprep.subr.bf16.mxu0 0
        %3757 = vmatpush1.bf16.msra.mxu0 0
        %3758 = vmatprep.subr.bf16.mxu0 0
        %3759 = vmatpush1.bf16.msra.mxu0 0
        %3760 = vmatprep.subr.bf16.mxu0 0
        %3761 = vmatpush1.bf16.msra.mxu0 %v3705
        %3762 = vmatprep.subr.bf16.mxu0 0
        %3763 = vmatpush1.bf16.msra.mxu0 %v3682
        %3764 = vmatprep.subr.bf16.mxu0 0
        %3765 = vmatpush2.bf16.msra.mxu0 0
        %3766 = vmatprep.subr.bf16.mxu0 0
        %3767 = vmatpush2.bf16.msra.mxu0 0
        %3768 = vmatprep.subr.bf16.mxu0 0
        %3769 = vmatpush2.bf16.msra.mxu0 0
        %3770 = vmatprep.subr.bf16.mxu0 0
        %3771 = vmatpush2.bf16.msra.mxu0 0
        %3772 = vmatprep.subr.bf16.mxu0 0
        %3773 = vmatpush2.bf16.msra.mxu0 0
        %3774 = vmatprep.subr.bf16.mxu0 0
        %3775 = vmatpush2.bf16.msra.mxu0 0
        %3776 = vmatprep.subr.bf16.mxu0 0
        %3777 = vmatpush2.bf16.msra.mxu0 0
        %3778 = vmatprep.subr.bf16.mxu0 0
        %3779 = vmatpush2.bf16.msra.mxu0 0
        %3780 = vmatprep.mubr.bf16.mxu0 0
        %3781 = vmatmul.mubr.bf16.gmra.mxu0 %v3702
        %v3782 = vpop.f32.mrf.mxu0
        %v3783 = vadd.f32 %v3742, %v3782
        %v3784 = vpop.f32.mrf.mxu0
        %v3785 = vpop.f32.mrf.mxu0
        %v3786 = vadd.f32 %v3745, %v3785
        %v3787 = vpop.f32.mrf.mxu0
        %3788 = vdwg.mxu0
        %v3789 = vadd.f32 %v3528, %v3783
        %v3790 = vadd.f32 %v3529, %v3786
        %v3791 = vld [vmem:[#allocation2] sm:$0x80]
        %v3792 = vld [vmem:[#allocation2 + $0x8] sm:$0x80]
        %v3793 = vld [vmem:[#allocation2 + $0x10] sm:$0x80]
        %v3794 = vld [vmem:[#allocation2 + $0x30] sm:$0x7f]
        %v3795 = vld [vmem:[#allocation2 + $0x38] sm:$0x7f]
        %v3796 = vld [vmem:[#allocation2 + $0x40] sm:$0x7f]
        %v3797 = vpack.c.bf16 %v1899, %v3791
        %v3798 = vpack.c.bf16 %v1900, %v3792
        %v3799 = vpack.c.bf16 %v1901, %v3793
        %v3800 = vpack.c.bf16 %v3794, %v3794
        %v3801 = vpack.c.bf16 %v3795, %v3795
        %v3802 = vpack.c.bf16 %v3796, %v3796
        %s3803 = scalar_lea.vmem %s3, 980
        %v3804 = vld [vmem:[%s3803] sm:$0xf]
        %v3805 = vld [vmem:[%s3803 + $0x4] sm:$0xf]
        %v3806 = vld [vmem:[%s3803 + $0x8] sm:$0xf]
        %v3807 = vld [vmem:[%s3803 + $0xc] sm:$0xf]
        %v3808 = vld [vmem:[%s3803 + $0x10] sm:$0xf]
        %v3809 = vld [vmem:[%s3803 + $0x14] sm:$0xf]
        %v3810 = vld [vmem:[%s3803 + $0x18] sm:$0xf]
        %v3811 = vld [vmem:[%s3803 + $0x1c] sm:$0xf]
        %v3812 = vld [vmem:[%s3803 + $0x20] sm:$0xf]
        %v3813 = vld [vmem:[%s3803 + $0x24] sm:$0xf]
        %v3814 = vld [vmem:[%s3803 + $0x28] sm:$0xf]
        %v3815 = vld [vmem:[%s3803 + $0x2c] sm:$0xf]
        %v3816 = vld [vmem:[%s3803 + $0x30] sm:$0xf]
        %v3817 = vld [vmem:[%s3803 + $0x34] sm:$0xf]
        %v3818 = vld [vmem:[%s3803 + $0x38] sm:$0xf]
        %v3819 = vld [vmem:[%s3803 + $0x3c] sm:$0xf]
        %v3820 = vld [vmem:[%s3803 + $0x40] sm:$0xf]
        %v3821 = vld [vmem:[%s3803 + $0x44] sm:$0xf]
        %v3822 = vld [vmem:[%s3803 + $0x48] sm:$0xf]
        %v3823 = vld [vmem:[%s3803 + $0x4c] sm:$0xf]
        %v3824 = vld [vmem:[%s3803 + $0x50] sm:$0xf]
        %v3825 = vld [vmem:[%s3803 + $0x54] sm:$0xf]
        %v3826 = vld [vmem:[%s3803 + $0x58] sm:$0xf]
        %v3827 = vld [vmem:[%s3803 + $0x5c] sm:$0xf]
        %v3828 = vld [vmem:[%s3803 + $0x60] sm:$0xf]
        %v3829 = vld [vmem:[%s3803 + $0x64] sm:$0xf]
        %v3830 = vld [vmem:[%s3803 + $0x68] sm:$0xf]
        %v3831 = vld [vmem:[%s3803 + $0x6c] sm:$0xf]
        %v3832 = vld [vmem:[%s3803 + $0x70] sm:$0xf]
        %v3833 = vld [vmem:[%s3803 + $0x74] sm:$0xf]
        %v3834 = vld [vmem:[%s3803 + $0x78] sm:$0xf]
        %v3835 = vld [vmem:[%s3803 + $0x7c] sm:$0xf]
        %v3836 = vld [vmem:[%s3803 + $0x80] sm:$0xf]
        %v3837 = vld [vmem:[%s3803 + $0x84] sm:$0xf]
        %v3838 = vld [vmem:[%s3803 + $0x88] sm:$0xf]
        %vm3839 = vsmask.f32 4352
        %v3841 = vshrl.u32 %v3797, 16
        %v3843 = vrot.slane %v3841, 3
        %v3844 = vshll.u32 %v3797, 16
        %v3846 = vrot.slane %v3844, 4
        %v3847 = vor.u32 %v3843, %v3846
        %v3849 = vshrl.u32 %v3800, 16
        %v3851 = vrot.slane %v3849, 3
        %v3852 = vshll.u32 %v3800, 16
        %v3854 = vrot.slane %v3852, 4
        %v3855 = vor.u32 %v3851, %v3854
        %v3856 = vsel %vm3839, %v3847, %v3855
        %v3858 = vshrl.u32 %v3798, 16
        %v3860 = vrot.slane %v3858, 3
        %v3861 = vshll.u32 %v3798, 16
        %v3863 = vrot.slane %v3861, 4
        %v3864 = vor.u32 %v3860, %v3863
        %v3866 = vshrl.u32 %v3801, 16
        %v3868 = vrot.slane %v3866, 3
        %v3869 = vshll.u32 %v3801, 16
        %v3871 = vrot.slane %v3869, 4
        %v3872 = vor.u32 %v3868, %v3871
        %v3873 = vsel %vm3839, %v3864, %v3872
        %v3875 = vshrl.u32 %v3799, 16
        %v3877 = vrot.slane %v3875, 3
        %v3878 = vshll.u32 %v3799, 16
        %v3880 = vrot.slane %v3878, 4
        %v3881 = vor.u32 %v3877, %v3880
        %v3883 = vshrl.u32 %v3802, 16
        %v3885 = vrot.slane %v3883, 3
        %v3886 = vshll.u32 %v3802, 16
        %v3888 = vrot.slane %v3886, 4
        %v3889 = vor.u32 %v3885, %v3888
        %v3890 = vsel %vm3839, %v3881, %v3889
        %v3928 = vunpack.c.l.b16 %v3804
        %v3929 = vunpack.c.l.b16 %v3805
        %v3930 = vunpack.c.l.b16 %v3806
        %v3931 = vunpack.c.l.b16 %v3807
        %v3932 = vunpack.c.l.b16 %v3808
        %v3933 = vunpack.c.l.b16 %v3809
        %v3934 = vunpack.c.l.b16 %v3810
        %v3935 = vunpack.c.l.b16 %v3811
        %v3936 = vunpack.c.l.b16 %v3812
        %v3937 = vunpack.c.l.b16 %v3813
        %v3938 = vunpack.c.l.b16 %v3814
        %v3939 = vunpack.c.l.b16 %v3815
        %v3940 = vunpack.c.l.b16 %v3816
        %v3941 = vunpack.c.l.b16 %v3817
        %v3942 = vunpack.c.l.b16 %v3818
        %v3943 = vunpack.c.l.b16 %v3819
        %v3944 = vunpack.c.l.b16 %v3820
        %v3945 = vunpack.c.l.b16 %v3821
        %v3946 = vunpack.c.l.b16 %v3822
        %v3947 = vunpack.c.l.b16 %v3823
        %v3948 = vunpack.c.l.b16 %v3824
        %v3949 = vunpack.c.l.b16 %v3825
        %v3950 = vunpack.c.l.b16 %v3826
        %v3951 = vunpack.c.l.b16 %v3827
        %v3952 = vunpack.c.l.b16 %v3828
        %v3953 = vunpack.c.l.b16 %v3829
        %v3954 = vunpack.c.l.b16 %v3830
        %v3955 = vunpack.c.l.b16 %v3831
        %v3956 = vunpack.c.l.b16 %v3832
        %v3957 = vunpack.c.l.b16 %v3833
        %v3958 = vunpack.c.l.b16 %v3834
        %v3959 = vunpack.c.l.b16 %v3835
        %v3960 = vunpack.c.l.b16 %v3836
        %v3961 = vunpack.c.l.b16 %v3837
        %v3962 = vunpack.c.l.b16 %v3838
        %v3963 = vpack.c.b16 %v3929, %v3928
        %v3964 = vpack.c.b16 %v3931, %v3930
        %v3965 = vpack.c.b16 %v3933, %v3932
        %v3966 = vpack.c.b16 %v3935, %v3934
        %v3967 = vpack.c.b16 %v3937, %v3936
        %v3968 = vpack.c.b16 %v3939, %v3938
        %v3969 = vpack.c.b16 %v3941, %v3940
        %v3970 = vpack.c.b16 %v3943, %v3942
        %v3971 = vpack.c.b16 %v3945, %v3944
        %v3972 = vpack.c.b16 %v3947, %v3946
        %v3973 = vpack.c.b16 %v3949, %v3948
        %v3974 = vpack.c.b16 %v3951, %v3950
        %v3975 = vpack.c.b16 %v3953, %v3952
        %v3976 = vpack.c.b16 %v3955, %v3954
        %v3977 = vpack.c.b16 %v3957, %v3956
        %v3978 = vpack.c.b16 %v3959, %v3958
        %v3979 = vpack.c.b16 %v3961, %v3960
        %v3980 = vpack.c.b16 %v3962, %v3962
        %v3999 = vsel %vm1884, %v3890, 0
        %v4002 = vsel %vm2135, %v3980, 0
        %4004 = vmatprep.subr.bf16.mxu0 0
        %4005 = vmatpush1.bf16.msra.mxu0 %v3970
        %4006 = vmatprep.subr.bf16.mxu0 0
        %4007 = vmatpush1.bf16.msra.mxu0 %v3969
        %4008 = vmatprep.subr.bf16.mxu0 0
        %4009 = vmatpush1.bf16.msra.mxu0 %v3968
        %4010 = vmatprep.subr.bf16.mxu0 0
        %4011 = vmatpush1.bf16.msra.mxu0 %v3967
        %4012 = vmatprep.subr.bf16.mxu0 0
        %4013 = vmatpush1.bf16.msra.mxu0 %v3966
        %4014 = vmatprep.subr.bf16.mxu0 0
        %4015 = vmatpush1.bf16.msra.mxu0 %v3965
        %4016 = vmatprep.subr.bf16.mxu0 0
        %4017 = vmatpush1.bf16.msra.mxu0 %v3964
        %4018 = vmatprep.subr.bf16.mxu0 0
        %4019 = vmatpush1.bf16.msra.mxu0 %v3963
        %4020 = vmatprep.subr.bf16.mxu0 0
        %4021 = vmatpush2.bf16.msra.mxu0 %v3978
        %4022 = vmatprep.subr.bf16.mxu0 0
        %4023 = vmatpush2.bf16.msra.mxu0 %v3977
        %4024 = vmatprep.subr.bf16.mxu0 0
        %4025 = vmatpush2.bf16.msra.mxu0 %v3976
        %4026 = vmatprep.subr.bf16.mxu0 0
        %4027 = vmatpush2.bf16.msra.mxu0 %v3975
        %4028 = vmatprep.subr.bf16.mxu0 0
        %4029 = vmatpush2.bf16.msra.mxu0 %v3974
        %4030 = vmatprep.subr.bf16.mxu0 0
        %4031 = vmatpush2.bf16.msra.mxu0 %v3973
        %4032 = vmatprep.subr.bf16.mxu0 0
        %4033 = vmatpush2.bf16.msra.mxu0 %v3972
        %4034 = vmatprep.subr.bf16.mxu0 0
        %4035 = vmatpush2.bf16.msra.mxu0 %v3971
        %4036 = vmatprep.mubr.bf16.mxu0 %v3873
        %4037 = vmatmul.mubr.bf16.gmra.mxu0 %v3856
        %v4038 = vpop.f32.mrf.mxu0
        %v4039 = vadd.f32 0.0, %v4038
        %v4040 = vpop.f32.mrf.mxu0
        %v4041 = vpop.f32.mrf.mxu0
        %v4042 = vadd.f32 0.0, %v4041
        %v4043 = vpop.f32.mrf.mxu0
        %4044 = vdwg.mxu0
        %4045 = vmatprep.subr.bf16.mxu0 0
        %4046 = vmatpush1.bf16.msra.mxu0 0
        %4047 = vmatprep.subr.bf16.mxu0 0
        %4048 = vmatpush1.bf16.msra.mxu0 0
        %4049 = vmatprep.subr.bf16.mxu0 0
        %4050 = vmatpush1.bf16.msra.mxu0 0
        %4051 = vmatprep.subr.bf16.mxu0 0
        %4052 = vmatpush1.bf16.msra.mxu0 0
        %4053 = vmatprep.subr.bf16.mxu0 0
        %4054 = vmatpush1.bf16.msra.mxu0 0
        %4055 = vmatprep.subr.bf16.mxu0 0
        %4056 = vmatpush1.bf16.msra.mxu0 0
        %4057 = vmatprep.subr.bf16.mxu0 0
        %4058 = vmatpush1.bf16.msra.mxu0 %v4002
        %4059 = vmatprep.subr.bf16.mxu0 0
        %4060 = vmatpush1.bf16.msra.mxu0 %v3979
        %4061 = vmatprep.subr.bf16.mxu0 0
        %4062 = vmatpush2.bf16.msra.mxu0 0
        %4063 = vmatprep.subr.bf16.mxu0 0
        %4064 = vmatpush2.bf16.msra.mxu0 0
        %4065 = vmatprep.subr.bf16.mxu0 0
        %4066 = vmatpush2.bf16.msra.mxu0 0
        %4067 = vmatprep.subr.bf16.mxu0 0
        %4068 = vmatpush2.bf16.msra.mxu0 0
        %4069 = vmatprep.subr.bf16.mxu0 0
        %4070 = vmatpush2.bf16.msra.mxu0 0
        %4071 = vmatprep.subr.bf16.mxu0 0
        %4072 = vmatpush2.bf16.msra.mxu0 0
        %4073 = vmatprep.subr.bf16.mxu0 0
        %4074 = vmatpush2.bf16.msra.mxu0 0
        %4075 = vmatprep.subr.bf16.mxu0 0
        %4076 = vmatpush2.bf16.msra.mxu0 0
        %4077 = vmatprep.mubr.bf16.mxu0 0
        %4078 = vmatmul.mubr.bf16.gmra.mxu0 %v3999
        %v4079 = vpop.f32.mrf.mxu0
        %v4080 = vadd.f32 %v4039, %v4079
        %v4081 = vpop.f32.mrf.mxu0
        %v4082 = vpop.f32.mrf.mxu0
        %v4083 = vadd.f32 %v4042, %v4082
        %v4084 = vpop.f32.mrf.mxu0
        %4085 = vdwg.mxu0
        %v4086 = vadd.f32 %v3789, %v4080
        %v4087 = vadd.f32 %v3790, %v4083
        %v4088 = vld [vmem:[#allocation2 + $0x30] sm:$0xff]
        %v4089 = vld [vmem:[#allocation2 + $0x38] sm:$0xff]
        %v4090 = vld [vmem:[#allocation2 + $0x40] sm:$0xff]
        %v4091 = vpack.c.bf16 %v4088, %v1899
        %v4092 = vpack.c.bf16 %v4089, %v1900
        %v4093 = vpack.c.bf16 %v4090, %v1901
        %s4094 = scalar_lea.vmem %s3, 1120
        %v4095 = vld [vmem:[%s4094] sm:$0xf]
        %v4096 = vld [vmem:[%s4094 + $0x4] sm:$0xf]
        %v4097 = vld [vmem:[%s4094 + $0x8] sm:$0xf]
        %v4098 = vld [vmem:[%s4094 + $0xc] sm:$0xf]
        %v4099 = vld [vmem:[%s4094 + $0x10] sm:$0xf]
        %v4100 = vld [vmem:[%s4094 + $0x14] sm:$0xf]
        %v4101 = vld [vmem:[%s4094 + $0x18] sm:$0xf]
        %v4102 = vld [vmem:[%s4094 + $0x1c] sm:$0xf]
        %v4103 = vld [vmem:[%s4094 + $0x20] sm:$0xf]
        %v4104 = vld [vmem:[%s4094 + $0x24] sm:$0xf]
        %v4105 = vld [vmem:[%s4094 + $0x28] sm:$0xf]
        %v4106 = vld [vmem:[%s4094 + $0x2c] sm:$0xf]
        %v4107 = vld [vmem:[%s4094 + $0x30] sm:$0xf]
        %v4108 = vld [vmem:[%s4094 + $0x34] sm:$0xf]
        %v4109 = vld [vmem:[%s4094 + $0x38] sm:$0xf]
        %v4110 = vld [vmem:[%s4094 + $0x3c] sm:$0xf]
        %v4111 = vld [vmem:[%s4094 + $0x40] sm:$0xf]
        %v4112 = vld [vmem:[%s4094 + $0x44] sm:$0xf]
        %v4113 = vld [vmem:[%s4094 + $0x48] sm:$0xf]
        %v4114 = vld [vmem:[%s4094 + $0x4c] sm:$0xf]
        %v4115 = vld [vmem:[%s4094 + $0x50] sm:$0xf]
        %v4116 = vld [vmem:[%s4094 + $0x54] sm:$0xf]
        %v4117 = vld [vmem:[%s4094 + $0x58] sm:$0xf]
        %v4118 = vld [vmem:[%s4094 + $0x5c] sm:$0xf]
        %v4119 = vld [vmem:[%s4094 + $0x60] sm:$0xf]
        %v4120 = vld [vmem:[%s4094 + $0x64] sm:$0xf]
        %v4121 = vld [vmem:[%s4094 + $0x68] sm:$0xf]
        %v4122 = vld [vmem:[%s4094 + $0x6c] sm:$0xf]
        %v4123 = vld [vmem:[%s4094 + $0x70] sm:$0xf]
        %v4124 = vld [vmem:[%s4094 + $0x74] sm:$0xf]
        %v4125 = vld [vmem:[%s4094 + $0x78] sm:$0xf]
        %v4126 = vld [vmem:[%s4094 + $0x7c] sm:$0xf]
        %v4127 = vld [vmem:[%s4094 + $0x80] sm:$0xf]
        %v4128 = vld [vmem:[%s4094 + $0x84] sm:$0xf]
        %v4129 = vld [vmem:[%s4094 + $0x88] sm:$0xf]
        %v4165 = vunpack.c.l.b16 %v4095
        %v4166 = vunpack.c.l.b16 %v4096
        %v4167 = vunpack.c.l.b16 %v4097
        %v4168 = vunpack.c.l.b16 %v4098
        %v4169 = vunpack.c.l.b16 %v4099
        %v4170 = vunpack.c.l.b16 %v4100
        %v4171 = vunpack.c.l.b16 %v4101
        %v4172 = vunpack.c.l.b16 %v4102
        %v4173 = vunpack.c.l.b16 %v4103
        %v4174 = vunpack.c.l.b16 %v4104
        %v4175 = vunpack.c.l.b16 %v4105
        %v4176 = vunpack.c.l.b16 %v4106
        %v4177 = vunpack.c.l.b16 %v4107
        %v4178 = vunpack.c.l.b16 %v4108
        %v4179 = vunpack.c.l.b16 %v4109
        %v4180 = vunpack.c.l.b16 %v4110
        %v4181 = vunpack.c.l.b16 %v4111
        %v4182 = vunpack.c.l.b16 %v4112
        %v4183 = vunpack.c.l.b16 %v4113
        %v4184 = vunpack.c.l.b16 %v4114
        %v4185 = vunpack.c.l.b16 %v4115
        %v4186 = vunpack.c.l.b16 %v4116
        %v4187 = vunpack.c.l.b16 %v4117
        %v4188 = vunpack.c.l.b16 %v4118
        %v4189 = vunpack.c.l.b16 %v4119
        %v4190 = vunpack.c.l.b16 %v4120
        %v4191 = vunpack.c.l.b16 %v4121
        %v4192 = vunpack.c.l.b16 %v4122
        %v4193 = vunpack.c.l.b16 %v4123
        %v4194 = vunpack.c.l.b16 %v4124
        %v4195 = vunpack.c.l.b16 %v4125
        %v4196 = vunpack.c.l.b16 %v4126
        %v4197 = vunpack.c.l.b16 %v4127
        %v4198 = vunpack.c.l.b16 %v4128
        %v4199 = vunpack.c.l.b16 %v4129
        %v4200 = vpack.c.b16 %v4166, %v4165
        %v4201 = vpack.c.b16 %v4168, %v4167
        %v4202 = vpack.c.b16 %v4170, %v4169
        %v4203 = vpack.c.b16 %v4172, %v4171
        %v4204 = vpack.c.b16 %v4174, %v4173
        %v4205 = vpack.c.b16 %v4176, %v4175
        %v4206 = vpack.c.b16 %v4178, %v4177
        %v4207 = vpack.c.b16 %v4180, %v4179
        %v4208 = vpack.c.b16 %v4182, %v4181
        %v4209 = vpack.c.b16 %v4184, %v4183
        %v4210 = vpack.c.b16 %v4186, %v4185
        %v4211 = vpack.c.b16 %v4188, %v4187
        %v4212 = vpack.c.b16 %v4190, %v4189
        %v4213 = vpack.c.b16 %v4192, %v4191
        %v4214 = vpack.c.b16 %v4194, %v4193
        %v4215 = vpack.c.b16 %v4196, %v4195
        %v4216 = vpack.c.b16 %v4198, %v4197
        %v4217 = vpack.c.b16 %v4199, %v4199
        %v4236 = vsel %vm1884, %v4093, 0
        %v4239 = vsel %vm2135, %v4217, 0
        %4241 = vmatprep.subr.bf16.mxu0 0
        %4242 = vmatpush1.bf16.msra.mxu0 %v4207
        %4243 = vmatprep.subr.bf16.mxu0 0
        %4244 = vmatpush1.bf16.msra.mxu0 %v4206
        %4245 = vmatprep.subr.bf16.mxu0 0
        %4246 = vmatpush1.bf16.msra.mxu0 %v4205
        %4247 = vmatprep.subr.bf16.mxu0 0
        %4248 = vmatpush1.bf16.msra.mxu0 %v4204
        %4249 = vmatprep.subr.bf16.mxu0 0
        %4250 = vmatpush1.bf16.msra.mxu0 %v4203
        %4251 = vmatprep.subr.bf16.mxu0 0
        %4252 = vmatpush1.bf16.msra.mxu0 %v4202
        %4253 = vmatprep.subr.bf16.mxu0 0
        %4254 = vmatpush1.bf16.msra.mxu0 %v4201
        %4255 = vmatprep.subr.bf16.mxu0 0
        %4256 = vmatpush1.bf16.msra.mxu0 %v4200
        %4257 = vmatprep.subr.bf16.mxu0 0
        %4258 = vmatpush2.bf16.msra.mxu0 %v4215
        %4259 = vmatprep.subr.bf16.mxu0 0
        %4260 = vmatpush2.bf16.msra.mxu0 %v4214
        %4261 = vmatprep.subr.bf16.mxu0 0
        %4262 = vmatpush2.bf16.msra.mxu0 %v4213
        %4263 = vmatprep.subr.bf16.mxu0 0
        %4264 = vmatpush2.bf16.msra.mxu0 %v4212
        %4265 = vmatprep.subr.bf16.mxu0 0
        %4266 = vmatpush2.bf16.msra.mxu0 %v4211
        %4267 = vmatprep.subr.bf16.mxu0 0
        %4268 = vmatpush2.bf16.msra.mxu0 %v4210
        %4269 = vmatprep.subr.bf16.mxu0 0
        %4270 = vmatpush2.bf16.msra.mxu0 %v4209
        %4271 = vmatprep.subr.bf16.mxu0 0
        %4272 = vmatpush2.bf16.msra.mxu0 %v4208
        %4273 = vmatprep.mubr.bf16.mxu0 %v4092
        %4274 = vmatmul.mubr.bf16.gmra.mxu0 %v4091
        %v4275 = vpop.f32.mrf.mxu0
        %v4276 = vadd.f32 0.0, %v4275
        %v4277 = vpop.f32.mrf.mxu0
        %v4278 = vpop.f32.mrf.mxu0
        %v4279 = vadd.f32 0.0, %v4278
        %v4280 = vpop.f32.mrf.mxu0
        %4281 = vdwg.mxu0
        %4282 = vmatprep.subr.bf16.mxu0 0
        %4283 = vmatpush1.bf16.msra.mxu0 0
        %4284 = vmatprep.subr.bf16.mxu0 0
        %4285 = vmatpush1.bf16.msra.mxu0 0
        %4286 = vmatprep.subr.bf16.mxu0 0
        %4287 = vmatpush1.bf16.msra.mxu0 0
        %4288 = vmatprep.subr.bf16.mxu0 0
        %4289 = vmatpush1.bf16.msra.mxu0 0
        %4290 = vmatprep.subr.bf16.mxu0 0
        %4291 = vmatpush1.bf16.msra.mxu0 0
        %4292 = vmatprep.subr.bf16.mxu0 0
        %4293 = vmatpush1.bf16.msra.mxu0 0
        %4294 = vmatprep.subr.bf16.mxu0 0
        %4295 = vmatpush1.bf16.msra.mxu0 %v4239
        %4296 = vmatprep.subr.bf16.mxu0 0
        %4297 = vmatpush1.bf16.msra.mxu0 %v4216
        %4298 = vmatprep.subr.bf16.mxu0 0
        %4299 = vmatpush2.bf16.msra.mxu0 0
        %4300 = vmatprep.subr.bf16.mxu0 0
        %4301 = vmatpush2.bf16.msra.mxu0 0
        %4302 = vmatprep.subr.bf16.mxu0 0
        %4303 = vmatpush2.bf16.msra.mxu0 0
        %4304 = vmatprep.subr.bf16.mxu0 0
        %4305 = vmatpush2.bf16.msra.mxu0 0
        %4306 = vmatprep.subr.bf16.mxu0 0
        %4307 = vmatpush2.bf16.msra.mxu0 0
        %4308 = vmatprep.subr.bf16.mxu0 0
        %4309 = vmatpush2.bf16.msra.mxu0 0
        %4310 = vmatprep.subr.bf16.mxu0 0
        %4311 = vmatpush2.bf16.msra.mxu0 0
        %4312 = vmatprep.subr.bf16.mxu0 0
        %4313 = vmatpush2.bf16.msra.mxu0 0
        %4314 = vmatprep.mubr.bf16.mxu0 0
        %4315 = vmatmul.mubr.bf16.gmra.mxu0 %v4236
        %v4316 = vpop.f32.mrf.mxu0
        %v4317 = vadd.f32 %v4276, %v4316
        %v4318 = vpop.f32.mrf.mxu0
        %v4319 = vpop.f32.mrf.mxu0
        %v4320 = vadd.f32 %v4279, %v4319
        %v4321 = vpop.f32.mrf.mxu0
        %4322 = vdwg.mxu0
        %v4323 = vadd.f32 %v4086, %v4317
        %v4324 = vadd.f32 %v4087, %v4320
        %v4325 = vld [vmem:[#allocation2 + $0x18] sm:$0xfe]
        %v4326 = vld [vmem:[#allocation2 + $0x20] sm:$0xfe]
        %v4327 = vld [vmem:[#allocation2 + $0x28] sm:$0xfe]
        %v4328 = vld [vmem:[#allocation2 + $0x30] sm:$0xff]
        %v4329 = vld [vmem:[#allocation2 + $0x38] sm:$0xff]
        %v4330 = vld [vmem:[#allocation2 + $0x40] sm:$0xff]
        %v4331 = vld [vmem:[#allocation2 + $0x48] sm:$0x1]
        %v4332 = vld [vmem:[#allocation2 + $0x50] sm:$0x1]
        %v4333 = vld [vmem:[#allocation2 + $0x58] sm:$0x1]
        %v4334 = vpack.c.bf16 %v4328, %v4325
        %v4335 = vpack.c.bf16 %v4329, %v4326
        %v4336 = vpack.c.bf16 %v4330, %v4327
        %v4337 = vpack.c.bf16 %v4331, %v4331
        %v4338 = vpack.c.bf16 %v4332, %v4332
        %v4339 = vpack.c.bf16 %v4333, %v4333
        %s4340 = scalar_lea.vmem %s3, 1260
        %v4341 = vld [vmem:[%s4340] sm:$0xf]
        %v4342 = vld [vmem:[%s4340 + $0x4] sm:$0xf]
        %v4343 = vld [vmem:[%s4340 + $0x8] sm:$0xf]
        %v4344 = vld [vmem:[%s4340 + $0xc] sm:$0xf]
        %v4345 = vld [vmem:[%s4340 + $0x10] sm:$0xf]
        %v4346 = vld [vmem:[%s4340 + $0x14] sm:$0xf]
        %v4347 = vld [vmem:[%s4340 + $0x18] sm:$0xf]
        %v4348 = vld [vmem:[%s4340 + $0x1c] sm:$0xf]
        %v4349 = vld [vmem:[%s4340 + $0x20] sm:$0xf]
        %v4350 = vld [vmem:[%s4340 + $0x24] sm:$0xf]
        %v4351 = vld [vmem:[%s4340 + $0x28] sm:$0xf]
        %v4352 = vld [vmem:[%s4340 + $0x2c] sm:$0xf]
        %v4353 = vld [vmem:[%s4340 + $0x30] sm:$0xf]
        %v4354 = vld [vmem:[%s4340 + $0x34] sm:$0xf]
        %v4355 = vld [vmem:[%s4340 + $0x38] sm:$0xf]
        %v4356 = vld [vmem:[%s4340 + $0x3c] sm:$0xf]
        %v4357 = vld [vmem:[%s4340 + $0x40] sm:$0xf]
        %v4358 = vld [vmem:[%s4340 + $0x44] sm:$0xf]
        %v4359 = vld [vmem:[%s4340 + $0x48] sm:$0xf]
        %v4360 = vld [vmem:[%s4340 + $0x4c] sm:$0xf]
        %v4361 = vld [vmem:[%s4340 + $0x50] sm:$0xf]
        %v4362 = vld [vmem:[%s4340 + $0x54] sm:$0xf]
        %v4363 = vld [vmem:[%s4340 + $0x58] sm:$0xf]
        %v4364 = vld [vmem:[%s4340 + $0x5c] sm:$0xf]
        %v4365 = vld [vmem:[%s4340 + $0x60] sm:$0xf]
        %v4366 = vld [vmem:[%s4340 + $0x64] sm:$0xf]
        %v4367 = vld [vmem:[%s4340 + $0x68] sm:$0xf]
        %v4368 = vld [vmem:[%s4340 + $0x6c] sm:$0xf]
        %v4369 = vld [vmem:[%s4340 + $0x70] sm:$0xf]
        %v4370 = vld [vmem:[%s4340 + $0x74] sm:$0xf]
        %v4371 = vld [vmem:[%s4340 + $0x78] sm:$0xf]
        %v4372 = vld [vmem:[%s4340 + $0x7c] sm:$0xf]
        %v4373 = vld [vmem:[%s4340 + $0x80] sm:$0xf]
        %v4374 = vld [vmem:[%s4340 + $0x84] sm:$0xf]
        %v4375 = vld [vmem:[%s4340 + $0x88] sm:$0xf]
        %v4377 = vshrl.u32 %v4334, 16
        %v4379 = vshll.u32 %v4334, 16
        %v4381 = vrot.slane %v4379, 1
        %v4382 = vor.u32 %v4377, %v4381
        %v4384 = vshll.u32 %v4337, 16
        %v4386 = vrot.slane %v4384, 1
        %v4387 = vsel %vm1988, %v4382, %v4386
        %v4389 = vshrl.u32 %v4335, 16
        %v4391 = vshll.u32 %v4335, 16
        %v4393 = vrot.slane %v4391, 1
        %v4394 = vor.u32 %v4389, %v4393
        %v4396 = vshll.u32 %v4338, 16
        %v4398 = vrot.slane %v4396, 1
        %v4399 = vsel %vm1988, %v4394, %v4398
        %v4401 = vshrl.u32 %v4336, 16
        %v4403 = vshll.u32 %v4336, 16
        %v4405 = vrot.slane %v4403, 1
        %v4406 = vor.u32 %v4401, %v4405
        %v4408 = vshll.u32 %v4339, 16
        %v4410 = vrot.slane %v4408, 1
        %v4411 = vsel %vm1988, %v4406, %v4410
        %v4449 = vunpack.c.l.b16 %v4341
        %v4450 = vunpack.c.l.b16 %v4342
        %v4451 = vunpack.c.l.b16 %v4343
        %v4452 = vunpack.c.l.b16 %v4344
        %v4453 = vunpack.c.l.b16 %v4345
        %v4454 = vunpack.c.l.b16 %v4346
        %v4455 = vunpack.c.l.b16 %v4347
        %v4456 = vunpack.c.l.b16 %v4348
        %v4457 = vunpack.c.l.b16 %v4349
        %v4458 = vunpack.c.l.b16 %v4350
        %v4459 = vunpack.c.l.b16 %v4351
        %v4460 = vunpack.c.l.b16 %v4352
        %v4461 = vunpack.c.l.b16 %v4353
        %v4462 = vunpack.c.l.b16 %v4354
        %v4463 = vunpack.c.l.b16 %v4355
        %v4464 = vunpack.c.l.b16 %v4356
        %v4465 = vunpack.c.l.b16 %v4357
        %v4466 = vunpack.c.l.b16 %v4358
        %v4467 = vunpack.c.l.b16 %v4359
        %v4468 = vunpack.c.l.b16 %v4360
        %v4469 = vunpack.c.l.b16 %v4361
        %v4470 = vunpack.c.l.b16 %v4362
        %v4471 = vunpack.c.l.b16 %v4363
        %v4472 = vunpack.c.l.b16 %v4364
        %v4473 = vunpack.c.l.b16 %v4365
        %v4474 = vunpack.c.l.b16 %v4366
        %v4475 = vunpack.c.l.b16 %v4367
        %v4476 = vunpack.c.l.b16 %v4368
        %v4477 = vunpack.c.l.b16 %v4369
        %v4478 = vunpack.c.l.b16 %v4370
        %v4479 = vunpack.c.l.b16 %v4371
        %v4480 = vunpack.c.l.b16 %v4372
        %v4481 = vunpack.c.l.b16 %v4373
        %v4482 = vunpack.c.l.b16 %v4374
        %v4483 = vunpack.c.l.b16 %v4375
        %v4484 = vpack.c.b16 %v4450, %v4449
        %v4485 = vpack.c.b16 %v4452, %v4451
        %v4486 = vpack.c.b16 %v4454, %v4453
        %v4487 = vpack.c.b16 %v4456, %v4455
        %v4488 = vpack.c.b16 %v4458, %v4457
        %v4489 = vpack.c.b16 %v4460, %v4459
        %v4490 = vpack.c.b16 %v4462, %v4461
        %v4491 = vpack.c.b16 %v4464, %v4463
        %v4492 = vpack.c.b16 %v4466, %v4465
        %v4493 = vpack.c.b16 %v4468, %v4467
        %v4494 = vpack.c.b16 %v4470, %v4469
        %v4495 = vpack.c.b16 %v4472, %v4471
        %v4496 = vpack.c.b16 %v4474, %v4473
        %v4497 = vpack.c.b16 %v4476, %v4475
        %v4498 = vpack.c.b16 %v4478, %v4477
        %v4499 = vpack.c.b16 %v4480, %v4479
        %v4500 = vpack.c.b16 %v4482, %v4481
        %v4501 = vpack.c.b16 %v4483, %v4483
        %v4520 = vsel %vm1884, %v4411, 0
        %v4523 = vsel %vm2135, %v4501, 0
        %4525 = vmatprep.subr.bf16.mxu0 0
        %4526 = vmatpush1.bf16.msra.mxu0 %v4491
        %4527 = vmatprep.subr.bf16.mxu0 0
        %4528 = vmatpush1.bf16.msra.mxu0 %v4490
        %4529 = vmatprep.subr.bf16.mxu0 0
        %4530 = vmatpush1.bf16.msra.mxu0 %v4489
        %4531 = vmatprep.subr.bf16.mxu0 0
        %4532 = vmatpush1.bf16.msra.mxu0 %v4488
        %4533 = vmatprep.subr.bf16.mxu0 0
        %4534 = vmatpush1.bf16.msra.mxu0 %v4487
        %4535 = vmatprep.subr.bf16.mxu0 0
        %4536 = vmatpush1.bf16.msra.mxu0 %v4486
        %4537 = vmatprep.subr.bf16.mxu0 0
        %4538 = vmatpush1.bf16.msra.mxu0 %v4485
        %4539 = vmatprep.subr.bf16.mxu0 0
        %4540 = vmatpush1.bf16.msra.mxu0 %v4484
        %4541 = vmatprep.subr.bf16.mxu0 0
        %4542 = vmatpush2.bf16.msra.mxu0 %v4499
        %4543 = vmatprep.subr.bf16.mxu0 0
        %4544 = vmatpush2.bf16.msra.mxu0 %v4498
        %4545 = vmatprep.subr.bf16.mxu0 0
        %4546 = vmatpush2.bf16.msra.mxu0 %v4497
        %4547 = vmatprep.subr.bf16.mxu0 0
        %4548 = vmatpush2.bf16.msra.mxu0 %v4496
        %4549 = vmatprep.subr.bf16.mxu0 0
        %4550 = vmatpush2.bf16.msra.mxu0 %v4495
        %4551 = vmatprep.subr.bf16.mxu0 0
        %4552 = vmatpush2.bf16.msra.mxu0 %v4494
        %4553 = vmatprep.subr.bf16.mxu0 0
        %4554 = vmatpush2.bf16.msra.mxu0 %v4493
        %4555 = vmatprep.subr.bf16.mxu0 0
        %4556 = vmatpush2.bf16.msra.mxu0 %v4492
        %4557 = vmatprep.mubr.bf16.mxu0 %v4399
        %4558 = vmatmul.mubr.bf16.gmra.mxu0 %v4387
        %v4559 = vpop.f32.mrf.mxu0
        %v4560 = vadd.f32 0.0, %v4559
        %v4561 = vpop.f32.mrf.mxu0
        %v4562 = vpop.f32.mrf.mxu0
        %v4563 = vadd.f32 0.0, %v4562
        %v4564 = vpop.f32.mrf.mxu0
        %4565 = vdwg.mxu0
        %4566 = vmatprep.subr.bf16.mxu0 0
        %4567 = vmatpush1.bf16.msra.mxu0 0
        %4568 = vmatprep.subr.bf16.mxu0 0
        %4569 = vmatpush1.bf16.msra.mxu0 0
        %4570 = vmatprep.subr.bf16.mxu0 0
        %4571 = vmatpush1.bf16.msra.mxu0 0
        %4572 = vmatprep.subr.bf16.mxu0 0
        %4573 = vmatpush1.bf16.msra.mxu0 0
        %4574 = vmatprep.subr.bf16.mxu0 0
        %4575 = vmatpush1.bf16.msra.mxu0 0
        %4576 = vmatprep.subr.bf16.mxu0 0
        %4577 = vmatpush1.bf16.msra.mxu0 0
        %4578 = vmatprep.subr.bf16.mxu0 0
        %4579 = vmatpush1.bf16.msra.mxu0 %v4523
        %4580 = vmatprep.subr.bf16.mxu0 0
        %4581 = vmatpush1.bf16.msra.mxu0 %v4500
        %4582 = vmatprep.subr.bf16.mxu0 0
        %4583 = vmatpush2.bf16.msra.mxu0 0
        %4584 = vmatprep.subr.bf16.mxu0 0
        %4585 = vmatpush2.bf16.msra.mxu0 0
        %4586 = vmatprep.subr.bf16.mxu0 0
        %4587 = vmatpush2.bf16.msra.mxu0 0
        %4588 = vmatprep.subr.bf16.mxu0 0
        %4589 = vmatpush2.bf16.msra.mxu0 0
        %4590 = vmatprep.subr.bf16.mxu0 0
        %4591 = vmatpush2.bf16.msra.mxu0 0
        %4592 = vmatprep.subr.bf16.mxu0 0
        %4593 = vmatpush2.bf16.msra.mxu0 0
        %4594 = vmatprep.subr.bf16.mxu0 0
        %4595 = vmatpush2.bf16.msra.mxu0 0
        %4596 = vmatprep.subr.bf16.mxu0 0
        %4597 = vmatpush2.bf16.msra.mxu0 0
        %4598 = vmatprep.mubr.bf16.mxu0 0
        %4599 = vmatmul.mubr.bf16.gmra.mxu0 %v4520
        %v4600 = vpop.f32.mrf.mxu0
        %v4601 = vadd.f32 %v4560, %v4600
        %v4602 = vpop.f32.mrf.mxu0
        %v4603 = vpop.f32.mrf.mxu0
        %v4604 = vadd.f32 %v4563, %v4603
        %v4605 = vpop.f32.mrf.mxu0
        %4606 = vdwg.mxu0
        %v4607 = vadd.f32 %v4323, %v4601
        %v4608 = vadd.f32 %v4324, %v4604
        %v4609 = vld [vmem:[%s4] sm:$0x1]
        %v4611 = vlaneseq
        %v4612 = vshrl.u32 %v4611, 7
        %v4613 = vsub.s32 0, %v4612
        %v4614 = vrot.slane %v4609, %v4613
        %v4616 = vadd.f32 %v4607, %v4614
        %v4617 = vadd.f32 %v4608, %v4614
        %v4618 = vmax.f32 %v4616, 0.0
        %v4619 = vmax.f32 %v4617, 0.0
        %vm4620 = vcmask 982016
        %4621 = vst.msk [vmem:[#allocation3] sm:$0xff] %vm4620, %v4618
        %4622 = vst.msk [vmem:[#allocation3 + $0x8] sm:$0xff] %vm4620, %v4619
        %v4623 = vld [vmem:[%s6] sm:$0x1]
        %v4624 = vld [vmem:[#allocation3] sm:$0x1]
        %v4625 = vld [vmem:[%s5] sm:$0xff]
        %v4626 = vld [vmem:[%s5 + $0x8] sm:$0xff]
        %v4627 = vld [vmem:[%s5 + $0x10] sm:$0xff]
        %v4628 = vld [vmem:[%s5 + $0x18] sm:$0xff]
        %v4629 = vld [vmem:[%s5 + $0x20] sm:$0xff]
        %v4630 = vld [vmem:[%s5 + $0x28] sm:$0xff]
        %v4631 = vld [vmem:[%s5 + $0x30] sm:$0xff]
        %v4632 = vld [vmem:[%s5 + $0x38] sm:$0xff]
        %v4633 = vld [vmem:[%s5 + $0x40] sm:$0xff]
        %v4634 = vld [vmem:[%s5 + $0x48] sm:$0xff]
        %v4635 = vld [vmem:[%s5 + $0x50] sm:$0xff]
        %v4636 = vld [vmem:[%s5 + $0x58] sm:$0xff]
        %v4637 = vld [vmem:[%s5 + $0x60] sm:$0xff]
        %v4638 = vld [vmem:[%s5 + $0x68] sm:$0xff]
        %v4639 = vld [vmem:[%s5 + $0x70] sm:$0xff]
        %v4641 = vsel %vm4620, %v4624, 0
        %4643 = vmatprep.subr.mxu0 0.0
        %4644 = vmatpush1.msra.mxu0 0.0
        %4645 = vmatprep.subr.mxu0 0.0
        %4646 = vmatpush1.msra.mxu0 %v4639
        %4647 = vmatprep.subr.mxu0 0.0
        %4648 = vmatpush1.msra.mxu0 %v4638
        %4649 = vmatprep.subr.mxu0 0.0
        %4650 = vmatpush1.msra.mxu0 %v4637
        %4651 = vmatprep.subr.mxu0 0.0
        %4652 = vmatpush1.msra.mxu0 %v4636
        %4653 = vmatprep.subr.mxu0 0.0
        %4654 = vmatpush1.msra.mxu0 %v4635
        %4655 = vmatprep.subr.mxu0 0.0
        %4656 = vmatpush1.msra.mxu0 %v4634
        %4657 = vmatprep.subr.mxu0 0.0
        %4658 = vmatpush1.msra.mxu0 %v4633
        %4659 = vmatprep.subr.mxu0 0.0
        %4660 = vmatpush1.msra.mxu0 %v4632
        %4661 = vmatprep.subr.mxu0 0.0
        %4662 = vmatpush1.msra.mxu0 %v4631
        %4663 = vmatprep.subr.mxu0 0.0
        %4664 = vmatpush1.msra.mxu0 %v4630
        %4665 = vmatprep.subr.mxu0 0.0
        %4666 = vmatpush1.msra.mxu0 %v4629
        %4667 = vmatprep.subr.mxu0 0.0
        %4668 = vmatpush1.msra.mxu0 %v4628
        %4669 = vmatprep.subr.mxu0 0.0
        %4670 = vmatpush1.msra.mxu0 %v4627
        %4671 = vmatprep.subr.mxu0 0.0
        %4672 = vmatpush1.msra.mxu0 %v4626
        %4673 = vmatprep.subr.mxu0 0.0
        %4674 = vmatpush1.msra.mxu0 %v4625
        %4675 = vmatprep.subr.mxu0 0.0
        %4676 = vmatpush2.msra.mxu0 0.0
        %4677 = vmatprep.subr.mxu0 0.0
        %4678 = vmatpush2.msra.mxu0 0.0
        %4679 = vmatprep.subr.mxu0 0.0
        %4680 = vmatpush2.msra.mxu0 0.0
        %4681 = vmatprep.subr.mxu0 0.0
        %4682 = vmatpush2.msra.mxu0 0.0
        %4683 = vmatprep.subr.mxu0 0.0
        %4684 = vmatpush2.msra.mxu0 0.0
        %4685 = vmatprep.subr.mxu0 0.0
        %4686 = vmatpush2.msra.mxu0 0.0
        %4687 = vmatprep.subr.mxu0 0.0
        %4688 = vmatpush2.msra.mxu0 0.0
        %4689 = vmatprep.subr.mxu0 0.0
        %4690 = vmatpush2.msra.mxu0 0.0
        %4691 = vmatprep.subr.mxu0 0.0
        %4692 = vmatpush2.msra.mxu0 0.0
        %4693 = vmatprep.subr.mxu0 0.0
        %4694 = vmatpush2.msra.mxu0 0.0
        %4695 = vmatprep.subr.mxu0 0.0
        %4696 = vmatpush2.msra.mxu0 0.0
        %4697 = vmatprep.subr.mxu0 0.0
        %4698 = vmatpush2.msra.mxu0 0.0
        %4699 = vmatprep.subr.mxu0 0.0
        %4700 = vmatpush2.msra.mxu0 0.0
        %4701 = vmatprep.subr.mxu0 0.0
        %4702 = vmatpush2.msra.mxu0 0.0
        %4703 = vmatprep.subr.mxu0 0.0
        %4704 = vmatpush2.msra.mxu0 0.0
        %4705 = vmatprep.subr.mxu0 0.0
        %4706 = vmatpush2.msra.mxu0 0.0
        %4707 = vmatprep.mubr.f32.mxu0 0.0
        %4708 = vmatmul.mubr.f32.gmra.mxu0 %v4641
        %v4709 = vpop.f32.mrf.mxu0
        %v4710 = vadd.f32 0.0, %v4709
        %v4711 = vpop.f32.mrf.mxu0
        %4712 = vdwg.mxu0
        %v4713 = vadd.f32 %v4623, %v4710
        %v4714 = vld [vmem:[#allocation3 + $0x1] sm:$0x1]
        %s4715 = scalar_lea.vmem %s5, 120
        %v4716 = vld [vmem:[%s4715] sm:$0xff]
        %v4717 = vld [vmem:[%s4715 + $0x8] sm:$0xff]
        %v4718 = vld [vmem:[%s4715 + $0x10] sm:$0xff]
        %v4719 = vld [vmem:[%s4715 + $0x18] sm:$0xff]
        %v4720 = vld [vmem:[%s4715 + $0x20] sm:$0xff]
        %v4721 = vld [vmem:[%s4715 + $0x28] sm:$0xff]
        %v4722 = vld [vmem:[%s4715 + $0x30] sm:$0xff]
        %v4723 = vld [vmem:[%s4715 + $0x38] sm:$0xff]
        %v4724 = vld [vmem:[%s4715 + $0x40] sm:$0xff]
        %v4725 = vld [vmem:[%s4715 + $0x48] sm:$0xff]
        %v4726 = vld [vmem:[%s4715 + $0x50] sm:$0xff]
        %v4727 = vld [vmem:[%s4715 + $0x58] sm:$0xff]
        %v4728 = vld [vmem:[%s4715 + $0x60] sm:$0xff]
        %v4729 = vld [vmem:[%s4715 + $0x68] sm:$0xff]
        %v4730 = vld [vmem:[%s4715 + $0x70] sm:$0xff]
        %v4732 = vsel %vm4620, %v4714, 0
        %4734 = vmatprep.subr.mxu0 0.0
        %4735 = vmatpush1.msra.mxu0 0.0
        %4736 = vmatprep.subr.mxu0 0.0
        %4737 = vmatpush1.msra.mxu0 %v4730
        %4738 = vmatprep.subr.mxu0 0.0
        %4739 = vmatpush1.msra.mxu0 %v4729
        %4740 = vmatprep.subr.mxu0 0.0
        %4741 = vmatpush1.msra.mxu0 %v4728
        %4742 = vmatprep.subr.mxu0 0.0
        %4743 = vmatpush1.msra.mxu0 %v4727
        %4744 = vmatprep.subr.mxu0 0.0
        %4745 = vmatpush1.msra.mxu0 %v4726
        %4746 = vmatprep.subr.mxu0 0.0
        %4747 = vmatpush1.msra.mxu0 %v4725
        %4748 = vmatprep.subr.mxu0 0.0
        %4749 = vmatpush1.msra.mxu0 %v4724
        %4750 = vmatprep.subr.mxu0 0.0
        %4751 = vmatpush1.msra.mxu0 %v4723
        %4752 = vmatprep.subr.mxu0 0.0
        %4753 = vmatpush1.msra.mxu0 %v4722
        %4754 = vmatprep.subr.mxu0 0.0
        %4755 = vmatpush1.msra.mxu0 %v4721
        %4756 = vmatprep.subr.mxu0 0.0
        %4757 = vmatpush1.msra.mxu0 %v4720
        %4758 = vmatprep.subr.mxu0 0.0
        %4759 = vmatpush1.msra.mxu0 %v4719
        %4760 = vmatprep.subr.mxu0 0.0
        %4761 = vmatpush1.msra.mxu0 %v4718
        %4762 = vmatprep.subr.mxu0 0.0
        %4763 = vmatpush1.msra.mxu0 %v4717
        %4764 = vmatprep.subr.mxu0 0.0
        %4765 = vmatpush1.msra.mxu0 %v4716
        %4766 = vmatprep.subr.mxu0 0.0
        %4767 = vmatpush2.msra.mxu0 0.0
        %4768 = vmatprep.subr.mxu0 0.0
        %4769 = vmatpush2.msra.mxu0 0.0
        %4770 = vmatprep.subr.mxu0 0.0
        %4771 = vmatpush2.msra.mxu0 0.0
        %4772 = vmatprep.subr.mxu0 0.0
        %4773 = vmatpush2.msra.mxu0 0.0
        %4774 = vmatprep.subr.mxu0 0.0
        %4775 = vmatpush2.msra.mxu0 0.0
        %4776 = vmatprep.subr.mxu0 0.0
        %4777 = vmatpush2.msra.mxu0 0.0
        %4778 = vmatprep.subr.mxu0 0.0
        %4779 = vmatpush2.msra.mxu0 0.0
        %4780 = vmatprep.subr.mxu0 0.0
        %4781 = vmatpush2.msra.mxu0 0.0
        %4782 = vmatprep.subr.mxu0 0.0
        %4783 = vmatpush2.msra.mxu0 0.0
        %4784 = vmatprep.subr.mxu0 0.0
        %4785 = vmatpush2.msra.mxu0 0.0
        %4786 = vmatprep.subr.mxu0 0.0
        %4787 = vmatpush2.msra.mxu0 0.0
        %4788 = vmatprep.subr.mxu0 0.0
        %4789 = vmatpush2.msra.mxu0 0.0
        %4790 = vmatprep.subr.mxu0 0.0
        %4791 = vmatpush2.msra.mxu0 0.0
        %4792 = vmatprep.subr.mxu0 0.0
        %4793 = vmatpush2.msra.mxu0 0.0
        %4794 = vmatprep.subr.mxu0 0.0
        %4795 = vmatpush2.msra.mxu0 0.0
        %4796 = vmatprep.subr.mxu0 0.0
        %4797 = vmatpush2.msra.mxu0 0.0
        %4798 = vmatprep.mubr.f32.mxu0 0.0
        %4799 = vmatmul.mubr.f32.gmra.mxu0 %v4732
        %v4800 = vpop.f32.mrf.mxu0
        %v4801 = vadd.f32 0.0, %v4800
        %v4802 = vpop.f32.mrf.mxu0
        %4803 = vdwg.mxu0
        %v4804 = vadd.f32 %v4713, %v4801
        %v4805 = vld [vmem:[#allocation3 + $0x2] sm:$0x1]
        %s4806 = scalar_lea.vmem %s5, 240
        %v4807 = vld [vmem:[%s4806] sm:$0xff]
        %v4808 = vld [vmem:[%s4806 + $0x8] sm:$0xff]
        %v4809 = vld [vmem:[%s4806 + $0x10] sm:$0xff]
        %v4810 = vld [vmem:[%s4806 + $0x18] sm:$0xff]
        %v4811 = vld [vmem:[%s4806 + $0x20] sm:$0xff]
        %v4812 = vld [vmem:[%s4806 + $0x28] sm:$0xff]
        %v4813 = vld [vmem:[%s4806 + $0x30] sm:$0xff]
        %v4814 = vld [vmem:[%s4806 + $0x38] sm:$0xff]
        %v4815 = vld [vmem:[%s4806 + $0x40] sm:$0xff]
        %v4816 = vld [vmem:[%s4806 + $0x48] sm:$0xff]
        %v4817 = vld [vmem:[%s4806 + $0x50] sm:$0xff]
        %v4818 = vld [vmem:[%s4806 + $0x58] sm:$0xff]
        %v4819 = vld [vmem:[%s4806 + $0x60] sm:$0xff]
        %v4820 = vld [vmem:[%s4806 + $0x68] sm:$0xff]
        %v4821 = vld [vmem:[%s4806 + $0x70] sm:$0xff]
        %v4823 = vsel %vm4620, %v4805, 0
        %4825 = vmatprep.subr.mxu0 0.0
        %4826 = vmatpush1.msra.mxu0 0.0
        %4827 = vmatprep.subr.mxu0 0.0
        %4828 = vmatpush1.msra.mxu0 %v4821
        %4829 = vmatprep.subr.mxu0 0.0
        %4830 = vmatpush1.msra.mxu0 %v4820
        %4831 = vmatprep.subr.mxu0 0.0
        %4832 = vmatpush1.msra.mxu0 %v4819
        %4833 = vmatprep.subr.mxu0 0.0
        %4834 = vmatpush1.msra.mxu0 %v4818
        %4835 = vmatprep.subr.mxu0 0.0
        %4836 = vmatpush1.msra.mxu0 %v4817
        %4837 = vmatprep.subr.mxu0 0.0
        %4838 = vmatpush1.msra.mxu0 %v4816
        %4839 = vmatprep.subr.mxu0 0.0
        %4840 = vmatpush1.msra.mxu0 %v4815
        %4841 = vmatprep.subr.mxu0 0.0
        %4842 = vmatpush1.msra.mxu0 %v4814
        %4843 = vmatprep.subr.mxu0 0.0
        %4844 = vmatpush1.msra.mxu0 %v4813
        %4845 = vmatprep.subr.mxu0 0.0
        %4846 = vmatpush1.msra.mxu0 %v4812
        %4847 = vmatprep.subr.mxu0 0.0
        %4848 = vmatpush1.msra.mxu0 %v4811
        %4849 = vmatprep.subr.mxu0 0.0
        %4850 = vmatpush1.msra.mxu0 %v4810
        %4851 = vmatprep.subr.mxu0 0.0
        %4852 = vmatpush1.msra.mxu0 %v4809
        %4853 = vmatprep.subr.mxu0 0.0
        %4854 = vmatpush1.msra.mxu0 %v4808
        %4855 = vmatprep.subr.mxu0 0.0
        %4856 = vmatpush1.msra.mxu0 %v4807
        %4857 = vmatprep.subr.mxu0 0.0
        %4858 = vmatpush2.msra.mxu0 0.0
        %4859 = vmatprep.subr.mxu0 0.0
        %4860 = vmatpush2.msra.mxu0 0.0
        %4861 = vmatprep.subr.mxu0 0.0
        %4862 = vmatpush2.msra.mxu0 0.0
        %4863 = vmatprep.subr.mxu0 0.0
        %4864 = vmatpush2.msra.mxu0 0.0
        %4865 = vmatprep.subr.mxu0 0.0
        %4866 = vmatpush2.msra.mxu0 0.0
        %4867 = vmatprep.subr.mxu0 0.0
        %4868 = vmatpush2.msra.mxu0 0.0
        %4869 = vmatprep.subr.mxu0 0.0
        %4870 = vmatpush2.msra.mxu0 0.0
        %4871 = vmatprep.subr.mxu0 0.0
        %4872 = vmatpush2.msra.mxu0 0.0
        %4873 = vmatprep.subr.mxu0 0.0
        %4874 = vmatpush2.msra.mxu0 0.0
        %4875 = vmatprep.subr.mxu0 0.0
        %4876 = vmatpush2.msra.mxu0 0.0
        %4877 = vmatprep.subr.mxu0 0.0
        %4878 = vmatpush2.msra.mxu0 0.0
        %4879 = vmatprep.subr.mxu0 0.0
        %4880 = vmatpush2.msra.mxu0 0.0
        %4881 = vmatprep.subr.mxu0 0.0
        %4882 = vmatpush2.msra.mxu0 0.0
        %4883 = vmatprep.subr.mxu0 0.0
        %4884 = vmatpush2.msra.mxu0 0.0
        %4885 = vmatprep.subr.mxu0 0.0
        %4886 = vmatpush2.msra.mxu0 0.0
        %4887 = vmatprep.subr.mxu0 0.0
        %4888 = vmatpush2.msra.mxu0 0.0
        %4889 = vmatprep.mubr.f32.mxu0 0.0
        %4890 = vmatmul.mubr.f32.gmra.mxu0 %v4823
        %v4891 = vpop.f32.mrf.mxu0
        %v4892 = vadd.f32 0.0, %v4891
        %v4893 = vpop.f32.mrf.mxu0
        %4894 = vdwg.mxu0
        %v4895 = vadd.f32 %v4804, %v4892
        %v4896 = vld [vmem:[#allocation3 + $0x3] sm:$0x1]
        %s4897 = scalar_lea.vmem %s5, 360
        %v4898 = vld [vmem:[%s4897] sm:$0xff]
        %v4899 = vld [vmem:[%s4897 + $0x8] sm:$0xff]
        %v4900 = vld [vmem:[%s4897 + $0x10] sm:$0xff]
        %v4901 = vld [vmem:[%s4897 + $0x18] sm:$0xff]
        %v4902 = vld [vmem:[%s4897 + $0x20] sm:$0xff]
        %v4903 = vld [vmem:[%s4897 + $0x28] sm:$0xff]
        %v4904 = vld [vmem:[%s4897 + $0x30] sm:$0xff]
        %v4905 = vld [vmem:[%s4897 + $0x38] sm:$0xff]
        %v4906 = vld [vmem:[%s4897 + $0x40] sm:$0xff]
        %v4907 = vld [vmem:[%s4897 + $0x48] sm:$0xff]
        %v4908 = vld [vmem:[%s4897 + $0x50] sm:$0xff]
        %v4909 = vld [vmem:[%s4897 + $0x58] sm:$0xff]
        %v4910 = vld [vmem:[%s4897 + $0x60] sm:$0xff]
        %v4911 = vld [vmem:[%s4897 + $0x68] sm:$0xff]
        %v4912 = vld [vmem:[%s4897 + $0x70] sm:$0xff]
        %v4914 = vsel %vm4620, %v4896, 0
        %4916 = vmatprep.subr.mxu0 0.0
        %4917 = vmatpush1.msra.mxu0 0.0
        %4918 = vmatprep.subr.mxu0 0.0
        %4919 = vmatpush1.msra.mxu0 %v4912
        %4920 = vmatprep.subr.mxu0 0.0
        %4921 = vmatpush1.msra.mxu0 %v4911
        %4922 = vmatprep.subr.mxu0 0.0
        %4923 = vmatpush1.msra.mxu0 %v4910
        %4924 = vmatprep.subr.mxu0 0.0
        %4925 = vmatpush1.msra.mxu0 %v4909
        %4926 = vmatprep.subr.mxu0 0.0
        %4927 = vmatpush1.msra.mxu0 %v4908
        %4928 = vmatprep.subr.mxu0 0.0
        %4929 = vmatpush1.msra.mxu0 %v4907
        %4930 = vmatprep.subr.mxu0 0.0
        %4931 = vmatpush1.msra.mxu0 %v4906
        %4932 = vmatprep.subr.mxu0 0.0
        %4933 = vmatpush1.msra.mxu0 %v4905
        %4934 = vmatprep.subr.mxu0 0.0
        %4935 = vmatpush1.msra.mxu0 %v4904
        %4936 = vmatprep.subr.mxu0 0.0
        %4937 = vmatpush1.msra.mxu0 %v4903
        %4938 = vmatprep.subr.mxu0 0.0
        %4939 = vmatpush1.msra.mxu0 %v4902
        %4940 = vmatprep.subr.mxu0 0.0
        %4941 = vmatpush1.msra.mxu0 %v4901
        %4942 = vmatprep.subr.mxu0 0.0
        %4943 = vmatpush1.msra.mxu0 %v4900
        %4944 = vmatprep.subr.mxu0 0.0
        %4945 = vmatpush1.msra.mxu0 %v4899
        %4946 = vmatprep.subr.mxu0 0.0
        %4947 = vmatpush1.msra.mxu0 %v4898
        %4948 = vmatprep.subr.mxu0 0.0
        %4949 = vmatpush2.msra.mxu0 0.0
        %4950 = vmatprep.subr.mxu0 0.0
        %4951 = vmatpush2.msra.mxu0 0.0
        %4952 = vmatprep.subr.mxu0 0.0
        %4953 = vmatpush2.msra.mxu0 0.0
        %4954 = vmatprep.subr.mxu0 0.0
        %4955 = vmatpush2.msra.mxu0 0.0
        %4956 = vmatprep.subr.mxu0 0.0
        %4957 = vmatpush2.msra.mxu0 0.0
        %4958 = vmatprep.subr.mxu0 0.0
        %4959 = vmatpush2.msra.mxu0 0.0
        %4960 = vmatprep.subr.mxu0 0.0
        %4961 = vmatpush2.msra.mxu0 0.0
        %4962 = vmatprep.subr.mxu0 0.0
        %4963 = vmatpush2.msra.mxu0 0.0
        %4964 = vmatprep.subr.mxu0 0.0
        %4965 = vmatpush2.msra.mxu0 0.0
        %4966 = vmatprep.subr.mxu0 0.0
        %4967 = vmatpush2.msra.mxu0 0.0
        %4968 = vmatprep.subr.mxu0 0.0
        %4969 = vmatpush2.msra.mxu0 0.0
        %4970 = vmatprep.subr.mxu0 0.0
        %4971 = vmatpush2.msra.mxu0 0.0
        %4972 = vmatprep.subr.mxu0 0.0
        %4973 = vmatpush2.msra.mxu0 0.0
        %4974 = vmatprep.subr.mxu0 0.0
        %4975 = vmatpush2.msra.mxu0 0.0
        %4976 = vmatprep.subr.mxu0 0.0
        %4977 = vmatpush2.msra.mxu0 0.0
        %4978 = vmatprep.subr.mxu0 0.0
        %4979 = vmatpush2.msra.mxu0 0.0
        %4980 = vmatprep.mubr.f32.mxu0 0.0
        %4981 = vmatmul.mubr.f32.gmra.mxu0 %v4914
        %v4982 = vpop.f32.mrf.mxu0
        %v4983 = vadd.f32 0.0, %v4982
        %v4984 = vpop.f32.mrf.mxu0
        %4985 = vdwg.mxu0
        %v4986 = vadd.f32 %v4895, %v4983
        %v4987 = vld [vmem:[#allocation3 + $0x4] sm:$0x1]
        %s4988 = scalar_lea.vmem %s5, 480
        %v4989 = vld [vmem:[%s4988] sm:$0xff]
        %v4990 = vld [vmem:[%s4988 + $0x8] sm:$0xff]
        %v4991 = vld [vmem:[%s4988 + $0x10] sm:$0xff]
        %v4992 = vld [vmem:[%s4988 + $0x18] sm:$0xff]
        %v4993 = vld [vmem:[%s4988 + $0x20] sm:$0xff]
        %v4994 = vld [vmem:[%s4988 + $0x28] sm:$0xff]
        %v4995 = vld [vmem:[%s4988 + $0x30] sm:$0xff]
        %v4996 = vld [vmem:[%s4988 + $0x38] sm:$0xff]
        %v4997 = vld [vmem:[%s4988 + $0x40] sm:$0xff]
        %v4998 = vld [vmem:[%s4988 + $0x48] sm:$0xff]
        %v4999 = vld [vmem:[%s4988 + $0x50] sm:$0xff]
        %v5000 = vld [vmem:[%s4988 + $0x58] sm:$0xff]
        %v5001 = vld [vmem:[%s4988 + $0x60] sm:$0xff]
        %v5002 = vld [vmem:[%s4988 + $0x68] sm:$0xff]
        %v5003 = vld [vmem:[%s4988 + $0x70] sm:$0xff]
        %v5005 = vsel %vm4620, %v4987, 0
        %5007 = vmatprep.subr.mxu0 0.0
        %5008 = vmatpush1.msra.mxu0 0.0
        %5009 = vmatprep.subr.mxu0 0.0
        %5010 = vmatpush1.msra.mxu0 %v5003
        %5011 = vmatprep.subr.mxu0 0.0
        %5012 = vmatpush1.msra.mxu0 %v5002
        %5013 = vmatprep.subr.mxu0 0.0
        %5014 = vmatpush1.msra.mxu0 %v5001
        %5015 = vmatprep.subr.mxu0 0.0
        %5016 = vmatpush1.msra.mxu0 %v5000
        %5017 = vmatprep.subr.mxu0 0.0
        %5018 = vmatpush1.msra.mxu0 %v4999
        %5019 = vmatprep.subr.mxu0 0.0
        %5020 = vmatpush1.msra.mxu0 %v4998
        %5021 = vmatprep.subr.mxu0 0.0
        %5022 = vmatpush1.msra.mxu0 %v4997
        %5023 = vmatprep.subr.mxu0 0.0
        %5024 = vmatpush1.msra.mxu0 %v4996
        %5025 = vmatprep.subr.mxu0 0.0
        %5026 = vmatpush1.msra.mxu0 %v4995
        %5027 = vmatprep.subr.mxu0 0.0
        %5028 = vmatpush1.msra.mxu0 %v4994
        %5029 = vmatprep.subr.mxu0 0.0
        %5030 = vmatpush1.msra.mxu0 %v4993
        %5031 = vmatprep.subr.mxu0 0.0
        %5032 = vmatpush1.msra.mxu0 %v4992
        %5033 = vmatprep.subr.mxu0 0.0
        %5034 = vmatpush1.msra.mxu0 %v4991
        %5035 = vmatprep.subr.mxu0 0.0
        %5036 = vmatpush1.msra.mxu0 %v4990
        %5037 = vmatprep.subr.mxu0 0.0
        %5038 = vmatpush1.msra.mxu0 %v4989
        %5039 = vmatprep.subr.mxu0 0.0
        %5040 = vmatpush2.msra.mxu0 0.0
        %5041 = vmatprep.subr.mxu0 0.0
        %5042 = vmatpush2.msra.mxu0 0.0
        %5043 = vmatprep.subr.mxu0 0.0
        %5044 = vmatpush2.msra.mxu0 0.0
        %5045 = vmatprep.subr.mxu0 0.0
        %5046 = vmatpush2.msra.mxu0 0.0
        %5047 = vmatprep.subr.mxu0 0.0
        %5048 = vmatpush2.msra.mxu0 0.0
        %5049 = vmatprep.subr.mxu0 0.0
        %5050 = vmatpush2.msra.mxu0 0.0
        %5051 = vmatprep.subr.mxu0 0.0
        %5052 = vmatpush2.msra.mxu0 0.0
        %5053 = vmatprep.subr.mxu0 0.0
        %5054 = vmatpush2.msra.mxu0 0.0
        %5055 = vmatprep.subr.mxu0 0.0
        %5056 = vmatpush2.msra.mxu0 0.0
        %5057 = vmatprep.subr.mxu0 0.0
        %5058 = vmatpush2.msra.mxu0 0.0
        %5059 = vmatprep.subr.mxu0 0.0
        %5060 = vmatpush2.msra.mxu0 0.0
        %5061 = vmatprep.subr.mxu0 0.0
        %5062 = vmatpush2.msra.mxu0 0.0
        %5063 = vmatprep.subr.mxu0 0.0
        %5064 = vmatpush2.msra.mxu0 0.0
        %5065 = vmatprep.subr.mxu0 0.0
        %5066 = vmatpush2.msra.mxu0 0.0
        %5067 = vmatprep.subr.mxu0 0.0
        %5068 = vmatpush2.msra.mxu0 0.0
        %5069 = vmatprep.subr.mxu0 0.0
        %5070 = vmatpush2.msra.mxu0 0.0
        %5071 = vmatprep.mubr.f32.mxu0 0.0
        %5072 = vmatmul.mubr.f32.gmra.mxu0 %v5005
        %v5073 = vpop.f32.mrf.mxu0
        %v5074 = vadd.f32 0.0, %v5073
        %v5075 = vpop.f32.mrf.mxu0
        %5076 = vdwg.mxu0
        %v5077 = vadd.f32 %v4986, %v5074
        %v5078 = vld [vmem:[#allocation3 + $0x5] sm:$0x1]
        %s5079 = scalar_lea.vmem %s5, 600
        %v5080 = vld [vmem:[%s5079] sm:$0xff]
        %v5081 = vld [vmem:[%s5079 + $0x8] sm:$0xff]
        %v5082 = vld [vmem:[%s5079 + $0x10] sm:$0xff]
        %v5083 = vld [vmem:[%s5079 + $0x18] sm:$0xff]
        %v5084 = vld [vmem:[%s5079 + $0x20] sm:$0xff]
        %v5085 = vld [vmem:[%s5079 + $0x28] sm:$0xff]
        %v5086 = vld [vmem:[%s5079 + $0x30] sm:$0xff]
        %v5087 = vld [vmem:[%s5079 + $0x38] sm:$0xff]
        %v5088 = vld [vmem:[%s5079 + $0x40] sm:$0xff]
        %v5089 = vld [vmem:[%s5079 + $0x48] sm:$0xff]
        %v5090 = vld [vmem:[%s5079 + $0x50] sm:$0xff]
        %v5091 = vld [vmem:[%s5079 + $0x58] sm:$0xff]
        %v5092 = vld [vmem:[%s5079 + $0x60] sm:$0xff]
        %v5093 = vld [vmem:[%s5079 + $0x68] sm:$0xff]
        %v5094 = vld [vmem:[%s5079 + $0x70] sm:$0xff]
        %v5096 = vsel %vm4620, %v5078, 0
        %5098 = vmatprep.subr.mxu0 0.0
        %5099 = vmatpush1.msra.mxu0 0.0
        %5100 = vmatprep.subr.mxu0 0.0
        %5101 = vmatpush1.msra.mxu0 %v5094
        %5102 = vmatprep.subr.mxu0 0.0
        %5103 = vmatpush1.msra.mxu0 %v5093
        %5104 = vmatprep.subr.mxu0 0.0
        %5105 = vmatpush1.msra.mxu0 %v5092
        %5106 = vmatprep.subr.mxu0 0.0
        %5107 = vmatpush1.msra.mxu0 %v5091
        %5108 = vmatprep.subr.mxu0 0.0
        %5109 = vmatpush1.msra.mxu0 %v5090
        %5110 = vmatprep.subr.mxu0 0.0
        %5111 = vmatpush1.msra.mxu0 %v5089
        %5112 = vmatprep.subr.mxu0 0.0
        %5113 = vmatpush1.msra.mxu0 %v5088
        %5114 = vmatprep.subr.mxu0 0.0
        %5115 = vmatpush1.msra.mxu0 %v5087
        %5116 = vmatprep.subr.mxu0 0.0
        %5117 = vmatpush1.msra.mxu0 %v5086
        %5118 = vmatprep.subr.mxu0 0.0
        %5119 = vmatpush1.msra.mxu0 %v5085
        %5120 = vmatprep.subr.mxu0 0.0
        %5121 = vmatpush1.msra.mxu0 %v5084
        %5122 = vmatprep.subr.mxu0 0.0
        %5123 = vmatpush1.msra.mxu0 %v5083
        %5124 = vmatprep.subr.mxu0 0.0
        %5125 = vmatpush1.msra.mxu0 %v5082
        %5126 = vmatprep.subr.mxu0 0.0
        %5127 = vmatpush1.msra.mxu0 %v5081
        %5128 = vmatprep.subr.mxu0 0.0
        %5129 = vmatpush1.msra.mxu0 %v5080
        %5130 = vmatprep.subr.mxu0 0.0
        %5131 = vmatpush2.msra.mxu0 0.0
        %5132 = vmatprep.subr.mxu0 0.0
        %5133 = vmatpush2.msra.mxu0 0.0
        %5134 = vmatprep.subr.mxu0 0.0
        %5135 = vmatpush2.msra.mxu0 0.0
        %5136 = vmatprep.subr.mxu0 0.0
        %5137 = vmatpush2.msra.mxu0 0.0
        %5138 = vmatprep.subr.mxu0 0.0
        %5139 = vmatpush2.msra.mxu0 0.0
        %5140 = vmatprep.subr.mxu0 0.0
        %5141 = vmatpush2.msra.mxu0 0.0
        %5142 = vmatprep.subr.mxu0 0.0
        %5143 = vmatpush2.msra.mxu0 0.0
        %5144 = vmatprep.subr.mxu0 0.0
        %5145 = vmatpush2.msra.mxu0 0.0
        %5146 = vmatprep.subr.mxu0 0.0
        %5147 = vmatpush2.msra.mxu0 0.0
        %5148 = vmatprep.subr.mxu0 0.0
        %5149 = vmatpush2.msra.mxu0 0.0
        %5150 = vmatprep.subr.mxu0 0.0
        %5151 = vmatpush2.msra.mxu0 0.0
        %5152 = vmatprep.subr.mxu0 0.0
        %5153 = vmatpush2.msra.mxu0 0.0
        %5154 = vmatprep.subr.mxu0 0.0
        %5155 = vmatpush2.msra.mxu0 0.0
        %5156 = vmatprep.subr.mxu0 0.0
        %5157 = vmatpush2.msra.mxu0 0.0
        %5158 = vmatprep.subr.mxu0 0.0
        %5159 = vmatpush2.msra.mxu0 0.0
        %5160 = vmatprep.subr.mxu0 0.0
        %5161 = vmatpush2.msra.mxu0 0.0
        %5162 = vmatprep.mubr.f32.mxu0 0.0
        %5163 = vmatmul.mubr.f32.gmra.mxu0 %v5096
        %v5164 = vpop.f32.mrf.mxu0
        %v5165 = vadd.f32 0.0, %v5164
        %v5166 = vpop.f32.mrf.mxu0
        %5167 = vdwg.mxu0
        %v5168 = vadd.f32 %v5077, %v5165
        %v5169 = vld [vmem:[#allocation3 + $0x6] sm:$0x1]
        %s5170 = scalar_lea.vmem %s5, 720
        %v5171 = vld [vmem:[%s5170] sm:$0xff]
        %v5172 = vld [vmem:[%s5170 + $0x8] sm:$0xff]
        %v5173 = vld [vmem:[%s5170 + $0x10] sm:$0xff]
        %v5174 = vld [vmem:[%s5170 + $0x18] sm:$0xff]
        %v5175 = vld [vmem:[%s5170 + $0x20] sm:$0xff]
        %v5176 = vld [vmem:[%s5170 + $0x28] sm:$0xff]
        %v5177 = vld [vmem:[%s5170 + $0x30] sm:$0xff]
        %v5178 = vld [vmem:[%s5170 + $0x38] sm:$0xff]
        %v5179 = vld [vmem:[%s5170 + $0x40] sm:$0xff]
        %v5180 = vld [vmem:[%s5170 + $0x48] sm:$0xff]
        %v5181 = vld [vmem:[%s5170 + $0x50] sm:$0xff]
        %v5182 = vld [vmem:[%s5170 + $0x58] sm:$0xff]
        %v5183 = vld [vmem:[%s5170 + $0x60] sm:$0xff]
        %v5184 = vld [vmem:[%s5170 + $0x68] sm:$0xff]
        %v5185 = vld [vmem:[%s5170 + $0x70] sm:$0xff]
        %v5187 = vsel %vm4620, %v5169, 0
        %5189 = vmatprep.subr.mxu0 0.0
        %5190 = vmatpush1.msra.mxu0 0.0
        %5191 = vmatprep.subr.mxu0 0.0
        %5192 = vmatpush1.msra.mxu0 %v5185
        %5193 = vmatprep.subr.mxu0 0.0
        %5194 = vmatpush1.msra.mxu0 %v5184
        %5195 = vmatprep.subr.mxu0 0.0
        %5196 = vmatpush1.msra.mxu0 %v5183
        %5197 = vmatprep.subr.mxu0 0.0
        %5198 = vmatpush1.msra.mxu0 %v5182
        %5199 = vmatprep.subr.mxu0 0.0
        %5200 = vmatpush1.msra.mxu0 %v5181
        %5201 = vmatprep.subr.mxu0 0.0
        %5202 = vmatpush1.msra.mxu0 %v5180
        %5203 = vmatprep.subr.mxu0 0.0
        %5204 = vmatpush1.msra.mxu0 %v5179
        %5205 = vmatprep.subr.mxu0 0.0
        %5206 = vmatpush1.msra.mxu0 %v5178
        %5207 = vmatprep.subr.mxu0 0.0
        %5208 = vmatpush1.msra.mxu0 %v5177
        %5209 = vmatprep.subr.mxu0 0.0
        %5210 = vmatpush1.msra.mxu0 %v5176
        %5211 = vmatprep.subr.mxu0 0.0
        %5212 = vmatpush1.msra.mxu0 %v5175
        %5213 = vmatprep.subr.mxu0 0.0
        %5214 = vmatpush1.msra.mxu0 %v5174
        %5215 = vmatprep.subr.mxu0 0.0
        %5216 = vmatpush1.msra.mxu0 %v5173
        %5217 = vmatprep.subr.mxu0 0.0
        %5218 = vmatpush1.msra.mxu0 %v5172
        %5219 = vmatprep.subr.mxu0 0.0
        %5220 = vmatpush1.msra.mxu0 %v5171
        %5221 = vmatprep.subr.mxu0 0.0
        %5222 = vmatpush2.msra.mxu0 0.0
        %5223 = vmatprep.subr.mxu0 0.0
        %5224 = vmatpush2.msra.mxu0 0.0
        %5225 = vmatprep.subr.mxu0 0.0
        %5226 = vmatpush2.msra.mxu0 0.0
        %5227 = vmatprep.subr.mxu0 0.0
        %5228 = vmatpush2.msra.mxu0 0.0
        %5229 = vmatprep.subr.mxu0 0.0
        %5230 = vmatpush2.msra.mxu0 0.0
        %5231 = vmatprep.subr.mxu0 0.0
        %5232 = vmatpush2.msra.mxu0 0.0
        %5233 = vmatprep.subr.mxu0 0.0
        %5234 = vmatpush2.msra.mxu0 0.0
        %5235 = vmatprep.subr.mxu0 0.0
        %5236 = vmatpush2.msra.mxu0 0.0
        %5237 = vmatprep.subr.mxu0 0.0
        %5238 = vmatpush2.msra.mxu0 0.0
        %5239 = vmatprep.subr.mxu0 0.0
        %5240 = vmatpush2.msra.mxu0 0.0
        %5241 = vmatprep.subr.mxu0 0.0
        %5242 = vmatpush2.msra.mxu0 0.0
        %5243 = vmatprep.subr.mxu0 0.0
        %5244 = vmatpush2.msra.mxu0 0.0
        %5245 = vmatprep.subr.mxu0 0.0
        %5246 = vmatpush2.msra.mxu0 0.0
        %5247 = vmatprep.subr.mxu0 0.0
        %5248 = vmatpush2.msra.mxu0 0.0
        %5249 = vmatprep.subr.mxu0 0.0
        %5250 = vmatpush2.msra.mxu0 0.0
        %5251 = vmatprep.subr.mxu0 0.0
        %5252 = vmatpush2.msra.mxu0 0.0
        %5253 = vmatprep.mubr.f32.mxu0 0.0
        %5254 = vmatmul.mubr.f32.gmra.mxu0 %v5187
        %v5255 = vpop.f32.mrf.mxu0
        %v5256 = vadd.f32 0.0, %v5255
        %v5257 = vpop.f32.mrf.mxu0
        %5258 = vdwg.mxu0
        %v5259 = vadd.f32 %v5168, %v5256
        %v5260 = vld [vmem:[#allocation3 + $0x7] sm:$0x1]
        %s5261 = scalar_lea.vmem %s5, 840
        %v5262 = vld [vmem:[%s5261] sm:$0xff]
        %v5263 = vld [vmem:[%s5261 + $0x8] sm:$0xff]
        %v5264 = vld [vmem:[%s5261 + $0x10] sm:$0xff]
        %v5265 = vld [vmem:[%s5261 + $0x18] sm:$0xff]
        %v5266 = vld [vmem:[%s5261 + $0x20] sm:$0xff]
        %v5267 = vld [vmem:[%s5261 + $0x28] sm:$0xff]
        %v5268 = vld [vmem:[%s5261 + $0x30] sm:$0xff]
        %v5269 = vld [vmem:[%s5261 + $0x38] sm:$0xff]
        %v5270 = vld [vmem:[%s5261 + $0x40] sm:$0xff]
        %v5271 = vld [vmem:[%s5261 + $0x48] sm:$0xff]
        %v5272 = vld [vmem:[%s5261 + $0x50] sm:$0xff]
        %v5273 = vld [vmem:[%s5261 + $0x58] sm:$0xff]
        %v5274 = vld [vmem:[%s5261 + $0x60] sm:$0xff]
        %v5275 = vld [vmem:[%s5261 + $0x68] sm:$0xff]
        %v5276 = vld [vmem:[%s5261 + $0x70] sm:$0xff]
        %v5278 = vsel %vm4620, %v5260, 0
        %5280 = vmatprep.subr.mxu0 0.0
        %5281 = vmatpush1.msra.mxu0 0.0
        %5282 = vmatprep.subr.mxu0 0.0
        %5283 = vmatpush1.msra.mxu0 %v5276
        %5284 = vmatprep.subr.mxu0 0.0
        %5285 = vmatpush1.msra.mxu0 %v5275
        %5286 = vmatprep.subr.mxu0 0.0
        %5287 = vmatpush1.msra.mxu0 %v5274
        %5288 = vmatprep.subr.mxu0 0.0
        %5289 = vmatpush1.msra.mxu0 %v5273
        %5290 = vmatprep.subr.mxu0 0.0
        %5291 = vmatpush1.msra.mxu0 %v5272
        %5292 = vmatprep.subr.mxu0 0.0
        %5293 = vmatpush1.msra.mxu0 %v5271
        %5294 = vmatprep.subr.mxu0 0.0
        %5295 = vmatpush1.msra.mxu0 %v5270
        %5296 = vmatprep.subr.mxu0 0.0
        %5297 = vmatpush1.msra.mxu0 %v5269
        %5298 = vmatprep.subr.mxu0 0.0
        %5299 = vmatpush1.msra.mxu0 %v5268
        %5300 = vmatprep.subr.mxu0 0.0
        %5301 = vmatpush1.msra.mxu0 %v5267
        %5302 = vmatprep.subr.mxu0 0.0
        %5303 = vmatpush1.msra.mxu0 %v5266
        %5304 = vmatprep.subr.mxu0 0.0
        %5305 = vmatpush1.msra.mxu0 %v5265
        %5306 = vmatprep.subr.mxu0 0.0
        %5307 = vmatpush1.msra.mxu0 %v5264
        %5308 = vmatprep.subr.mxu0 0.0
        %5309 = vmatpush1.msra.mxu0 %v5263
        %5310 = vmatprep.subr.mxu0 0.0
        %5311 = vmatpush1.msra.mxu0 %v5262
        %5312 = vmatprep.subr.mxu0 0.0
        %5313 = vmatpush2.msra.mxu0 0.0
        %5314 = vmatprep.subr.mxu0 0.0
        %5315 = vmatpush2.msra.mxu0 0.0
        %5316 = vmatprep.subr.mxu0 0.0
        %5317 = vmatpush2.msra.mxu0 0.0
        %5318 = vmatprep.subr.mxu0 0.0
        %5319 = vmatpush2.msra.mxu0 0.0
        %5320 = vmatprep.subr.mxu0 0.0
        %5321 = vmatpush2.msra.mxu0 0.0
        %5322 = vmatprep.subr.mxu0 0.0
        %5323 = vmatpush2.msra.mxu0 0.0
        %5324 = vmatprep.subr.mxu0 0.0
        %5325 = vmatpush2.msra.mxu0 0.0
        %5326 = vmatprep.subr.mxu0 0.0
        %5327 = vmatpush2.msra.mxu0 0.0
        %5328 = vmatprep.subr.mxu0 0.0
        %5329 = vmatpush2.msra.mxu0 0.0
        %5330 = vmatprep.subr.mxu0 0.0
        %5331 = vmatpush2.msra.mxu0 0.0
        %5332 = vmatprep.subr.mxu0 0.0
        %5333 = vmatpush2.msra.mxu0 0.0
        %5334 = vmatprep.subr.mxu0 0.0
        %5335 = vmatpush2.msra.mxu0 0.0
        %5336 = vmatprep.subr.mxu0 0.0
        %5337 = vmatpush2.msra.mxu0 0.0
        %5338 = vmatprep.subr.mxu0 0.0
        %5339 = vmatpush2.msra.mxu0 0.0
        %5340 = vmatprep.subr.mxu0 0.0
        %5341 = vmatpush2.msra.mxu0 0.0
        %5342 = vmatprep.subr.mxu0 0.0
        %5343 = vmatpush2.msra.mxu0 0.0
        %5344 = vmatprep.mubr.f32.mxu0 0.0
        %5345 = vmatmul.mubr.f32.gmra.mxu0 %v5278
        %v5346 = vpop.f32.mrf.mxu0
        %v5347 = vadd.f32 0.0, %v5346
        %v5348 = vpop.f32.mrf.mxu0
        %5349 = vdwg.mxu0
        %v5350 = vadd.f32 %v5259, %v5347
        %v5351 = vld [vmem:[#allocation3 + $0x8] sm:$0x1]
        %s5352 = scalar_lea.vmem %s5, 960
        %v5353 = vld [vmem:[%s5352] sm:$0xff]
        %v5354 = vld [vmem:[%s5352 + $0x8] sm:$0xff]
        %v5355 = vld [vmem:[%s5352 + $0x10] sm:$0xff]
        %v5356 = vld [vmem:[%s5352 + $0x18] sm:$0xff]
        %v5357 = vld [vmem:[%s5352 + $0x20] sm:$0xff]
        %v5358 = vld [vmem:[%s5352 + $0x28] sm:$0xff]
        %v5359 = vld [vmem:[%s5352 + $0x30] sm:$0xff]
        %v5360 = vld [vmem:[%s5352 + $0x38] sm:$0xff]
        %v5361 = vld [vmem:[%s5352 + $0x40] sm:$0xff]
        %v5362 = vld [vmem:[%s5352 + $0x48] sm:$0xff]
        %v5363 = vld [vmem:[%s5352 + $0x50] sm:$0xff]
        %v5364 = vld [vmem:[%s5352 + $0x58] sm:$0xff]
        %v5365 = vld [vmem:[%s5352 + $0x60] sm:$0xff]
        %v5366 = vld [vmem:[%s5352 + $0x68] sm:$0xff]
        %v5367 = vld [vmem:[%s5352 + $0x70] sm:$0xff]
        %v5369 = vsel %vm4620, %v5351, 0
        %5371 = vmatprep.subr.mxu0 0.0
        %5372 = vmatpush1.msra.mxu0 0.0
        %5373 = vmatprep.subr.mxu0 0.0
        %5374 = vmatpush1.msra.mxu0 %v5367
        %5375 = vmatprep.subr.mxu0 0.0
        %5376 = vmatpush1.msra.mxu0 %v5366
        %5377 = vmatprep.subr.mxu0 0.0
        %5378 = vmatpush1.msra.mxu0 %v5365
        %5379 = vmatprep.subr.mxu0 0.0
        %5380 = vmatpush1.msra.mxu0 %v5364
        %5381 = vmatprep.subr.mxu0 0.0
        %5382 = vmatpush1.msra.mxu0 %v5363
        %5383 = vmatprep.subr.mxu0 0.0
        %5384 = vmatpush1.msra.mxu0 %v5362
        %5385 = vmatprep.subr.mxu0 0.0
        %5386 = vmatpush1.msra.mxu0 %v5361
        %5387 = vmatprep.subr.mxu0 0.0
        %5388 = vmatpush1.msra.mxu0 %v5360
        %5389 = vmatprep.subr.mxu0 0.0
        %5390 = vmatpush1.msra.mxu0 %v5359
        %5391 = vmatprep.subr.mxu0 0.0
        %5392 = vmatpush1.msra.mxu0 %v5358
        %5393 = vmatprep.subr.mxu0 0.0
        %5394 = vmatpush1.msra.mxu0 %v5357
        %5395 = vmatprep.subr.mxu0 0.0
        %5396 = vmatpush1.msra.mxu0 %v5356
        %5397 = vmatprep.subr.mxu0 0.0
        %5398 = vmatpush1.msra.mxu0 %v5355
        %5399 = vmatprep.subr.mxu0 0.0
        %5400 = vmatpush1.msra.mxu0 %v5354
        %5401 = vmatprep.subr.mxu0 0.0
        %5402 = vmatpush1.msra.mxu0 %v5353
        %5403 = vmatprep.subr.mxu0 0.0
        %5404 = vmatpush2.msra.mxu0 0.0
        %5405 = vmatprep.subr.mxu0 0.0
        %5406 = vmatpush2.msra.mxu0 0.0
        %5407 = vmatprep.subr.mxu0 0.0
        %5408 = vmatpush2.msra.mxu0 0.0
        %5409 = vmatprep.subr.mxu0 0.0
        %5410 = vmatpush2.msra.mxu0 0.0
        %5411 = vmatprep.subr.mxu0 0.0
        %5412 = vmatpush2.msra.mxu0 0.0
        %5413 = vmatprep.subr.mxu0 0.0
        %5414 = vmatpush2.msra.mxu0 0.0
        %5415 = vmatprep.subr.mxu0 0.0
        %5416 = vmatpush2.msra.mxu0 0.0
        %5417 = vmatprep.subr.mxu0 0.0
        %5418 = vmatpush2.msra.mxu0 0.0
        %5419 = vmatprep.subr.mxu0 0.0
        %5420 = vmatpush2.msra.mxu0 0.0
        %5421 = vmatprep.subr.mxu0 0.0
        %5422 = vmatpush2.msra.mxu0 0.0
        %5423 = vmatprep.subr.mxu0 0.0
        %5424 = vmatpush2.msra.mxu0 0.0
        %5425 = vmatprep.subr.mxu0 0.0
        %5426 = vmatpush2.msra.mxu0 0.0
        %5427 = vmatprep.subr.mxu0 0.0
        %5428 = vmatpush2.msra.mxu0 0.0
        %5429 = vmatprep.subr.mxu0 0.0
        %5430 = vmatpush2.msra.mxu0 0.0
        %5431 = vmatprep.subr.mxu0 0.0
        %5432 = vmatpush2.msra.mxu0 0.0
        %5433 = vmatprep.subr.mxu0 0.0
        %5434 = vmatpush2.msra.mxu0 0.0
        %5435 = vmatprep.mubr.f32.mxu0 0.0
        %5436 = vmatmul.mubr.f32.gmra.mxu0 %v5369
        %v5437 = vpop.f32.mrf.mxu0
        %v5438 = vadd.f32 0.0, %v5437
        %v5439 = vpop.f32.mrf.mxu0
        %5440 = vdwg.mxu0
        %v5441 = vadd.f32 %v5350, %v5438
        %v5442 = vld [vmem:[#allocation3 + $0x9] sm:$0x1]
        %s5443 = scalar_lea.vmem %s5, 1080
        %v5444 = vld [vmem:[%s5443] sm:$0xff]
        %v5445 = vld [vmem:[%s5443 + $0x8] sm:$0xff]
        %v5446 = vld [vmem:[%s5443 + $0x10] sm:$0xff]
        %v5447 = vld [vmem:[%s5443 + $0x18] sm:$0xff]
        %v5448 = vld [vmem:[%s5443 + $0x20] sm:$0xff]
        %v5449 = vld [vmem:[%s5443 + $0x28] sm:$0xff]
        %v5450 = vld [vmem:[%s5443 + $0x30] sm:$0xff]
        %v5451 = vld [vmem:[%s5443 + $0x38] sm:$0xff]
        %v5452 = vld [vmem:[%s5443 + $0x40] sm:$0xff]
        %v5453 = vld [vmem:[%s5443 + $0x48] sm:$0xff]
        %v5454 = vld [vmem:[%s5443 + $0x50] sm:$0xff]
        %v5455 = vld [vmem:[%s5443 + $0x58] sm:$0xff]
        %v5456 = vld [vmem:[%s5443 + $0x60] sm:$0xff]
        %v5457 = vld [vmem:[%s5443 + $0x68] sm:$0xff]
        %v5458 = vld [vmem:[%s5443 + $0x70] sm:$0xff]
        %v5460 = vsel %vm4620, %v5442, 0
        %5462 = vmatprep.subr.mxu0 0.0
        %5463 = vmatpush1.msra.mxu0 0.0
        %5464 = vmatprep.subr.mxu0 0.0
        %5465 = vmatpush1.msra.mxu0 %v5458
        %5466 = vmatprep.subr.mxu0 0.0
        %5467 = vmatpush1.msra.mxu0 %v5457
        %5468 = vmatprep.subr.mxu0 0.0
        %5469 = vmatpush1.msra.mxu0 %v5456
        %5470 = vmatprep.subr.mxu0 0.0
        %5471 = vmatpush1.msra.mxu0 %v5455
        %5472 = vmatprep.subr.mxu0 0.0
        %5473 = vmatpush1.msra.mxu0 %v5454
        %5474 = vmatprep.subr.mxu0 0.0
        %5475 = vmatpush1.msra.mxu0 %v5453
        %5476 = vmatprep.subr.mxu0 0.0
        %5477 = vmatpush1.msra.mxu0 %v5452
        %5478 = vmatprep.subr.mxu0 0.0
        %5479 = vmatpush1.msra.mxu0 %v5451
        %5480 = vmatprep.subr.mxu0 0.0
        %5481 = vmatpush1.msra.mxu0 %v5450
        %5482 = vmatprep.subr.mxu0 0.0
        %5483 = vmatpush1.msra.mxu0 %v5449
        %5484 = vmatprep.subr.mxu0 0.0
        %5485 = vmatpush1.msra.mxu0 %v5448
        %5486 = vmatprep.subr.mxu0 0.0
        %5487 = vmatpush1.msra.mxu0 %v5447
        %5488 = vmatprep.subr.mxu0 0.0
        %5489 = vmatpush1.msra.mxu0 %v5446
        %5490 = vmatprep.subr.mxu0 0.0
        %5491 = vmatpush1.msra.mxu0 %v5445
        %5492 = vmatprep.subr.mxu0 0.0
        %5493 = vmatpush1.msra.mxu0 %v5444
        %5494 = vmatprep.subr.mxu0 0.0
        %5495 = vmatpush2.msra.mxu0 0.0
        %5496 = vmatprep.subr.mxu0 0.0
        %5497 = vmatpush2.msra.mxu0 0.0
        %5498 = vmatprep.subr.mxu0 0.0
        %5499 = vmatpush2.msra.mxu0 0.0
        %5500 = vmatprep.subr.mxu0 0.0
        %5501 = vmatpush2.msra.mxu0 0.0
        %5502 = vmatprep.subr.mxu0 0.0
        %5503 = vmatpush2.msra.mxu0 0.0
        %5504 = vmatprep.subr.mxu0 0.0
        %5505 = vmatpush2.msra.mxu0 0.0
        %5506 = vmatprep.subr.mxu0 0.0
        %5507 = vmatpush2.msra.mxu0 0.0
        %5508 = vmatprep.subr.mxu0 0.0
        %5509 = vmatpush2.msra.mxu0 0.0
        %5510 = vmatprep.subr.mxu0 0.0
        %5511 = vmatpush2.msra.mxu0 0.0
        %5512 = vmatprep.subr.mxu0 0.0
        %5513 = vmatpush2.msra.mxu0 0.0
        %5514 = vmatprep.subr.mxu0 0.0
        %5515 = vmatpush2.msra.mxu0 0.0
        %5516 = vmatprep.subr.mxu0 0.0
        %5517 = vmatpush2.msra.mxu0 0.0
        %5518 = vmatprep.subr.mxu0 0.0
        %5519 = vmatpush2.msra.mxu0 0.0
        %5520 = vmatprep.subr.mxu0 0.0
        %5521 = vmatpush2.msra.mxu0 0.0
        %5522 = vmatprep.subr.mxu0 0.0
        %5523 = vmatpush2.msra.mxu0 0.0
        %5524 = vmatprep.subr.mxu0 0.0
        %5525 = vmatpush2.msra.mxu0 0.0
        %5526 = vmatprep.mubr.f32.mxu0 0.0
        %5527 = vmatmul.mubr.f32.gmra.mxu0 %v5460
        %v5528 = vpop.f32.mrf.mxu0
        %v5529 = vadd.f32 0.0, %v5528
        %v5530 = vpop.f32.mrf.mxu0
        %5531 = vdwg.mxu0
        %v5532 = vadd.f32 %v5441, %v5529
        %v5533 = vld [vmem:[#allocation3 + $0xa] sm:$0x1]
        %s5534 = scalar_lea.vmem %s5, 1200
        %v5535 = vld [vmem:[%s5534] sm:$0xff]
        %v5536 = vld [vmem:[%s5534 + $0x8] sm:$0xff]
        %v5537 = vld [vmem:[%s5534 + $0x10] sm:$0xff]
        %v5538 = vld [vmem:[%s5534 + $0x18] sm:$0xff]
        %v5539 = vld [vmem:[%s5534 + $0x20] sm:$0xff]
        %v5540 = vld [vmem:[%s5534 + $0x28] sm:$0xff]
        %v5541 = vld [vmem:[%s5534 + $0x30] sm:$0xff]
        %v5542 = vld [vmem:[%s5534 + $0x38] sm:$0xff]
        %v5543 = vld [vmem:[%s5534 + $0x40] sm:$0xff]
        %v5544 = vld [vmem:[%s5534 + $0x48] sm:$0xff]
        %v5545 = vld [vmem:[%s5534 + $0x50] sm:$0xff]
        %v5546 = vld [vmem:[%s5534 + $0x58] sm:$0xff]
        %v5547 = vld [vmem:[%s5534 + $0x60] sm:$0xff]
        %v5548 = vld [vmem:[%s5534 + $0x68] sm:$0xff]
        %v5549 = vld [vmem:[%s5534 + $0x70] sm:$0xff]
        %v5551 = vsel %vm4620, %v5533, 0
        %5553 = vmatprep.subr.mxu0 0.0
        %5554 = vmatpush1.msra.mxu0 0.0
        %5555 = vmatprep.subr.mxu0 0.0
        %5556 = vmatpush1.msra.mxu0 %v5549
        %5557 = vmatprep.subr.mxu0 0.0
        %5558 = vmatpush1.msra.mxu0 %v5548
        %5559 = vmatprep.subr.mxu0 0.0
        %5560 = vmatpush1.msra.mxu0 %v5547
        %5561 = vmatprep.subr.mxu0 0.0
        %5562 = vmatpush1.msra.mxu0 %v5546
        %5563 = vmatprep.subr.mxu0 0.0
        %5564 = vmatpush1.msra.mxu0 %v5545
        %5565 = vmatprep.subr.mxu0 0.0
        %5566 = vmatpush1.msra.mxu0 %v5544
        %5567 = vmatprep.subr.mxu0 0.0
        %5568 = vmatpush1.msra.mxu0 %v5543
        %5569 = vmatprep.subr.mxu0 0.0
        %5570 = vmatpush1.msra.mxu0 %v5542
        %5571 = vmatprep.subr.mxu0 0.0
        %5572 = vmatpush1.msra.mxu0 %v5541
        %5573 = vmatprep.subr.mxu0 0.0
        %5574 = vmatpush1.msra.mxu0 %v5540
        %5575 = vmatprep.subr.mxu0 0.0
        %5576 = vmatpush1.msra.mxu0 %v5539
        %5577 = vmatprep.subr.mxu0 0.0
        %5578 = vmatpush1.msra.mxu0 %v5538
        %5579 = vmatprep.subr.mxu0 0.0
        %5580 = vmatpush1.msra.mxu0 %v5537
        %5581 = vmatprep.subr.mxu0 0.0
        %5582 = vmatpush1.msra.mxu0 %v5536
        %5583 = vmatprep.subr.mxu0 0.0
        %5584 = vmatpush1.msra.mxu0 %v5535
        %5585 = vmatprep.subr.mxu0 0.0
        %5586 = vmatpush2.msra.mxu0 0.0
        %5587 = vmatprep.subr.mxu0 0.0
        %5588 = vmatpush2.msra.mxu0 0.0
        %5589 = vmatprep.subr.mxu0 0.0
        %5590 = vmatpush2.msra.mxu0 0.0
        %5591 = vmatprep.subr.mxu0 0.0
        %5592 = vmatpush2.msra.mxu0 0.0
        %5593 = vmatprep.subr.mxu0 0.0
        %5594 = vmatpush2.msra.mxu0 0.0
        %5595 = vmatprep.subr.mxu0 0.0
        %5596 = vmatpush2.msra.mxu0 0.0
        %5597 = vmatprep.subr.mxu0 0.0
        %5598 = vmatpush2.msra.mxu0 0.0
        %5599 = vmatprep.subr.mxu0 0.0
        %5600 = vmatpush2.msra.mxu0 0.0
        %5601 = vmatprep.subr.mxu0 0.0
        %5602 = vmatpush2.msra.mxu0 0.0
        %5603 = vmatprep.subr.mxu0 0.0
        %5604 = vmatpush2.msra.mxu0 0.0
        %5605 = vmatprep.subr.mxu0 0.0
        %5606 = vmatpush2.msra.mxu0 0.0
        %5607 = vmatprep.subr.mxu0 0.0
        %5608 = vmatpush2.msra.mxu0 0.0
        %5609 = vmatprep.subr.mxu0 0.0
        %5610 = vmatpush2.msra.mxu0 0.0
        %5611 = vmatprep.subr.mxu0 0.0
        %5612 = vmatpush2.msra.mxu0 0.0
        %5613 = vmatprep.subr.mxu0 0.0
        %5614 = vmatpush2.msra.mxu0 0.0
        %5615 = vmatprep.subr.mxu0 0.0
        %5616 = vmatpush2.msra.mxu0 0.0
        %5617 = vmatprep.mubr.f32.mxu0 0.0
        %5618 = vmatmul.mubr.f32.gmra.mxu0 %v5551
        %v5619 = vpop.f32.mrf.mxu0
        %v5620 = vadd.f32 0.0, %v5619
        %v5621 = vpop.f32.mrf.mxu0
        %5622 = vdwg.mxu0
        %v5623 = vadd.f32 %v5532, %v5620
        %v5624 = vld [vmem:[#allocation3 + $0xb] sm:$0x1]
        %s5625 = scalar_lea.vmem %s5, 1320
        %v5626 = vld [vmem:[%s5625] sm:$0xff]
        %v5627 = vld [vmem:[%s5625 + $0x8] sm:$0xff]
        %v5628 = vld [vmem:[%s5625 + $0x10] sm:$0xff]
        %v5629 = vld [vmem:[%s5625 + $0x18] sm:$0xff]
        %v5630 = vld [vmem:[%s5625 + $0x20] sm:$0xff]
        %v5631 = vld [vmem:[%s5625 + $0x28] sm:$0xff]
        %v5632 = vld [vmem:[%s5625 + $0x30] sm:$0xff]
        %v5633 = vld [vmem:[%s5625 + $0x38] sm:$0xff]
        %v5634 = vld [vmem:[%s5625 + $0x40] sm:$0xff]
        %v5635 = vld [vmem:[%s5625 + $0x48] sm:$0xff]
        %v5636 = vld [vmem:[%s5625 + $0x50] sm:$0xff]
        %v5637 = vld [vmem:[%s5625 + $0x58] sm:$0xff]
        %v5638 = vld [vmem:[%s5625 + $0x60] sm:$0xff]
        %v5639 = vld [vmem:[%s5625 + $0x68] sm:$0xff]
        %v5640 = vld [vmem:[%s5625 + $0x70] sm:$0xff]
        %v5642 = vsel %vm4620, %v5624, 0
        %5644 = vmatprep.subr.mxu0 0.0
        %5645 = vmatpush1.msra.mxu0 0.0
        %5646 = vmatprep.subr.mxu0 0.0
        %5647 = vmatpush1.msra.mxu0 %v5640
        %5648 = vmatprep.subr.mxu0 0.0
        %5649 = vmatpush1.msra.mxu0 %v5639
        %5650 = vmatprep.subr.mxu0 0.0
        %5651 = vmatpush1.msra.mxu0 %v5638
        %5652 = vmatprep.subr.mxu0 0.0
        %5653 = vmatpush1.msra.mxu0 %v5637
        %5654 = vmatprep.subr.mxu0 0.0
        %5655 = vmatpush1.msra.mxu0 %v5636
        %5656 = vmatprep.subr.mxu0 0.0
        %5657 = vmatpush1.msra.mxu0 %v5635
        %5658 = vmatprep.subr.mxu0 0.0
        %5659 = vmatpush1.msra.mxu0 %v5634
        %5660 = vmatprep.subr.mxu0 0.0
        %5661 = vmatpush1.msra.mxu0 %v5633
        %5662 = vmatprep.subr.mxu0 0.0
        %5663 = vmatpush1.msra.mxu0 %v5632
        %5664 = vmatprep.subr.mxu0 0.0
        %5665 = vmatpush1.msra.mxu0 %v5631
        %5666 = vmatprep.subr.mxu0 0.0
        %5667 = vmatpush1.msra.mxu0 %v5630
        %5668 = vmatprep.subr.mxu0 0.0
        %5669 = vmatpush1.msra.mxu0 %v5629
        %5670 = vmatprep.subr.mxu0 0.0
        %5671 = vmatpush1.msra.mxu0 %v5628
        %5672 = vmatprep.subr.mxu0 0.0
        %5673 = vmatpush1.msra.mxu0 %v5627
        %5674 = vmatprep.subr.mxu0 0.0
        %5675 = vmatpush1.msra.mxu0 %v5626
        %5676 = vmatprep.subr.mxu0 0.0
        %5677 = vmatpush2.msra.mxu0 0.0
        %5678 = vmatprep.subr.mxu0 0.0
        %5679 = vmatpush2.msra.mxu0 0.0
        %5680 = vmatprep.subr.mxu0 0.0
        %5681 = vmatpush2.msra.mxu0 0.0
        %5682 = vmatprep.subr.mxu0 0.0
        %5683 = vmatpush2.msra.mxu0 0.0
        %5684 = vmatprep.subr.mxu0 0.0
        %5685 = vmatpush2.msra.mxu0 0.0
        %5686 = vmatprep.subr.mxu0 0.0
        %5687 = vmatpush2.msra.mxu0 0.0
        %5688 = vmatprep.subr.mxu0 0.0
        %5689 = vmatpush2.msra.mxu0 0.0
        %5690 = vmatprep.subr.mxu0 0.0
        %5691 = vmatpush2.msra.mxu0 0.0
        %5692 = vmatprep.subr.mxu0 0.0
        %5693 = vmatpush2.msra.mxu0 0.0
        %5694 = vmatprep.subr.mxu0 0.0
        %5695 = vmatpush2.msra.mxu0 0.0
        %5696 = vmatprep.subr.mxu0 0.0
        %5697 = vmatpush2.msra.mxu0 0.0
        %5698 = vmatprep.subr.mxu0 0.0
        %5699 = vmatpush2.msra.mxu0 0.0
        %5700 = vmatprep.subr.mxu0 0.0
        %5701 = vmatpush2.msra.mxu0 0.0
        %5702 = vmatprep.subr.mxu0 0.0
        %5703 = vmatpush2.msra.mxu0 0.0
        %5704 = vmatprep.subr.mxu0 0.0
        %5705 = vmatpush2.msra.mxu0 0.0
        %5706 = vmatprep.subr.mxu0 0.0
        %5707 = vmatpush2.msra.mxu0 0.0
        %5708 = vmatprep.mubr.f32.mxu0 0.0
        %5709 = vmatmul.mubr.f32.gmra.mxu0 %v5642
        %v5710 = vpop.f32.mrf.mxu0
        %v5711 = vadd.f32 0.0, %v5710
        %v5712 = vpop.f32.mrf.mxu0
        %5713 = vdwg.mxu0
        %v5714 = vadd.f32 %v5623, %v5711
        %v5715 = vld [vmem:[#allocation3 + $0xc] sm:$0x1]
        %s5716 = scalar_lea.vmem %s5, 1440
        %v5717 = vld [vmem:[%s5716] sm:$0xff]
        %v5718 = vld [vmem:[%s5716 + $0x8] sm:$0xff]
        %v5719 = vld [vmem:[%s5716 + $0x10] sm:$0xff]
        %v5720 = vld [vmem:[%s5716 + $0x18] sm:$0xff]
        %v5721 = vld [vmem:[%s5716 + $0x20] sm:$0xff]
        %v5722 = vld [vmem:[%s5716 + $0x28] sm:$0xff]
        %v5723 = vld [vmem:[%s5716 + $0x30] sm:$0xff]
        %v5724 = vld [vmem:[%s5716 + $0x38] sm:$0xff]
        %v5725 = vld [vmem:[%s5716 + $0x40] sm:$0xff]
        %v5726 = vld [vmem:[%s5716 + $0x48] sm:$0xff]
        %v5727 = vld [vmem:[%s5716 + $0x50] sm:$0xff]
        %v5728 = vld [vmem:[%s5716 + $0x58] sm:$0xff]
        %v5729 = vld [vmem:[%s5716 + $0x60] sm:$0xff]
        %v5730 = vld [vmem:[%s5716 + $0x68] sm:$0xff]
        %v5731 = vld [vmem:[%s5716 + $0x70] sm:$0xff]
        %v5733 = vsel %vm4620, %v5715, 0
        %5735 = vmatprep.subr.mxu0 0.0
        %5736 = vmatpush1.msra.mxu0 0.0
        %5737 = vmatprep.subr.mxu0 0.0
        %5738 = vmatpush1.msra.mxu0 %v5731
        %5739 = vmatprep.subr.mxu0 0.0
        %5740 = vmatpush1.msra.mxu0 %v5730
        %5741 = vmatprep.subr.mxu0 0.0
        %5742 = vmatpush1.msra.mxu0 %v5729
        %5743 = vmatprep.subr.mxu0 0.0
        %5744 = vmatpush1.msra.mxu0 %v5728
        %5745 = vmatprep.subr.mxu0 0.0
        %5746 = vmatpush1.msra.mxu0 %v5727
        %5747 = vmatprep.subr.mxu0 0.0
        %5748 = vmatpush1.msra.mxu0 %v5726
        %5749 = vmatprep.subr.mxu0 0.0
        %5750 = vmatpush1.msra.mxu0 %v5725
        %5751 = vmatprep.subr.mxu0 0.0
        %5752 = vmatpush1.msra.mxu0 %v5724
        %5753 = vmatprep.subr.mxu0 0.0
        %5754 = vmatpush1.msra.mxu0 %v5723
        %5755 = vmatprep.subr.mxu0 0.0
        %5756 = vmatpush1.msra.mxu0 %v5722
        %5757 = vmatprep.subr.mxu0 0.0
        %5758 = vmatpush1.msra.mxu0 %v5721
        %5759 = vmatprep.subr.mxu0 0.0
        %5760 = vmatpush1.msra.mxu0 %v5720
        %5761 = vmatprep.subr.mxu0 0.0
        %5762 = vmatpush1.msra.mxu0 %v5719
        %5763 = vmatprep.subr.mxu0 0.0
        %5764 = vmatpush1.msra.mxu0 %v5718
        %5765 = vmatprep.subr.mxu0 0.0
        %5766 = vmatpush1.msra.mxu0 %v5717
        %5767 = vmatprep.subr.mxu0 0.0
        %5768 = vmatpush2.msra.mxu0 0.0
        %5769 = vmatprep.subr.mxu0 0.0
        %5770 = vmatpush2.msra.mxu0 0.0
        %5771 = vmatprep.subr.mxu0 0.0
        %5772 = vmatpush2.msra.mxu0 0.0
        %5773 = vmatprep.subr.mxu0 0.0
        %5774 = vmatpush2.msra.mxu0 0.0
        %5775 = vmatprep.subr.mxu0 0.0
        %5776 = vmatpush2.msra.mxu0 0.0
        %5777 = vmatprep.subr.mxu0 0.0
        %5778 = vmatpush2.msra.mxu0 0.0
        %5779 = vmatprep.subr.mxu0 0.0
        %5780 = vmatpush2.msra.mxu0 0.0
        %5781 = vmatprep.subr.mxu0 0.0
        %5782 = vmatpush2.msra.mxu0 0.0
        %5783 = vmatprep.subr.mxu0 0.0
        %5784 = vmatpush2.msra.mxu0 0.0
        %5785 = vmatprep.subr.mxu0 0.0
        %5786 = vmatpush2.msra.mxu0 0.0
        %5787 = vmatprep.subr.mxu0 0.0
        %5788 = vmatpush2.msra.mxu0 0.0
        %5789 = vmatprep.subr.mxu0 0.0
        %5790 = vmatpush2.msra.mxu0 0.0
        %5791 = vmatprep.subr.mxu0 0.0
        %5792 = vmatpush2.msra.mxu0 0.0
        %5793 = vmatprep.subr.mxu0 0.0
        %5794 = vmatpush2.msra.mxu0 0.0
        %5795 = vmatprep.subr.mxu0 0.0
        %5796 = vmatpush2.msra.mxu0 0.0
        %5797 = vmatprep.subr.mxu0 0.0
        %5798 = vmatpush2.msra.mxu0 0.0
        %5799 = vmatprep.mubr.f32.mxu0 0.0
        %5800 = vmatmul.mubr.f32.gmra.mxu0 %v5733
        %v5801 = vpop.f32.mrf.mxu0
        %v5802 = vadd.f32 0.0, %v5801
        %v5803 = vpop.f32.mrf.mxu0
        %5804 = vdwg.mxu0
        %v5805 = vadd.f32 %v5714, %v5802
        %v5806 = vld [vmem:[#allocation3 + $0xd] sm:$0x1]
        %s5807 = scalar_lea.vmem %s5, 1560
        %v5808 = vld [vmem:[%s5807] sm:$0xff]
        %v5809 = vld [vmem:[%s5807 + $0x8] sm:$0xff]
        %v5810 = vld [vmem:[%s5807 + $0x10] sm:$0xff]
        %v5811 = vld [vmem:[%s5807 + $0x18] sm:$0xff]
        %v5812 = vld [vmem:[%s5807 + $0x20] sm:$0xff]
        %v5813 = vld [vmem:[%s5807 + $0x28] sm:$0xff]
        %v5814 = vld [vmem:[%s5807 + $0x30] sm:$0xff]
        %v5815 = vld [vmem:[%s5807 + $0x38] sm:$0xff]
        %v5816 = vld [vmem:[%s5807 + $0x40] sm:$0xff]
        %v5817 = vld [vmem:[%s5807 + $0x48] sm:$0xff]
        %v5818 = vld [vmem:[%s5807 + $0x50] sm:$0xff]
        %v5819 = vld [vmem:[%s5807 + $0x58] sm:$0xff]
        %v5820 = vld [vmem:[%s5807 + $0x60] sm:$0xff]
        %v5821 = vld [vmem:[%s5807 + $0x68] sm:$0xff]
        %v5822 = vld [vmem:[%s5807 + $0x70] sm:$0xff]
        %v5824 = vsel %vm4620, %v5806, 0
        %5826 = vmatprep.subr.mxu0 0.0
        %5827 = vmatpush1.msra.mxu0 0.0
        %5828 = vmatprep.subr.mxu0 0.0
        %5829 = vmatpush1.msra.mxu0 %v5822
        %5830 = vmatprep.subr.mxu0 0.0
        %5831 = vmatpush1.msra.mxu0 %v5821
        %5832 = vmatprep.subr.mxu0 0.0
        %5833 = vmatpush1.msra.mxu0 %v5820
        %5834 = vmatprep.subr.mxu0 0.0
        %5835 = vmatpush1.msra.mxu0 %v5819
        %5836 = vmatprep.subr.mxu0 0.0
        %5837 = vmatpush1.msra.mxu0 %v5818
        %5838 = vmatprep.subr.mxu0 0.0
        %5839 = vmatpush1.msra.mxu0 %v5817
        %5840 = vmatprep.subr.mxu0 0.0
        %5841 = vmatpush1.msra.mxu0 %v5816
        %5842 = vmatprep.subr.mxu0 0.0
        %5843 = vmatpush1.msra.mxu0 %v5815
        %5844 = vmatprep.subr.mxu0 0.0
        %5845 = vmatpush1.msra.mxu0 %v5814
        %5846 = vmatprep.subr.mxu0 0.0
        %5847 = vmatpush1.msra.mxu0 %v5813
        %5848 = vmatprep.subr.mxu0 0.0
        %5849 = vmatpush1.msra.mxu0 %v5812
        %5850 = vmatprep.subr.mxu0 0.0
        %5851 = vmatpush1.msra.mxu0 %v5811
        %5852 = vmatprep.subr.mxu0 0.0
        %5853 = vmatpush1.msra.mxu0 %v5810
        %5854 = vmatprep.subr.mxu0 0.0
        %5855 = vmatpush1.msra.mxu0 %v5809
        %5856 = vmatprep.subr.mxu0 0.0
        %5857 = vmatpush1.msra.mxu0 %v5808
        %5858 = vmatprep.subr.mxu0 0.0
        %5859 = vmatpush2.msra.mxu0 0.0
        %5860 = vmatprep.subr.mxu0 0.0
        %5861 = vmatpush2.msra.mxu0 0.0
        %5862 = vmatprep.subr.mxu0 0.0
        %5863 = vmatpush2.msra.mxu0 0.0
        %5864 = vmatprep.subr.mxu0 0.0
        %5865 = vmatpush2.msra.mxu0 0.0
        %5866 = vmatprep.subr.mxu0 0.0
        %5867 = vmatpush2.msra.mxu0 0.0
        %5868 = vmatprep.subr.mxu0 0.0
        %5869 = vmatpush2.msra.mxu0 0.0
        %5870 = vmatprep.subr.mxu0 0.0
        %5871 = vmatpush2.msra.mxu0 0.0
        %5872 = vmatprep.subr.mxu0 0.0
        %5873 = vmatpush2.msra.mxu0 0.0
        %5874 = vmatprep.subr.mxu0 0.0
        %5875 = vmatpush2.msra.mxu0 0.0
        %5876 = vmatprep.subr.mxu0 0.0
        %5877 = vmatpush2.msra.mxu0 0.0
        %5878 = vmatprep.subr.mxu0 0.0
        %5879 = vmatpush2.msra.mxu0 0.0
        %5880 = vmatprep.subr.mxu0 0.0
        %5881 = vmatpush2.msra.mxu0 0.0
        %5882 = vmatprep.subr.mxu0 0.0
        %5883 = vmatpush2.msra.mxu0 0.0
        %5884 = vmatprep.subr.mxu0 0.0
        %5885 = vmatpush2.msra.mxu0 0.0
        %5886 = vmatprep.subr.mxu0 0.0
        %5887 = vmatpush2.msra.mxu0 0.0
        %5888 = vmatprep.subr.mxu0 0.0
        %5889 = vmatpush2.msra.mxu0 0.0
        %5890 = vmatprep.mubr.f32.mxu0 0.0
        %5891 = vmatmul.mubr.f32.gmra.mxu0 %v5824
        %v5892 = vpop.f32.mrf.mxu0
        %v5893 = vadd.f32 0.0, %v5892
        %v5894 = vpop.f32.mrf.mxu0
        %5895 = vdwg.mxu0
        %v5896 = vadd.f32 %v5805, %v5893
        %v5897 = vld [vmem:[#allocation3 + $0xe] sm:$0x1]
        %s5898 = scalar_lea.vmem %s5, 1680
        %v5899 = vld [vmem:[%s5898] sm:$0xff]
        %v5900 = vld [vmem:[%s5898 + $0x8] sm:$0xff]
        %v5901 = vld [vmem:[%s5898 + $0x10] sm:$0xff]
        %v5902 = vld [vmem:[%s5898 + $0x18] sm:$0xff]
        %v5903 = vld [vmem:[%s5898 + $0x20] sm:$0xff]
        %v5904 = vld [vmem:[%s5898 + $0x28] sm:$0xff]
        %v5905 = vld [vmem:[%s5898 + $0x30] sm:$0xff]
        %v5906 = vld [vmem:[%s5898 + $0x38] sm:$0xff]
        %v5907 = vld [vmem:[%s5898 + $0x40] sm:$0xff]
        %v5908 = vld [vmem:[%s5898 + $0x48] sm:$0xff]
        %v5909 = vld [vmem:[%s5898 + $0x50] sm:$0xff]
        %v5910 = vld [vmem:[%s5898 + $0x58] sm:$0xff]
        %v5911 = vld [vmem:[%s5898 + $0x60] sm:$0xff]
        %v5912 = vld [vmem:[%s5898 + $0x68] sm:$0xff]
        %v5913 = vld [vmem:[%s5898 + $0x70] sm:$0xff]
        %v5915 = vsel %vm4620, %v5897, 0
        %5917 = vmatprep.subr.mxu0 0.0
        %5918 = vmatpush1.msra.mxu0 0.0
        %5919 = vmatprep.subr.mxu0 0.0
        %5920 = vmatpush1.msra.mxu0 %v5913
        %5921 = vmatprep.subr.mxu0 0.0
        %5922 = vmatpush1.msra.mxu0 %v5912
        %5923 = vmatprep.subr.mxu0 0.0
        %5924 = vmatpush1.msra.mxu0 %v5911
        %5925 = vmatprep.subr.mxu0 0.0
        %5926 = vmatpush1.msra.mxu0 %v5910
        %5927 = vmatprep.subr.mxu0 0.0
        %5928 = vmatpush1.msra.mxu0 %v5909
        %5929 = vmatprep.subr.mxu0 0.0
        %5930 = vmatpush1.msra.mxu0 %v5908
        %5931 = vmatprep.subr.mxu0 0.0
        %5932 = vmatpush1.msra.mxu0 %v5907
        %5933 = vmatprep.subr.mxu0 0.0
        %5934 = vmatpush1.msra.mxu0 %v5906
        %5935 = vmatprep.subr.mxu0 0.0
        %5936 = vmatpush1.msra.mxu0 %v5905
        %5937 = vmatprep.subr.mxu0 0.0
        %5938 = vmatpush1.msra.mxu0 %v5904
        %5939 = vmatprep.subr.mxu0 0.0
        %5940 = vmatpush1.msra.mxu0 %v5903
        %5941 = vmatprep.subr.mxu0 0.0
        %5942 = vmatpush1.msra.mxu0 %v5902
        %5943 = vmatprep.subr.mxu0 0.0
        %5944 = vmatpush1.msra.mxu0 %v5901
        %5945 = vmatprep.subr.mxu0 0.0
        %5946 = vmatpush1.msra.mxu0 %v5900
        %5947 = vmatprep.subr.mxu0 0.0
        %5948 = vmatpush1.msra.mxu0 %v5899
        %5949 = vmatprep.subr.mxu0 0.0
        %5950 = vmatpush2.msra.mxu0 0.0
        %5951 = vmatprep.subr.mxu0 0.0
        %5952 = vmatpush2.msra.mxu0 0.0
        %5953 = vmatprep.subr.mxu0 0.0
        %5954 = vmatpush2.msra.mxu0 0.0
        %5955 = vmatprep.subr.mxu0 0.0
        %5956 = vmatpush2.msra.mxu0 0.0
        %5957 = vmatprep.subr.mxu0 0.0
        %5958 = vmatpush2.msra.mxu0 0.0
        %5959 = vmatprep.subr.mxu0 0.0
        %5960 = vmatpush2.msra.mxu0 0.0
        %5961 = vmatprep.subr.mxu0 0.0
        %5962 = vmatpush2.msra.mxu0 0.0
        %5963 = vmatprep.subr.mxu0 0.0
        %5964 = vmatpush2.msra.mxu0 0.0
        %5965 = vmatprep.subr.mxu0 0.0
        %5966 = vmatpush2.msra.mxu0 0.0
        %5967 = vmatprep.subr.mxu0 0.0
        %5968 = vmatpush2.msra.mxu0 0.0
        %5969 = vmatprep.subr.mxu0 0.0
        %5970 = vmatpush2.msra.mxu0 0.0
        %5971 = vmatprep.subr.mxu0 0.0
        %5972 = vmatpush2.msra.mxu0 0.0
        %5973 = vmatprep.subr.mxu0 0.0
        %5974 = vmatpush2.msra.mxu0 0.0
        %5975 = vmatprep.subr.mxu0 0.0
        %5976 = vmatpush2.msra.mxu0 0.0
        %5977 = vmatprep.subr.mxu0 0.0
        %5978 = vmatpush2.msra.mxu0 0.0
        %5979 = vmatprep.subr.mxu0 0.0
        %5980 = vmatpush2.msra.mxu0 0.0
        %5981 = vmatprep.mubr.f32.mxu0 0.0
        %5982 = vmatmul.mubr.f32.gmra.mxu0 %v5915
        %v5983 = vpop.f32.mrf.mxu0
        %v5984 = vadd.f32 0.0, %v5983
        %v5985 = vpop.f32.mrf.mxu0
        %5986 = vdwg.mxu0
        %v5987 = vadd.f32 %v5896, %v5984
        %v5988 = vld [vmem:[#allocation3 + $0xf] sm:$0x1]
        %s5989 = scalar_lea.vmem %s5, 1800
        %v5990 = vld [vmem:[%s5989] sm:$0xff]
        %v5991 = vld [vmem:[%s5989 + $0x8] sm:$0xff]
        %v5992 = vld [vmem:[%s5989 + $0x10] sm:$0xff]
        %v5993 = vld [vmem:[%s5989 + $0x18] sm:$0xff]
        %v5994 = vld [vmem:[%s5989 + $0x20] sm:$0xff]
        %v5995 = vld [vmem:[%s5989 + $0x28] sm:$0xff]
        %v5996 = vld [vmem:[%s5989 + $0x30] sm:$0xff]
        %v5997 = vld [vmem:[%s5989 + $0x38] sm:$0xff]
        %v5998 = vld [vmem:[%s5989 + $0x40] sm:$0xff]
        %v5999 = vld [vmem:[%s5989 + $0x48] sm:$0xff]
        %v6000 = vld [vmem:[%s5989 + $0x50] sm:$0xff]
        %v6001 = vld [vmem:[%s5989 + $0x58] sm:$0xff]
        %v6002 = vld [vmem:[%s5989 + $0x60] sm:$0xff]
        %v6003 = vld [vmem:[%s5989 + $0x68] sm:$0xff]
        %v6004 = vld [vmem:[%s5989 + $0x70] sm:$0xff]
        %v6006 = vsel %vm4620, %v5988, 0
        %6008 = vmatprep.subr.mxu0 0.0
        %6009 = vmatpush1.msra.mxu0 0.0
        %6010 = vmatprep.subr.mxu0 0.0
        %6011 = vmatpush1.msra.mxu0 %v6004
        %6012 = vmatprep.subr.mxu0 0.0
        %6013 = vmatpush1.msra.mxu0 %v6003
        %6014 = vmatprep.subr.mxu0 0.0
        %6015 = vmatpush1.msra.mxu0 %v6002
        %6016 = vmatprep.subr.mxu0 0.0
        %6017 = vmatpush1.msra.mxu0 %v6001
        %6018 = vmatprep.subr.mxu0 0.0
        %6019 = vmatpush1.msra.mxu0 %v6000
        %6020 = vmatprep.subr.mxu0 0.0
        %6021 = vmatpush1.msra.mxu0 %v5999
        %6022 = vmatprep.subr.mxu0 0.0
        %6023 = vmatpush1.msra.mxu0 %v5998
        %6024 = vmatprep.subr.mxu0 0.0
        %6025 = vmatpush1.msra.mxu0 %v5997
        %6026 = vmatprep.subr.mxu0 0.0
        %6027 = vmatpush1.msra.mxu0 %v5996
        %6028 = vmatprep.subr.mxu0 0.0
        %6029 = vmatpush1.msra.mxu0 %v5995
        %6030 = vmatprep.subr.mxu0 0.0
        %6031 = vmatpush1.msra.mxu0 %v5994
        %6032 = vmatprep.subr.mxu0 0.0
        %6033 = vmatpush1.msra.mxu0 %v5993
        %6034 = vmatprep.subr.mxu0 0.0
        %6035 = vmatpush1.msra.mxu0 %v5992
        %6036 = vmatprep.subr.mxu0 0.0
        %6037 = vmatpush1.msra.mxu0 %v5991
        %6038 = vmatprep.subr.mxu0 0.0
        %6039 = vmatpush1.msra.mxu0 %v5990
        %6040 = vmatprep.subr.mxu0 0.0
        %6041 = vmatpush2.msra.mxu0 0.0
        %6042 = vmatprep.subr.mxu0 0.0
        %6043 = vmatpush2.msra.mxu0 0.0
        %6044 = vmatprep.subr.mxu0 0.0
        %6045 = vmatpush2.msra.mxu0 0.0
        %6046 = vmatprep.subr.mxu0 0.0
        %6047 = vmatpush2.msra.mxu0 0.0
        %6048 = vmatprep.subr.mxu0 0.0
        %6049 = vmatpush2.msra.mxu0 0.0
        %6050 = vmatprep.subr.mxu0 0.0
        %6051 = vmatpush2.msra.mxu0 0.0
        %6052 = vmatprep.subr.mxu0 0.0
        %6053 = vmatpush2.msra.mxu0 0.0
        %6054 = vmatprep.subr.mxu0 0.0
        %6055 = vmatpush2.msra.mxu0 0.0
        %6056 = vmatprep.subr.mxu0 0.0
        %6057 = vmatpush2.msra.mxu0 0.0
        %6058 = vmatprep.subr.mxu0 0.0
        %6059 = vmatpush2.msra.mxu0 0.0
        %6060 = vmatprep.subr.mxu0 0.0
        %6061 = vmatpush2.msra.mxu0 0.0
        %6062 = vmatprep.subr.mxu0 0.0
        %6063 = vmatpush2.msra.mxu0 0.0
        %6064 = vmatprep.subr.mxu0 0.0
        %6065 = vmatpush2.msra.mxu0 0.0
        %6066 = vmatprep.subr.mxu0 0.0
        %6067 = vmatpush2.msra.mxu0 0.0
        %6068 = vmatprep.subr.mxu0 0.0
        %6069 = vmatpush2.msra.mxu0 0.0
        %6070 = vmatprep.subr.mxu0 0.0
        %6071 = vmatpush2.msra.mxu0 0.0
        %6072 = vmatprep.mubr.f32.mxu0 0.0
        %6073 = vmatmul.mubr.f32.gmra.mxu0 %v6006
        %v6074 = vpop.f32.mrf.mxu0
        %v6075 = vadd.f32 0.0, %v6074
        %v6076 = vpop.f32.mrf.mxu0
        %6077 = vdwg.mxu0
        %v6078 = vadd.f32 %v5987, %v6075
        %v6079 = vmax.f32 %v6078, 0.0
        %v6080 = vld [vmem:[%s7] sm:$0xff]
        %v6081 = vld [vmem:[%s7 + $0x8] sm:$0xff]
        %v6082 = vld [vmem:[%s8] sm:$0x1]
        %vm6083 = vcmask 130048
        %v6085 = vsel %vm6083, %v6079, 0
        %6087 = vmatprep.subr.mxu0 0.0
        %6088 = vmatpush1.msra.mxu0 0.0
        %6089 = vmatprep.subr.mxu0 0.0
        %6090 = vmatpush1.msra.mxu0 0.0
        %6091 = vmatprep.subr.mxu0 0.0
        %6092 = vmatpush1.msra.mxu0 0.0
        %6093 = vmatprep.subr.mxu0 0.0
        %6094 = vmatpush1.msra.mxu0 0.0
        %6095 = vmatprep.subr.mxu0 0.0
        %6096 = vmatpush1.msra.mxu0 0.0
        %6097 = vmatprep.subr.mxu0 0.0
        %6098 = vmatpush1.msra.mxu0 0.0
        %6099 = vmatprep.subr.mxu0 0.0
        %6100 = vmatpush1.msra.mxu0 0.0
        %6101 = vmatprep.subr.mxu0 0.0
        %6102 = vmatpush1.msra.mxu0 0.0
        %6103 = vmatprep.subr.mxu0 0.0
        %6104 = vmatpush1.msra.mxu0 0.0
        %6105 = vmatprep.subr.mxu0 0.0
        %6106 = vmatpush1.msra.mxu0 0.0
        %6107 = vmatprep.subr.mxu0 0.0
        %6108 = vmatpush1.msra.mxu0 0.0
        %6109 = vmatprep.subr.mxu0 0.0
        %6110 = vmatpush1.msra.mxu0 0.0
        %6111 = vmatprep.subr.mxu0 0.0
        %6112 = vmatpush1.msra.mxu0 0.0
        %6113 = vmatprep.subr.mxu0 0.0
        %6114 = vmatpush1.msra.mxu0 0.0
        %6115 = vmatprep.subr.mxu0 0.0
        %6116 = vmatpush1.msra.mxu0 %v6081
        %6117 = vmatprep.subr.mxu0 0.0
        %6118 = vmatpush1.msra.mxu0 %v6080
        %6119 = vmatprep.subr.mxu0 0.0
        %6120 = vmatpush2.msra.mxu0 0.0
        %6121 = vmatprep.subr.mxu0 0.0
        %6122 = vmatpush2.msra.mxu0 0.0
        %6123 = vmatprep.subr.mxu0 0.0
        %6124 = vmatpush2.msra.mxu0 0.0
        %6125 = vmatprep.subr.mxu0 0.0
        %6126 = vmatpush2.msra.mxu0 0.0
        %6127 = vmatprep.subr.mxu0 0.0
        %6128 = vmatpush2.msra.mxu0 0.0
        %6129 = vmatprep.subr.mxu0 0.0
        %6130 = vmatpush2.msra.mxu0 0.0
        %6131 = vmatprep.subr.mxu0 0.0
        %6132 = vmatpush2.msra.mxu0 0.0
        %6133 = vmatprep.subr.mxu0 0.0
        %6134 = vmatpush2.msra.mxu0 0.0
        %6135 = vmatprep.subr.mxu0 0.0
        %6136 = vmatpush2.msra.mxu0 0.0
        %6137 = vmatprep.subr.mxu0 0.0
        %6138 = vmatpush2.msra.mxu0 0.0
        %6139 = vmatprep.subr.mxu0 0.0
        %6140 = vmatpush2.msra.mxu0 0.0
        %6141 = vmatprep.subr.mxu0 0.0
        %6142 = vmatpush2.msra.mxu0 0.0
        %6143 = vmatprep.subr.mxu0 0.0
        %6144 = vmatpush2.msra.mxu0 0.0
        %6145 = vmatprep.subr.mxu0 0.0
        %6146 = vmatpush2.msra.mxu0 0.0
        %6147 = vmatprep.subr.mxu0 0.0
        %6148 = vmatpush2.msra.mxu0 0.0
        %6149 = vmatprep.subr.mxu0 0.0
        %6150 = vmatpush2.msra.mxu0 0.0
        %6151 = vmatprep.mubr.f32.mxu0 0.0
        %6152 = vmatmul.mubr.f32.gmra.mxu0 %v6085
        %v6153 = vpop.f32.mrf.mxu0
        %v6154 = vadd.f32 %v6082, %v6153
        %v6155 = vpop.f32.mrf.mxu0
        %6156 = vdwg.mxu0
        %vm6157 = vcmask 1040384
        %v6158 = vsel %vm6157, %v6154, -inf
        %6159 = vmax.xlane.f32.xlu0 %v6158
        %v6160 = vpop.xlane.xlu0 %6159
        %v6161 = vsub.f32 %v6154, %v6160
        %v6162 = vmul.f32 %v6161, 1.442695
        %v6163 = vpow.pop %v6162
        %v6164 = vsel %vm6157, %v6163, 0.0
        %6165 = vadd.xlane.f32.xlu0 %v6164
        %v6166 = vpop.xlane.xlu0 %6165
        %v6167 = vlog2.pop %v6166
        %v6168 = vmul.f32 %v6167, 0.6931472
        %v6169 = vsub.f32 %v6161, %v6168
        %6170 = vst [vmem:[%s324] sm:$0x1] %v6169
        %s6171 = sand.u32 %s225, 1
        %s6172 = scalar_lea.sflag [#allocation5], %s6171
        %s6173 = sand.u32 %s225, 1
        %s6174 = scalar_lea.vmem [#allocation4], %s6173
        // Predicated region
        $region57: #{cnn_kws_forward.1} parent=55 // pred_check
          %p6175 = pneg %p235
        $region58: #{cnn_kws_forward.1} parent=55 // pred_check_branch
          %6177 = sbr.rel (%p6175) target = $region60
        $region59: #{cnn_kws_forward.1} parent=55 // pred_region
          %s6179 = ssub.s32 16, 16
          %6180 = vsyncadd %s6172, %s6179
          %s6181 = smul.addr %s23, 16
          %s6182 = scalar_lea.hbm %s9, %s6181
          %s6184 = sshll.u32 %s6174, 4
          %s6185 = int_to_ptr.vmem [resolvable:$true] %s6184
          %6187 = dma.vmem_to_hbm [thread:$0]  %s6185, 16, %s6182, %s6172
        $region60: #{cnn_kws_forward.1} parent=55 // pred_fallthru
          _
      $region56: #{cnn_kws_forward.1} parent=5 // pred_fallthru
        _
      %p6188 = scmp.le.s32.totalorder 2, %s18
      // Predicated region
      $region61: #{cnn_kws_forward.1} parent=5 // pred_check
        %p6189 = pneg %p6188
      $region62: #{cnn_kws_forward.1} parent=5 // pred_check_branch
        %6191 = sbr.rel (%p6189) target = $region64
      $region63: #{cnn_kws_forward.1} parent=5 // pred_region
        %s6192 = ssub.s32 %s18, 2
        // Predicated region
        $region65: #{cnn_kws_forward.1} parent=63 // pred_check
          %p6193 = pneg %p241
        $region66: #{cnn_kws_forward.1} parent=63 // pred_check_branch
          %6195 = sbr.rel (%p6193) target = $region68
        $region67: #{cnn_kws_forward.1} parent=63 // pred_region
          %s6196 = sand.u32 %s226, 1
          %s6197 = scalar_lea.sflag [#allocation5], %s6196
          %s6198 = sand.u32 %s226, 1
          %s6199 = scalar_lea.vmem [#allocation4], %s6198
          %6200 = dma.done %s6197, 16
        $region68: #{cnn_kws_forward.1} parent=63 // pred_fallthru
          _
      $region64: #{cnn_kws_forward.1} parent=5 // pred_fallthru
        _
    $region6: #{cnn_kws_forward.1} parent=1 // loop_footer
      %s22 = sadd.s32 1, %s18
    $region7: #{cnn_kws_forward.1} parent=1 // loop_footer_branch
      %17 = sbr.rel target = $region3
    $region8: #{cnn_kws_forward.1} parent=1 // loop_exit
      _
    %6201 = vsyncpa [#allocation5], 1
    %s6202 = scalar_lea.sflag [#allocation5], 1
    %6203 = vsyncpa %s6202, 1

</llo_original>
